<compile_context>
chip_gen: v7x
topology: tpu7x:2x2x1
jax: 0.10.0
libtpu: 0.0.40
codegen_flags: <defaults>
</compile_context>

<pallas_src>
import functools
import jax
import jax.numpy as jnp
from jax import lax
from jax.experimental import pallas as pl
from jax.experimental.pallas import tpu as pltpu

# ---- hyperparameters (from api.py) ----
DIM_FEEDFORWARD = 512
D_MODEL = 256
NUM_CLASSES = 3
NUM_HEADS = 4
NUM_LAYERS = 4
NUM_SEGMENT_LAYERS = 2
SEGMENT_SIZE = 8
PATCH_TIME = 4   # not defined in snippet -> chosen
PATCH_FREQ = 4   # not defined in snippet -> chosen
SEG_HEADS = 2
SEG_FFN = 256
LN_EPS = 1e-5

TM_MAX = 256      # row-tile for matmul/LN kernels (fits 16 MiB scoped VMEM on v5e)
TS_MAX = 256      # q / kv tile for attention
NEG_INF = -1e30


def _row_tile(m):
    """Largest legal row tile: full dim if small, else a multiple of 8."""
    return m if m <= TM_MAX else TM_MAX


def _ln(y, g, b):
    mean = jnp.mean(y, axis=-1, keepdims=True)
    c = y - mean
    var = jnp.mean(c * c, axis=-1, keepdims=True)
    return c * lax.rsqrt(var + LN_EPS) * g + b


# =========================== Pallas kernels ===========================

def _linear_kernel(x_ref, w_ref, b_ref, o_ref, *, relu):
    y = jnp.dot(x_ref[...].astype(jnp.bfloat16), w_ref[...].astype(jnp.bfloat16),
                preferred_element_type=jnp.float32)
    y = y + b_ref[...]
    if relu:
        y = jnp.maximum(y, 0.0)
    o_ref[...] = y.astype(o_ref.dtype)


def linear(x, w, b, relu=False):
    """x: (..., K) @ w: (K, N) + b: (N,), row-tiled over M with parallel grid."""
    K, N = w.shape
    lead = x.shape[:-1]
    x2 = x.reshape(-1, K)
    M = x2.shape[0]
    tm = _row_tile(M)
    out = pl.pallas_call(
        functools.partial(_linear_kernel, relu=relu),
        out_shape=jax.ShapeDtypeStruct((M, N), jnp.float32),
        grid=(pl.cdiv(M, tm),),
        in_specs=[
            pl.BlockSpec((tm, K), lambda i: (i, 0)),
            pl.BlockSpec((K, N), lambda i: (0, 0)),
            pl.BlockSpec((1, N), lambda i: (0, 0)),
        ],
        out_specs=pl.BlockSpec((tm, N), lambda i: (i, 0)),
        compiler_params=pltpu.CompilerParams(dimension_semantics=("parallel",)),
    )(x2, w, b.reshape(1, N))
    return out.reshape(lead + (N,))


def _proj_res_ln_kernel(a_ref, x_ref, w_ref, b_ref, g_ref, bt_ref, o_ref):
    """out = LayerNorm(x + a @ W_out + b_out)."""
    y = jnp.dot(a_ref[...].astype(jnp.bfloat16), w_ref[...].astype(jnp.bfloat16),
                preferred_element_type=jnp.float32)
    y = y + b_ref[...] + x_ref[...]
    o_ref[...] = _ln(y, g_ref[...], bt_ref[...]).astype(o_ref.dtype)


def proj_residual_ln(attn, x, w, b, gamma, beta):
    B, S, D = x.shape
    a2 = attn.reshape(-1, D)
    x2 = x.reshape(-1, D)
    M = a2.shape[0]
    tm = _row_tile(M)
    out = pl.pallas_call(
        _proj_res_ln_kernel,
        out_shape=jax.ShapeDtypeStruct((M, D), jnp.float32),
        grid=(pl.cdiv(M, tm),),
        in_specs=[
            pl.BlockSpec((tm, D), lambda i: (i, 0)),
            pl.BlockSpec((tm, D), lambda i: (i, 0)),
            pl.BlockSpec((D, D), lambda i: (0, 0)),
            pl.BlockSpec((1, D), lambda i: (0, 0)),
            pl.BlockSpec((1, D), lambda i: (0, 0)),
            pl.BlockSpec((1, D), lambda i: (0, 0)),
        ],
        out_specs=pl.BlockSpec((tm, D), lambda i: (i, 0)),
        compiler_params=pltpu.CompilerParams(dimension_semantics=("parallel",)),
    )(a2, x2, w, b.reshape(1, D), gamma.reshape(1, D), beta.reshape(1, D))
    return out.reshape(B, S, D)


def _ffn_res_ln_kernel(x_ref, w1_ref, b1_ref, w2_ref, b2_ref, g_ref, bt_ref, o_ref):
    """out = LayerNorm(x + relu(x@W1+b1)@W2 + b2); (tm, F) intermediate stays in VMEM."""
    x = x_ref[...]
    h = jnp.dot(x.astype(jnp.bfloat16), w1_ref[...].astype(jnp.bfloat16),
                preferred_element_type=jnp.float32) + b1_ref[...]
    h = jnp.maximum(h, 0.0)
    y = jnp.dot(h.astype(jnp.bfloat16), w2_ref[...].astype(jnp.bfloat16),
                preferred_element_type=jnp.float32) + b2_ref[...]
    y = y + x
    o_ref[...] = _ln(y, g_ref[...], bt_ref[...]).astype(o_ref.dtype)


def ffn_residual_ln(x, w1, b1, w2, b2, gamma, beta):
    B, S, D = x.shape
    F = w1.shape[1]
    x2 = x.reshape(-1, D)
    M = x2.shape[0]
    tm = _row_tile(M)
    out = pl.pallas_call(
        _ffn_res_ln_kernel,
        out_shape=jax.ShapeDtypeStruct((M, D), jnp.float32),
        grid=(pl.cdiv(M, tm),),
        in_specs=[
            pl.BlockSpec((tm, D), lambda i: (i, 0)),
            pl.BlockSpec((D, F), lambda i: (0, 0)),
            pl.BlockSpec((1, F), lambda i: (0, 0)),
            pl.BlockSpec((F, D), lambda i: (0, 0)),
            pl.BlockSpec((1, D), lambda i: (0, 0)),
            pl.BlockSpec((1, D), lambda i: (0, 0)),
            pl.BlockSpec((1, D), lambda i: (0, 0)),
        ],
        out_specs=pl.BlockSpec((tm, D), lambda i: (i, 0)),
        compiler_params=pltpu.CompilerParams(dimension_semantics=("parallel",)),
    )(x2, w1, b1.reshape(1, F), w2, b2.reshape(1, D),
      gamma.reshape(1, D), beta.reshape(1, D))
    return out.reshape(B, S, D)


def _mha_kernel(q_ref, k_ref, v_ref, o_ref, m_ref, l_ref, acc_ref,
                *, heads, scale, seq_len, tk):
    """Lane-dense multi-head attention, online-softmax over KV tiles.

    q/k/v/o blocks are (1, T, D) with D = heads * dh (lane-dense); heads are
    sliced inside at multiples of dh.  Grid = (B, nQ, nKV), KV axis innermost
    ("arbitrary") with m/l/acc accumulators in VMEM scratch.
    """
    kv = pl.program_id(2)
    D = q_ref.shape[-1]
    dh = D // heads

    @pl.when(kv == 0)
    def _():
        m_ref[...] = jnp.full_like(m_ref, NEG_INF)
        l_ref[...] = jnp.zeros_like(l_ref)
        acc_ref[...] = jnp.zeros_like(acc_ref)

    q = q_ref[0]   # (TQ, D)
    k = k_ref[0]   # (TK, D)
    v = v_ref[0]   # (TK, D)

    need_mask = (seq_len % tk) != 0
    if need_mask:
        col = lax.broadcasted_iota(jnp.int32, (q.shape[0], k.shape[0]), 1)
        valid = (kv * tk + col) < seq_len

    for h in range(heads):
        sl = slice(h * dh, (h + 1) * dh)
        qh = (q[:, sl] * scale).astype(jnp.bfloat16)
        kh = k[:, sl].astype(jnp.bfloat16)
        vh = v[:, sl].astype(jnp.bfloat16)
        # contract dh axes directly (no transpose), f32 accumulation on MXU
        s = lax.dot_general(qh, kh, (((1,), (1,)), ((), ())),
                            preferred_element_type=jnp.float32)   # (TQ, TK)
        if need_mask:
            s = jnp.where(valid, s, NEG_INF)
        m_prev = m_ref[:, h:h + 1]
        m_new = jnp.maximum(m_prev, jnp.max(s, axis=-1, keepdims=True))
        alpha = jnp.exp(m_prev - m_new)
        p = jnp.exp(s - m_new)
        l_ref[:, h:h + 1] = alpha * l_ref[:, h:h + 1] + jnp.sum(p, axis=-1, keepdims=True)
        acc_ref[:, sl] = alpha * acc_ref[:, sl] + lax.dot_general(
            p.astype(jnp.bfloat16), vh, (((1,), (0,)), ((), ())),
            preferred_element_type=jnp.float32)
        m_ref[:, h:h + 1] = m_new

    @pl.when(kv == pl.num_programs(2) - 1)
    def _():
        parts = []
        for h in range(heads):
            inv = pl.reciprocal(l_ref[:, h:h + 1], approx=True)
            parts.append(acc_ref[:, h * dh:(h + 1) * dh] * inv)
        o_ref[0] = jnp.concatenate(parts, axis=-1).astype(o_ref.dtype)


def mha_core(q, k, v, heads):
    """q/k/v: (B, S, D) lane-dense -> softmax(qk^T/sqrt(dh)) v, all heads."""
    B, S, D = q.shape
    dh = D // heads
    scale = 1.0 / (dh ** 0.5)
    tq = S if S <= TS_MAX else TS_MAX
    tk = S if S <= TS_MAX else TS_MAX
    return pl.pallas_call(
        functools.partial(_mha_kernel, heads=heads, scale=scale, seq_len=S, tk=tk),
        out_shape=jax.ShapeDtypeStruct((B, S, D), jnp.float32),
        grid=(B, pl.cdiv(S, tq), pl.cdiv(S, tk)),
        in_specs=[
            pl.BlockSpec((1, tq, D), lambda b, i, j: (b, i, 0)),
            pl.BlockSpec((1, tk, D), lambda b, i, j: (b, j, 0)),
            pl.BlockSpec((1, tk, D), lambda b, i, j: (b, j, 0)),
        ],
        out_specs=pl.BlockSpec((1, tq, D), lambda b, i, j: (b, i, 0)),
        scratch_shapes=[
            pltpu.VMEM((tq, heads), jnp.float32),   # running max m
            pltpu.VMEM((tq, heads), jnp.float32),   # running sum l
            pltpu.VMEM((tq, D), jnp.float32),       # output accumulator
        ],
        compiler_params=pltpu.CompilerParams(
            dimension_semantics=("parallel", "parallel", "arbitrary")),
    )(q, k, v)


# ======================= model building blocks =======================

def transformer_layer(x, p, num_heads):
    """nn.TransformerEncoderLayer, batch_first, post-norm, ReLU, no dropout."""
    qkv = linear(x, p["w_in"], p["b_in"])            # (B, S, 3D)  Pallas, row-tiled
    q, k, v = jnp.split(qkv, 3, axis=-1)             # (B, S, D) each, lane-dense
    attn = mha_core(q, k, v, num_heads)              # (B, S, D)   Pallas, flash
    x = proj_residual_ln(attn, x, p["w_out"], p["b_out"], p["ln1_g"], p["ln1_b"])
    x = ffn_residual_ln(x, p["w_ff1"], p["b_ff1"], p["w_ff2"], p["b_ff2"],
                        p["ln2_g"], p["ln2_b"])
    return x


def patch_embed(x, w, b):
    # K=16 projection is a tiny, MXU-starved matmul -> leave to XLA (perf review)
    B, T, F = x.shape
    T2 = (T // PATCH_TIME) * PATCH_TIME
    F2 = (F // PATCH_FREQ) * PATCH_FREQ
    x = x[:, :T2, :F2].reshape(B, T2 // PATCH_TIME, PATCH_TIME,
                               F2 // PATCH_FREQ, PATCH_FREQ)
    x = x.transpose(0, 1, 3, 2, 4).reshape(B, -1, PATCH_TIME * PATCH_FREQ)
    return jnp.dot(x, w) + b                          # (B, N_patch, D)


def forward(params, mel, art):
    xm = patch_embed(mel, params["mel_w"], params["mel_b"])
    xa = patch_embed(art, params["art_w"], params["art_b"])
    B = xm.shape[0]

    cls_tok = jnp.broadcast_to(params["cls_token"], (B, 1, D_MODEL))
    x = jnp.concatenate([cls_tok, xm, xa], axis=1)
    S = x.shape[1]
    x = x + params["pos_embed"][:, :S, :]

    for p in params["enc_layers"]:
        x = transformer_layer(x, p, NUM_HEADS)

    cls = x[:, 0]          # (B, D)
    tok = x[:, 1:]         # (B, N, D)

    # Segment-level self attention (segment mean is cheap glue, kept in JAX)
    N = tok.shape[1]
    n = N // SEGMENT_SIZE
    seg = tok[:, :n * SEGMENT_SIZE].reshape(B, n, SEGMENT_SIZE, D_MODEL).mean(axis=2)
    for p in params["seg_layers"]:
        seg = transformer_layer(seg, p, SEG_HEADS)
    seg = seg.mean(axis=1)                                 # (B, D)

    feat = jnp.concatenate([cls, seg], axis=-1)            # (B, 2D)

    # Multi-task heads: M=B, N=1/3 -> pure launch overhead in Pallas; use XLA.
    h_bin = jax.nn.relu(jnp.dot(feat, params["bin_w1"]) + params["bin_b1"])
    bin_logit = (jnp.dot(h_bin, params["bin_w2"]) + params["bin_b2"])[..., 0]
    h_mul = jax.nn.relu(jnp.dot(feat, params["mul_w1"]) + params["mul_b1"])
    mul_logit = jnp.dot(h_mul, params["mul_w2"]) + params["mul_b2"]
    return bin_logit, mul_logit


# ======================= deterministic parameter init =======================

def _init_tlayer(key, d, f):
    ks = jax.random.split(key, 4)
    sd = 0.02
    return dict(
        w_in=jax.random.normal(ks[0], (d, 3 * d), jnp.float32) * sd,
        b_in=jnp.zeros((3 * d,), jnp.float32),
        w_out=jax.random.normal(ks[1], (d, d), jnp.float32) * sd,
        b_out=jnp.zeros((d,), jnp.float32),
        ln1_g=jnp.ones((d,), jnp.float32),
        ln1_b=jnp.zeros((d,), jnp.float32),
        w_ff1=jax.random.normal(ks[2], (d, f), jnp.float32) * sd,
        b_ff1=jnp.zeros((f,), jnp.float32),
        w_ff2=jax.random.normal(ks[3], (f, d), jnp.float32) * sd,
        b_ff2=jnp.zeros((d,), jnp.float32),
        ln2_g=jnp.ones((d,), jnp.float32),
        ln2_b=jnp.zeros((d,), jnp.float32),
    )


def init_params(key):
    keys = jax.random.split(key, 12)
    sd = 0.02
    dim_patch = PATCH_TIME * PATCH_FREQ
    h = (2 * D_MODEL) // 2
    params = dict(
        mel_w=jax.random.normal(keys[0], (dim_patch, D_MODEL), jnp.float32) * sd,
        mel_b=jnp.zeros((D_MODEL,), jnp.float32),
        art_w=jax.random.normal(keys[1], (dim_patch, D_MODEL), jnp.float32) * sd,
        art_b=jnp.zeros((D_MODEL,), jnp.float32),
        cls_token=jnp.zeros((1, 1, D_MODEL), jnp.float32),
        pos_embed=jnp.zeros((1, 10000, D_MODEL), jnp.float32),
        enc_layers=[_init_tlayer(k, D_MODEL, DIM_FEEDFORWARD)
                    for k in jax.random.split(keys[2], NUM_LAYERS)],
        seg_layers=[_init_tlayer(k, D_MODEL, SEG_FFN)
                    for k in jax.random.split(keys[3], NUM_SEGMENT_LAYERS)],
        bin_w1=jax.random.normal(keys[4], (2 * D_MODEL, h), jnp.float32) * sd,
        bin_b1=jnp.zeros((h,), jnp.float32),
        bin_w2=jax.random.normal(keys[5], (h, 1), jnp.float32) * sd,
        bin_b2=jnp.zeros((1,), jnp.float32),
        mul_w1=jax.random.normal(keys[6], (2 * D_MODEL, h), jnp.float32) * sd,
        mul_b1=jnp.zeros((h,), jnp.float32),
        mul_w2=jax.random.normal(keys[7], (h, NUM_CLASSES), jnp.float32) * sd,
        mul_b2=jnp.zeros((NUM_CLASSES,), jnp.float32),
    )
    return params


# =============================== main ===============================

if __name__ == "__main__":
    key = jax.random.PRNGKey(0)
    kp, km, ka = jax.random.split(key, 3)
    params = init_params(kp)

    # small spectrogram-like inputs: (B, T, F) = (2, 16, 16)
    mel = jax.random.normal(km, (2, 16, 16), jnp.float32)
    art = jax.random.normal(ka, (2, 16, 16), jnp.float32)

    fwd = jax.jit(forward)
    bin_logit, mul_logit = fwd(params, mel, art)
    jax.block_until_ready((bin_logit, mul_logit))

    assert bin_logit.shape == (2,)
    assert mul_logit.shape == (2, NUM_CLASSES)
    print("KERNEL_OK")
</pallas_src>

<mosaic_0001>
module attributes {stable_mosaic.version = 11 : i64} {
  func.func @_linear_kernel(%arg0: i32, %arg1: memref<66x256xf32, #tpu.memory_space<vmem>>, %arg2: memref<256x768xf32, #tpu.memory_space<vmem>>, %arg3: memref<1x768xf32, #tpu.memory_space<vmem>>, %arg4: memref<66x768xf32, #tpu.memory_space<vmem>>) attributes {dimension_semantics = [#tpu.dimension_semantics<parallel>], iteration_bounds = array<i64: 1>, scalar_prefetch = 0 : i64, scratch_operands = 0 : i64, tpu.core_type = #tpu.core_type<tc>, window_params = [{transform_indices = @transform_0, window_bounds = array<i64: 66, 256>}, {pipeline_mode = #tpu.pipeline_mode<synchronous>, transform_indices = @transform_1, window_bounds = array<i64: 256, 768>}, {pipeline_mode = #tpu.pipeline_mode<synchronous>, transform_indices = @transform_2, window_bounds = array<i64: 1, 768>}, {transform_indices = @transform_3, window_bounds = array<i64: 66, 768>}]} {
    %c0 = arith.constant 0 : index
    %c0_0 = arith.constant 0 : index
    %0 = vector.load %arg1[%c0, %c0_0] : memref<66x256xf32, #tpu.memory_space<vmem>>, vector<66x256xf32>
    %1 = arith.truncf %0 : vector<66x256xf32> to vector<66x256xbf16>
    %c0_1 = arith.constant 0 : index
    %c0_2 = arith.constant 0 : index
    %2 = vector.load %arg2[%c0_1, %c0_2] : memref<256x768xf32, #tpu.memory_space<vmem>>, vector<256x768xf32>
    %3 = arith.truncf %2 : vector<256x768xf32> to vector<256x768xbf16>
    %cst = arith.constant dense<0.000000e+00> : vector<66x768xf32>
    %4 = tpu.matmul %1, %3, %cst {dimension_numbers = #tpu.dot_dimension_numbers<[1], [0], [0], [1], [0, 0, 1, 1], [], []>} : vector<66x256xbf16>, vector<256x768xbf16>, vector<66x768xf32> -> vector<66x768xf32>
    %c0_3 = arith.constant 0 : index
    %c0_4 = arith.constant 0 : index
    %5 = vector.load %arg3[%c0_3, %c0_4] : memref<1x768xf32, #tpu.memory_space<vmem>>, vector<1x768xf32>
    %6 = vector.broadcast %5 : vector<1x768xf32> to vector<66x768xf32>
    %7 = arith.addf %4, %6 : vector<66x768xf32>
    %c0_5 = arith.constant 0 : index
    %c0_6 = arith.constant 0 : index
    %8 = vector.load %arg4[%c0_5, %c0_6] : memref<66x768xf32, #tpu.memory_space<vmem>>, vector<66x768xf32>
    tpu.vector_store %arg4[%c0_5, %c0_6], %7 {strides = array<i32>} : memref<66x768xf32, #tpu.memory_space<vmem>>, vector<66x768xf32>,
    return
  }
  func.func @transform_0(%arg0: i32) -> (i32, i32) {
    %c0_i32 = arith.constant 0 : i32
    %c0_i32_0 = arith.constant 0 : i32
    return %arg0, %c0_i32 : i32, i32
  }
  func.func @transform_1(%arg0: i32) -> (i32, i32) {
    %c0_i32 = arith.constant 0 : i32
    %c0_i32_0 = arith.constant 0 : i32
    %c0_i32_1 = arith.constant 0 : i32
    return %c0_i32, %c0_i32_0 : i32, i32
  }
  func.func @transform_2(%arg0: i32) -> (i32, i32) {
    %c0_i32 = arith.constant 0 : i32
    %c0_i32_0 = arith.constant 0 : i32
    %c0_i32_1 = arith.constant 0 : i32
    return %c0_i32, %c0_i32_0 : i32, i32
  }
  func.func @transform_3(%arg0: i32) -> (i32, i32) {
    %c0_i32 = arith.constant 0 : i32
    %c0_i32_0 = arith.constant 0 : i32
    return %arg0, %c0_i32 : i32, i32
  }
}

module attributes {stable_mosaic.version = 11 : i64} {
  func.func @_mha_kernel(%arg0: i32, %arg1: i32, %arg2: i32, %arg3: memref<1x33x256xf32, #tpu.memory_space<vmem>>, %arg4: memref<1x33x256xf32, #tpu.memory_space<vmem>>, %arg5: memref<1x33x256xf32, #tpu.memory_space<vmem>>, %arg6: memref<1x33x256xf32, #tpu.memory_space<vmem>>, %arg7: memref<33x4xf32, #tpu.memory_space<vmem>>, %arg8: memref<33x4xf32, #tpu.memory_space<vmem>>, %arg9: memref<33x256xf32, #tpu.memory_space<vmem>>) attributes {dimension_semantics = [#tpu.dimension_semantics<parallel>, #tpu.dimension_semantics<parallel>, #tpu.dimension_semantics<arbitrary>], iteration_bounds = array<i64: 2, 1, 1>, scalar_prefetch = 0 : i64, scratch_operands = 3 : i64, tpu.core_type = #tpu.core_type<tc>, window_params = [{transform_indices = @transform_0, window_bounds = array<i64: 1, 33, 256>}, {transform_indices = @transform_1, window_bounds = array<i64: 1, 33, 256>}, {transform_indices = @transform_2, window_bounds = array<i64: 1, 33, 256>}, {transform_indices = @transform_3, window_bounds = array<i64: 1, 33, 256>}]} {
    %c0_i32 = arith.constant 0 : i32
    %0 = arith.cmpi eq, %arg2, %c0_i32 : i32
    %1 = arith.extui %0 : i1 to i32
    %c0_i32_0 = arith.constant 0 : i32
    %2 = arith.cmpi ne, %1, %c0_i32_0 : i32
    scf.if %2 {
      %cst_72 = arith.constant -1.000000e+30 : f32
      %140 = vector.broadcast %cst_72 : f32 to vector<33x4xf32>
      %c0_73 = arith.constant 0 : index
      %c0_74 = arith.constant 0 : index
      %141 = vector.load %arg7[%c0_73, %c0_74] : memref<33x4xf32, #tpu.memory_space<vmem>>, vector<33x4xf32>
      tpu.vector_store %arg7[%c0_73, %c0_74], %140 {strides = array<i32>} : memref<33x4xf32, #tpu.memory_space<vmem>>, vector<33x4xf32>,
      %cst_75 = arith.constant 0.000000e+00 : f32
      %142 = vector.broadcast %cst_75 : f32 to vector<33x4xf32>
      %c0_76 = arith.constant 0 : index
      %c0_77 = arith.constant 0 : index
      %143 = vector.load %arg8[%c0_76, %c0_77] : memref<33x4xf32, #tpu.memory_space<vmem>>, vector<33x4xf32>
      tpu.vector_store %arg8[%c0_76, %c0_77], %142 {strides = array<i32>} : memref<33x4xf32, #tpu.memory_space<vmem>>, vector<33x4xf32>,
      %cst_78 = arith.constant 0.000000e+00 : f32
      %144 = vector.broadcast %cst_78 : f32 to vector<33x256xf32>
      %c0_79 = arith.constant 0 : index
      %c0_80 = arith.constant 0 : index
      %145 = vector.load %arg9[%c0_79, %c0_80] : memref<33x256xf32, #tpu.memory_space<vmem>>, vector<33x256xf32>
      tpu.vector_store %arg9[%c0_79, %c0_80], %144 {strides = array<i32>} : memref<33x256xf32, #tpu.memory_space<vmem>>, vector<33x256xf32>,
    } else {
    }
    %c0 = arith.constant 0 : index
    %c0_1 = arith.constant 0 : index
    %c0_2 = arith.constant 0 : index
    %3 = vector.load %arg3[%c0, %c0_1, %c0_2] : memref<1x33x256xf32, #tpu.memory_space<vmem>>, vector<1x33x256xf32>
    %4 = vector.shape_cast %3 : vector<1x33x256xf32> to vector<33x256xf32>
    %c0_3 = arith.constant 0 : index
    %c0_4 = arith.constant 0 : index
    %c0_5 = arith.constant 0 : index
    %5 = vector.load %arg4[%c0_3, %c0_4, %c0_5] : memref<1x33x256xf32, #tpu.memory_space<vmem>>, vector<1x33x256xf32>
    %6 = vector.shape_cast %5 : vector<1x33x256xf32> to vector<33x256xf32>
    %c0_6 = arith.constant 0 : index
    %c0_7 = arith.constant 0 : index
    %c0_8 = arith.constant 0 : index
    %7 = vector.load %arg5[%c0_6, %c0_7, %c0_8] : memref<1x33x256xf32, #tpu.memory_space<vmem>>, vector<1x33x256xf32>
    %8 = vector.shape_cast %7 : vector<1x33x256xf32> to vector<33x256xf32>
    %9 = vector.extract_strided_slice %4 {offsets = [0, 0], sizes = [33, 64], strides = [1, 1]} : vector<33x256xf32> to vector<33x64xf32>
    %cst = arith.constant 1.250000e-01 : f32
    %10 = vector.broadcast %cst : f32 to vector<33x64xf32>
    %11 = arith.mulf %9, %10 : vector<33x64xf32>
    %12 = arith.truncf %11 : vector<33x64xf32> to vector<33x64xbf16>
    %13 = vector.extract_strided_slice %6 {offsets = [0, 0], sizes = [33, 64], strides = [1, 1]} : vector<33x256xf32> to vector<33x64xf32>
    %14 = arith.truncf %13 : vector<33x64xf32> to vector<33x64xbf16>
    %15 = vector.extract_strided_slice %8 {offsets = [0, 0], sizes = [33, 64], strides = [1, 1]} : vector<33x256xf32> to vector<33x64xf32>
    %16 = arith.truncf %15 : vector<33x64xf32> to vector<33x64xbf16>
    %cst_9 = arith.constant dense<0.000000e+00> : vector<33x33xf32>
    %17 = tpu.matmul %12, %14, %cst_9 {dimension_numbers = #tpu.dot_dimension_numbers<[1], [1], [0], [0], [0, 0, 1, 0], [], []>} : vector<33x64xbf16>, vector<33x64xbf16>, vector<33x33xf32> -> vector<33x33xf32>
    %c0_10 = arith.constant 0 : index
    %c0_11 = arith.constant 0 : index
    %18 = vector.load %arg7[%c0_10, %c0_11] : memref<33x4xf32, #tpu.memory_space<vmem>>, vector<33x1xf32>
    %cst_12 = arith.constant dense<0xFF800000> : vector<33xf32>
    %19 = vector.multi_reduction <maximumf>, %17, %cst_12 [1] : vector<33x33xf32> to vector<33xf32>
    %20 = vector.shape_cast %19 : vector<33xf32> to vector<33x1xf32>
    %21 = arith.maximumf %18, %20 : vector<33x1xf32>
    %22 = arith.subf %18, %21 : vector<33x1xf32>
    %23 = math.exp %22 : vector<33x1xf32>
    %24 = vector.broadcast %21 : vector<33x1xf32> to vector<33x33xf32>
    %25 = arith.subf %17, %24 : vector<33x33xf32>
    %26 = math.exp %25 : vector<33x33xf32>
    %c0_13 = arith.constant 0 : index
    %c0_14 = arith.constant 0 : index
    %27 = vector.load %arg8[%c0_13, %c0_14] : memref<33x4xf32, #tpu.memory_space<vmem>>, vector<33x1xf32>
    %28 = arith.mulf %23, %27 : vector<33x1xf32>
    %cst_15 = arith.constant dense<0.000000e+00> : vector<33xf32>
    %29 = vector.multi_reduction <add>, %26, %cst_15 [1] : vector<33x33xf32> to vector<33xf32>
    %30 = vector.shape_cast %29 : vector<33xf32> to vector<33x1xf32>
    %31 = arith.addf %28, %30 : vector<33x1xf32>
    %c0_16 = arith.constant 0 : index
    %c0_17 = arith.constant 0 : index
    %32 = vector.load %arg8[%c0_16, %c0_17] : memref<33x4xf32, #tpu.memory_space<vmem>>, vector<33x1xf32>
    tpu.vector_store %arg8[%c0_16, %c0_17], %31 {strides = array<i32>} : memref<33x4xf32, #tpu.memory_space<vmem>>, vector<33x1xf32>,
    %c0_18 = arith.constant 0 : index
    %c0_19 = arith.constant 0 : index
    %33 = vector.load %arg9[%c0_18, %c0_19] : memref<33x256xf32, #tpu.memory_space<vmem>>, vector<33x64xf32>
    %34 = vector.broadcast %23 : vector<33x1xf32> to vector<33x64xf32>
    %35 = arith.mulf %34, %33 : vector<33x64xf32>
    %36 = arith.truncf %26 : vector<33x33xf32> to vector<33x33xbf16>
    %cst_20 = arith.constant dense<0.000000e+00> : vector<33x64xf32>
    %37 = tpu.matmul %36, %16, %cst_20 {dimension_numbers = #tpu.dot_dimension_numbers<[1], [0], [0], [1], [0, 0, 1, 1], [], []>} : vector<33x33xbf16>, vector<33x64xbf16>, vector<33x64xf32> -> vector<33x64xf32>
    %38 = arith.addf %35, %37 : vector<33x64xf32>
    %c0_21 = arith.constant 0 : index
    %c0_22 = arith.constant 0 : index
    %39 = vector.load %arg9[%c0_21, %c0_22] : memref<33x256xf32, #tpu.memory_space<vmem>>, vector<33x64xf32>
    tpu.vector_store %arg9[%c0_21, %c0_22], %38 {strides = array<i32>} : memref<33x256xf32, #tpu.memory_space<vmem>>, vector<33x64xf32>,
    %c0_23 = arith.constant 0 : index
    %c0_24 = arith.constant 0 : index
    %40 = vector.load %arg7[%c0_23, %c0_24] : memref<33x4xf32, #tpu.memory_space<vmem>>, vector<33x1xf32>
    tpu.vector_store %arg7[%c0_23, %c0_24], %21 {strides = array<i32>} : memref<33x4xf32, #tpu.memory_space<vmem>>, vector<33x1xf32>,
    %41 = vector.extract_strided_slice %4 {offsets = [0, 64], sizes = [33, 64], strides = [1, 1]} : vector<33x256xf32> to vector<33x64xf32>
    %cst_25 = arith.constant 1.250000e-01 : f32
    %42 = vector.broadcast %cst_25 : f32 to vector<33x64xf32>
    %43 = arith.mulf %41, %42 : vector<33x64xf32>
    %44 = arith.truncf %43 : vector<33x64xf32> to vector<33x64xbf16>
    %45 = vector.extract_strided_slice %6 {offsets = [0, 64], sizes = [33, 64], strides = [1, 1]} : vector<33x256xf32> to vector<33x64xf32>
    %46 = arith.truncf %45 : vector<33x64xf32> to vector<33x64xbf16>
    %47 = vector.extract_strided_slice %8 {offsets = [0, 64], sizes = [33, 64], strides = [1, 1]} : vector<33x256xf32> to vector<33x64xf32>
    %48 = arith.truncf %47 : vector<33x64xf32> to vector<33x64xbf16>
    %cst_26 = arith.constant dense<0.000000e+00> : vector<33x33xf32>
    %49 = tpu.matmul %44, %46, %cst_26 {dimension_numbers = #tpu.dot_dimension_numbers<[1], [1], [0], [0], [0, 0, 1, 0], [], []>} : vector<33x64xbf16>, vector<33x64xbf16>, vector<33x33xf32> -> vector<33x33xf32>
    %c0_27 = arith.constant 0 : index
    %c1 = arith.constant 1 : index
    %50 = vector.load %arg7[%c0_27, %c1] : memref<33x4xf32, #tpu.memory_space<vmem>>, vector<33x1xf32>
    %cst_28 = arith.constant dense<0xFF800000> : vector<33xf32>
    %51 = vector.multi_reduction <maximumf>, %49, %cst_28 [1] : vector<33x33xf32> to vector<33xf32>
    %52 = vector.shape_cast %51 : vector<33xf32> to vector<33x1xf32>
    %53 = arith.maximumf %50, %52 : vector<33x1xf32>
    %54 = arith.subf %50, %53 : vector<33x1xf32>
    %55 = math.exp %54 : vector<33x1xf32>
    %56 = vector.broadcast %53 : vector<33x1xf32> to vector<33x33xf32>
    %57 = arith.subf %49, %56 : vector<33x33xf32>
    %58 = math.exp %57 : vector<33x33xf32>
    %c0_29 = arith.constant 0 : index
    %c1_30 = arith.constant 1 : index
    %59 = vector.load %arg8[%c0_29, %c1_30] : memref<33x4xf32, #tpu.memory_space<vmem>>, vector<33x1xf32>
    %60 = arith.mulf %55, %59 : vector<33x1xf32>
    %cst_31 = arith.constant dense<0.000000e+00> : vector<33xf32>
    %61 = vector.multi_reduction <add>, %58, %cst_31 [1] : vector<33x33xf32> to vector<33xf32>
    %62 = vector.shape_cast %61 : vector<33xf32> to vector<33x1xf32>
    %63 = arith.addf %60, %62 : vector<33x1xf32>
    %c0_32 = arith.constant 0 : index
    %c1_33 = arith.constant 1 : index
    %64 = vector.load %arg8[%c0_32, %c1_33] : memref<33x4xf32, #tpu.memory_space<vmem>>, vector<33x1xf32>
    tpu.vector_store %arg8[%c0_32, %c1_33], %63 {strides = array<i32>} : memref<33x4xf32, #tpu.memory_space<vmem>>, vector<33x1xf32>,
    %c0_34 = arith.constant 0 : index
    %c64 = arith.constant 64 : index
    %65 = vector.load %arg9[%c0_34, %c64] : memref<33x256xf32, #tpu.memory_space<vmem>>, vector<33x64xf32>
    %66 = vector.broadcast %55 : vector<33x1xf32> to vector<33x64xf32>
    %67 = arith.mulf %66, %65 : vector<33x64xf32>
    %68 = arith.truncf %58 : vector<33x33xf32> to vector<33x33xbf16>
    %cst_35 = arith.constant dense<0.000000e+00> : vector<33x64xf32>
    %69 = tpu.matmul %68, %48, %cst_35 {dimension_numbers = #tpu.dot_dimension_numbers<[1], [0], [0], [1], [0, 0, 1, 1], [], []>} : vector<33x33xbf16>, vector<33x64xbf16>, vector<33x64xf32> -> vector<33x64xf32>
    %70 = arith.addf %67, %69 : vector<33x64xf32>
    %c0_36 = arith.constant 0 : index
    %c64_37 = arith.constant 64 : index
    %71 = vector.load %arg9[%c0_36, %c64_37] : memref<33x256xf32, #tpu.memory_space<vmem>>, vector<33x64xf32>
    tpu.vector_store %arg9[%c0_36, %c64_37], %70 {strides = array<i32>} : memref<33x256xf32, #tpu.memory_space<vmem>>, vector<33x64xf32>,
    %c0_38 = arith.constant 0 : index
    %c1_39 = arith.constant 1 : index
    %72 = vector.load %arg7[%c0_38, %c1_39] : memref<33x4xf32, #tpu.memory_space<vmem>>, vector<33x1xf32>
    tpu.vector_store %arg7[%c0_38, %c1_39], %53 {strides = array<i32>} : memref<33x4xf32, #tpu.memory_space<vmem>>, vector<33x1xf32>,
    %73 = vector.extract_strided_slice %4 {offsets = [0, 128], sizes = [33, 64], strides = [1, 1]} : vector<33x256xf32> to vector<33x64xf32>
    %cst_40 = arith.constant 1.250000e-01 : f32
    %74 = vector.broadcast %cst_40 : f32 to vector<33x64xf32>
    %75 = arith.mulf %73, %74 : vector<33x64xf32>
    %76 = arith.truncf %75 : vector<33x64xf32> to vector<33x64xbf16>
    %77 = vector.extract_strided_slice %6 {offsets = [0, 128], sizes = [33, 64], strides = [1, 1]} : vector<33x256xf32> to vector<33x64xf32>
    %78 = arith.truncf %77 : vector<33x64xf32> to vector<33x64xbf16>
    %79 = vector.extract_strided_slice %8 {offsets = [0, 128], sizes = [33, 64], strides = [1, 1]} : vector<33x256xf32> to vector<33x64xf32>
    %80 = arith.truncf %79 : vector<33x64xf32> to vector<33x64xbf16>
    %cst_41 = arith.constant dense<0.000000e+00> : vector<33x33xf32>
    %81 = tpu.matmul %76, %78, %cst_41 {dimension_numbers = #tpu.dot_dimension_numbers<[1], [1], [0], [0], [0, 0, 1, 0], [], []>} : vector<33x64xbf16>, vector<33x64xbf16>, vector<33x33xf32> -> vector<33x33xf32>
    %c0_42 = arith.constant 0 : index
    %c2 = arith.constant 2 : index
    %82 = vector.load %arg7[%c0_42, %c2] : memref<33x4xf32, #tpu.memory_space<vmem>>, vector<33x1xf32>
    %cst_43 = arith.constant dense<0xFF800000> : vector<33xf32>
    %83 = vector.multi_reduction <maximumf>, %81, %cst_43 [1] : vector<33x33xf32> to vector<33xf32>
    %84 = vector.shape_cast %83 : vector<33xf32> to vector<33x1xf32>
    %85 = arith.maximumf %82, %84 : vector<33x1xf32>
    %86 = arith.subf %82, %85 : vector<33x1xf32>
    %87 = math.exp %86 : vector<33x1xf32>
    %88 = vector.broadcast %85 : vector<33x1xf32> to vector<33x33xf32>
    %89 = arith.subf %81, %88 : vector<33x33xf32>
    %90 = math.exp %89 : vector<33x33xf32>
    %c0_44 = arith.constant 0 : index
    %c2_45 = arith.constant 2 : index
    %91 = vector.load %arg8[%c0_44, %c2_45] : memref<33x4xf32, #tpu.memory_space<vmem>>, vector<33x1xf32>
    %92 = arith.mulf %87, %91 : vector<33x1xf32>
    %cst_46 = arith.constant dense<0.000000e+00> : vector<33xf32>
    %93 = vector.multi_reduction <add>, %90, %cst_46 [1] : vector<33x33xf32> to vector<33xf32>
    %94 = vector.shape_cast %93 : vector<33xf32> to vector<33x1xf32>
    %95 = arith.addf %92, %94 : vector<33x1xf32>
    %c0_47 = arith.constant 0 : index
    %c2_48 = arith.constant 2 : index
    %96 = vector.load %arg8[%c0_47, %c2_48] : memref<33x4xf32, #tpu.memory_space<vmem>>, vector<33x1xf32>
    tpu.vector_store %arg8[%c0_47, %c2_48], %95 {strides = array<i32>} : memref<33x4xf32, #tpu.memory_space<vmem>>, vector<33x1xf32>,
    %c0_49 = arith.constant 0 : index
    %c128 = arith.constant 128 : index
    %97 = vector.load %arg9[%c0_49, %c128] : memref<33x256xf32, #tpu.memory_space<vmem>>, vector<33x64xf32>
    %98 = vector.broadcast %87 : vector<33x1xf32> to vector<33x64xf32>
    %99 = arith.mulf %98, %97 : vector<33x64xf32>
    %100 = arith.truncf %90 : vector<33x33xf32> to vector<33x33xbf16>
    %cst_50 = arith.constant dense<0.000000e+00> : vector<33x64xf32>
    %101 = tpu.matmul %100, %80, %cst_50 {dimension_numbers = #tpu.dot_dimension_numbers<[1], [0], [0], [1], [0, 0, 1, 1], [], []>} : vector<33x33xbf16>, vector<33x64xbf16>, vector<33x64xf32> -> vector<33x64xf32>
    %102 = arith.addf %99, %101 : vector<33x64xf32>
    %c0_51 = arith.constant 0 : index
    %c128_52 = arith.constant 128 : index
    %103 = vector.load %arg9[%c0_51, %c128_52] : memref<33x256xf32, #tpu.memory_space<vmem>>, vector<33x64xf32>
    tpu.vector_store %arg9[%c0_51, %c128_52], %102 {strides = array<i32>} : memref<33x256xf32, #tpu.memory_space<vmem>>, vector<33x64xf32>,
    %c0_53 = arith.constant 0 : index
    %c2_54 = arith.constant 2 : index
    %104 = vector.load %arg7[%c0_53, %c2_54] : memref<33x4xf32, #tpu.memory_space<vmem>>, vector<33x1xf32>
    tpu.vector_store %arg7[%c0_53, %c2_54], %85 {strides = array<i32>} : memref<33x4xf32, #tpu.memory_space<vmem>>, vector<33x1xf32>,
    %105 = vector.extract_strided_slice %4 {offsets = [0, 192], sizes = [33, 64], strides = [1, 1]} : vector<33x256xf32> to vector<33x64xf32>
    %cst_55 = arith.constant 1.250000e-01 : f32
    %106 = vector.broadcast %cst_55 : f32 to vector<33x64xf32>
    %107 = arith.mulf %105, %106 : vector<33x64xf32>
    %108 = arith.truncf %107 : vector<33x64xf32> to vector<33x64xbf16>
    %109 = vector.extract_strided_slice %6 {offsets = [0, 192], sizes = [33, 64], strides = [1, 1]} : vector<33x256xf32> to vector<33x64xf32>
    %110 = arith.truncf %109 : vector<33x64xf32> to vector<33x64xbf16>
    %111 = vector.extract_strided_slice %8 {offsets = [0, 192], sizes = [33, 64], strides = [1, 1]} : vector<33x256xf32> to vector<33x64xf32>
    %112 = arith.truncf %111 : vector<33x64xf32> to vector<33x64xbf16>
    %cst_56 = arith.constant dense<0.000000e+00> : vector<33x33xf32>
    %113 = tpu.matmul %108, %110, %cst_56 {dimension_numbers = #tpu.dot_dimension_numbers<[1], [1], [0], [0], [0, 0, 1, 0], [], []>} : vector<33x64xbf16>, vector<33x64xbf16>, vector<33x33xf32> -> vector<33x33xf32>
    %c0_57 = arith.constant 0 : index
    %c3 = arith.constant 3 : index
    %114 = vector.load %arg7[%c0_57, %c3] : memref<33x4xf32, #tpu.memory_space<vmem>>, vector<33x1xf32>
    %cst_58 = arith.constant dense<0xFF800000> : vector<33xf32>
    %115 = vector.multi_reduction <maximumf>, %113, %cst_58 [1] : vector<33x33xf32> to vector<33xf32>
    %116 = vector.shape_cast %115 : vector<33xf32> to vector<33x1xf32>
    %117 = arith.maximumf %114, %116 : vector<33x1xf32>
    %118 = arith.subf %114, %117 : vector<33x1xf32>
    %119 = math.exp %118 : vector<33x1xf32>
    %120 = vector.broadcast %117 : vector<33x1xf32> to vector<33x33xf32>
    %121 = arith.subf %113, %120 : vector<33x33xf32>
    %122 = math.exp %121 : vector<33x33xf32>
    %c0_59 = arith.constant 0 : index
    %c3_60 = arith.constant 3 : index
    %123 = vector.load %arg8[%c0_59, %c3_60] : memref<33x4xf32, #tpu.memory_space<vmem>>, vector<33x1xf32>
    %124 = arith.mulf %119, %123 : vector<33x1xf32>
    %cst_61 = arith.constant dense<0.000000e+00> : vector<33xf32>
    %125 = vector.multi_reduction <add>, %122, %cst_61 [1] : vector<33x33xf32> to vector<33xf32>
    %126 = vector.shape_cast %125 : vector<33xf32> to vector<33x1xf32>
    %127 = arith.addf %124, %126 : vector<33x1xf32>
    %c0_62 = arith.constant 0 : index
    %c3_63 = arith.constant 3 : index
    %128 = vector.load %arg8[%c0_62, %c3_63] : memref<33x4xf32, #tpu.memory_space<vmem>>, vector<33x1xf32>
    tpu.vector_store %arg8[%c0_62, %c3_63], %127 {strides = array<i32>} : memref<33x4xf32, #tpu.memory_space<vmem>>, vector<33x1xf32>,
    %c0_64 = arith.constant 0 : index
    %c192 = arith.constant 192 : index
    %129 = vector.load %arg9[%c0_64, %c192] : memref<33x256xf32, #tpu.memory_space<vmem>>, vector<33x64xf32>
    %130 = vector.broadcast %119 : vector<33x1xf32> to vector<33x64xf32>
    %131 = arith.mulf %130, %129 : vector<33x64xf32>
    %132 = arith.truncf %122 : vector<33x33xf32> to vector<33x33xbf16>
    %cst_65 = arith.constant dense<0.000000e+00> : vector<33x64xf32>
    %133 = tpu.matmul %132, %112, %cst_65 {dimension_numbers = #tpu.dot_dimension_numbers<[1], [0], [0], [1], [0, 0, 1, 1], [], []>} : vector<33x33xbf16>, vector<33x64xbf16>, vector<33x64xf32> -> vector<33x64xf32>
    %134 = arith.addf %131, %133 : vector<33x64xf32>
    %c0_66 = arith.constant 0 : index
    %c192_67 = arith.constant 192 : index
    %135 = vector.load %arg9[%c0_66, %c192_67] : memref<33x256xf32, #tpu.memory_space<vmem>>, vector<33x64xf32>
    tpu.vector_store %arg9[%c0_66, %c192_67], %134 {strides = array<i32>} : memref<33x256xf32, #tpu.memory_space<vmem>>, vector<33x64xf32>,
    %c0_68 = arith.constant 0 : index
    %c3_69 = arith.constant 3 : index
    %136 = vector.load %arg7[%c0_68, %c3_69] : memref<33x4xf32, #tpu.memory_space<vmem>>, vector<33x1xf32>
    tpu.vector_store %arg7[%c0_68, %c3_69], %117 {strides = array<i32>} : memref<33x4xf32, #tpu.memory_space<vmem>>, vector<33x1xf32>,
    %c0_i32_70 = arith.constant 0 : i32
    %137 = arith.cmpi eq, %arg2, %c0_i32_70 : i32
    %138 = arith.extui %137 : i1 to i32
    %c0_i32_71 = arith.constant 0 : i32
    %139 = arith.cmpi ne, %138, %c0_i32_71 : i32
    scf.if %139 {
      %c0_72 = arith.constant 0 : index
      %c0_73 = arith.constant 0 : index
      %140 = vector.load %arg8[%c0_72, %c0_73] : memref<33x4xf32, #tpu.memory_space<vmem>>, vector<33x1xf32>
      %141 = tpu.reciprocal %140 {approx = true} : vector<33x1xf32> -> vector<33x1xf32>
      %c0_74 = arith.constant 0 : index
      %c0_75 = arith.constant 0 : index
      %142 = vector.load %arg9[%c0_74, %c0_75] : memref<33x256xf32, #tpu.memory_space<vmem>>, vector<33x64xf32>
      %143 = vector.broadcast %141 : vector<33x1xf32> to vector<33x64xf32>
      %144 = arith.mulf %142, %143 : vector<33x64xf32>
      %c0_76 = arith.constant 0 : index
      %c1_77 = arith.constant 1 : index
      %145 = vector.load %arg8[%c0_76, %c1_77] : memref<33x4xf32, #tpu.memory_space<vmem>>, vector<33x1xf32>
      %146 = tpu.reciprocal %145 {approx = true} : vector<33x1xf32> -> vector<33x1xf32>
      %c0_78 = arith.constant 0 : index
      %c64_79 = arith.constant 64 : index
      %147 = vector.load %arg9[%c0_78, %c64_79] : memref<33x256xf32, #tpu.memory_space<vmem>>, vector<33x64xf32>
      %148 = vector.broadcast %146 : vector<33x1xf32> to vector<33x64xf32>
      %149 = arith.mulf %147, %148 : vector<33x64xf32>
      %c0_80 = arith.constant 0 : index
      %c2_81 = arith.constant 2 : index
      %150 = vector.load %arg8[%c0_80, %c2_81] : memref<33x4xf32, #tpu.memory_space<vmem>>, vector<33x1xf32>
      %151 = tpu.reciprocal %150 {approx = true} : vector<33x1xf32> -> vector<33x1xf32>
      %c0_82 = arith.constant 0 : index
      %c128_83 = arith.constant 128 : index
      %152 = vector.load %arg9[%c0_82, %c128_83] : memref<33x256xf32, #tpu.memory_space<vmem>>, vector<33x64xf32>
      %153 = vector.broadcast %151 : vector<33x1xf32> to vector<33x64xf32>
      %154 = arith.mulf %152, %153 : vector<33x64xf32>
      %c0_84 = arith.constant 0 : index
      %c3_85 = arith.constant 3 : index
      %155 = vector.load %arg8[%c0_84, %c3_85] : memref<33x4xf32, #tpu.memory_space<vmem>>, vector<33x1xf32>
      %156 = tpu.reciprocal %155 {approx = true} : vector<33x1xf32> -> vector<33x1xf32>
      %c0_86 = arith.constant 0 : index
      %c192_87 = arith.constant 192 : index
      %157 = vector.load %arg9[%c0_86, %c192_87] : memref<33x256xf32, #tpu.memory_space<vmem>>, vector<33x64xf32>
      %158 = vector.broadcast %156 : vector<33x1xf32> to vector<33x64xf32>
      %159 = arith.mulf %157, %158 : vector<33x64xf32>
      %160 = tpu.concatenate %144, %149, %154, %159 in 1 : vector<33x64xf32>, vector<33x64xf32>, vector<33x64xf32>, vector<33x64xf32> -> vector<33x256xf32>
      %c0_88 = arith.constant 0 : index
      %c0_89 = arith.constant 0 : index
      %c0_90 = arith.constant 0 : index
      %161 = vector.load %arg6[%c0_88, %c0_89, %c0_90] : memref<1x33x256xf32, #tpu.memory_space<vmem>>, vector<1x33x256xf32>
      %162 = vector.shape_cast %161 : vector<1x33x256xf32> to vector<33x256xf32>
      %163 = vector.shape_cast %160 : vector<33x256xf32> to vector<1x33x256xf32>
      tpu.vector_store %arg6[%c0_88, %c0_89, %c0_90], %163 {strides = array<i32>} : memref<1x33x256xf32, #tpu.memory_space<vmem>>, vector<1x33x256xf32>,
    } else {
    }
    return
  }
  func.func @transform_0(%arg0: i32, %arg1: i32, %arg2: i32) -> (i32, i32, i32) {
    %c0_i32 = arith.constant 0 : i32
    %c0_i32_0 = arith.constant 0 : i32
    return %arg0, %arg1, %c0_i32 : i32, i32, i32
  }
  func.func @transform_1(%arg0: i32, %arg1: i32, %arg2: i32) -> (i32, i32, i32) {
    %c0_i32 = arith.constant 0 : i32
    %c0_i32_0 = arith.constant 0 : i32
    return %arg0, %arg2, %c0_i32 : i32, i32, i32
  }
  func.func @transform_2(%arg0: i32, %arg1: i32, %arg2: i32) -> (i32, i32, i32) {
    %c0_i32 = arith.constant 0 : i32
    %c0_i32_0 = arith.constant 0 : i32
    return %arg0, %arg2, %c0_i32 : i32, i32, i32
  }
  func.func @transform_3(%arg0: i32, %arg1: i32, %arg2: i32) -> (i32, i32, i32) {
    %c0_i32 = arith.constant 0 : i32
    %c0_i32_0 = arith.constant 0 : i32
    return %arg0, %arg1, %c0_i32 : i32, i32, i32
  }
}

module attributes {stable_mosaic.version = 11 : i64} {
  func.func @_proj_res_ln_kernel(%arg0: i32, %arg1: memref<66x256xf32, #tpu.memory_space<vmem>>, %arg2: memref<66x256xf32, #tpu.memory_space<vmem>>, %arg3: memref<256x256xf32, #tpu.memory_space<vmem>>, %arg4: memref<1x256xf32, #tpu.memory_space<vmem>>, %arg5: memref<1x256xf32, #tpu.memory_space<vmem>>, %arg6: memref<1x256xf32, #tpu.memory_space<vmem>>, %arg7: memref<66x256xf32, #tpu.memory_space<vmem>>) attributes {dimension_semantics = [#tpu.dimension_semantics<parallel>], iteration_bounds = array<i64: 1>, scalar_prefetch = 0 : i64, scratch_operands = 0 : i64, tpu.core_type = #tpu.core_type<tc>, window_params = [{transform_indices = @transform_0, window_bounds = array<i64: 66, 256>}, {transform_indices = @transform_1, window_bounds = array<i64: 66, 256>}, {pipeline_mode = #tpu.pipeline_mode<synchronous>, transform_indices = @transform_2, window_bounds = array<i64: 256, 256>}, {pipeline_mode = #tpu.pipeline_mode<synchronous>, transform_indices = @transform_3, window_bounds = array<i64: 1, 256>}, {pipeline_mode = #tpu.pipeline_mode<synchronous>, transform_indices = @transform_4, window_bounds = array<i64: 1, 256>}, {pipeline_mode = #tpu.pipeline_mode<synchronous>, transform_indices = @transform_5, window_bounds = array<i64: 1, 256>}, {transform_indices = @transform_6, window_bounds = array<i64: 66, 256>}]} {
    %c0 = arith.constant 0 : index
    %c0_0 = arith.constant 0 : index
    %0 = vector.load %arg1[%c0, %c0_0] : memref<66x256xf32, #tpu.memory_space<vmem>>, vector<66x256xf32>
    %1 = arith.truncf %0 : vector<66x256xf32> to vector<66x256xbf16>
    %c0_1 = arith.constant 0 : index
    %c0_2 = arith.constant 0 : index
    %2 = vector.load %arg3[%c0_1, %c0_2] : memref<256x256xf32, #tpu.memory_space<vmem>>, vector<256x256xf32>
    %3 = arith.truncf %2 : vector<256x256xf32> to vector<256x256xbf16>
    %cst = arith.constant dense<0.000000e+00> : vector<66x256xf32>
    %4 = tpu.matmul %1, %3, %cst {dimension_numbers = #tpu.dot_dimension_numbers<[1], [0], [0], [1], [0, 0, 1, 1], [], []>} : vector<66x256xbf16>, vector<256x256xbf16>, vector<66x256xf32> -> vector<66x256xf32>
    %c0_3 = arith.constant 0 : index
    %c0_4 = arith.constant 0 : index
    %5 = vector.load %arg4[%c0_3, %c0_4] : memref<1x256xf32, #tpu.memory_space<vmem>>, vector<1x256xf32>
    %6 = vector.broadcast %5 : vector<1x256xf32> to vector<66x256xf32>
    %7 = arith.addf %4, %6 : vector<66x256xf32>
    %c0_5 = arith.constant 0 : index
    %c0_6 = arith.constant 0 : index
    %8 = vector.load %arg2[%c0_5, %c0_6] : memref<66x256xf32, #tpu.memory_space<vmem>>, vector<66x256xf32>
    %9 = arith.addf %7, %8 : vector<66x256xf32>
    %c0_7 = arith.constant 0 : index
    %c0_8 = arith.constant 0 : index
    %10 = vector.load %arg5[%c0_7, %c0_8] : memref<1x256xf32, #tpu.memory_space<vmem>>, vector<1x256xf32>
    %c0_9 = arith.constant 0 : index
    %c0_10 = arith.constant 0 : index
    %11 = vector.load %arg6[%c0_9, %c0_10] : memref<1x256xf32, #tpu.memory_space<vmem>>, vector<1x256xf32>
    %cst_11 = arith.constant dense<0.000000e+00> : vector<66xf32>
    %12 = vector.multi_reduction <add>, %9, %cst_11 [1] : vector<66x256xf32> to vector<66xf32>
    %13 = vector.shape_cast %12 : vector<66xf32> to vector<66x1xf32>
    %cst_12 = arith.constant 2.560000e+02 : f32
    %14 = vector.broadcast %cst_12 : f32 to vector<66x1xf32>
    %15 = arith.divf %13, %14 : vector<66x1xf32>
    %16 = vector.broadcast %15 : vector<66x1xf32> to vector<66x256xf32>
    %17 = arith.subf %9, %16 : vector<66x256xf32>
    %18 = arith.mulf %17, %17 : vector<66x256xf32>
    %cst_13 = arith.constant dense<0.000000e+00> : vector<66xf32>
    %19 = vector.multi_reduction <add>, %18, %cst_13 [1] : vector<66x256xf32> to vector<66xf32>
    %20 = vector.shape_cast %19 : vector<66xf32> to vector<66x1xf32>
    %cst_14 = arith.constant 2.560000e+02 : f32
    %21 = vector.broadcast %cst_14 : f32 to vector<66x1xf32>
    %22 = arith.divf %20, %21 : vector<66x1xf32>
    %cst_15 = arith.constant 9.99999974E-6 : f32
    %23 = vector.broadcast %cst_15 : f32 to vector<66x1xf32>
    %24 = arith.addf %22, %23 : vector<66x1xf32>
    %25 = math.rsqrt %24 : vector<66x1xf32>
    %26 = vector.broadcast %25 : vector<66x1xf32> to vector<66x256xf32>
    %27 = arith.mulf %17, %26 : vector<66x256xf32>
    %28 = vector.broadcast %10 : vector<1x256xf32> to vector<66x256xf32>
    %29 = arith.mulf %27, %28 : vector<66x256xf32>
    %30 = vector.broadcast %11 : vector<1x256xf32> to vector<66x256xf32>
    %31 = arith.addf %29, %30 : vector<66x256xf32>
    %c0_16 = arith.constant 0 : index
    %c0_17 = arith.constant 0 : index
    %32 = vector.load %arg7[%c0_16, %c0_17] : memref<66x256xf32, #tpu.memory_space<vmem>>, vector<66x256xf32>
    tpu.vector_store %arg7[%c0_16, %c0_17], %31 {strides = array<i32>} : memref<66x256xf32, #tpu.memory_space<vmem>>, vector<66x256xf32>,
    return
  }
  func.func @transform_0(%arg0: i32) -> (i32, i32) {
    %c0_i32 = arith.constant 0 : i32
    %c0_i32_0 = arith.constant 0 : i32
    return %arg0, %c0_i32 : i32, i32
  }
  func.func @transform_1(%arg0: i32) -> (i32, i32) {
    %c0_i32 = arith.constant 0 : i32
    %c0_i32_0 = arith.constant 0 : i32
    return %arg0, %c0_i32 : i32, i32
  }
  func.func @transform_2(%arg0: i32) -> (i32, i32) {
    %c0_i32 = arith.constant 0 : i32
    %c0_i32_0 = arith.constant 0 : i32
    %c0_i32_1 = arith.constant 0 : i32
    return %c0_i32, %c0_i32_0 : i32, i32
  }
  func.func @transform_3(%arg0: i32) -> (i32, i32) {
    %c0_i32 = arith.constant 0 : i32
    %c0_i32_0 = arith.constant 0 : i32
    %c0_i32_1 = arith.constant 0 : i32
    return %c0_i32, %c0_i32_0 : i32, i32
  }
  func.func @transform_4(%arg0: i32) -> (i32, i32) {
    %c0_i32 = arith.constant 0 : i32
    %c0_i32_0 = arith.constant 0 : i32
    %c0_i32_1 = arith.constant 0 : i32
    return %c0_i32, %c0_i32_0 : i32, i32
  }
  func.func @transform_5(%arg0: i32) -> (i32, i32) {
    %c0_i32 = arith.constant 0 : i32
    %c0_i32_0 = arith.constant 0 : i32
    %c0_i32_1 = arith.constant 0 : i32
    return %c0_i32, %c0_i32_0 : i32, i32
  }
  func.func @transform_6(%arg0: i32) -> (i32, i32) {
    %c0_i32 = arith.constant 0 : i32
    %c0_i32_0 = arith.constant 0 : i32
    return %arg0, %c0_i32 : i32, i32
  }
}

module attributes {stable_mosaic.version = 11 : i64} {
  func.func @_ffn_res_ln_kernel(%arg0: i32, %arg1: memref<66x256xf32, #tpu.memory_space<vmem>>, %arg2: memref<256x512xf32, #tpu.memory_space<vmem>>, %arg3: memref<1x512xf32, #tpu.memory_space<vmem>>, %arg4: memref<512x256xf32, #tpu.memory_space<vmem>>, %arg5: memref<1x256xf32, #tpu.memory_space<vmem>>, %arg6: memref<1x256xf32, #tpu.memory_space<vmem>>, %arg7: memref<1x256xf32, #tpu.memory_space<vmem>>, %arg8: memref<66x256xf32, #tpu.memory_space<vmem>>) attributes {dimension_semantics = [#tpu.dimension_semantics<parallel>], iteration_bounds = array<i64: 1>, scalar_prefetch = 0 : i64, scratch_operands = 0 : i64, tpu.core_type = #tpu.core_type<tc>, window_params = [{transform_indices = @transform_0, window_bounds = array<i64: 66, 256>}, {pipeline_mode = #tpu.pipeline_mode<synchronous>, transform_indices = @transform_1, window_bounds = array<i64: 256, 512>}, {pipeline_mode = #tpu.pipeline_mode<synchronous>, transform_indices = @transform_2, window_bounds = array<i64: 1, 512>}, {pipeline_mode = #tpu.pipeline_mode<synchronous>, transform_indices = @transform_3, window_bounds = array<i64: 512, 256>}, {pipeline_mode = #tpu.pipeline_mode<synchronous>, transform_indices = @transform_4, window_bounds = array<i64: 1, 256>}, {pipeline_mode = #tpu.pipeline_mode<synchronous>, transform_indices = @transform_5, window_bounds = array<i64: 1, 256>}, {pipeline_mode = #tpu.pipeline_mode<synchronous>, transform_indices = @transform_6, window_bounds = array<i64: 1, 256>}, {transform_indices = @transform_7, window_bounds = array<i64: 66, 256>}]} {
    %c0 = arith.constant 0 : index
    %c0_0 = arith.constant 0 : index
    %0 = vector.load %arg1[%c0, %c0_0] : memref<66x256xf32, #tpu.memory_space<vmem>>, vector<66x256xf32>
    %1 = arith.truncf %0 : vector<66x256xf32> to vector<66x256xbf16>
    %c0_1 = arith.constant 0 : index
    %c0_2 = arith.constant 0 : index
    %2 = vector.load %arg2[%c0_1, %c0_2] : memref<256x512xf32, #tpu.memory_space<vmem>>, vector<256x512xf32>
    %3 = arith.truncf %2 : vector<256x512xf32> to vector<256x512xbf16>
    %cst = arith.constant dense<0.000000e+00> : vector<66x512xf32>
    %4 = tpu.matmul %1, %3, %cst {dimension_numbers = #tpu.dot_dimension_numbers<[1], [0], [0], [1], [0, 0, 1, 1], [], []>} : vector<66x256xbf16>, vector<256x512xbf16>, vector<66x512xf32> -> vector<66x512xf32>
    %c0_3 = arith.constant 0 : index
    %c0_4 = arith.constant 0 : index
    %5 = vector.load %arg3[%c0_3, %c0_4] : memref<1x512xf32, #tpu.memory_space<vmem>>, vector<1x512xf32>
    %6 = vector.broadcast %5 : vector<1x512xf32> to vector<66x512xf32>
    %7 = arith.addf %4, %6 : vector<66x512xf32>
    %cst_5 = arith.constant 0.000000e+00 : f32
    %8 = vector.broadcast %cst_5 : f32 to vector<66x512xf32>
    %9 = arith.maximumf %7, %8 : vector<66x512xf32>
    %10 = arith.truncf %9 : vector<66x512xf32> to vector<66x512xbf16>
    %c0_6 = arith.constant 0 : index
    %c0_7 = arith.constant 0 : index
    %11 = vector.load %arg4[%c0_6, %c0_7] : memref<512x256xf32, #tpu.memory_space<vmem>>, vector<512x256xf32>
    %12 = arith.truncf %11 : vector<512x256xf32> to vector<512x256xbf16>
    %cst_8 = arith.constant dense<0.000000e+00> : vector<66x256xf32>
    %13 = tpu.matmul %10, %12, %cst_8 {dimension_numbers = #tpu.dot_dimension_numbers<[1], [0], [0], [1], [0, 0, 1, 1], [], []>} : vector<66x512xbf16>, vector<512x256xbf16>, vector<66x256xf32> -> vector<66x256xf32>
    %c0_9 = arith.constant 0 : index
    %c0_10 = arith.constant 0 : index
    %14 = vector.load %arg5[%c0_9, %c0_10] : memref<1x256xf32, #tpu.memory_space<vmem>>, vector<1x256xf32>
    %15 = vector.broadcast %14 : vector<1x256xf32> to vector<66x256xf32>
    %16 = arith.addf %13, %15 : vector<66x256xf32>
    %17 = arith.addf %16, %0 : vector<66x256xf32>
    %c0_11 = arith.constant 0 : index
    %c0_12 = arith.constant 0 : index
    %18 = vector.load %arg6[%c0_11, %c0_12] : memref<1x256xf32, #tpu.memory_space<vmem>>, vector<1x256xf32>
    %c0_13 = arith.constant 0 : index
    %c0_14 = arith.constant 0 : index
    %19 = vector.load %arg7[%c0_13, %c0_14] : memref<1x256xf32, #tpu.memory_space<vmem>>, vector<1x256xf32>
    %cst_15 = arith.constant dense<0.000000e+00> : vector<66xf32>
    %20 = vector.multi_reduction <add>, %17, %cst_15 [1] : vector<66x256xf32> to vector<66xf32>
    %21 = vector.shape_cast %20 : vector<66xf32> to vector<66x1xf32>
    %cst_16 = arith.constant 2.560000e+02 : f32
    %22 = vector.broadcast %cst_16 : f32 to vector<66x1xf32>
    %23 = arith.divf %21, %22 : vector<66x1xf32>
    %24 = vector.broadcast %23 : vector<66x1xf32> to vector<66x256xf32>
    %25 = arith.subf %17, %24 : vector<66x256xf32>
    %26 = arith.mulf %25, %25 : vector<66x256xf32>
    %cst_17 = arith.constant dense<0.000000e+00> : vector<66xf32>
    %27 = vector.multi_reduction <add>, %26, %cst_17 [1] : vector<66x256xf32> to vector<66xf32>
    %28 = vector.shape_cast %27 : vector<66xf32> to vector<66x1xf32>
    %cst_18 = arith.constant 2.560000e+02 : f32
    %29 = vector.broadcast %cst_18 : f32 to vector<66x1xf32>
    %30 = arith.divf %28, %29 : vector<66x1xf32>
    %cst_19 = arith.constant 9.99999974E-6 : f32
    %31 = vector.broadcast %cst_19 : f32 to vector<66x1xf32>
    %32 = arith.addf %30, %31 : vector<66x1xf32>
    %33 = math.rsqrt %32 : vector<66x1xf32>
    %34 = vector.broadcast %33 : vector<66x1xf32> to vector<66x256xf32>
    %35 = arith.mulf %25, %34 : vector<66x256xf32>
    %36 = vector.broadcast %18 : vector<1x256xf32> to vector<66x256xf32>
    %37 = arith.mulf %35, %36 : vector<66x256xf32>
    %38 = vector.broadcast %19 : vector<1x256xf32> to vector<66x256xf32>
    %39 = arith.addf %37, %38 : vector<66x256xf32>
    %c0_20 = arith.constant 0 : index
    %c0_21 = arith.constant 0 : index
    %40 = vector.load %arg8[%c0_20, %c0_21] : memref<66x256xf32, #tpu.memory_space<vmem>>, vector<66x256xf32>
    tpu.vector_store %arg8[%c0_20, %c0_21], %39 {strides = array<i32>} : memref<66x256xf32, #tpu.memory_space<vmem>>, vector<66x256xf32>,
    return
  }
  func.func @transform_0(%arg0: i32) -> (i32, i32) {
    %c0_i32 = arith.constant 0 : i32
    %c0_i32_0 = arith.constant 0 : i32
    return %arg0, %c0_i32 : i32, i32
  }
  func.func @transform_1(%arg0: i32) -> (i32, i32) {
    %c0_i32 = arith.constant 0 : i32
    %c0_i32_0 = arith.constant 0 : i32
    %c0_i32_1 = arith.constant 0 : i32
    return %c0_i32, %c0_i32_0 : i32, i32
  }
  func.func @transform_2(%arg0: i32) -> (i32, i32) {
    %c0_i32 = arith.constant 0 : i32
    %c0_i32_0 = arith.constant 0 : i32
    %c0_i32_1 = arith.constant 0 : i32
    return %c0_i32, %c0_i32_0 : i32, i32
  }
  func.func @transform_3(%arg0: i32) -> (i32, i32) {
    %c0_i32 = arith.constant 0 : i32
    %c0_i32_0 = arith.constant 0 : i32
    %c0_i32_1 = arith.constant 0 : i32
    return %c0_i32, %c0_i32_0 : i32, i32
  }
  func.func @transform_4(%arg0: i32) -> (i32, i32) {
    %c0_i32 = arith.constant 0 : i32
    %c0_i32_0 = arith.constant 0 : i32
    %c0_i32_1 = arith.constant 0 : i32
    return %c0_i32, %c0_i32_0 : i32, i32
  }
  func.func @transform_5(%arg0: i32) -> (i32, i32) {
    %c0_i32 = arith.constant 0 : i32
    %c0_i32_0 = arith.constant 0 : i32
    %c0_i32_1 = arith.constant 0 : i32
    return %c0_i32, %c0_i32_0 : i32, i32
  }
  func.func @transform_6(%arg0: i32) -> (i32, i32) {
    %c0_i32 = arith.constant 0 : i32
    %c0_i32_0 = arith.constant 0 : i32
    %c0_i32_1 = arith.constant 0 : i32
    return %c0_i32, %c0_i32_0 : i32, i32
  }
  func.func @transform_7(%arg0: i32) -> (i32, i32) {
    %c0_i32 = arith.constant 0 : i32
    %c0_i32_0 = arith.constant 0 : i32
    return %arg0, %c0_i32 : i32, i32
  }
}

module attributes {stable_mosaic.version = 11 : i64} {
  func.func @_proj_res_ln_kernel(%arg0: i32, %arg1: memref<66x256xf32, #tpu.memory_space<vmem>>, %arg2: memref<66x256xf32, #tpu.memory_space<vmem>>, %arg3: memref<256x256xf32, #tpu.memory_space<vmem>>, %arg4: memref<1x256xf32, #tpu.memory_space<vmem>>, %arg5: memref<1x256xf32, #tpu.memory_space<vmem>>, %arg6: memref<1x256xf32, #tpu.memory_space<vmem>>, %arg7: memref<66x256xf32, #tpu.memory_space<vmem>>) attributes {dimension_semantics = [#tpu.dimension_semantics<parallel>], iteration_bounds = array<i64: 1>, scalar_prefetch = 0 : i64, scratch_operands = 0 : i64, tpu.core_type = #tpu.core_type<tc>, window_params = [{transform_indices = @transform_0, window_bounds = array<i64: 66, 256>}, {transform_indices = @transform_1, window_bounds = array<i64: 66, 256>}, {pipeline_mode = #tpu.pipeline_mode<synchronous>, transform_indices = @transform_2, window_bounds = array<i64: 256, 256>}, {pipeline_mode = #tpu.pipeline_mode<synchronous>, transform_indices = @transform_3, window_bounds = array<i64: 1, 256>}, {pipeline_mode = #tpu.pipeline_mode<synchronous>, transform_indices = @transform_4, window_bounds = array<i64: 1, 256>}, {pipeline_mode = #tpu.pipeline_mode<synchronous>, transform_indices = @transform_5, window_bounds = array<i64: 1, 256>}, {transform_indices = @transform_6, window_bounds = array<i64: 66, 256>}]} {
    %c0 = arith.constant 0 : index
    %c0_0 = arith.constant 0 : index
    %0 = vector.load %arg1[%c0, %c0_0] : memref<66x256xf32, #tpu.memory_space<vmem>>, vector<66x256xf32>
    %1 = arith.truncf %0 : vector<66x256xf32> to vector<66x256xbf16>
    %c0_1 = arith.constant 0 : index
    %c0_2 = arith.constant 0 : index
    %2 = vector.load %arg3[%c0_1, %c0_2] : memref<256x256xf32, #tpu.memory_space<vmem>>, vector<256x256xf32>
    %3 = arith.truncf %2 : vector<256x256xf32> to vector<256x256xbf16>
    %cst = arith.constant dense<0.000000e+00> : vector<66x256xf32>
    %4 = tpu.matmul %1, %3, %cst {dimension_numbers = #tpu.dot_dimension_numbers<[1], [0], [0], [1], [0, 0, 1, 1], [], []>} : vector<66x256xbf16>, vector<256x256xbf16>, vector<66x256xf32> -> vector<66x256xf32>
    %c0_3 = arith.constant 0 : index
    %c0_4 = arith.constant 0 : index
    %5 = vector.load %arg4[%c0_3, %c0_4] : memref<1x256xf32, #tpu.memory_space<vmem>>, vector<1x256xf32>
    %6 = vector.broadcast %5 : vector<1x256xf32> to vector<66x256xf32>
    %7 = arith.addf %4, %6 : vector<66x256xf32>
    %c0_5 = arith.constant 0 : index
    %c0_6 = arith.constant 0 : index
    %8 = vector.load %arg2[%c0_5, %c0_6] : memref<66x256xf32, #tpu.memory_space<vmem>>, vector<66x256xf32>
    %9 = arith.addf %7, %8 : vector<66x256xf32>
    %c0_7 = arith.constant 0 : index
    %c0_8 = arith.constant 0 : index
    %10 = vector.load %arg5[%c0_7, %c0_8] : memref<1x256xf32, #tpu.memory_space<vmem>>, vector<1x256xf32>
    %c0_9 = arith.constant 0 : index
    %c0_10 = arith.constant 0 : index
    %11 = vector.load %arg6[%c0_9, %c0_10] : memref<1x256xf32, #tpu.memory_space<vmem>>, vector<1x256xf32>
    %cst_11 = arith.constant dense<0.000000e+00> : vector<66xf32>
    %12 = vector.multi_reduction <add>, %9, %cst_11 [1] : vector<66x256xf32> to vector<66xf32>
    %13 = vector.shape_cast %12 : vector<66xf32> to vector<66x1xf32>
    %cst_12 = arith.constant 2.560000e+02 : f32
    %14 = vector.broadcast %cst_12 : f32 to vector<66x1xf32>
    %15 = arith.divf %13, %14 : vector<66x1xf32>
    %16 = vector.broadcast %15 : vector<66x1xf32> to vector<66x256xf32>
    %17 = arith.subf %9, %16 : vector<66x256xf32>
    %18 = arith.mulf %17, %17 : vector<66x256xf32>
    %cst_13 = arith.constant dense<0.000000e+00> : vector<66xf32>
    %19 = vector.multi_reduction <add>, %18, %cst_13 [1] : vector<66x256xf32> to vector<66xf32>
    %20 = vector.shape_cast %19 : vector<66xf32> to vector<66x1xf32>
    %cst_14 = arith.constant 2.560000e+02 : f32
    %21 = vector.broadcast %cst_14 : f32 to vector<66x1xf32>
    %22 = arith.divf %20, %21 : vector<66x1xf32>
    %cst_15 = arith.constant 9.99999974E-6 : f32
    %23 = vector.broadcast %cst_15 : f32 to vector<66x1xf32>
    %24 = arith.addf %22, %23 : vector<66x1xf32>
    %25 = math.rsqrt %24 : vector<66x1xf32>
    %26 = vector.broadcast %25 : vector<66x1xf32> to vector<66x256xf32>
    %27 = arith.mulf %17, %26 : vector<66x256xf32>
    %28 = vector.broadcast %10 : vector<1x256xf32> to vector<66x256xf32>
    %29 = arith.mulf %27, %28 : vector<66x256xf32>
    %30 = vector.broadcast %11 : vector<1x256xf32> to vector<66x256xf32>
    %31 = arith.addf %29, %30 : vector<66x256xf32>
    %c0_16 = arith.constant 0 : index
    %c0_17 = arith.constant 0 : index
    %32 = vector.load %arg7[%c0_16, %c0_17] : memref<66x256xf32, #tpu.memory_space<vmem>>, vector<66x256xf32>
    tpu.vector_store %arg7[%c0_16, %c0_17], %31 {strides = array<i32>} : memref<66x256xf32, #tpu.memory_space<vmem>>, vector<66x256xf32>,
    return
  }
  func.func @transform_0(%arg0: i32) -> (i32, i32) {
    %c0_i32 = arith.constant 0 : i32
    %c0_i32_0 = arith.constant 0 : i32
    return %arg0, %c0_i32 : i32, i32
  }
  func.func @transform_1(%arg0: i32) -> (i32, i32) {
    %c0_i32 = arith.constant 0 : i32
    %c0_i32_0 = arith.constant 0 : i32
    return %arg0, %c0_i32 : i32, i32
  }
  func.func @transform_2(%arg0: i32) -> (i32, i32) {
    %c0_i32 = arith.constant 0 : i32
    %c0_i32_0 = arith.constant 0 : i32
    %c0_i32_1 = arith.constant 0 : i32
    return %c0_i32, %c0_i32_0 : i32, i32
  }
  func.func @transform_3(%arg0: i32) -> (i32, i32) {
    %c0_i32 = arith.constant 0 : i32
    %c0_i32_0 = arith.constant 0 : i32
    %c0_i32_1 = arith.constant 0 : i32
    return %c0_i32, %c0_i32_0 : i32, i32
  }
  func.func @transform_4(%arg0: i32) -> (i32, i32) {
    %c0_i32 = arith.constant 0 : i32
    %c0_i32_0 = arith.constant 0 : i32
    %c0_i32_1 = arith.constant 0 : i32
    return %c0_i32, %c0_i32_0 : i32, i32
  }
  func.func @transform_5(%arg0: i32) -> (i32, i32) {
    %c0_i32 = arith.constant 0 : i32
    %c0_i32_0 = arith.constant 0 : i32
    %c0_i32_1 = arith.constant 0 : i32
    return %c0_i32, %c0_i32_0 : i32, i32
  }
  func.func @transform_6(%arg0: i32) -> (i32, i32) {
    %c0_i32 = arith.constant 0 : i32
    %c0_i32_0 = arith.constant 0 : i32
    return %arg0, %c0_i32 : i32, i32
  }
}

module attributes {stable_mosaic.version = 11 : i64} {
  func.func @_ffn_res_ln_kernel(%arg0: i32, %arg1: memref<66x256xf32, #tpu.memory_space<vmem>>, %arg2: memref<256x512xf32, #tpu.memory_space<vmem>>, %arg3: memref<1x512xf32, #tpu.memory_space<vmem>>, %arg4: memref<512x256xf32, #tpu.memory_space<vmem>>, %arg5: memref<1x256xf32, #tpu.memory_space<vmem>>, %arg6: memref<1x256xf32, #tpu.memory_space<vmem>>, %arg7: memref<1x256xf32, #tpu.memory_space<vmem>>, %arg8: memref<66x256xf32, #tpu.memory_space<vmem>>) attributes {dimension_semantics = [#tpu.dimension_semantics<parallel>], iteration_bounds = array<i64: 1>, scalar_prefetch = 0 : i64, scratch_operands = 0 : i64, tpu.core_type = #tpu.core_type<tc>, window_params = [{transform_indices = @transform_0, window_bounds = array<i64: 66, 256>}, {pipeline_mode = #tpu.pipeline_mode<synchronous>, transform_indices = @transform_1, window_bounds = array<i64: 256, 512>}, {pipeline_mode = #tpu.pipeline_mode<synchronous>, transform_indices = @transform_2, window_bounds = array<i64: 1, 512>}, {pipeline_mode = #tpu.pipeline_mode<synchronous>, transform_indices = @transform_3, window_bounds = array<i64: 512, 256>}, {pipeline_mode = #tpu.pipeline_mode<synchronous>, transform_indices = @transform_4, window_bounds = array<i64: 1, 256>}, {pipeline_mode = #tpu.pipeline_mode<synchronous>, transform_indices = @transform_5, window_bounds = array<i64: 1, 256>}, {pipeline_mode = #tpu.pipeline_mode<synchronous>, transform_indices = @transform_6, window_bounds = array<i64: 1, 256>}, {transform_indices = @transform_7, window_bounds = array<i64: 66, 256>}]} {
    %c0 = arith.constant 0 : index
    %c0_0 = arith.constant 0 : index
    %0 = vector.load %arg1[%c0, %c0_0] : memref<66x256xf32, #tpu.memory_space<vmem>>, vector<66x256xf32>
    %1 = arith.truncf %0 : vector<66x256xf32> to vector<66x256xbf16>
    %c0_1 = arith.constant 0 : index
    %c0_2 = arith.constant 0 : index
    %2 = vector.load %arg2[%c0_1, %c0_2] : memref<256x512xf32, #tpu.memory_space<vmem>>, vector<256x512xf32>
    %3 = arith.truncf %2 : vector<256x512xf32> to vector<256x512xbf16>
    %cst = arith.constant dense<0.000000e+00> : vector<66x512xf32>
    %4 = tpu.matmul %1, %3, %cst {dimension_numbers = #tpu.dot_dimension_numbers<[1], [0], [0], [1], [0, 0, 1, 1], [], []>} : vector<66x256xbf16>, vector<256x512xbf16>, vector<66x512xf32> -> vector<66x512xf32>
    %c0_3 = arith.constant 0 : index
    %c0_4 = arith.constant 0 : index
    %5 = vector.load %arg3[%c0_3, %c0_4] : memref<1x512xf32, #tpu.memory_space<vmem>>, vector<1x512xf32>
    %6 = vector.broadcast %5 : vector<1x512xf32> to vector<66x512xf32>
    %7 = arith.addf %4, %6 : vector<66x512xf32>
    %cst_5 = arith.constant 0.000000e+00 : f32
    %8 = vector.broadcast %cst_5 : f32 to vector<66x512xf32>
    %9 = arith.maximumf %7, %8 : vector<66x512xf32>
    %10 = arith.truncf %9 : vector<66x512xf32> to vector<66x512xbf16>
    %c0_6 = arith.constant 0 : index
    %c0_7 = arith.constant 0 : index
    %11 = vector.load %arg4[%c0_6, %c0_7] : memref<512x256xf32, #tpu.memory_space<vmem>>, vector<512x256xf32>
    %12 = arith.truncf %11 : vector<512x256xf32> to vector<512x256xbf16>
    %cst_8 = arith.constant dense<0.000000e+00> : vector<66x256xf32>
    %13 = tpu.matmul %10, %12, %cst_8 {dimension_numbers = #tpu.dot_dimension_numbers<[1], [0], [0], [1], [0, 0, 1, 1], [], []>} : vector<66x512xbf16>, vector<512x256xbf16>, vector<66x256xf32> -> vector<66x256xf32>
    %c0_9 = arith.constant 0 : index
    %c0_10 = arith.constant 0 : index
    %14 = vector.load %arg5[%c0_9, %c0_10] : memref<1x256xf32, #tpu.memory_space<vmem>>, vector<1x256xf32>
    %15 = vector.broadcast %14 : vector<1x256xf32> to vector<66x256xf32>
    %16 = arith.addf %13, %15 : vector<66x256xf32>
    %17 = arith.addf %16, %0 : vector<66x256xf32>
    %c0_11 = arith.constant 0 : index
    %c0_12 = arith.constant 0 : index
    %18 = vector.load %arg6[%c0_11, %c0_12] : memref<1x256xf32, #tpu.memory_space<vmem>>, vector<1x256xf32>
    %c0_13 = arith.constant 0 : index
    %c0_14 = arith.constant 0 : index
    %19 = vector.load %arg7[%c0_13, %c0_14] : memref<1x256xf32, #tpu.memory_space<vmem>>, vector<1x256xf32>
    %cst_15 = arith.constant dense<0.000000e+00> : vector<66xf32>
    %20 = vector.multi_reduction <add>, %17, %cst_15 [1] : vector<66x256xf32> to vector<66xf32>
    %21 = vector.shape_cast %20 : vector<66xf32> to vector<66x1xf32>
    %cst_16 = arith.constant 2.560000e+02 : f32
    %22 = vector.broadcast %cst_16 : f32 to vector<66x1xf32>
    %23 = arith.divf %21, %22 : vector<66x1xf32>
    %24 = vector.broadcast %23 : vector<66x1xf32> to vector<66x256xf32>
    %25 = arith.subf %17, %24 : vector<66x256xf32>
    %26 = arith.mulf %25, %25 : vector<66x256xf32>
    %cst_17 = arith.constant dense<0.000000e+00> : vector<66xf32>
    %27 = vector.multi_reduction <add>, %26, %cst_17 [1] : vector<66x256xf32> to vector<66xf32>
    %28 = vector.shape_cast %27 : vector<66xf32> to vector<66x1xf32>
    %cst_18 = arith.constant 2.560000e+02 : f32
    %29 = vector.broadcast %cst_18 : f32 to vector<66x1xf32>
    %30 = arith.divf %28, %29 : vector<66x1xf32>
    %cst_19 = arith.constant 9.99999974E-6 : f32
    %31 = vector.broadcast %cst_19 : f32 to vector<66x1xf32>
    %32 = arith.addf %30, %31 : vector<66x1xf32>
    %33 = math.rsqrt %32 : vector<66x1xf32>
    %34 = vector.broadcast %33 : vector<66x1xf32> to vector<66x256xf32>
    %35 = arith.mulf %25, %34 : vector<66x256xf32>
    %36 = vector.broadcast %18 : vector<1x256xf32> to vector<66x256xf32>
    %37 = arith.mulf %35, %36 : vector<66x256xf32>
    %38 = vector.broadcast %19 : vector<1x256xf32> to vector<66x256xf32>
    %39 = arith.addf %37, %38 : vector<66x256xf32>
    %c0_20 = arith.constant 0 : index
    %c0_21 = arith.constant 0 : index
    %40 = vector.load %arg8[%c0_20, %c0_21] : memref<66x256xf32, #tpu.memory_space<vmem>>, vector<66x256xf32>
    tpu.vector_store %arg8[%c0_20, %c0_21], %39 {strides = array<i32>} : memref<66x256xf32, #tpu.memory_space<vmem>>, vector<66x256xf32>,
    return
  }
  func.func @transform_0(%arg0: i32) -> (i32, i32) {
    %c0_i32 = arith.constant 0 : i32
    %c0_i32_0 = arith.constant 0 : i32
    return %arg0, %c0_i32 : i32, i32
  }
  func.func @transform_1(%arg0: i32) -> (i32, i32) {
    %c0_i32 = arith.constant 0 : i32
    %c0_i32_0 = arith.constant 0 : i32
    %c0_i32_1 = arith.constant 0 : i32
    return %c0_i32, %c0_i32_0 : i32, i32
  }
  func.func @transform_2(%arg0: i32) -> (i32, i32) {
    %c0_i32 = arith.constant 0 : i32
    %c0_i32_0 = arith.constant 0 : i32
    %c0_i32_1 = arith.constant 0 : i32
    return %c0_i32, %c0_i32_0 : i32, i32
  }
  func.func @transform_3(%arg0: i32) -> (i32, i32) {
    %c0_i32 = arith.constant 0 : i32
    %c0_i32_0 = arith.constant 0 : i32
    %c0_i32_1 = arith.constant 0 : i32
    return %c0_i32, %c0_i32_0 : i32, i32
  }
  func.func @transform_4(%arg0: i32) -> (i32, i32) {
    %c0_i32 = arith.constant 0 : i32
    %c0_i32_0 = arith.constant 0 : i32
    %c0_i32_1 = arith.constant 0 : i32
    return %c0_i32, %c0_i32_0 : i32, i32
  }
  func.func @transform_5(%arg0: i32) -> (i32, i32) {
    %c0_i32 = arith.constant 0 : i32
    %c0_i32_0 = arith.constant 0 : i32
    %c0_i32_1 = arith.constant 0 : i32
    return %c0_i32, %c0_i32_0 : i32, i32
  }
  func.func @transform_6(%arg0: i32) -> (i32, i32) {
    %c0_i32 = arith.constant 0 : i32
    %c0_i32_0 = arith.constant 0 : i32
    %c0_i32_1 = arith.constant 0 : i32
    return %c0_i32, %c0_i32_0 : i32, i32
  }
  func.func @transform_7(%arg0: i32) -> (i32, i32) {
    %c0_i32 = arith.constant 0 : i32
    %c0_i32_0 = arith.constant 0 : i32
    return %arg0, %c0_i32 : i32, i32
  }
}

module attributes {stable_mosaic.version = 11 : i64} {
  func.func @_linear_kernel(%arg0: i32, %arg1: memref<66x256xf32, #tpu.memory_space<vmem>>, %arg2: memref<256x768xf32, #tpu.memory_space<vmem>>, %arg3: memref<1x768xf32, #tpu.memory_space<vmem>>, %arg4: memref<66x768xf32, #tpu.memory_space<vmem>>) attributes {dimension_semantics = [#tpu.dimension_semantics<parallel>], iteration_bounds = array<i64: 1>, scalar_prefetch = 0 : i64, scratch_operands = 0 : i64, tpu.core_type = #tpu.core_type<tc>, window_params = [{transform_indices = @transform_0, window_bounds = array<i64: 66, 256>}, {pipeline_mode = #tpu.pipeline_mode<synchronous>, transform_indices = @transform_1, window_bounds = array<i64: 256, 768>}, {pipeline_mode = #tpu.pipeline_mode<synchronous>, transform_indices = @transform_2, window_bounds = array<i64: 1, 768>}, {transform_indices = @transform_3, window_bounds = array<i64: 66, 768>}]} {
    %c0 = arith.constant 0 : index
    %c0_0 = arith.constant 0 : index
    %0 = vector.load %arg1[%c0, %c0_0] : memref<66x256xf32, #tpu.memory_space<vmem>>, vector<66x256xf32>
    %1 = arith.truncf %0 : vector<66x256xf32> to vector<66x256xbf16>
    %c0_1 = arith.constant 0 : index
    %c0_2 = arith.constant 0 : index
    %2 = vector.load %arg2[%c0_1, %c0_2] : memref<256x768xf32, #tpu.memory_space<vmem>>, vector<256x768xf32>
    %3 = arith.truncf %2 : vector<256x768xf32> to vector<256x768xbf16>
    %cst = arith.constant dense<0.000000e+00> : vector<66x768xf32>
    %4 = tpu.matmul %1, %3, %cst {dimension_numbers = #tpu.dot_dimension_numbers<[1], [0], [0], [1], [0, 0, 1, 1], [], []>} : vector<66x256xbf16>, vector<256x768xbf16>, vector<66x768xf32> -> vector<66x768xf32>
    %c0_3 = arith.constant 0 : index
    %c0_4 = arith.constant 0 : index
    %5 = vector.load %arg3[%c0_3, %c0_4] : memref<1x768xf32, #tpu.memory_space<vmem>>, vector<1x768xf32>
    %6 = vector.broadcast %5 : vector<1x768xf32> to vector<66x768xf32>
    %7 = arith.addf %4, %6 : vector<66x768xf32>
    %c0_5 = arith.constant 0 : index
    %c0_6 = arith.constant 0 : index
    %8 = vector.load %arg4[%c0_5, %c0_6] : memref<66x768xf32, #tpu.memory_space<vmem>>, vector<66x768xf32>
    tpu.vector_store %arg4[%c0_5, %c0_6], %7 {strides = array<i32>} : memref<66x768xf32, #tpu.memory_space<vmem>>, vector<66x768xf32>,
    return
  }
  func.func @transform_0(%arg0: i32) -> (i32, i32) {
    %c0_i32 = arith.constant 0 : i32
    %c0_i32_0 = arith.constant 0 : i32
    return %arg0, %c0_i32 : i32, i32
  }
  func.func @transform_1(%arg0: i32) -> (i32, i32) {
    %c0_i32 = arith.constant 0 : i32
    %c0_i32_0 = arith.constant 0 : i32
    %c0_i32_1 = arith.constant 0 : i32
    return %c0_i32, %c0_i32_0 : i32, i32
  }
  func.func @transform_2(%arg0: i32) -> (i32, i32) {
    %c0_i32 = arith.constant 0 : i32
    %c0_i32_0 = arith.constant 0 : i32
    %c0_i32_1 = arith.constant 0 : i32
    return %c0_i32, %c0_i32_0 : i32, i32
  }
  func.func @transform_3(%arg0: i32) -> (i32, i32) {
    %c0_i32 = arith.constant 0 : i32
    %c0_i32_0 = arith.constant 0 : i32
    return %arg0, %c0_i32 : i32, i32
  }
}

module attributes {stable_mosaic.version = 11 : i64} {
  func.func @_linear_kernel(%arg0: i32, %arg1: memref<8x256xf32, #tpu.memory_space<vmem>>, %arg2: memref<256x768xf32, #tpu.memory_space<vmem>>, %arg3: memref<1x768xf32, #tpu.memory_space<vmem>>, %arg4: memref<8x768xf32, #tpu.memory_space<vmem>>) attributes {dimension_semantics = [#tpu.dimension_semantics<parallel>], iteration_bounds = array<i64: 1>, scalar_prefetch = 0 : i64, scratch_operands = 0 : i64, tpu.core_type = #tpu.core_type<tc>, window_params = [{transform_indices = @transform_0, window_bounds = array<i64: 8, 256>}, {pipeline_mode = #tpu.pipeline_mode<synchronous>, transform_indices = @transform_1, window_bounds = array<i64: 256, 768>}, {pipeline_mode = #tpu.pipeline_mode<synchronous>, transform_indices = @transform_2, window_bounds = array<i64: 1, 768>}, {transform_indices = @transform_3, window_bounds = array<i64: 8, 768>}]} {
    %c0 = arith.constant 0 : index
    %c0_0 = arith.constant 0 : index
    %0 = vector.load %arg1[%c0, %c0_0] : memref<8x256xf32, #tpu.memory_space<vmem>>, vector<8x256xf32>
    %1 = arith.truncf %0 : vector<8x256xf32> to vector<8x256xbf16>
    %c0_1 = arith.constant 0 : index
    %c0_2 = arith.constant 0 : index
    %2 = vector.load %arg2[%c0_1, %c0_2] : memref<256x768xf32, #tpu.memory_space<vmem>>, vector<256x768xf32>
    %3 = arith.truncf %2 : vector<256x768xf32> to vector<256x768xbf16>
    %cst = arith.constant dense<0.000000e+00> : vector<8x768xf32>
    %4 = tpu.matmul %1, %3, %cst {dimension_numbers = #tpu.dot_dimension_numbers<[1], [0], [0], [1], [0, 0, 1, 1], [], []>} : vector<8x256xbf16>, vector<256x768xbf16>, vector<8x768xf32> -> vector<8x768xf32>
    %c0_3 = arith.constant 0 : index
    %c0_4 = arith.constant 0 : index
    %5 = vector.load %arg3[%c0_3, %c0_4] : memref<1x768xf32, #tpu.memory_space<vmem>>, vector<1x768xf32>
    %6 = vector.broadcast %5 : vector<1x768xf32> to vector<8x768xf32>
    %7 = arith.addf %4, %6 : vector<8x768xf32>
    %c0_5 = arith.constant 0 : index
    %c0_6 = arith.constant 0 : index
    %8 = vector.load %arg4[%c0_5, %c0_6] : memref<8x768xf32, #tpu.memory_space<vmem>>, vector<8x768xf32>
    tpu.vector_store %arg4[%c0_5, %c0_6], %7 {strides = array<i32>} : memref<8x768xf32, #tpu.memory_space<vmem>>, vector<8x768xf32>,
    return
  }
  func.func @transform_0(%arg0: i32) -> (i32, i32) {
    %c0_i32 = arith.constant 0 : i32
    %c0_i32_0 = arith.constant 0 : i32
    return %arg0, %c0_i32 : i32, i32
  }
  func.func @transform_1(%arg0: i32) -> (i32, i32) {
    %c0_i32 = arith.constant 0 : i32
    %c0_i32_0 = arith.constant 0 : i32
    %c0_i32_1 = arith.constant 0 : i32
    return %c0_i32, %c0_i32_0 : i32, i32
  }
  func.func @transform_2(%arg0: i32) -> (i32, i32) {
    %c0_i32 = arith.constant 0 : i32
    %c0_i32_0 = arith.constant 0 : i32
    %c0_i32_1 = arith.constant 0 : i32
    return %c0_i32, %c0_i32_0 : i32, i32
  }
  func.func @transform_3(%arg0: i32) -> (i32, i32) {
    %c0_i32 = arith.constant 0 : i32
    %c0_i32_0 = arith.constant 0 : i32
    return %arg0, %c0_i32 : i32, i32
  }
}

module attributes {stable_mosaic.version = 11 : i64} {
  func.func @_mha_kernel(%arg0: i32, %arg1: i32, %arg2: i32, %arg3: memref<1x4x256xf32, #tpu.memory_space<vmem>>, %arg4: memref<1x4x256xf32, #tpu.memory_space<vmem>>, %arg5: memref<1x4x256xf32, #tpu.memory_space<vmem>>, %arg6: memref<1x4x256xf32, #tpu.memory_space<vmem>>, %arg7: memref<4x2xf32, #tpu.memory_space<vmem>>, %arg8: memref<4x2xf32, #tpu.memory_space<vmem>>, %arg9: memref<4x256xf32, #tpu.memory_space<vmem>>) attributes {dimension_semantics = [#tpu.dimension_semantics<parallel>, #tpu.dimension_semantics<parallel>, #tpu.dimension_semantics<arbitrary>], iteration_bounds = array<i64: 2, 1, 1>, scalar_prefetch = 0 : i64, scratch_operands = 3 : i64, tpu.core_type = #tpu.core_type<tc>, window_params = [{transform_indices = @transform_0, window_bounds = array<i64: 1, 4, 256>}, {transform_indices = @transform_1, window_bounds = array<i64: 1, 4, 256>}, {transform_indices = @transform_2, window_bounds = array<i64: 1, 4, 256>}, {transform_indices = @transform_3, window_bounds = array<i64: 1, 4, 256>}]} {
    %c0_i32 = arith.constant 0 : i32
    %0 = arith.cmpi eq, %arg2, %c0_i32 : i32
    %1 = arith.extui %0 : i1 to i32
    %c0_i32_0 = arith.constant 0 : i32
    %2 = arith.cmpi ne, %1, %c0_i32_0 : i32
    scf.if %2 {
      %cst_42 = arith.constant -1.000000e+30 : f32
      %76 = vector.broadcast %cst_42 : f32 to vector<4x2xf32>
      %c0_43 = arith.constant 0 : index
      %c0_44 = arith.constant 0 : index
      %77 = vector.load %arg7[%c0_43, %c0_44] : memref<4x2xf32, #tpu.memory_space<vmem>>, vector<4x2xf32>
      tpu.vector_store %arg7[%c0_43, %c0_44], %76 {strides = array<i32>} : memref<4x2xf32, #tpu.memory_space<vmem>>, vector<4x2xf32>,
      %cst_45 = arith.constant 0.000000e+00 : f32
      %78 = vector.broadcast %cst_45 : f32 to vector<4x2xf32>
      %c0_46 = arith.constant 0 : index
      %c0_47 = arith.constant 0 : index
      %79 = vector.load %arg8[%c0_46, %c0_47] : memref<4x2xf32, #tpu.memory_space<vmem>>, vector<4x2xf32>
      tpu.vector_store %arg8[%c0_46, %c0_47], %78 {strides = array<i32>} : memref<4x2xf32, #tpu.memory_space<vmem>>, vector<4x2xf32>,
      %cst_48 = arith.constant 0.000000e+00 : f32
      %80 = vector.broadcast %cst_48 : f32 to vector<4x256xf32>
      %c0_49 = arith.constant 0 : index
      %c0_50 = arith.constant 0 : index
      %81 = vector.load %arg9[%c0_49, %c0_50] : memref<4x256xf32, #tpu.memory_space<vmem>>, vector<4x256xf32>
      tpu.vector_store %arg9[%c0_49, %c0_50], %80 {strides = array<i32>} : memref<4x256xf32, #tpu.memory_space<vmem>>, vector<4x256xf32>,
    } else {
    }
    %c0 = arith.constant 0 : index
    %c0_1 = arith.constant 0 : index
    %c0_2 = arith.constant 0 : index
    %3 = vector.load %arg3[%c0, %c0_1, %c0_2] : memref<1x4x256xf32, #tpu.memory_space<vmem>>, vector<1x4x256xf32>
    %4 = vector.shape_cast %3 : vector<1x4x256xf32> to vector<4x256xf32>
    %c0_3 = arith.constant 0 : index
    %c0_4 = arith.constant 0 : index
    %c0_5 = arith.constant 0 : index
    %5 = vector.load %arg4[%c0_3, %c0_4, %c0_5] : memref<1x4x256xf32, #tpu.memory_space<vmem>>, vector<1x4x256xf32>
    %6 = vector.shape_cast %5 : vector<1x4x256xf32> to vector<4x256xf32>
    %c0_6 = arith.constant 0 : index
    %c0_7 = arith.constant 0 : index
    %c0_8 = arith.constant 0 : index
    %7 = vector.load %arg5[%c0_6, %c0_7, %c0_8] : memref<1x4x256xf32, #tpu.memory_space<vmem>>, vector<1x4x256xf32>
    %8 = vector.shape_cast %7 : vector<1x4x256xf32> to vector<4x256xf32>
    %9 = vector.extract_strided_slice %4 {offsets = [0, 0], sizes = [4, 128], strides = [1, 1]} : vector<4x256xf32> to vector<4x128xf32>
    %cst = arith.constant 0.0883883461 : f32
    %10 = vector.broadcast %cst : f32 to vector<4x128xf32>
    %11 = arith.mulf %9, %10 : vector<4x128xf32>
    %12 = arith.truncf %11 : vector<4x128xf32> to vector<4x128xbf16>
    %13 = vector.extract_strided_slice %6 {offsets = [0, 0], sizes = [4, 128], strides = [1, 1]} : vector<4x256xf32> to vector<4x128xf32>
    %14 = arith.truncf %13 : vector<4x128xf32> to vector<4x128xbf16>
    %15 = vector.extract_strided_slice %8 {offsets = [0, 0], sizes = [4, 128], strides = [1, 1]} : vector<4x256xf32> to vector<4x128xf32>
    %16 = arith.truncf %15 : vector<4x128xf32> to vector<4x128xbf16>
    %cst_9 = arith.constant dense<0.000000e+00> : vector<4x4xf32>
    %17 = tpu.matmul %12, %14, %cst_9 {dimension_numbers = #tpu.dot_dimension_numbers<[1], [1], [0], [0], [0, 0, 1, 0], [], []>} : vector<4x128xbf16>, vector<4x128xbf16>, vector<4x4xf32> -> vector<4x4xf32>
    %c0_10 = arith.constant 0 : index
    %c0_11 = arith.constant 0 : index
    %18 = vector.load %arg7[%c0_10, %c0_11] : memref<4x2xf32, #tpu.memory_space<vmem>>, vector<4x1xf32>
    %cst_12 = arith.constant dense<0xFF800000> : vector<4xf32>
    %19 = vector.multi_reduction <maximumf>, %17, %cst_12 [1] : vector<4x4xf32> to vector<4xf32>
    %20 = vector.shape_cast %19 : vector<4xf32> to vector<4x1xf32>
    %21 = arith.maximumf %18, %20 : vector<4x1xf32>
    %22 = arith.subf %18, %21 : vector<4x1xf32>
    %23 = math.exp %22 : vector<4x1xf32>
    %24 = vector.broadcast %21 : vector<4x1xf32> to vector<4x4xf32>
    %25 = arith.subf %17, %24 : vector<4x4xf32>
    %26 = math.exp %25 : vector<4x4xf32>
    %c0_13 = arith.constant 0 : index
    %c0_14 = arith.constant 0 : index
    %27 = vector.load %arg8[%c0_13, %c0_14] : memref<4x2xf32, #tpu.memory_space<vmem>>, vector<4x1xf32>
    %28 = arith.mulf %23, %27 : vector<4x1xf32>
    %cst_15 = arith.constant dense<0.000000e+00> : vector<4xf32>
    %29 = vector.multi_reduction <add>, %26, %cst_15 [1] : vector<4x4xf32> to vector<4xf32>
    %30 = vector.shape_cast %29 : vector<4xf32> to vector<4x1xf32>
    %31 = arith.addf %28, %30 : vector<4x1xf32>
    %c0_16 = arith.constant 0 : index
    %c0_17 = arith.constant 0 : index
    %32 = vector.load %arg8[%c0_16, %c0_17] : memref<4x2xf32, #tpu.memory_space<vmem>>, vector<4x1xf32>
    tpu.vector_store %arg8[%c0_16, %c0_17], %31 {strides = array<i32>} : memref<4x2xf32, #tpu.memory_space<vmem>>, vector<4x1xf32>,
    %c0_18 = arith.constant 0 : index
    %c0_19 = arith.constant 0 : index
    %33 = vector.load %arg9[%c0_18, %c0_19] : memref<4x256xf32, #tpu.memory_space<vmem>>, vector<4x128xf32>
    %34 = vector.broadcast %23 : vector<4x1xf32> to vector<4x128xf32>
    %35 = arith.mulf %34, %33 : vector<4x128xf32>
    %36 = arith.truncf %26 : vector<4x4xf32> to vector<4x4xbf16>
    %cst_20 = arith.constant dense<0.000000e+00> : vector<4x128xf32>
    %37 = tpu.matmul %36, %16, %cst_20 {dimension_numbers = #tpu.dot_dimension_numbers<[1], [0], [0], [1], [0, 0, 1, 1], [], []>} : vector<4x4xbf16>, vector<4x128xbf16>, vector<4x128xf32> -> vector<4x128xf32>
    %38 = arith.addf %35, %37 : vector<4x128xf32>
    %c0_21 = arith.constant 0 : index
    %c0_22 = arith.constant 0 : index
    %39 = vector.load %arg9[%c0_21, %c0_22] : memref<4x256xf32, #tpu.memory_space<vmem>>, vector<4x128xf32>
    tpu.vector_store %arg9[%c0_21, %c0_22], %38 {strides = array<i32>} : memref<4x256xf32, #tpu.memory_space<vmem>>, vector<4x128xf32>,
    %c0_23 = arith.constant 0 : index
    %c0_24 = arith.constant 0 : index
    %40 = vector.load %arg7[%c0_23, %c0_24] : memref<4x2xf32, #tpu.memory_space<vmem>>, vector<4x1xf32>
    tpu.vector_store %arg7[%c0_23, %c0_24], %21 {strides = array<i32>} : memref<4x2xf32, #tpu.memory_space<vmem>>, vector<4x1xf32>,
    %41 = vector.extract_strided_slice %4 {offsets = [0, 128], sizes = [4, 128], strides = [1, 1]} : vector<4x256xf32> to vector<4x128xf32>
    %cst_25 = arith.constant 0.0883883461 : f32
    %42 = vector.broadcast %cst_25 : f32 to vector<4x128xf32>
    %43 = arith.mulf %41, %42 : vector<4x128xf32>
    %44 = arith.truncf %43 : vector<4x128xf32> to vector<4x128xbf16>
    %45 = vector.extract_strided_slice %6 {offsets = [0, 128], sizes = [4, 128], strides = [1, 1]} : vector<4x256xf32> to vector<4x128xf32>
    %46 = arith.truncf %45 : vector<4x128xf32> to vector<4x128xbf16>
    %47 = vector.extract_strided_slice %8 {offsets = [0, 128], sizes = [4, 128], strides = [1, 1]} : vector<4x256xf32> to vector<4x128xf32>
    %48 = arith.truncf %47 : vector<4x128xf32> to vector<4x128xbf16>
    %cst_26 = arith.constant dense<0.000000e+00> : vector<4x4xf32>
    %49 = tpu.matmul %44, %46, %cst_26 {dimension_numbers = #tpu.dot_dimension_numbers<[1], [1], [0], [0], [0, 0, 1, 0], [], []>} : vector<4x128xbf16>, vector<4x128xbf16>, vector<4x4xf32> -> vector<4x4xf32>
    %c0_27 = arith.constant 0 : index
    %c1 = arith.constant 1 : index
    %50 = vector.load %arg7[%c0_27, %c1] : memref<4x2xf32, #tpu.memory_space<vmem>>, vector<4x1xf32>
    %cst_28 = arith.constant dense<0xFF800000> : vector<4xf32>
    %51 = vector.multi_reduction <maximumf>, %49, %cst_28 [1] : vector<4x4xf32> to vector<4xf32>
    %52 = vector.shape_cast %51 : vector<4xf32> to vector<4x1xf32>
    %53 = arith.maximumf %50, %52 : vector<4x1xf32>
    %54 = arith.subf %50, %53 : vector<4x1xf32>
    %55 = math.exp %54 : vector<4x1xf32>
    %56 = vector.broadcast %53 : vector<4x1xf32> to vector<4x4xf32>
    %57 = arith.subf %49, %56 : vector<4x4xf32>
    %58 = math.exp %57 : vector<4x4xf32>
    %c0_29 = arith.constant 0 : index
    %c1_30 = arith.constant 1 : index
    %59 = vector.load %arg8[%c0_29, %c1_30] : memref<4x2xf32, #tpu.memory_space<vmem>>, vector<4x1xf32>
    %60 = arith.mulf %55, %59 : vector<4x1xf32>
    %cst_31 = arith.constant dense<0.000000e+00> : vector<4xf32>
    %61 = vector.multi_reduction <add>, %58, %cst_31 [1] : vector<4x4xf32> to vector<4xf32>
    %62 = vector.shape_cast %61 : vector<4xf32> to vector<4x1xf32>
    %63 = arith.addf %60, %62 : vector<4x1xf32>
    %c0_32 = arith.constant 0 : index
    %c1_33 = arith.constant 1 : index
    %64 = vector.load %arg8[%c0_32, %c1_33] : memref<4x2xf32, #tpu.memory_space<vmem>>, vector<4x1xf32>
    tpu.vector_store %arg8[%c0_32, %c1_33], %63 {strides = array<i32>} : memref<4x2xf32, #tpu.memory_space<vmem>>, vector<4x1xf32>,
    %c0_34 = arith.constant 0 : index
    %c128 = arith.constant 128 : index
    %65 = vector.load %arg9[%c0_34, %c128] : memref<4x256xf32, #tpu.memory_space<vmem>>, vector<4x128xf32>
    %66 = vector.broadcast %55 : vector<4x1xf32> to vector<4x128xf32>
    %67 = arith.mulf %66, %65 : vector<4x128xf32>
    %68 = arith.truncf %58 : vector<4x4xf32> to vector<4x4xbf16>
    %cst_35 = arith.constant dense<0.000000e+00> : vector<4x128xf32>
    %69 = tpu.matmul %68, %48, %cst_35 {dimension_numbers = #tpu.dot_dimension_numbers<[1], [0], [0], [1], [0, 0, 1, 1], [], []>} : vector<4x4xbf16>, vector<4x128xbf16>, vector<4x128xf32> -> vector<4x128xf32>
    %70 = arith.addf %67, %69 : vector<4x128xf32>
    %c0_36 = arith.constant 0 : index
    %c128_37 = arith.constant 128 : index
    %71 = vector.load %arg9[%c0_36, %c128_37] : memref<4x256xf32, #tpu.memory_space<vmem>>, vector<4x128xf32>
    tpu.vector_store %arg9[%c0_36, %c128_37], %70 {strides = array<i32>} : memref<4x256xf32, #tpu.memory_space<vmem>>, vector<4x128xf32>,
    %c0_38 = arith.constant 0 : index
    %c1_39 = arith.constant 1 : index
    %72 = vector.load %arg7[%c0_38, %c1_39] : memref<4x2xf32, #tpu.memory_space<vmem>>, vector<4x1xf32>
    tpu.vector_store %arg7[%c0_38, %c1_39], %53 {strides = array<i32>} : memref<4x2xf32, #tpu.memory_space<vmem>>, vector<4x1xf32>,
    %c0_i32_40 = arith.constant 0 : i32
    %73 = arith.cmpi eq, %arg2, %c0_i32_40 : i32
    %74 = arith.extui %73 : i1 to i32
    %c0_i32_41 = arith.constant 0 : i32
    %75 = arith.cmpi ne, %74, %c0_i32_41 : i32
    scf.if %75 {
      %c0_42 = arith.constant 0 : index
      %c0_43 = arith.constant 0 : index
      %76 = vector.load %arg8[%c0_42, %c0_43] : memref<4x2xf32, #tpu.memory_space<vmem>>, vector<4x1xf32>
      %77 = tpu.reciprocal %76 {approx = true} : vector<4x1xf32> -> vector<4x1xf32>
      %c0_44 = arith.constant 0 : index
      %c0_45 = arith.constant 0 : index
      %78 = vector.load %arg9[%c0_44, %c0_45] : memref<4x256xf32, #tpu.memory_space<vmem>>, vector<4x128xf32>
      %79 = vector.broadcast %77 : vector<4x1xf32> to vector<4x128xf32>
      %80 = arith.mulf %78, %79 : vector<4x128xf32>
      %c0_46 = arith.constant 0 : index
      %c1_47 = arith.constant 1 : index
      %81 = vector.load %arg8[%c0_46, %c1_47] : memref<4x2xf32, #tpu.memory_space<vmem>>, vector<4x1xf32>
      %82 = tpu.reciprocal %81 {approx = true} : vector<4x1xf32> -> vector<4x1xf32>
      %c0_48 = arith.constant 0 : index
      %c128_49 = arith.constant 128 : index
      %83 = vector.load %arg9[%c0_48, %c128_49] : memref<4x256xf32, #tpu.memory_space<vmem>>, vector<4x128xf32>
      %84 = vector.broadcast %82 : vector<4x1xf32> to vector<4x128xf32>
      %85 = arith.mulf %83, %84 : vector<4x128xf32>
      %86 = tpu.concatenate %80, %85 in 1 : vector<4x128xf32>, vector<4x128xf32> -> vector<4x256xf32>
      %c0_50 = arith.constant 0 : index
      %c0_51 = arith.constant 0 : index
      %c0_52 = arith.constant 0 : index
      %87 = vector.load %arg6[%c0_50, %c0_51, %c0_52] : memref<1x4x256xf32, #tpu.memory_space<vmem>>, vector<1x4x256xf32>
      %88 = vector.shape_cast %87 : vector<1x4x256xf32> to vector<4x256xf32>
      %89 = vector.shape_cast %86 : vector<4x256xf32> to vector<1x4x256xf32>
      tpu.vector_store %arg6[%c0_50, %c0_51, %c0_52], %89 {strides = array<i32>} : memref<1x4x256xf32, #tpu.memory_space<vmem>>, vector<1x4x256xf32>,
    } else {
    }
    return
  }
  func.func @transform_0(%arg0: i32, %arg1: i32, %arg2: i32) -> (i32, i32, i32) {
    %c0_i32 = arith.constant 0 : i32
    %c0_i32_0 = arith.constant 0 : i32
    return %arg0, %arg1, %c0_i32 : i32, i32, i32
  }
  func.func @transform_1(%arg0: i32, %arg1: i32, %arg2: i32) -> (i32, i32, i32) {
    %c0_i32 = arith.constant 0 : i32
    %c0_i32_0 = arith.constant 0 : i32
    return %arg0, %arg2, %c0_i32 : i32, i32, i32
  }
  func.func @transform_2(%arg0: i32, %arg1: i32, %arg2: i32) -> (i32, i32, i32) {
    %c0_i32 = arith.constant 0 : i32
    %c0_i32_0 = arith.constant 0 : i32
    return %arg0, %arg2, %c0_i32 : i32, i32, i32
  }
  func.func @transform_3(%arg0: i32, %arg1: i32, %arg2: i32) -> (i32, i32, i32) {
    %c0_i32 = arith.constant 0 : i32
    %c0_i32_0 = arith.constant 0 : i32
    return %arg0, %arg1, %c0_i32 : i32, i32, i32
  }
}

module attributes {stable_mosaic.version = 11 : i64} {
  func.func @_proj_res_ln_kernel(%arg0: i32, %arg1: memref<8x256xf32, #tpu.memory_space<vmem>>, %arg2: memref<8x256xf32, #tpu.memory_space<vmem>>, %arg3: memref<256x256xf32, #tpu.memory_space<vmem>>, %arg4: memref<1x256xf32, #tpu.memory_space<vmem>>, %arg5: memref<1x256xf32, #tpu.memory_space<vmem>>, %arg6: memref<1x256xf32, #tpu.memory_space<vmem>>, %arg7: memref<8x256xf32, #tpu.memory_space<vmem>>) attributes {dimension_semantics = [#tpu.dimension_semantics<parallel>], iteration_bounds = array<i64: 1>, scalar_prefetch = 0 : i64, scratch_operands = 0 : i64, tpu.core_type = #tpu.core_type<tc>, window_params = [{transform_indices = @transform_0, window_bounds = array<i64: 8, 256>}, {transform_indices = @transform_1, window_bounds = array<i64: 8, 256>}, {pipeline_mode = #tpu.pipeline_mode<synchronous>, transform_indices = @transform_2, window_bounds = array<i64: 256, 256>}, {pipeline_mode = #tpu.pipeline_mode<synchronous>, transform_indices = @transform_3, window_bounds = array<i64: 1, 256>}, {pipeline_mode = #tpu.pipeline_mode<synchronous>, transform_indices = @transform_4, window_bounds = array<i64: 1, 256>}, {pipeline_mode = #tpu.pipeline_mode<synchronous>, transform_indices = @transform_5, window_bounds = array<i64: 1, 256>}, {transform_indices = @transform_6, window_bounds = array<i64: 8, 256>}]} {
    %c0 = arith.constant 0 : index
    %c0_0 = arith.constant 0 : index
    %0 = vector.load %arg1[%c0, %c0_0] : memref<8x256xf32, #tpu.memory_space<vmem>>, vector<8x256xf32>
    %1 = arith.truncf %0 : vector<8x256xf32> to vector<8x256xbf16>
    %c0_1 = arith.constant 0 : index
    %c0_2 = arith.constant 0 : index
    %2 = vector.load %arg3[%c0_1, %c0_2] : memref<256x256xf32, #tpu.memory_space<vmem>>, vector<256x256xf32>
    %3 = arith.truncf %2 : vector<256x256xf32> to vector<256x256xbf16>
    %cst = arith.constant dense<0.000000e+00> : vector<8x256xf32>
    %4 = tpu.matmul %1, %3, %cst {dimension_numbers = #tpu.dot_dimension_numbers<[1], [0], [0], [1], [0, 0, 1, 1], [], []>} : vector<8x256xbf16>, vector<256x256xbf16>, vector<8x256xf32> -> vector<8x256xf32>
    %c0_3 = arith.constant 0 : index
    %c0_4 = arith.constant 0 : index
    %5 = vector.load %arg4[%c0_3, %c0_4] : memref<1x256xf32, #tpu.memory_space<vmem>>, vector<1x256xf32>
    %6 = vector.broadcast %5 : vector<1x256xf32> to vector<8x256xf32>
    %7 = arith.addf %4, %6 : vector<8x256xf32>
    %c0_5 = arith.constant 0 : index
    %c0_6 = arith.constant 0 : index
    %8 = vector.load %arg2[%c0_5, %c0_6] : memref<8x256xf32, #tpu.memory_space<vmem>>, vector<8x256xf32>
    %9 = arith.addf %7, %8 : vector<8x256xf32>
    %c0_7 = arith.constant 0 : index
    %c0_8 = arith.constant 0 : index
    %10 = vector.load %arg5[%c0_7, %c0_8] : memref<1x256xf32, #tpu.memory_space<vmem>>, vector<1x256xf32>
    %c0_9 = arith.constant 0 : index
    %c0_10 = arith.constant 0 : index
    %11 = vector.load %arg6[%c0_9, %c0_10] : memref<1x256xf32, #tpu.memory_space<vmem>>, vector<1x256xf32>
    %cst_11 = arith.constant dense<0.000000e+00> : vector<8xf32>
    %12 = vector.multi_reduction <add>, %9, %cst_11 [1] : vector<8x256xf32> to vector<8xf32>
    %13 = vector.shape_cast %12 : vector<8xf32> to vector<8x1xf32>
    %cst_12 = arith.constant 2.560000e+02 : f32
    %14 = vector.broadcast %cst_12 : f32 to vector<8x1xf32>
    %15 = arith.divf %13, %14 : vector<8x1xf32>
    %16 = vector.broadcast %15 : vector<8x1xf32> to vector<8x256xf32>
    %17 = arith.subf %9, %16 : vector<8x256xf32>
    %18 = arith.mulf %17, %17 : vector<8x256xf32>
    %cst_13 = arith.constant dense<0.000000e+00> : vector<8xf32>
    %19 = vector.multi_reduction <add>, %18, %cst_13 [1] : vector<8x256xf32> to vector<8xf32>
    %20 = vector.shape_cast %19 : vector<8xf32> to vector<8x1xf32>
    %cst_14 = arith.constant 2.560000e+02 : f32
    %21 = vector.broadcast %cst_14 : f32 to vector<8x1xf32>
    %22 = arith.divf %20, %21 : vector<8x1xf32>
    %cst_15 = arith.constant 9.99999974E-6 : f32
    %23 = vector.broadcast %cst_15 : f32 to vector<8x1xf32>
    %24 = arith.addf %22, %23 : vector<8x1xf32>
    %25 = math.rsqrt %24 : vector<8x1xf32>
    %26 = vector.broadcast %25 : vector<8x1xf32> to vector<8x256xf32>
    %27 = arith.mulf %17, %26 : vector<8x256xf32>
    %28 = vector.broadcast %10 : vector<1x256xf32> to vector<8x256xf32>
    %29 = arith.mulf %27, %28 : vector<8x256xf32>
    %30 = vector.broadcast %11 : vector<1x256xf32> to vector<8x256xf32>
    %31 = arith.addf %29, %30 : vector<8x256xf32>
    %c0_16 = arith.constant 0 : index
    %c0_17 = arith.constant 0 : index
    %32 = vector.load %arg7[%c0_16, %c0_17] : memref<8x256xf32, #tpu.memory_space<vmem>>, vector<8x256xf32>
    tpu.vector_store %arg7[%c0_16, %c0_17], %31 {strides = array<i32>} : memref<8x256xf32, #tpu.memory_space<vmem>>, vector<8x256xf32>,
    return
  }
  func.func @transform_0(%arg0: i32) -> (i32, i32) {
    %c0_i32 = arith.constant 0 : i32
    %c0_i32_0 = arith.constant 0 : i32
    return %arg0, %c0_i32 : i32, i32
  }
  func.func @transform_1(%arg0: i32) -> (i32, i32) {
    %c0_i32 = arith.constant 0 : i32
    %c0_i32_0 = arith.constant 0 : i32
    return %arg0, %c0_i32 : i32, i32
  }
  func.func @transform_2(%arg0: i32) -> (i32, i32) {
    %c0_i32 = arith.constant 0 : i32
    %c0_i32_0 = arith.constant 0 : i32
    %c0_i32_1 = arith.constant 0 : i32
    return %c0_i32, %c0_i32_0 : i32, i32
  }
  func.func @transform_3(%arg0: i32) -> (i32, i32) {
    %c0_i32 = arith.constant 0 : i32
    %c0_i32_0 = arith.constant 0 : i32
    %c0_i32_1 = arith.constant 0 : i32
    return %c0_i32, %c0_i32_0 : i32, i32
  }
  func.func @transform_4(%arg0: i32) -> (i32, i32) {
    %c0_i32 = arith.constant 0 : i32
    %c0_i32_0 = arith.constant 0 : i32
    %c0_i32_1 = arith.constant 0 : i32
    return %c0_i32, %c0_i32_0 : i32, i32
  }
  func.func @transform_5(%arg0: i32) -> (i32, i32) {
    %c0_i32 = arith.constant 0 : i32
    %c0_i32_0 = arith.constant 0 : i32
    %c0_i32_1 = arith.constant 0 : i32
    return %c0_i32, %c0_i32_0 : i32, i32
  }
  func.func @transform_6(%arg0: i32) -> (i32, i32) {
    %c0_i32 = arith.constant 0 : i32
    %c0_i32_0 = arith.constant 0 : i32
    return %arg0, %c0_i32 : i32, i32
  }
}

module attributes {stable_mosaic.version = 11 : i64} {
  func.func @_ffn_res_ln_kernel(%arg0: i32, %arg1: memref<8x256xf32, #tpu.memory_space<vmem>>, %arg2: memref<256x256xf32, #tpu.memory_space<vmem>>, %arg3: memref<1x256xf32, #tpu.memory_space<vmem>>, %arg4: memref<256x256xf32, #tpu.memory_space<vmem>>, %arg5: memref<1x256xf32, #tpu.memory_space<vmem>>, %arg6: memref<1x256xf32, #tpu.memory_space<vmem>>, %arg7: memref<1x256xf32, #tpu.memory_space<vmem>>, %arg8: memref<8x256xf32, #tpu.memory_space<vmem>>) attributes {dimension_semantics = [#tpu.dimension_semantics<parallel>], iteration_bounds = array<i64: 1>, scalar_prefetch = 0 : i64, scratch_operands = 0 : i64, tpu.core_type = #tpu.core_type<tc>, window_params = [{transform_indices = @transform_0, window_bounds = array<i64: 8, 256>}, {pipeline_mode = #tpu.pipeline_mode<synchronous>, transform_indices = @transform_1, window_bounds = array<i64: 256, 256>}, {pipeline_mode = #tpu.pipeline_mode<synchronous>, transform_indices = @transform_2, window_bounds = array<i64: 1, 256>}, {pipeline_mode = #tpu.pipeline_mode<synchronous>, transform_indices = @transform_3, window_bounds = array<i64: 256, 256>}, {pipeline_mode = #tpu.pipeline_mode<synchronous>, transform_indices = @transform_4, window_bounds = array<i64: 1, 256>}, {pipeline_mode = #tpu.pipeline_mode<synchronous>, transform_indices = @transform_5, window_bounds = array<i64: 1, 256>}, {pipeline_mode = #tpu.pipeline_mode<synchronous>, transform_indices = @transform_6, window_bounds = array<i64: 1, 256>}, {transform_indices = @transform_7, window_bounds = array<i64: 8, 256>}]} {
    %c0 = arith.constant 0 : index
    %c0_0 = arith.constant 0 : index
    %0 = vector.load %arg1[%c0, %c0_0] : memref<8x256xf32, #tpu.memory_space<vmem>>, vector<8x256xf32>
    %1 = arith.truncf %0 : vector<8x256xf32> to vector<8x256xbf16>
    %c0_1 = arith.constant 0 : index
    %c0_2 = arith.constant 0 : index
    %2 = vector.load %arg2[%c0_1, %c0_2] : memref<256x256xf32, #tpu.memory_space<vmem>>, vector<256x256xf32>
    %3 = arith.truncf %2 : vector<256x256xf32> to vector<256x256xbf16>
    %cst = arith.constant dense<0.000000e+00> : vector<8x256xf32>
    %4 = tpu.matmul %1, %3, %cst {dimension_numbers = #tpu.dot_dimension_numbers<[1], [0], [0], [1], [0, 0, 1, 1], [], []>} : vector<8x256xbf16>, vector<256x256xbf16>, vector<8x256xf32> -> vector<8x256xf32>
    %c0_3 = arith.constant 0 : index
    %c0_4 = arith.constant 0 : index
    %5 = vector.load %arg3[%c0_3, %c0_4] : memref<1x256xf32, #tpu.memory_space<vmem>>, vector<1x256xf32>
    %6 = vector.broadcast %5 : vector<1x256xf32> to vector<8x256xf32>
    %7 = arith.addf %4, %6 : vector<8x256xf32>
    %cst_5 = arith.constant 0.000000e+00 : f32
    %8 = vector.broadcast %cst_5 : f32 to vector<8x256xf32>
    %9 = arith.maximumf %7, %8 : vector<8x256xf32>
    %10 = arith.truncf %9 : vector<8x256xf32> to vector<8x256xbf16>
    %c0_6 = arith.constant 0 : index
    %c0_7 = arith.constant 0 : index
    %11 = vector.load %arg4[%c0_6, %c0_7] : memref<256x256xf32, #tpu.memory_space<vmem>>, vector<256x256xf32>
    %12 = arith.truncf %11 : vector<256x256xf32> to vector<256x256xbf16>
    %cst_8 = arith.constant dense<0.000000e+00> : vector<8x256xf32>
    %13 = tpu.matmul %10, %12, %cst_8 {dimension_numbers = #tpu.dot_dimension_numbers<[1], [0], [0], [1], [0, 0, 1, 1], [], []>} : vector<8x256xbf16>, vector<256x256xbf16>, vector<8x256xf32> -> vector<8x256xf32>
    %c0_9 = arith.constant 0 : index
    %c0_10 = arith.constant 0 : index
    %14 = vector.load %arg5[%c0_9, %c0_10] : memref<1x256xf32, #tpu.memory_space<vmem>>, vector<1x256xf32>
    %15 = vector.broadcast %14 : vector<1x256xf32> to vector<8x256xf32>
    %16 = arith.addf %13, %15 : vector<8x256xf32>
    %17 = arith.addf %16, %0 : vector<8x256xf32>
    %c0_11 = arith.constant 0 : index
    %c0_12 = arith.constant 0 : index
    %18 = vector.load %arg6[%c0_11, %c0_12] : memref<1x256xf32, #tpu.memory_space<vmem>>, vector<1x256xf32>
    %c0_13 = arith.constant 0 : index
    %c0_14 = arith.constant 0 : index
    %19 = vector.load %arg7[%c0_13, %c0_14] : memref<1x256xf32, #tpu.memory_space<vmem>>, vector<1x256xf32>
    %cst_15 = arith.constant dense<0.000000e+00> : vector<8xf32>
    %20 = vector.multi_reduction <add>, %17, %cst_15 [1] : vector<8x256xf32> to vector<8xf32>
    %21 = vector.shape_cast %20 : vector<8xf32> to vector<8x1xf32>
    %cst_16 = arith.constant 2.560000e+02 : f32
    %22 = vector.broadcast %cst_16 : f32 to vector<8x1xf32>
    %23 = arith.divf %21, %22 : vector<8x1xf32>
    %24 = vector.broadcast %23 : vector<8x1xf32> to vector<8x256xf32>
    %25 = arith.subf %17, %24 : vector<8x256xf32>
    %26 = arith.mulf %25, %25 : vector<8x256xf32>
    %cst_17 = arith.constant dense<0.000000e+00> : vector<8xf32>
    %27 = vector.multi_reduction <add>, %26, %cst_17 [1] : vector<8x256xf32> to vector<8xf32>
    %28 = vector.shape_cast %27 : vector<8xf32> to vector<8x1xf32>
    %cst_18 = arith.constant 2.560000e+02 : f32
    %29 = vector.broadcast %cst_18 : f32 to vector<8x1xf32>
    %30 = arith.divf %28, %29 : vector<8x1xf32>
    %cst_19 = arith.constant 9.99999974E-6 : f32
    %31 = vector.broadcast %cst_19 : f32 to vector<8x1xf32>
    %32 = arith.addf %30, %31 : vector<8x1xf32>
    %33 = math.rsqrt %32 : vector<8x1xf32>
    %34 = vector.broadcast %33 : vector<8x1xf32> to vector<8x256xf32>
    %35 = arith.mulf %25, %34 : vector<8x256xf32>
    %36 = vector.broadcast %18 : vector<1x256xf32> to vector<8x256xf32>
    %37 = arith.mulf %35, %36 : vector<8x256xf32>
    %38 = vector.broadcast %19 : vector<1x256xf32> to vector<8x256xf32>
    %39 = arith.addf %37, %38 : vector<8x256xf32>
    %c0_20 = arith.constant 0 : index
    %c0_21 = arith.constant 0 : index
    %40 = vector.load %arg8[%c0_20, %c0_21] : memref<8x256xf32, #tpu.memory_space<vmem>>, vector<8x256xf32>
    tpu.vector_store %arg8[%c0_20, %c0_21], %39 {strides = array<i32>} : memref<8x256xf32, #tpu.memory_space<vmem>>, vector<8x256xf32>,
    return
  }
  func.func @transform_0(%arg0: i32) -> (i32, i32) {
    %c0_i32 = arith.constant 0 : i32
    %c0_i32_0 = arith.constant 0 : i32
    return %arg0, %c0_i32 : i32, i32
  }
  func.func @transform_1(%arg0: i32) -> (i32, i32) {
    %c0_i32 = arith.constant 0 : i32
    %c0_i32_0 = arith.constant 0 : i32
    %c0_i32_1 = arith.constant 0 : i32
    return %c0_i32, %c0_i32_0 : i32, i32
  }
  func.func @transform_2(%arg0: i32) -> (i32, i32) {
    %c0_i32 = arith.constant 0 : i32
    %c0_i32_0 = arith.constant 0 : i32
    %c0_i32_1 = arith.constant 0 : i32
    return %c0_i32, %c0_i32_0 : i32, i32
  }
  func.func @transform_3(%arg0: i32) -> (i32, i32) {
    %c0_i32 = arith.constant 0 : i32
    %c0_i32_0 = arith.constant 0 : i32
    %c0_i32_1 = arith.constant 0 : i32
    return %c0_i32, %c0_i32_0 : i32, i32
  }
  func.func @transform_4(%arg0: i32) -> (i32, i32) {
    %c0_i32 = arith.constant 0 : i32
    %c0_i32_0 = arith.constant 0 : i32
    %c0_i32_1 = arith.constant 0 : i32
    return %c0_i32, %c0_i32_0 : i32, i32
  }
  func.func @transform_5(%arg0: i32) -> (i32, i32) {
    %c0_i32 = arith.constant 0 : i32
    %c0_i32_0 = arith.constant 0 : i32
    %c0_i32_1 = arith.constant 0 : i32
    return %c0_i32, %c0_i32_0 : i32, i32
  }
  func.func @transform_6(%arg0: i32) -> (i32, i32) {
    %c0_i32 = arith.constant 0 : i32
    %c0_i32_0 = arith.constant 0 : i32
    %c0_i32_1 = arith.constant 0 : i32
    return %c0_i32, %c0_i32_0 : i32, i32
  }
  func.func @transform_7(%arg0: i32) -> (i32, i32) {
    %c0_i32 = arith.constant 0 : i32
    %c0_i32_0 = arith.constant 0 : i32
    return %arg0, %c0_i32 : i32, i32
  }
}

module attributes {stable_mosaic.version = 11 : i64} {
  func.func @_ffn_res_ln_kernel(%arg0: i32, %arg1: memref<8x256xf32, #tpu.memory_space<vmem>>, %arg2: memref<256x256xf32, #tpu.memory_space<vmem>>, %arg3: memref<1x256xf32, #tpu.memory_space<vmem>>, %arg4: memref<256x256xf32, #tpu.memory_space<vmem>>, %arg5: memref<1x256xf32, #tpu.memory_space<vmem>>, %arg6: memref<1x256xf32, #tpu.memory_space<vmem>>, %arg7: memref<1x256xf32, #tpu.memory_space<vmem>>, %arg8: memref<8x256xf32, #tpu.memory_space<vmem>>) attributes {dimension_semantics = [#tpu.dimension_semantics<parallel>], iteration_bounds = array<i64: 1>, scalar_prefetch = 0 : i64, scratch_operands = 0 : i64, tpu.core_type = #tpu.core_type<tc>, window_params = [{transform_indices = @transform_0, window_bounds = array<i64: 8, 256>}, {pipeline_mode = #tpu.pipeline_mode<synchronous>, transform_indices = @transform_1, window_bounds = array<i64: 256, 256>}, {pipeline_mode = #tpu.pipeline_mode<synchronous>, transform_indices = @transform_2, window_bounds = array<i64: 1, 256>}, {pipeline_mode = #tpu.pipeline_mode<synchronous>, transform_indices = @transform_3, window_bounds = array<i64: 256, 256>}, {pipeline_mode = #tpu.pipeline_mode<synchronous>, transform_indices = @transform_4, window_bounds = array<i64: 1, 256>}, {pipeline_mode = #tpu.pipeline_mode<synchronous>, transform_indices = @transform_5, window_bounds = array<i64: 1, 256>}, {pipeline_mode = #tpu.pipeline_mode<synchronous>, transform_indices = @transform_6, window_bounds = array<i64: 1, 256>}, {transform_indices = @transform_7, window_bounds = array<i64: 8, 256>}]} {
    %c0 = arith.constant 0 : index
    %c0_0 = arith.constant 0 : index
    %0 = vector.load %arg1[%c0, %c0_0] : memref<8x256xf32, #tpu.memory_space<vmem>>, vector<8x256xf32>
    %1 = arith.truncf %0 : vector<8x256xf32> to vector<8x256xbf16>
    %c0_1 = arith.constant 0 : index
    %c0_2 = arith.constant 0 : index
    %2 = vector.load %arg2[%c0_1, %c0_2] : memref<256x256xf32, #tpu.memory_space<vmem>>, vector<256x256xf32>
    %3 = arith.truncf %2 : vector<256x256xf32> to vector<256x256xbf16>
    %cst = arith.constant dense<0.000000e+00> : vector<8x256xf32>
    %4 = tpu.matmul %1, %3, %cst {dimension_numbers = #tpu.dot_dimension_numbers<[1], [0], [0], [1], [0, 0, 1, 1], [], []>} : vector<8x256xbf16>, vector<256x256xbf16>, vector<8x256xf32> -> vector<8x256xf32>
    %c0_3 = arith.constant 0 : index
    %c0_4 = arith.constant 0 : index
    %5 = vector.load %arg3[%c0_3, %c0_4] : memref<1x256xf32, #tpu.memory_space<vmem>>, vector<1x256xf32>
    %6 = vector.broadcast %5 : vector<1x256xf32> to vector<8x256xf32>
    %7 = arith.addf %4, %6 : vector<8x256xf32>
    %cst_5 = arith.constant 0.000000e+00 : f32
    %8 = vector.broadcast %cst_5 : f32 to vector<8x256xf32>
    %9 = arith.maximumf %7, %8 : vector<8x256xf32>
    %10 = arith.truncf %9 : vector<8x256xf32> to vector<8x256xbf16>
    %c0_6 = arith.constant 0 : index
    %c0_7 = arith.constant 0 : index
    %11 = vector.load %arg4[%c0_6, %c0_7] : memref<256x256xf32, #tpu.memory_space<vmem>>, vector<256x256xf32>
    %12 = arith.truncf %11 : vector<256x256xf32> to vector<256x256xbf16>
    %cst_8 = arith.constant dense<0.000000e+00> : vector<8x256xf32>
    %13 = tpu.matmul %10, %12, %cst_8 {dimension_numbers = #tpu.dot_dimension_numbers<[1], [0], [0], [1], [0, 0, 1, 1], [], []>} : vector<8x256xbf16>, vector<256x256xbf16>, vector<8x256xf32> -> vector<8x256xf32>
    %c0_9 = arith.constant 0 : index
    %c0_10 = arith.constant 0 : index
    %14 = vector.load %arg5[%c0_9, %c0_10] : memref<1x256xf32, #tpu.memory_space<vmem>>, vector<1x256xf32>
    %15 = vector.broadcast %14 : vector<1x256xf32> to vector<8x256xf32>
    %16 = arith.addf %13, %15 : vector<8x256xf32>
    %17 = arith.addf %16, %0 : vector<8x256xf32>
    %c0_11 = arith.constant 0 : index
    %c0_12 = arith.constant 0 : index
    %18 = vector.load %arg6[%c0_11, %c0_12] : memref<1x256xf32, #tpu.memory_space<vmem>>, vector<1x256xf32>
    %c0_13 = arith.constant 0 : index
    %c0_14 = arith.constant 0 : index
    %19 = vector.load %arg7[%c0_13, %c0_14] : memref<1x256xf32, #tpu.memory_space<vmem>>, vector<1x256xf32>
    %cst_15 = arith.constant dense<0.000000e+00> : vector<8xf32>
    %20 = vector.multi_reduction <add>, %17, %cst_15 [1] : vector<8x256xf32> to vector<8xf32>
    %21 = vector.shape_cast %20 : vector<8xf32> to vector<8x1xf32>
    %cst_16 = arith.constant 2.560000e+02 : f32
    %22 = vector.broadcast %cst_16 : f32 to vector<8x1xf32>
    %23 = arith.divf %21, %22 : vector<8x1xf32>
    %24 = vector.broadcast %23 : vector<8x1xf32> to vector<8x256xf32>
    %25 = arith.subf %17, %24 : vector<8x256xf32>
    %26 = arith.mulf %25, %25 : vector<8x256xf32>
    %cst_17 = arith.constant dense<0.000000e+00> : vector<8xf32>
    %27 = vector.multi_reduction <add>, %26, %cst_17 [1] : vector<8x256xf32> to vector<8xf32>
    %28 = vector.shape_cast %27 : vector<8xf32> to vector<8x1xf32>
    %cst_18 = arith.constant 2.560000e+02 : f32
    %29 = vector.broadcast %cst_18 : f32 to vector<8x1xf32>
    %30 = arith.divf %28, %29 : vector<8x1xf32>
    %cst_19 = arith.constant 9.99999974E-6 : f32
    %31 = vector.broadcast %cst_19 : f32 to vector<8x1xf32>
    %32 = arith.addf %30, %31 : vector<8x1xf32>
    %33 = math.rsqrt %32 : vector<8x1xf32>
    %34 = vector.broadcast %33 : vector<8x1xf32> to vector<8x256xf32>
    %35 = arith.mulf %25, %34 : vector<8x256xf32>
    %36 = vector.broadcast %18 : vector<1x256xf32> to vector<8x256xf32>
    %37 = arith.mulf %35, %36 : vector<8x256xf32>
    %38 = vector.broadcast %19 : vector<1x256xf32> to vector<8x256xf32>
    %39 = arith.addf %37, %38 : vector<8x256xf32>
    %c0_20 = arith.constant 0 : index
    %c0_21 = arith.constant 0 : index
    %40 = vector.load %arg8[%c0_20, %c0_21] : memref<8x256xf32, #tpu.memory_space<vmem>>, vector<8x256xf32>
    tpu.vector_store %arg8[%c0_20, %c0_21], %39 {strides = array<i32>} : memref<8x256xf32, #tpu.memory_space<vmem>>, vector<8x256xf32>,
    return
  }
  func.func @transform_0(%arg0: i32) -> (i32, i32) {
    %c0_i32 = arith.constant 0 : i32
    %c0_i32_0 = arith.constant 0 : i32
    return %arg0, %c0_i32 : i32, i32
  }
  func.func @transform_1(%arg0: i32) -> (i32, i32) {
    %c0_i32 = arith.constant 0 : i32
    %c0_i32_0 = arith.constant 0 : i32
    %c0_i32_1 = arith.constant 0 : i32
    return %c0_i32, %c0_i32_0 : i32, i32
  }
  func.func @transform_2(%arg0: i32) -> (i32, i32) {
    %c0_i32 = arith.constant 0 : i32
    %c0_i32_0 = arith.constant 0 : i32
    %c0_i32_1 = arith.constant 0 : i32
    return %c0_i32, %c0_i32_0 : i32, i32
  }
  func.func @transform_3(%arg0: i32) -> (i32, i32) {
    %c0_i32 = arith.constant 0 : i32
    %c0_i32_0 = arith.constant 0 : i32
    %c0_i32_1 = arith.constant 0 : i32
    return %c0_i32, %c0_i32_0 : i32, i32
  }
  func.func @transform_4(%arg0: i32) -> (i32, i32) {
    %c0_i32 = arith.constant 0 : i32
    %c0_i32_0 = arith.constant 0 : i32
    %c0_i32_1 = arith.constant 0 : i32
    return %c0_i32, %c0_i32_0 : i32, i32
  }
  func.func @transform_5(%arg0: i32) -> (i32, i32) {
    %c0_i32 = arith.constant 0 : i32
    %c0_i32_0 = arith.constant 0 : i32
    %c0_i32_1 = arith.constant 0 : i32
    return %c0_i32, %c0_i32_0 : i32, i32
  }
  func.func @transform_6(%arg0: i32) -> (i32, i32) {
    %c0_i32 = arith.constant 0 : i32
    %c0_i32_0 = arith.constant 0 : i32
    %c0_i32_1 = arith.constant 0 : i32
    return %c0_i32, %c0_i32_0 : i32, i32
  }
  func.func @transform_7(%arg0: i32) -> (i32, i32) {
    %c0_i32 = arith.constant 0 : i32
    %c0_i32_0 = arith.constant 0 : i32
    return %arg0, %c0_i32 : i32, i32
  }
}

</mosaic_0001>

<llo_original>
// kernel: forward.26
$region0: #{forward.26}
  #allocation0 [shape = 'u32[]', space=smem, size = 0x4, offset = 0x4, fixed_abs, tag = 'smem constant byte address 0x4 - core index']
  #allocation1 [shape = 'u32[144,128]{1,0:T(1,128)}', space=vmem, size = 0x12000, scoped, tag = 'internal scratch']
  %s0 = inlined_call_operand.vmem [shape: f32[66,256], index: 0, kind: input, shape index: {}]
  %s1 = inlined_call_operand.vmem [shape: f32[66,256], index: 1, kind: input, shape index: {}]
  %s2 = inlined_call_operand.hbm [shape: f32[256,256], index: 2, kind: input, shape index: {}]
  %s3 = inlined_call_operand.hbm [shape: f32[1,256], index: 3, kind: input, shape index: {}]
  %s4 = inlined_call_operand.hbm [shape: f32[1,256], index: 4, kind: input, shape index: {}]
  %s5 = inlined_call_operand.hbm [shape: f32[1,256], index: 5, kind: input, shape index: {}]
  %s6 = inlined_call_operand.vmem [shape: f32[66,256], index: 6, kind: output, shape index: {}]
  %s7 = sld [smem:[#allocation0]]
  $region50: #{forward.26} parent=0
    _
  %s9 = ssub.s32 1, %s7
  %s10 = scalar_select 0, %s9, %s7
  $region1: #{forward.26} parent=0
    #allocation2 [shape = 'u8[262144]{0}', space=vmem, size = 0x40000, scoped, tag = 'input window, operand 2, single buffered']
    #allocation3 [shape = 's32[1]{0}', space=sflag, size = 0x4, scoped, tag = 'scoped memory for forward.26']
    #allocation4 [shape = 'u8[1024]{0}', space=vmem, size = 0x400, scoped, tag = 'input window, operand 3, single buffered']
    #allocation5 [shape = 's32[1]{0}', space=sflag, size = 0x4, scoped, tag = 'scoped memory for forward.26']
    #allocation6 [shape = 'u8[1024]{0}', space=vmem, size = 0x400, scoped, tag = 'input window, operand 4, single buffered']
    #allocation7 [shape = 'u8[1024]{0}', space=vmem, size = 0x400, scoped, tag = 'input window, operand 5, single buffered']
    #allocation8 [shape = 's32[1]{0}', space=sflag, size = 0x4, scoped, tag = 'scoped memory for forward.26']
    %11 = vsyncpa [#allocation3], 0
    %12 = vsyncpa [#allocation5], 0
    %13 = vsyncpa [#allocation8], 0
    // Predicated region
    $region2: #{forward.26} parent=1 // pred_check
      _
    $region3: #{forward.26} parent=1 // pred_check_branch
      %15 = sbr.rel (0) target = $region5
    $region4: #{forward.26} parent=1 // pred_region
      _
    $region5: #{forward.26} parent=1 // pred_fallthru
      _
    // Predicated region
    $region6: #{forward.26} parent=1 // pred_check
      _
    $region7: #{forward.26} parent=1 // pred_check_branch
      %17 = sbr.rel (0) target = $region9
    $region8: #{forward.26} parent=1 // pred_region
      _
    $region9: #{forward.26} parent=1 // pred_fallthru
      _
    // Predicated region
    $region10: #{forward.26} parent=1 // pred_check
      _
    $region11: #{forward.26} parent=1 // pred_check_branch
      %19 = sbr.rel (0) target = $region13
    $region12: #{forward.26} parent=1 // pred_region
      %s21 = ssub.s32 8192, 8192
      %22 = vsyncadd [#allocation3], %s21
      %s23 = sshll.u32 [#allocation2], 4
      %s24 = int_to_ptr.vmem [resolvable:$true] %s23
      %29 = dma.hbm_to_vmem [thread:$0]  %s2, 8192, %s24, [#allocation3], 256, 256, 16
    $region13: #{forward.26} parent=1 // pred_fallthru
      _
    // Predicated region
    $region14: #{forward.26} parent=1 // pred_check
      _
    $region15: #{forward.26} parent=1 // pred_check_branch
      %31 = sbr.rel (0) target = $region17
    $region16: #{forward.26} parent=1 // pred_region
      %s33 = ssub.s32 32, 32
      %34 = vsyncadd [#allocation5], %s33
      %s36 = sshll.u32 [#allocation4], 4
      %s37 = int_to_ptr.vmem [resolvable:$true] %s36
      %39 = dma.hbm_to_vmem [thread:$0]  %s3, 32, %s37, [#allocation5]
    $region17: #{forward.26} parent=1 // pred_fallthru
      _
    // Predicated region
    $region18: #{forward.26} parent=1 // pred_check
      _
    $region19: #{forward.26} parent=1 // pred_check_branch
      %41 = sbr.rel (0) target = $region21
    $region20: #{forward.26} parent=1 // pred_region
      %s43 = ssub.s32 32, 32
      %44 = vsyncadd [#allocation5], %s43
      %s46 = sshll.u32 [#allocation6], 4
      %s47 = int_to_ptr.vmem [resolvable:$true] %s46
      %49 = dma.hbm_to_vmem [thread:$0]  %s4, 32, %s47, [#allocation5]
    $region21: #{forward.26} parent=1 // pred_fallthru
      _
    // Predicated region
    $region22: #{forward.26} parent=1 // pred_check
      _
    $region23: #{forward.26} parent=1 // pred_check_branch
      %51 = sbr.rel (0) target = $region25
    $region24: #{forward.26} parent=1 // pred_region
      %s53 = ssub.s32 32, 32
      %54 = vsyncadd [#allocation8], %s53
      %s56 = sshll.u32 [#allocation7], 4
      %s57 = int_to_ptr.vmem [resolvable:$true] %s56
      %59 = dma.hbm_to_vmem [thread:$0]  %s5, 32, %s57, [#allocation8]
    $region25: #{forward.26} parent=1 // pred_fallthru
      _
    // Predicated region
    $region26: #{forward.26} parent=1 // pred_check
      _
    $region27: #{forward.26} parent=1 // pred_check_branch
      %61 = sbr.rel (0) target = $region29
    $region28: #{forward.26} parent=1 // pred_region
      %62 = dma.done [#allocation3], 8192
    $region29: #{forward.26} parent=1 // pred_fallthru
      _
    // Predicated region
    $region30: #{forward.26} parent=1 // pred_check
      _
    $region31: #{forward.26} parent=1 // pred_check_branch
      %64 = sbr.rel (0) target = $region33
    $region32: #{forward.26} parent=1 // pred_region
      %65 = dma.done [#allocation5], 32
    $region33: #{forward.26} parent=1 // pred_fallthru
      _
    // Predicated region
    $region34: #{forward.26} parent=1 // pred_check
      _
    $region35: #{forward.26} parent=1 // pred_check_branch
      %67 = sbr.rel (0) target = $region37
    $region36: #{forward.26} parent=1 // pred_region
      %68 = dma.done [#allocation5], 32
    $region37: #{forward.26} parent=1 // pred_fallthru
      _
    // Predicated region
    $region38: #{forward.26} parent=1 // pred_check
      _
    $region39: #{forward.26} parent=1 // pred_check_branch
      %70 = sbr.rel (0) target = $region41
    $region40: #{forward.26} parent=1 // pred_region
      %71 = dma.done [#allocation8], 32
    $region41: #{forward.26} parent=1 // pred_fallthru
      _
    %v72 = vld [vmem:[%s0] sm:$0xff]
    %v73 = vld [vmem:[%s0 + $0x8] sm:$0xff]
    %v74 = vld [vmem:[%s0 + $0x10] sm:$0xff]
    %v75 = vld [vmem:[%s0 + $0x18] sm:$0xff]
    %v76 = vld [vmem:[%s0 + $0x20] sm:$0xff]
    %v77 = vld [vmem:[%s0 + $0x28] sm:$0xff]
    %v78 = vld [vmem:[%s0 + $0x30] sm:$0xff]
    %v79 = vld [vmem:[%s0 + $0x38] sm:$0xff]
    %v80 = vld [vmem:[%s0 + $0x40] sm:$0xff]
    %v81 = vld [vmem:[%s0 + $0x48] sm:$0xff]
    %v82 = vld [vmem:[%s0 + $0x50] sm:$0xff]
    %v83 = vld [vmem:[%s0 + $0x58] sm:$0xff]
    %v84 = vld [vmem:[%s0 + $0x60] sm:$0xff]
    %v85 = vld [vmem:[%s0 + $0x68] sm:$0xff]
    %v86 = vld [vmem:[%s0 + $0x70] sm:$0xff]
    %v87 = vld [vmem:[%s0 + $0x78] sm:$0xff]
    %v88 = vld [vmem:[%s0 + $0x80] sm:$0x3]
    %v89 = vld [vmem:[%s0 + $0x88] sm:$0x3]
    %v90 = vpack.c.bf16 %v74, %v72
    %v91 = vpack.c.bf16 %v75, %v73
    %v92 = vpack.c.bf16 %v78, %v76
    %v93 = vpack.c.bf16 %v79, %v77
    %v94 = vpack.c.bf16 %v82, %v80
    %v95 = vpack.c.bf16 %v83, %v81
    %v96 = vpack.c.bf16 %v86, %v84
    %v97 = vpack.c.bf16 %v87, %v85
    %v98 = vpack.c.bf16 %v88, %v88
    %v99 = vpack.c.bf16 %v89, %v89
    %v100 = vld [vmem:[#allocation2] sm:$0xff]
    %v101 = vld [vmem:[#allocation2 + $0x8] sm:$0xff]
    %v102 = vld [vmem:[#allocation2 + $0x10] sm:$0xff]
    %v103 = vld [vmem:[#allocation2 + $0x18] sm:$0xff]
    %v104 = vld [vmem:[#allocation2 + $0x20] sm:$0xff]
    %v105 = vld [vmem:[#allocation2 + $0x28] sm:$0xff]
    %v106 = vld [vmem:[#allocation2 + $0x30] sm:$0xff]
    %v107 = vld [vmem:[#allocation2 + $0x38] sm:$0xff]
    %v108 = vld [vmem:[#allocation2 + $0x40] sm:$0xff]
    %v109 = vld [vmem:[#allocation2 + $0x48] sm:$0xff]
    %v110 = vld [vmem:[#allocation2 + $0x50] sm:$0xff]
    %v111 = vld [vmem:[#allocation2 + $0x58] sm:$0xff]
    %v112 = vld [vmem:[#allocation2 + $0x60] sm:$0xff]
    %v113 = vld [vmem:[#allocation2 + $0x68] sm:$0xff]
    %v114 = vld [vmem:[#allocation2 + $0x70] sm:$0xff]
    %v115 = vld [vmem:[#allocation2 + $0x78] sm:$0xff]
    %v116 = vld [vmem:[#allocation2 + $0x80] sm:$0xff]
    %v117 = vld [vmem:[#allocation2 + $0x88] sm:$0xff]
    %v118 = vld [vmem:[#allocation2 + $0x90] sm:$0xff]
    %v119 = vld [vmem:[#allocation2 + $0x98] sm:$0xff]
    %v120 = vld [vmem:[#allocation2 + $0xa0] sm:$0xff]
    %v121 = vld [vmem:[#allocation2 + $0xa8] sm:$0xff]
    %v122 = vld [vmem:[#allocation2 + $0xb0] sm:$0xff]
    %v123 = vld [vmem:[#allocation2 + $0xb8] sm:$0xff]
    %v124 = vld [vmem:[#allocation2 + $0xc0] sm:$0xff]
    %v125 = vld [vmem:[#allocation2 + $0xc8] sm:$0xff]
    %v126 = vld [vmem:[#allocation2 + $0xd0] sm:$0xff]
    %v127 = vld [vmem:[#allocation2 + $0xd8] sm:$0xff]
    %v128 = vld [vmem:[#allocation2 + $0xe0] sm:$0xff]
    %v129 = vld [vmem:[#allocation2 + $0xe8] sm:$0xff]
    %v130 = vld [vmem:[#allocation2 + $0xf0] sm:$0xff]
    %v131 = vld [vmem:[#allocation2 + $0xf8] sm:$0xff]
    %v132 = vld [vmem:[#allocation2 + $0x100] sm:$0xff]
    %v133 = vld [vmem:[#allocation2 + $0x108] sm:$0xff]
    %v134 = vld [vmem:[#allocation2 + $0x110] sm:$0xff]
    %v135 = vld [vmem:[#allocation2 + $0x118] sm:$0xff]
    %v136 = vld [vmem:[#allocation2 + $0x120] sm:$0xff]
    %v137 = vld [vmem:[#allocation2 + $0x128] sm:$0xff]
    %v138 = vld [vmem:[#allocation2 + $0x130] sm:$0xff]
    %v139 = vld [vmem:[#allocation2 + $0x138] sm:$0xff]
    %v140 = vld [vmem:[#allocation2 + $0x140] sm:$0xff]
    %v141 = vld [vmem:[#allocation2 + $0x148] sm:$0xff]
    %v142 = vld [vmem:[#allocation2 + $0x150] sm:$0xff]
    %v143 = vld [vmem:[#allocation2 + $0x158] sm:$0xff]
    %v144 = vld [vmem:[#allocation2 + $0x160] sm:$0xff]
    %v145 = vld [vmem:[#allocation2 + $0x168] sm:$0xff]
    %v146 = vld [vmem:[#allocation2 + $0x170] sm:$0xff]
    %v147 = vld [vmem:[#allocation2 + $0x178] sm:$0xff]
    %v148 = vld [vmem:[#allocation2 + $0x180] sm:$0xff]
    %v149 = vld [vmem:[#allocation2 + $0x188] sm:$0xff]
    %v150 = vld [vmem:[#allocation2 + $0x190] sm:$0xff]
    %v151 = vld [vmem:[#allocation2 + $0x198] sm:$0xff]
    %v152 = vld [vmem:[#allocation2 + $0x1a0] sm:$0xff]
    %v153 = vld [vmem:[#allocation2 + $0x1a8] sm:$0xff]
    %v154 = vld [vmem:[#allocation2 + $0x1b0] sm:$0xff]
    %v155 = vld [vmem:[#allocation2 + $0x1b8] sm:$0xff]
    %v156 = vld [vmem:[#allocation2 + $0x1c0] sm:$0xff]
    %v157 = vld [vmem:[#allocation2 + $0x1c8] sm:$0xff]
    %v158 = vld [vmem:[#allocation2 + $0x1d0] sm:$0xff]
    %v159 = vld [vmem:[#allocation2 + $0x1d8] sm:$0xff]
    %v160 = vld [vmem:[#allocation2 + $0x1e0] sm:$0xff]
    %v161 = vld [vmem:[#allocation2 + $0x1e8] sm:$0xff]
    %v162 = vld [vmem:[#allocation2 + $0x1f0] sm:$0xff]
    %v163 = vld [vmem:[#allocation2 + $0x1f8] sm:$0xff]
    %v164 = vpack.c.bf16 %v102, %v100
    %v165 = vpack.c.bf16 %v103, %v101
    %v166 = vpack.c.bf16 %v106, %v104
    %v167 = vpack.c.bf16 %v107, %v105
    %v168 = vpack.c.bf16 %v110, %v108
    %v169 = vpack.c.bf16 %v111, %v109
    %v170 = vpack.c.bf16 %v114, %v112
    %v171 = vpack.c.bf16 %v115, %v113
    %v172 = vpack.c.bf16 %v118, %v116
    %v173 = vpack.c.bf16 %v119, %v117
    %v174 = vpack.c.bf16 %v122, %v120
    %v175 = vpack.c.bf16 %v123, %v121
    %v176 = vpack.c.bf16 %v126, %v124
    %v177 = vpack.c.bf16 %v127, %v125
    %v178 = vpack.c.bf16 %v130, %v128
    %v179 = vpack.c.bf16 %v131, %v129
    %v180 = vpack.c.bf16 %v134, %v132
    %v181 = vpack.c.bf16 %v135, %v133
    %v182 = vpack.c.bf16 %v138, %v136
    %v183 = vpack.c.bf16 %v139, %v137
    %v184 = vpack.c.bf16 %v142, %v140
    %v185 = vpack.c.bf16 %v143, %v141
    %v186 = vpack.c.bf16 %v146, %v144
    %v187 = vpack.c.bf16 %v147, %v145
    %v188 = vpack.c.bf16 %v150, %v148
    %v189 = vpack.c.bf16 %v151, %v149
    %v190 = vpack.c.bf16 %v154, %v152
    %v191 = vpack.c.bf16 %v155, %v153
    %v192 = vpack.c.bf16 %v158, %v156
    %v193 = vpack.c.bf16 %v159, %v157
    %v194 = vpack.c.bf16 %v162, %v160
    %v195 = vpack.c.bf16 %v163, %v161
    %v196 = vld [vmem:[#allocation4] sm:$0x3]
    %v198 = vlaneseq
    %v199 = vshrl.u32 %v198, 7
    %v200 = vsub.s32 0, %v199
    %v201 = vrot.slane %v196, %v200
    %v202 = vlaneseq
    %v203 = vshrl.u32 %v202, 7
    %v204 = vsub.s32 1, %v203
    %v205 = vrot.slane %v196, %v204
    %208 = vmatprep.subr.bf16.mxu0 %v165
    %209 = vmatpush1.bf16.msra.mxu0 %v164
    %210 = vmatprep.subr.bf16.mxu0 %v167
    %211 = vmatpush1.bf16.msra.mxu0 %v166
    %212 = vmatprep.subr.bf16.mxu0 %v169
    %213 = vmatpush1.bf16.msra.mxu0 %v168
    %214 = vmatprep.subr.bf16.mxu0 %v171
    %215 = vmatpush1.bf16.msra.mxu0 %v170
    %216 = vmatprep.subr.bf16.mxu0 %v173
    %217 = vmatpush1.bf16.msra.mxu0 %v172
    %218 = vmatprep.subr.bf16.mxu0 %v175
    %219 = vmatpush1.bf16.msra.mxu0 %v174
    %220 = vmatprep.subr.bf16.mxu0 %v177
    %221 = vmatpush1.bf16.msra.mxu0 %v176
    %222 = vmatprep.subr.bf16.mxu0 %v179
    %223 = vmatpush1.bf16.msra.mxu0 %v178
    %224 = vmatprep.subr.bf16.mxu0 %v181
    %225 = vmatpush1.bf16.msra.mxu0 %v180
    %226 = vmatprep.subr.bf16.mxu0 %v183
    %227 = vmatpush1.bf16.msra.mxu0 %v182
    %228 = vmatprep.subr.bf16.mxu0 %v185
    %229 = vmatpush1.bf16.msra.mxu0 %v184
    %230 = vmatprep.subr.bf16.mxu0 %v187
    %231 = vmatpush1.bf16.msra.mxu0 %v186
    %232 = vmatprep.subr.bf16.mxu0 %v189
    %233 = vmatpush1.bf16.msra.mxu0 %v188
    %234 = vmatprep.subr.bf16.mxu0 %v191
    %235 = vmatpush1.bf16.msra.mxu0 %v190
    %236 = vmatprep.subr.bf16.mxu0 %v193
    %237 = vmatpush1.bf16.msra.mxu0 %v192
    %238 = vmatprep.subr.bf16.mxu0 %v195
    %239 = vmatpush1.bf16.msra.mxu0 %v194
    %240 = vmatprep.mubr.bf16.mxu0 %v91
    %241 = vmatmul.mubr.bf16.gmra.mrb[0].mxu0 %v90
    %v242 = vpop.f32.mrb[0].mxu0
    %v243 = vadd.f32 %v201, %v242
    %v244 = vpop.f32.mrb[0].mxu0
    %v245 = vadd.f32 %v205, %v244
    %v246 = vpop.f32.mrb[0].mxu0
    %v247 = vadd.f32 %v201, %v246
    %v248 = vpop.f32.mrb[0].mxu0
    %v249 = vadd.f32 %v205, %v248
    %250 = vmatprep.mubr.bf16.mxu0 %v93
    %251 = vmatmul.mubr.bf16.gmra.mrb[0].mxu0 %v92
    %v252 = vpop.f32.mrb[0].mxu0
    %v253 = vadd.f32 %v201, %v252
    %v254 = vpop.f32.mrb[0].mxu0
    %v255 = vadd.f32 %v205, %v254
    %v256 = vpop.f32.mrb[0].mxu0
    %v257 = vadd.f32 %v201, %v256
    %v258 = vpop.f32.mrb[0].mxu0
    %v259 = vadd.f32 %v205, %v258
    %260 = vmatprep.mubr.bf16.mxu0 %v95
    %261 = vmatmul.mubr.bf16.gmra.mrb[0].mxu0 %v94
    %v262 = vpop.f32.mrb[0].mxu0
    %v263 = vadd.f32 %v201, %v262
    %v264 = vpop.f32.mrb[0].mxu0
    %v265 = vadd.f32 %v205, %v264
    %v266 = vpop.f32.mrb[0].mxu0
    %v267 = vadd.f32 %v201, %v266
    %v268 = vpop.f32.mrb[0].mxu0
    %v269 = vadd.f32 %v205, %v268
    %270 = vmatprep.mubr.bf16.mxu0 %v97
    %271 = vmatmul.mubr.bf16.gmra.mrb[0].mxu0 %v96
    %v272 = vpop.f32.mrb[0].mxu0
    %v273 = vadd.f32 %v201, %v272
    %v274 = vpop.f32.mrb[0].mxu0
    %v275 = vadd.f32 %v205, %v274
    %v276 = vpop.f32.mrb[0].mxu0
    %v277 = vadd.f32 %v201, %v276
    %v278 = vpop.f32.mrb[0].mxu0
    %v279 = vadd.f32 %v205, %v278
    %280 = vmatprep.mubr.bf16.mxu0 %v99
    %281 = vmatmul.mubr.bf16.gmra.mrb[0].mxu0 %v98
    %v282 = vpop.f32.mrb[0].mxu0
    %v283 = vadd.f32 %v201, %v282
    %v284 = vpop.f32.mrb[0].mxu0
    %v285 = vadd.f32 %v205, %v284
    %v286 = vpop.f32.mrb[0].mxu0
    %v287 = vpop.f32.mrb[0].mxu0
    %288 = vdwg.mxu0
    %v289 = vld [vmem:[%s1] sm:$0xff]
    %v290 = vld [vmem:[%s1 + $0x8] sm:$0xff]
    %v291 = vld [vmem:[%s1 + $0x10] sm:$0xff]
    %v292 = vld [vmem:[%s1 + $0x18] sm:$0xff]
    %v293 = vld [vmem:[%s1 + $0x20] sm:$0xff]
    %v294 = vld [vmem:[%s1 + $0x28] sm:$0xff]
    %v295 = vld [vmem:[%s1 + $0x30] sm:$0xff]
    %v296 = vld [vmem:[%s1 + $0x38] sm:$0xff]
    %v297 = vld [vmem:[%s1 + $0x40] sm:$0xff]
    %v298 = vld [vmem:[%s1 + $0x48] sm:$0xff]
    %v299 = vld [vmem:[%s1 + $0x50] sm:$0xff]
    %v300 = vld [vmem:[%s1 + $0x58] sm:$0xff]
    %v301 = vld [vmem:[%s1 + $0x60] sm:$0xff]
    %v302 = vld [vmem:[%s1 + $0x68] sm:$0xff]
    %v303 = vld [vmem:[%s1 + $0x70] sm:$0xff]
    %v304 = vld [vmem:[%s1 + $0x78] sm:$0xff]
    %v305 = vld [vmem:[%s1 + $0x80] sm:$0x3]
    %v306 = vld [vmem:[%s1 + $0x88] sm:$0x3]
    %v307 = vadd.f32 %v243, %v289
    %v308 = vadd.f32 %v245, %v290
    %v309 = vadd.f32 %v247, %v291
    %v310 = vadd.f32 %v249, %v292
    %v311 = vadd.f32 %v253, %v293
    %v312 = vadd.f32 %v255, %v294
    %v313 = vadd.f32 %v257, %v295
    %v314 = vadd.f32 %v259, %v296
    %v315 = vadd.f32 %v263, %v297
    %v316 = vadd.f32 %v265, %v298
    %v317 = vadd.f32 %v267, %v299
    %v318 = vadd.f32 %v269, %v300
    %v319 = vadd.f32 %v273, %v301
    %v320 = vadd.f32 %v275, %v302
    %v321 = vadd.f32 %v277, %v303
    %v322 = vadd.f32 %v279, %v304
    %v323 = vadd.f32 %v283, %v305
    %v324 = vadd.f32 %v285, %v306
    %v325 = vld [vmem:[#allocation6] sm:$0x3]
    %v326 = vld [vmem:[#allocation7] sm:$0x3]
    %v327 = vadd.f32 %v307, %v308
    %328 = vadd.xlane.f32.xlu0 %v327
    %v329 = vpop.xlane.xlu0 %328
    %v330 = vadd.f32 %v309, %v310
    %331 = vadd.xlane.f32.xlu0 %v330
    %v332 = vpop.xlane.xlu0 %331
    %v333 = vadd.f32 %v311, %v312
    %334 = vadd.xlane.f32.xlu0 %v333
    %v335 = vpop.xlane.xlu0 %334
    %v336 = vadd.f32 %v313, %v314
    %337 = vadd.xlane.f32.xlu0 %v336
    %v338 = vpop.xlane.xlu0 %337
    %v339 = vadd.f32 %v315, %v316
    %340 = vadd.xlane.f32.xlu0 %v339
    %v341 = vpop.xlane.xlu0 %340
    %v342 = vadd.f32 %v317, %v318
    %343 = vadd.xlane.f32.xlu0 %v342
    %v344 = vpop.xlane.xlu0 %343
    %v345 = vadd.f32 %v319, %v320
    %346 = vadd.xlane.f32.xlu0 %v345
    %v347 = vpop.xlane.xlu0 %346
    %v348 = vadd.f32 %v321, %v322
    %349 = vadd.xlane.f32.xlu0 %v348
    %v350 = vpop.xlane.xlu0 %349
    %vm351 = vcmask 1041408
    %v352 = vsel %vm351, %v323, 0.0
    %v353 = vsel %vm351, %v324, 0.0
    %v354 = vadd.f32 %v352, %v353
    %355 = vadd.xlane.f32.xlu0 %v354
    %v356 = vpop.xlane.xlu0 %355
    %v357 = vrcp.pop 256.0
    %v358 = vmul.f32 %v329, %v357
    %v359 = vmul.f32 %v332, %v357
    %v360 = vmul.f32 %v335, %v357
    %v361 = vmul.f32 %v338, %v357
    %v362 = vmul.f32 %v341, %v357
    %v363 = vmul.f32 %v344, %v357
    %v364 = vmul.f32 %v347, %v357
    %v365 = vmul.f32 %v350, %v357
    %v366 = vmul.f32 %v356, %v357
    %v367 = vsub.f32 %v307, %v358
    %v368 = vsub.f32 %v308, %v358
    %v369 = vsub.f32 %v309, %v359
    %v370 = vsub.f32 %v310, %v359
    %v371 = vsub.f32 %v311, %v360
    %v372 = vsub.f32 %v312, %v360
    %v373 = vsub.f32 %v313, %v361
    %v374 = vsub.f32 %v314, %v361
    %v375 = vsub.f32 %v315, %v362
    %v376 = vsub.f32 %v316, %v362
    %v377 = vsub.f32 %v317, %v363
    %v378 = vsub.f32 %v318, %v363
    %v379 = vsub.f32 %v319, %v364
    %v380 = vsub.f32 %v320, %v364
    %v381 = vsub.f32 %v321, %v365
    %v382 = vsub.f32 %v322, %v365
    %v383 = vsub.f32 %v323, %v366
    %v384 = vsub.f32 %v324, %v366
    %v385 = vmul.f32 %v367, %v367
    %v386 = vmul.f32 %v368, %v368
    %v387 = vmul.f32 %v369, %v369
    %v388 = vmul.f32 %v370, %v370
    %v389 = vmul.f32 %v371, %v371
    %v390 = vmul.f32 %v372, %v372
    %v391 = vmul.f32 %v373, %v373
    %v392 = vmul.f32 %v374, %v374
    %v393 = vmul.f32 %v375, %v375
    %v394 = vmul.f32 %v376, %v376
    %v395 = vmul.f32 %v377, %v377
    %v396 = vmul.f32 %v378, %v378
    %v397 = vmul.f32 %v379, %v379
    %v398 = vmul.f32 %v380, %v380
    %v399 = vmul.f32 %v381, %v381
    %v400 = vmul.f32 %v382, %v382
    %v401 = vmul.f32 %v383, %v383
    %v402 = vmul.f32 %v384, %v384
    %v403 = vadd.f32 %v385, %v386
    %404 = vadd.xlane.f32.xlu0 %v403
    %v405 = vpop.xlane.xlu0 %404
    %v406 = vadd.f32 %v387, %v388
    %407 = vadd.xlane.f32.xlu0 %v406
    %v408 = vpop.xlane.xlu0 %407
    %v409 = vadd.f32 %v389, %v390
    %410 = vadd.xlane.f32.xlu0 %v409
    %v411 = vpop.xlane.xlu0 %410
    %v412 = vadd.f32 %v391, %v392
    %413 = vadd.xlane.f32.xlu0 %v412
    %v414 = vpop.xlane.xlu0 %413
    %v415 = vadd.f32 %v393, %v394
    %416 = vadd.xlane.f32.xlu0 %v415
    %v417 = vpop.xlane.xlu0 %416
    %v418 = vadd.f32 %v395, %v396
    %419 = vadd.xlane.f32.xlu0 %v418
    %v420 = vpop.xlane.xlu0 %419
    %v421 = vadd.f32 %v397, %v398
    %422 = vadd.xlane.f32.xlu0 %v421
    %v423 = vpop.xlane.xlu0 %422
    %v424 = vadd.f32 %v399, %v400
    %425 = vadd.xlane.f32.xlu0 %v424
    %v426 = vpop.xlane.xlu0 %425
    %v427 = vsel %vm351, %v401, 0.0
    %v428 = vsel %vm351, %v402, 0.0
    %v429 = vadd.f32 %v427, %v428
    %430 = vadd.xlane.f32.xlu0 %v429
    %v431 = vpop.xlane.xlu0 %430
    %v432 = vmul.f32 %v405, %v357
    %v433 = vmul.f32 %v408, %v357
    %v434 = vmul.f32 %v411, %v357
    %v435 = vmul.f32 %v414, %v357
    %v436 = vmul.f32 %v417, %v357
    %v437 = vmul.f32 %v420, %v357
    %v438 = vmul.f32 %v423, %v357
    %v439 = vmul.f32 %v426, %v357
    %v440 = vmul.f32 %v431, %v357
    %v441 = vadd.f32 %v432, 1e-05
    %v442 = vadd.f32 %v433, 1e-05
    %v443 = vadd.f32 %v434, 1e-05
    %v444 = vadd.f32 %v435, 1e-05
    %v445 = vadd.f32 %v436, 1e-05
    %v446 = vadd.f32 %v437, 1e-05
    %v447 = vadd.f32 %v438, 1e-05
    %v448 = vadd.f32 %v439, 1e-05
    %v449 = vadd.f32 %v440, 1e-05
    %v450 = vrsqrt.pop %v441
    %v451 = vrsqrt.pop %v442
    %v452 = vrsqrt.pop %v443
    %v453 = vrsqrt.pop %v444
    %v454 = vrsqrt.pop %v445
    %v455 = vrsqrt.pop %v446
    %v456 = vrsqrt.pop %v447
    %v457 = vrsqrt.pop %v448
    %v458 = vrsqrt.pop %v449
    %v459 = vmul.f32 %v367, %v450
    %v460 = vmul.f32 %v368, %v450
    %v461 = vmul.f32 %v369, %v451
    %v462 = vmul.f32 %v370, %v451
    %v463 = vmul.f32 %v371, %v452
    %v464 = vmul.f32 %v372, %v452
    %v465 = vmul.f32 %v373, %v453
    %v466 = vmul.f32 %v374, %v453
    %v467 = vmul.f32 %v375, %v454
    %v468 = vmul.f32 %v376, %v454
    %v469 = vmul.f32 %v377, %v455
    %v470 = vmul.f32 %v378, %v455
    %v471 = vmul.f32 %v379, %v456
    %v472 = vmul.f32 %v380, %v456
    %v473 = vmul.f32 %v381, %v457
    %v474 = vmul.f32 %v382, %v457
    %v475 = vmul.f32 %v383, %v458
    %v476 = vmul.f32 %v384, %v458
    %v478 = vlaneseq
    %v479 = vshrl.u32 %v478, 7
    %v480 = vsub.s32 0, %v479
    %v481 = vrot.slane %v325, %v480
    %v482 = vlaneseq
    %v483 = vshrl.u32 %v482, 7
    %v484 = vsub.s32 1, %v483
    %v485 = vrot.slane %v325, %v484
    %v488 = vmul.f32 %v459, %v481
    %v489 = vmul.f32 %v460, %v485
    %v490 = vmul.f32 %v461, %v481
    %v491 = vmul.f32 %v462, %v485
    %v492 = vmul.f32 %v463, %v481
    %v493 = vmul.f32 %v464, %v485
    %v494 = vmul.f32 %v465, %v481
    %v495 = vmul.f32 %v466, %v485
    %v496 = vmul.f32 %v467, %v481
    %v497 = vmul.f32 %v468, %v485
    %v498 = vmul.f32 %v469, %v481
    %v499 = vmul.f32 %v470, %v485
    %v500 = vmul.f32 %v471, %v481
    %v501 = vmul.f32 %v472, %v485
    %v502 = vmul.f32 %v473, %v481
    %v503 = vmul.f32 %v474, %v485
    %v504 = vmul.f32 %v475, %v481
    %v505 = vmul.f32 %v476, %v485
    %v507 = vlaneseq
    %v508 = vshrl.u32 %v507, 7
    %v509 = vsub.s32 0, %v508
    %v510 = vrot.slane %v326, %v509
    %v511 = vlaneseq
    %v512 = vshrl.u32 %v511, 7
    %v513 = vsub.s32 1, %v512
    %v514 = vrot.slane %v326, %v513
    %v517 = vadd.f32 %v488, %v510
    %v518 = vadd.f32 %v489, %v514
    %v519 = vadd.f32 %v490, %v510
    %v520 = vadd.f32 %v491, %v514
    %v521 = vadd.f32 %v492, %v510
    %v522 = vadd.f32 %v493, %v514
    %v523 = vadd.f32 %v494, %v510
    %v524 = vadd.f32 %v495, %v514
    %v525 = vadd.f32 %v496, %v510
    %v526 = vadd.f32 %v497, %v514
    %v527 = vadd.f32 %v498, %v510
    %v528 = vadd.f32 %v499, %v514
    %v529 = vadd.f32 %v500, %v510
    %v530 = vadd.f32 %v501, %v514
    %v531 = vadd.f32 %v502, %v510
    %v532 = vadd.f32 %v503, %v514
    %v533 = vadd.f32 %v504, %v510
    %v534 = vadd.f32 %v505, %v514
    %535 = vst [vmem:[%s6] sm:$0xff] %v517
    %536 = vst [vmem:[%s6 + $0x8] sm:$0xff] %v518
    %537 = vst [vmem:[%s6 + $0x10] sm:$0xff] %v519
    %538 = vst [vmem:[%s6 + $0x18] sm:$0xff] %v520
    %539 = vst [vmem:[%s6 + $0x20] sm:$0xff] %v521
    %540 = vst [vmem:[%s6 + $0x28] sm:$0xff] %v522
    %541 = vst [vmem:[%s6 + $0x30] sm:$0xff] %v523
    %542 = vst [vmem:[%s6 + $0x38] sm:$0xff] %v524
    %543 = vst [vmem:[%s6 + $0x40] sm:$0xff] %v525
    %544 = vst [vmem:[%s6 + $0x48] sm:$0xff] %v526
    %545 = vst [vmem:[%s6 + $0x50] sm:$0xff] %v527
    %546 = vst [vmem:[%s6 + $0x58] sm:$0xff] %v528
    %547 = vst [vmem:[%s6 + $0x60] sm:$0xff] %v529
    %548 = vst [vmem:[%s6 + $0x68] sm:$0xff] %v530
    %549 = vst [vmem:[%s6 + $0x70] sm:$0xff] %v531
    %550 = vst [vmem:[%s6 + $0x78] sm:$0xff] %v532
    %551 = vst [vmem:[%s6 + $0x80] sm:$0x3] %v533
    %552 = vst [vmem:[%s6 + $0x88] sm:$0x3] %v534
    // Predicated region
    $region42: #{forward.26} parent=1 // pred_check
      _
    $region43: #{forward.26} parent=1 // pred_check_branch
      %554 = sbr.rel (0) target = $region45
    $region44: #{forward.26} parent=1 // pred_region
      _
    $region45: #{forward.26} parent=1 // pred_fallthru
      _
    // Predicated region
    $region46: #{forward.26} parent=1 // pred_check
      _
    $region47: #{forward.26} parent=1 // pred_check_branch
      %556 = sbr.rel (0) target = $region49
    $region48: #{forward.26} parent=1 // pred_region
      _
    $region49: #{forward.26} parent=1 // pred_fallthru
      _
    %557 = vsyncpa [#allocation3], 1
    %558 = vsyncpa [#allocation5], 1
    %559 = vsyncpa [#allocation8], 1

// kernel: forward.24
$region0: #{forward.24}
  #allocation0 [shape = 'u32[]', space=smem, size = 0x4, offset = 0x4, fixed_abs, tag = 'smem constant byte address 0x4 - core index']
  #allocation1 [shape = 'u32[144,128]{1,0:T(1,128)}', space=vmem, size = 0x12000, scoped, tag = 'internal scratch']
  %s0 = inlined_call_operand.vmem [shape: f32[66,256], index: 0, kind: input, shape index: {}]
  %s1 = inlined_call_operand.hbm [shape: f32[256,768], index: 1, kind: input, shape index: {}]
  %s2 = inlined_call_operand.vmem [shape: f32[1,768], index: 2, kind: input, shape index: {}]
  %s3 = inlined_call_operand.vmem [shape: f32[66,768], index: 3, kind: output, shape index: {}]
  %s4 = sld [smem:[#allocation0]]
  $region26: #{forward.24} parent=0
    _
  %s6 = ssub.s32 1, %s4
  %s7 = scalar_select 0, %s6, %s4
  $region1: #{forward.24} parent=0
    #allocation2 [shape = 'u8[786432]{0}', space=vmem, size = 0xc0000, scoped, tag = 'input window, operand 1, single buffered']
    #allocation3 [shape = 's32[1]{0}', space=sflag, size = 0x4, scoped, tag = 'scoped memory for forward.24']
    %8 = vsyncpa [#allocation3], 0
    // Predicated region
    $region2: #{forward.24} parent=1 // pred_check
      _
    $region3: #{forward.24} parent=1 // pred_check_branch
      %10 = sbr.rel (0) target = $region5
    $region4: #{forward.24} parent=1 // pred_region
      _
    $region5: #{forward.24} parent=1 // pred_fallthru
      _
    // Predicated region
    $region6: #{forward.24} parent=1 // pred_check
      _
    $region7: #{forward.24} parent=1 // pred_check_branch
      %12 = sbr.rel (0) target = $region9
    $region8: #{forward.24} parent=1 // pred_region
      %s14 = ssub.s32 24576, 24576
      %15 = vsyncadd [#allocation3], %s14
      %s16 = sshll.u32 [#allocation2], 4
      %s17 = int_to_ptr.vmem [resolvable:$true] %s16
      %22 = dma.hbm_to_vmem [thread:$0]  %s1, 24576, %s17, [#allocation3], 768, 768, 48
    $region9: #{forward.24} parent=1 // pred_fallthru
      _
    // Predicated region
    $region10: #{forward.24} parent=1 // pred_check
      _
    $region11: #{forward.24} parent=1 // pred_check_branch
      %24 = sbr.rel (0) target = $region13
    $region12: #{forward.24} parent=1 // pred_region
      _
    $region13: #{forward.24} parent=1 // pred_fallthru
      _
    // Predicated region
    $region14: #{forward.24} parent=1 // pred_check
      _
    $region15: #{forward.24} parent=1 // pred_check_branch
      %26 = sbr.rel (0) target = $region17
    $region16: #{forward.24} parent=1 // pred_region
      %27 = dma.done [#allocation3], 24576
    $region17: #{forward.24} parent=1 // pred_fallthru
      _
    %v28 = vld [vmem:[%s0] sm:$0xff]
    %v29 = vld [vmem:[%s0 + $0x8] sm:$0xff]
    %v30 = vld [vmem:[%s0 + $0x10] sm:$0xff]
    %v31 = vld [vmem:[%s0 + $0x18] sm:$0xff]
    %v32 = vld [vmem:[%s0 + $0x20] sm:$0xff]
    %v33 = vld [vmem:[%s0 + $0x28] sm:$0xff]
    %v34 = vld [vmem:[%s0 + $0x30] sm:$0xff]
    %v35 = vld [vmem:[%s0 + $0x38] sm:$0xff]
    %v36 = vld [vmem:[%s0 + $0x40] sm:$0xff]
    %v37 = vld [vmem:[%s0 + $0x48] sm:$0xff]
    %v38 = vld [vmem:[%s0 + $0x50] sm:$0xff]
    %v39 = vld [vmem:[%s0 + $0x58] sm:$0xff]
    %v40 = vld [vmem:[%s0 + $0x60] sm:$0xff]
    %v41 = vld [vmem:[%s0 + $0x68] sm:$0xff]
    %v42 = vld [vmem:[%s0 + $0x70] sm:$0xff]
    %v43 = vld [vmem:[%s0 + $0x78] sm:$0xff]
    %v44 = vld [vmem:[%s0 + $0x80] sm:$0x3]
    %v45 = vld [vmem:[%s0 + $0x88] sm:$0x3]
    %v46 = vpack.c.bf16 %v30, %v28
    %v47 = vpack.c.bf16 %v31, %v29
    %v48 = vpack.c.bf16 %v34, %v32
    %v49 = vpack.c.bf16 %v35, %v33
    %v50 = vpack.c.bf16 %v38, %v36
    %v51 = vpack.c.bf16 %v39, %v37
    %v52 = vpack.c.bf16 %v42, %v40
    %v53 = vpack.c.bf16 %v43, %v41
    %v54 = vpack.c.bf16 %v44, %v44
    %v55 = vpack.c.bf16 %v45, %v45
    %v56 = vld [vmem:[#allocation2] sm:$0xff]
    %v57 = vld [vmem:[#allocation2 + $0x8] sm:$0xff]
    %v58 = vld [vmem:[#allocation2 + $0x10] sm:$0xff]
    %v59 = vld [vmem:[#allocation2 + $0x18] sm:$0xff]
    %v60 = vld [vmem:[#allocation2 + $0x20] sm:$0xff]
    %v61 = vld [vmem:[#allocation2 + $0x28] sm:$0xff]
    %v62 = vld [vmem:[#allocation2 + $0x30] sm:$0xff]
    %v63 = vld [vmem:[#allocation2 + $0x38] sm:$0xff]
    %v64 = vld [vmem:[#allocation2 + $0x40] sm:$0xff]
    %v65 = vld [vmem:[#allocation2 + $0x48] sm:$0xff]
    %v66 = vld [vmem:[#allocation2 + $0x50] sm:$0xff]
    %v67 = vld [vmem:[#allocation2 + $0x58] sm:$0xff]
    %v68 = vld [vmem:[#allocation2 + $0x60] sm:$0xff]
    %v69 = vld [vmem:[#allocation2 + $0x68] sm:$0xff]
    %v70 = vld [vmem:[#allocation2 + $0x70] sm:$0xff]
    %v71 = vld [vmem:[#allocation2 + $0x78] sm:$0xff]
    %v72 = vld [vmem:[#allocation2 + $0x80] sm:$0xff]
    %v73 = vld [vmem:[#allocation2 + $0x88] sm:$0xff]
    %v74 = vld [vmem:[#allocation2 + $0x90] sm:$0xff]
    %v75 = vld [vmem:[#allocation2 + $0x98] sm:$0xff]
    %v76 = vld [vmem:[#allocation2 + $0xa0] sm:$0xff]
    %v77 = vld [vmem:[#allocation2 + $0xa8] sm:$0xff]
    %v78 = vld [vmem:[#allocation2 + $0xb0] sm:$0xff]
    %v79 = vld [vmem:[#allocation2 + $0xb8] sm:$0xff]
    %v80 = vld [vmem:[#allocation2 + $0xc0] sm:$0xff]
    %v81 = vld [vmem:[#allocation2 + $0xc8] sm:$0xff]
    %v82 = vld [vmem:[#allocation2 + $0xd0] sm:$0xff]
    %v83 = vld [vmem:[#allocation2 + $0xd8] sm:$0xff]
    %v84 = vld [vmem:[#allocation2 + $0xe0] sm:$0xff]
    %v85 = vld [vmem:[#allocation2 + $0xe8] sm:$0xff]
    %v86 = vld [vmem:[#allocation2 + $0xf0] sm:$0xff]
    %v87 = vld [vmem:[#allocation2 + $0xf8] sm:$0xff]
    %v88 = vld [vmem:[#allocation2 + $0x100] sm:$0xff]
    %v89 = vld [vmem:[#allocation2 + $0x108] sm:$0xff]
    %v90 = vld [vmem:[#allocation2 + $0x110] sm:$0xff]
    %v91 = vld [vmem:[#allocation2 + $0x118] sm:$0xff]
    %v92 = vld [vmem:[#allocation2 + $0x120] sm:$0xff]
    %v93 = vld [vmem:[#allocation2 + $0x128] sm:$0xff]
    %v94 = vld [vmem:[#allocation2 + $0x130] sm:$0xff]
    %v95 = vld [vmem:[#allocation2 + $0x138] sm:$0xff]
    %v96 = vld [vmem:[#allocation2 + $0x140] sm:$0xff]
    %v97 = vld [vmem:[#allocation2 + $0x148] sm:$0xff]
    %v98 = vld [vmem:[#allocation2 + $0x150] sm:$0xff]
    %v99 = vld [vmem:[#allocation2 + $0x158] sm:$0xff]
    %v100 = vld [vmem:[#allocation2 + $0x160] sm:$0xff]
    %v101 = vld [vmem:[#allocation2 + $0x168] sm:$0xff]
    %v102 = vld [vmem:[#allocation2 + $0x170] sm:$0xff]
    %v103 = vld [vmem:[#allocation2 + $0x178] sm:$0xff]
    %v104 = vld [vmem:[#allocation2 + $0x180] sm:$0xff]
    %v105 = vld [vmem:[#allocation2 + $0x188] sm:$0xff]
    %v106 = vld [vmem:[#allocation2 + $0x190] sm:$0xff]
    %v107 = vld [vmem:[#allocation2 + $0x198] sm:$0xff]
    %v108 = vld [vmem:[#allocation2 + $0x1a0] sm:$0xff]
    %v109 = vld [vmem:[#allocation2 + $0x1a8] sm:$0xff]
    %v110 = vld [vmem:[#allocation2 + $0x1b0] sm:$0xff]
    %v111 = vld [vmem:[#allocation2 + $0x1b8] sm:$0xff]
    %v112 = vld [vmem:[#allocation2 + $0x1c0] sm:$0xff]
    %v113 = vld [vmem:[#allocation2 + $0x1c8] sm:$0xff]
    %v114 = vld [vmem:[#allocation2 + $0x1d0] sm:$0xff]
    %v115 = vld [vmem:[#allocation2 + $0x1d8] sm:$0xff]
    %v116 = vld [vmem:[#allocation2 + $0x1e0] sm:$0xff]
    %v117 = vld [vmem:[#allocation2 + $0x1e8] sm:$0xff]
    %v118 = vld [vmem:[#allocation2 + $0x1f0] sm:$0xff]
    %v119 = vld [vmem:[#allocation2 + $0x1f8] sm:$0xff]
    %v120 = vld [vmem:[#allocation2 + $0x200] sm:$0xff]
    %v121 = vld [vmem:[#allocation2 + $0x208] sm:$0xff]
    %v122 = vld [vmem:[#allocation2 + $0x210] sm:$0xff]
    %v123 = vld [vmem:[#allocation2 + $0x218] sm:$0xff]
    %v124 = vld [vmem:[#allocation2 + $0x220] sm:$0xff]
    %v125 = vld [vmem:[#allocation2 + $0x228] sm:$0xff]
    %v126 = vld [vmem:[#allocation2 + $0x230] sm:$0xff]
    %v127 = vld [vmem:[#allocation2 + $0x238] sm:$0xff]
    %v128 = vld [vmem:[#allocation2 + $0x240] sm:$0xff]
    %v129 = vld [vmem:[#allocation2 + $0x248] sm:$0xff]
    %v130 = vld [vmem:[#allocation2 + $0x250] sm:$0xff]
    %v131 = vld [vmem:[#allocation2 + $0x258] sm:$0xff]
    %v132 = vld [vmem:[#allocation2 + $0x260] sm:$0xff]
    %v133 = vld [vmem:[#allocation2 + $0x268] sm:$0xff]
    %v134 = vld [vmem:[#allocation2 + $0x270] sm:$0xff]
    %v135 = vld [vmem:[#allocation2 + $0x278] sm:$0xff]
    %v136 = vld [vmem:[#allocation2 + $0x280] sm:$0xff]
    %v137 = vld [vmem:[#allocation2 + $0x288] sm:$0xff]
    %v138 = vld [vmem:[#allocation2 + $0x290] sm:$0xff]
    %v139 = vld [vmem:[#allocation2 + $0x298] sm:$0xff]
    %v140 = vld [vmem:[#allocation2 + $0x2a0] sm:$0xff]
    %v141 = vld [vmem:[#allocation2 + $0x2a8] sm:$0xff]
    %v142 = vld [vmem:[#allocation2 + $0x2b0] sm:$0xff]
    %v143 = vld [vmem:[#allocation2 + $0x2b8] sm:$0xff]
    %v144 = vld [vmem:[#allocation2 + $0x2c0] sm:$0xff]
    %v145 = vld [vmem:[#allocation2 + $0x2c8] sm:$0xff]
    %v146 = vld [vmem:[#allocation2 + $0x2d0] sm:$0xff]
    %v147 = vld [vmem:[#allocation2 + $0x2d8] sm:$0xff]
    %v148 = vld [vmem:[#allocation2 + $0x2e0] sm:$0xff]
    %v149 = vld [vmem:[#allocation2 + $0x2e8] sm:$0xff]
    %v150 = vld [vmem:[#allocation2 + $0x2f0] sm:$0xff]
    %v151 = vld [vmem:[#allocation2 + $0x2f8] sm:$0xff]
    %v152 = vld [vmem:[#allocation2 + $0x300] sm:$0xff]
    %v153 = vld [vmem:[#allocation2 + $0x308] sm:$0xff]
    %v154 = vld [vmem:[#allocation2 + $0x310] sm:$0xff]
    %v155 = vld [vmem:[#allocation2 + $0x318] sm:$0xff]
    %v156 = vld [vmem:[#allocation2 + $0x320] sm:$0xff]
    %v157 = vld [vmem:[#allocation2 + $0x328] sm:$0xff]
    %v158 = vld [vmem:[#allocation2 + $0x330] sm:$0xff]
    %v159 = vld [vmem:[#allocation2 + $0x338] sm:$0xff]
    %v160 = vld [vmem:[#allocation2 + $0x340] sm:$0xff]
    %v161 = vld [vmem:[#allocation2 + $0x348] sm:$0xff]
    %v162 = vld [vmem:[#allocation2 + $0x350] sm:$0xff]
    %v163 = vld [vmem:[#allocation2 + $0x358] sm:$0xff]
    %v164 = vld [vmem:[#allocation2 + $0x360] sm:$0xff]
    %v165 = vld [vmem:[#allocation2 + $0x368] sm:$0xff]
    %v166 = vld [vmem:[#allocation2 + $0x370] sm:$0xff]
    %v167 = vld [vmem:[#allocation2 + $0x378] sm:$0xff]
    %v168 = vld [vmem:[#allocation2 + $0x380] sm:$0xff]
    %v169 = vld [vmem:[#allocation2 + $0x388] sm:$0xff]
    %v170 = vld [vmem:[#allocation2 + $0x390] sm:$0xff]
    %v171 = vld [vmem:[#allocation2 + $0x398] sm:$0xff]
    %v172 = vld [vmem:[#allocation2 + $0x3a0] sm:$0xff]
    %v173 = vld [vmem:[#allocation2 + $0x3a8] sm:$0xff]
    %v174 = vld [vmem:[#allocation2 + $0x3b0] sm:$0xff]
    %v175 = vld [vmem:[#allocation2 + $0x3b8] sm:$0xff]
    %v176 = vld [vmem:[#allocation2 + $0x3c0] sm:$0xff]
    %v177 = vld [vmem:[#allocation2 + $0x3c8] sm:$0xff]
    %v178 = vld [vmem:[#allocation2 + $0x3d0] sm:$0xff]
    %v179 = vld [vmem:[#allocation2 + $0x3d8] sm:$0xff]
    %v180 = vld [vmem:[#allocation2 + $0x3e0] sm:$0xff]
    %v181 = vld [vmem:[#allocation2 + $0x3e8] sm:$0xff]
    %v182 = vld [vmem:[#allocation2 + $0x3f0] sm:$0xff]
    %v183 = vld [vmem:[#allocation2 + $0x3f8] sm:$0xff]
    %v184 = vld [vmem:[#allocation2 + $0x400] sm:$0xff]
    %v185 = vld [vmem:[#allocation2 + $0x408] sm:$0xff]
    %v186 = vld [vmem:[#allocation2 + $0x410] sm:$0xff]
    %v187 = vld [vmem:[#allocation2 + $0x418] sm:$0xff]
    %v188 = vld [vmem:[#allocation2 + $0x420] sm:$0xff]
    %v189 = vld [vmem:[#allocation2 + $0x428] sm:$0xff]
    %v190 = vld [vmem:[#allocation2 + $0x430] sm:$0xff]
    %v191 = vld [vmem:[#allocation2 + $0x438] sm:$0xff]
    %v192 = vld [vmem:[#allocation2 + $0x440] sm:$0xff]
    %v193 = vld [vmem:[#allocation2 + $0x448] sm:$0xff]
    %v194 = vld [vmem:[#allocation2 + $0x450] sm:$0xff]
    %v195 = vld [vmem:[#allocation2 + $0x458] sm:$0xff]
    %v196 = vld [vmem:[#allocation2 + $0x460] sm:$0xff]
    %v197 = vld [vmem:[#allocation2 + $0x468] sm:$0xff]
    %v198 = vld [vmem:[#allocation2 + $0x470] sm:$0xff]
    %v199 = vld [vmem:[#allocation2 + $0x478] sm:$0xff]
    %v200 = vld [vmem:[#allocation2 + $0x480] sm:$0xff]
    %v201 = vld [vmem:[#allocation2 + $0x488] sm:$0xff]
    %v202 = vld [vmem:[#allocation2 + $0x490] sm:$0xff]
    %v203 = vld [vmem:[#allocation2 + $0x498] sm:$0xff]
    %v204 = vld [vmem:[#allocation2 + $0x4a0] sm:$0xff]
    %v205 = vld [vmem:[#allocation2 + $0x4a8] sm:$0xff]
    %v206 = vld [vmem:[#allocation2 + $0x4b0] sm:$0xff]
    %v207 = vld [vmem:[#allocation2 + $0x4b8] sm:$0xff]
    %v208 = vld [vmem:[#allocation2 + $0x4c0] sm:$0xff]
    %v209 = vld [vmem:[#allocation2 + $0x4c8] sm:$0xff]
    %v210 = vld [vmem:[#allocation2 + $0x4d0] sm:$0xff]
    %v211 = vld [vmem:[#allocation2 + $0x4d8] sm:$0xff]
    %v212 = vld [vmem:[#allocation2 + $0x4e0] sm:$0xff]
    %v213 = vld [vmem:[#allocation2 + $0x4e8] sm:$0xff]
    %v214 = vld [vmem:[#allocation2 + $0x4f0] sm:$0xff]
    %v215 = vld [vmem:[#allocation2 + $0x4f8] sm:$0xff]
    %v216 = vld [vmem:[#allocation2 + $0x500] sm:$0xff]
    %v217 = vld [vmem:[#allocation2 + $0x508] sm:$0xff]
    %v218 = vld [vmem:[#allocation2 + $0x510] sm:$0xff]
    %v219 = vld [vmem:[#allocation2 + $0x518] sm:$0xff]
    %v220 = vld [vmem:[#allocation2 + $0x520] sm:$0xff]
    %v221 = vld [vmem:[#allocation2 + $0x528] sm:$0xff]
    %v222 = vld [vmem:[#allocation2 + $0x530] sm:$0xff]
    %v223 = vld [vmem:[#allocation2 + $0x538] sm:$0xff]
    %v224 = vld [vmem:[#allocation2 + $0x540] sm:$0xff]
    %v225 = vld [vmem:[#allocation2 + $0x548] sm:$0xff]
    %v226 = vld [vmem:[#allocation2 + $0x550] sm:$0xff]
    %v227 = vld [vmem:[#allocation2 + $0x558] sm:$0xff]
    %v228 = vld [vmem:[#allocation2 + $0x560] sm:$0xff]
    %v229 = vld [vmem:[#allocation2 + $0x568] sm:$0xff]
    %v230 = vld [vmem:[#allocation2 + $0x570] sm:$0xff]
    %v231 = vld [vmem:[#allocation2 + $0x578] sm:$0xff]
    %v232 = vld [vmem:[#allocation2 + $0x580] sm:$0xff]
    %v233 = vld [vmem:[#allocation2 + $0x588] sm:$0xff]
    %v234 = vld [vmem:[#allocation2 + $0x590] sm:$0xff]
    %v235 = vld [vmem:[#allocation2 + $0x598] sm:$0xff]
    %v236 = vld [vmem:[#allocation2 + $0x5a0] sm:$0xff]
    %v237 = vld [vmem:[#allocation2 + $0x5a8] sm:$0xff]
    %v238 = vld [vmem:[#allocation2 + $0x5b0] sm:$0xff]
    %v239 = vld [vmem:[#allocation2 + $0x5b8] sm:$0xff]
    %v240 = vld [vmem:[#allocation2 + $0x5c0] sm:$0xff]
    %v241 = vld [vmem:[#allocation2 + $0x5c8] sm:$0xff]
    %v242 = vld [vmem:[#allocation2 + $0x5d0] sm:$0xff]
    %v243 = vld [vmem:[#allocation2 + $0x5d8] sm:$0xff]
    %v244 = vld [vmem:[#allocation2 + $0x5e0] sm:$0xff]
    %v245 = vld [vmem:[#allocation2 + $0x5e8] sm:$0xff]
    %v246 = vld [vmem:[#allocation2 + $0x5f0] sm:$0xff]
    %v247 = vld [vmem:[#allocation2 + $0x5f8] sm:$0xff]
    %v248 = vpack.c.bf16 %v62, %v56
    %v249 = vpack.c.bf16 %v63, %v57
    %v250 = vpack.c.bf16 %v64, %v58
    %v251 = vpack.c.bf16 %v65, %v59
    %v252 = vpack.c.bf16 %v66, %v60
    %v253 = vpack.c.bf16 %v67, %v61
    %v254 = vpack.c.bf16 %v74, %v68
    %v255 = vpack.c.bf16 %v75, %v69
    %v256 = vpack.c.bf16 %v76, %v70
    %v257 = vpack.c.bf16 %v77, %v71
    %v258 = vpack.c.bf16 %v78, %v72
    %v259 = vpack.c.bf16 %v79, %v73
    %v260 = vpack.c.bf16 %v86, %v80
    %v261 = vpack.c.bf16 %v87, %v81
    %v262 = vpack.c.bf16 %v88, %v82
    %v263 = vpack.c.bf16 %v89, %v83
    %v264 = vpack.c.bf16 %v90, %v84
    %v265 = vpack.c.bf16 %v91, %v85
    %v266 = vpack.c.bf16 %v98, %v92
    %v267 = vpack.c.bf16 %v99, %v93
    %v268 = vpack.c.bf16 %v100, %v94
    %v269 = vpack.c.bf16 %v101, %v95
    %v270 = vpack.c.bf16 %v102, %v96
    %v271 = vpack.c.bf16 %v103, %v97
    %v272 = vpack.c.bf16 %v110, %v104
    %v273 = vpack.c.bf16 %v111, %v105
    %v274 = vpack.c.bf16 %v112, %v106
    %v275 = vpack.c.bf16 %v113, %v107
    %v276 = vpack.c.bf16 %v114, %v108
    %v277 = vpack.c.bf16 %v115, %v109
    %v278 = vpack.c.bf16 %v122, %v116
    %v279 = vpack.c.bf16 %v123, %v117
    %v280 = vpack.c.bf16 %v124, %v118
    %v281 = vpack.c.bf16 %v125, %v119
    %v282 = vpack.c.bf16 %v126, %v120
    %v283 = vpack.c.bf16 %v127, %v121
    %v284 = vpack.c.bf16 %v134, %v128
    %v285 = vpack.c.bf16 %v135, %v129
    %v286 = vpack.c.bf16 %v136, %v130
    %v287 = vpack.c.bf16 %v137, %v131
    %v288 = vpack.c.bf16 %v138, %v132
    %v289 = vpack.c.bf16 %v139, %v133
    %v290 = vpack.c.bf16 %v146, %v140
    %v291 = vpack.c.bf16 %v147, %v141
    %v292 = vpack.c.bf16 %v148, %v142
    %v293 = vpack.c.bf16 %v149, %v143
    %v294 = vpack.c.bf16 %v150, %v144
    %v295 = vpack.c.bf16 %v151, %v145
    %v296 = vpack.c.bf16 %v158, %v152
    %v297 = vpack.c.bf16 %v159, %v153
    %v298 = vpack.c.bf16 %v160, %v154
    %v299 = vpack.c.bf16 %v161, %v155
    %v300 = vpack.c.bf16 %v162, %v156
    %v301 = vpack.c.bf16 %v163, %v157
    %v302 = vpack.c.bf16 %v170, %v164
    %v303 = vpack.c.bf16 %v171, %v165
    %v304 = vpack.c.bf16 %v172, %v166
    %v305 = vpack.c.bf16 %v173, %v167
    %v306 = vpack.c.bf16 %v174, %v168
    %v307 = vpack.c.bf16 %v175, %v169
    %v308 = vpack.c.bf16 %v182, %v176
    %v309 = vpack.c.bf16 %v183, %v177
    %v310 = vpack.c.bf16 %v184, %v178
    %v311 = vpack.c.bf16 %v185, %v179
    %v312 = vpack.c.bf16 %v186, %v180
    %v313 = vpack.c.bf16 %v187, %v181
    %v314 = vpack.c.bf16 %v194, %v188
    %v315 = vpack.c.bf16 %v195, %v189
    %v316 = vpack.c.bf16 %v196, %v190
    %v317 = vpack.c.bf16 %v197, %v191
    %v318 = vpack.c.bf16 %v198, %v192
    %v319 = vpack.c.bf16 %v199, %v193
    %v320 = vpack.c.bf16 %v206, %v200
    %v321 = vpack.c.bf16 %v207, %v201
    %v322 = vpack.c.bf16 %v208, %v202
    %v323 = vpack.c.bf16 %v209, %v203
    %v324 = vpack.c.bf16 %v210, %v204
    %v325 = vpack.c.bf16 %v211, %v205
    %v326 = vpack.c.bf16 %v218, %v212
    %v327 = vpack.c.bf16 %v219, %v213
    %v328 = vpack.c.bf16 %v220, %v214
    %v329 = vpack.c.bf16 %v221, %v215
    %v330 = vpack.c.bf16 %v222, %v216
    %v331 = vpack.c.bf16 %v223, %v217
    %v332 = vpack.c.bf16 %v230, %v224
    %v333 = vpack.c.bf16 %v231, %v225
    %v334 = vpack.c.bf16 %v232, %v226
    %v335 = vpack.c.bf16 %v233, %v227
    %v336 = vpack.c.bf16 %v234, %v228
    %v337 = vpack.c.bf16 %v235, %v229
    %v338 = vpack.c.bf16 %v242, %v236
    %v339 = vpack.c.bf16 %v243, %v237
    %v340 = vpack.c.bf16 %v244, %v238
    %v341 = vpack.c.bf16 %v245, %v239
    %v342 = vpack.c.bf16 %v246, %v240
    %v343 = vpack.c.bf16 %v247, %v241
    %v344 = vld [vmem:[%s2] sm:$0x3f]
    %v346 = vlaneseq
    %v347 = vshrl.u32 %v346, 7
    %v348 = vsub.s32 0, %v347
    %v349 = vrot.slane %v344, %v348
    %v350 = vlaneseq
    %v351 = vshrl.u32 %v350, 7
    %v352 = vsub.s32 1, %v351
    %v353 = vrot.slane %v344, %v352
    %v354 = vlaneseq
    %v355 = vshrl.u32 %v354, 7
    %v356 = vsub.s32 2, %v355
    %v357 = vrot.slane %v344, %v356
    %v358 = vlaneseq
    %v359 = vshrl.u32 %v358, 7
    %v360 = vsub.s32 3, %v359
    %v361 = vrot.slane %v344, %v360
    %v362 = vlaneseq
    %v363 = vshrl.u32 %v362, 7
    %v364 = vsub.s32 4, %v363
    %v365 = vrot.slane %v344, %v364
    %v366 = vlaneseq
    %v367 = vshrl.u32 %v366, 7
    %v368 = vsub.s32 5, %v367
    %v369 = vrot.slane %v344, %v368
    %376 = vmatprep.subr.bf16.mxu0 %v249
    %377 = vmatpush1.bf16.msra.mxu0 %v248
    %378 = vmatprep.subr.bf16.mxu0 %v255
    %379 = vmatpush1.bf16.msra.mxu0 %v254
    %380 = vmatprep.subr.bf16.mxu0 %v261
    %381 = vmatpush1.bf16.msra.mxu0 %v260
    %382 = vmatprep.subr.bf16.mxu0 %v267
    %383 = vmatpush1.bf16.msra.mxu0 %v266
    %384 = vmatprep.subr.bf16.mxu0 %v273
    %385 = vmatpush1.bf16.msra.mxu0 %v272
    %386 = vmatprep.subr.bf16.mxu0 %v279
    %387 = vmatpush1.bf16.msra.mxu0 %v278
    %388 = vmatprep.subr.bf16.mxu0 %v285
    %389 = vmatpush1.bf16.msra.mxu0 %v284
    %390 = vmatprep.subr.bf16.mxu0 %v291
    %391 = vmatpush1.bf16.msra.mxu0 %v290
    %392 = vmatprep.subr.bf16.mxu0 %v297
    %393 = vmatpush1.bf16.msra.mxu0 %v296
    %394 = vmatprep.subr.bf16.mxu0 %v303
    %395 = vmatpush1.bf16.msra.mxu0 %v302
    %396 = vmatprep.subr.bf16.mxu0 %v309
    %397 = vmatpush1.bf16.msra.mxu0 %v308
    %398 = vmatprep.subr.bf16.mxu0 %v315
    %399 = vmatpush1.bf16.msra.mxu0 %v314
    %400 = vmatprep.subr.bf16.mxu0 %v321
    %401 = vmatpush1.bf16.msra.mxu0 %v320
    %402 = vmatprep.subr.bf16.mxu0 %v327
    %403 = vmatpush1.bf16.msra.mxu0 %v326
    %404 = vmatprep.subr.bf16.mxu0 %v333
    %405 = vmatpush1.bf16.msra.mxu0 %v332
    %406 = vmatprep.subr.bf16.mxu0 %v339
    %407 = vmatpush1.bf16.msra.mxu0 %v338
    %408 = vmatprep.mubr.bf16.mxu0 %v47
    %409 = vmatmul.mubr.bf16.gmra.mrb[0].mxu0 %v46
    %v410 = vpop.f32.mrb[0].mxu0
    %v411 = vadd.f32 %v349, %v410
    %v412 = vpop.f32.mrb[0].mxu0
    %v413 = vadd.f32 %v353, %v412
    %v414 = vpop.f32.mrb[0].mxu0
    %v415 = vadd.f32 %v349, %v414
    %v416 = vpop.f32.mrb[0].mxu0
    %v417 = vadd.f32 %v353, %v416
    %418 = vmatprep.mubr.bf16.mxu0 %v49
    %419 = vmatmul.mubr.bf16.gmra.mrb[0].mxu0 %v48
    %v420 = vpop.f32.mrb[0].mxu0
    %v421 = vadd.f32 %v349, %v420
    %v422 = vpop.f32.mrb[0].mxu0
    %v423 = vadd.f32 %v353, %v422
    %v424 = vpop.f32.mrb[0].mxu0
    %v425 = vadd.f32 %v349, %v424
    %v426 = vpop.f32.mrb[0].mxu0
    %v427 = vadd.f32 %v353, %v426
    %428 = vmatprep.mubr.bf16.mxu0 %v51
    %429 = vmatmul.mubr.bf16.gmra.mrb[0].mxu0 %v50
    %v430 = vpop.f32.mrb[0].mxu0
    %v431 = vadd.f32 %v349, %v430
    %v432 = vpop.f32.mrb[0].mxu0
    %v433 = vadd.f32 %v353, %v432
    %v434 = vpop.f32.mrb[0].mxu0
    %v435 = vadd.f32 %v349, %v434
    %v436 = vpop.f32.mrb[0].mxu0
    %v437 = vadd.f32 %v353, %v436
    %438 = vmatprep.mubr.bf16.mxu0 %v53
    %439 = vmatmul.mubr.bf16.gmra.mrb[0].mxu0 %v52
    %v440 = vpop.f32.mrb[0].mxu0
    %v441 = vadd.f32 %v349, %v440
    %v442 = vpop.f32.mrb[0].mxu0
    %v443 = vadd.f32 %v353, %v442
    %v444 = vpop.f32.mrb[0].mxu0
    %v445 = vadd.f32 %v349, %v444
    %v446 = vpop.f32.mrb[0].mxu0
    %v447 = vadd.f32 %v353, %v446
    %448 = vmatprep.mubr.bf16.mxu0 %v55
    %449 = vmatmul.mubr.bf16.gmra.mrb[0].mxu0 %v54
    %v450 = vpop.f32.mrb[0].mxu0
    %v451 = vadd.f32 %v349, %v450
    %v452 = vpop.f32.mrb[0].mxu0
    %v453 = vadd.f32 %v353, %v452
    %v454 = vpop.f32.mrb[0].mxu0
    %v455 = vpop.f32.mrb[0].mxu0
    %456 = vdwg.mxu0
    %457 = vmatprep.subr.bf16.mxu0 %v251
    %458 = vmatpush1.bf16.msra.mxu0 %v250
    %459 = vmatprep.subr.bf16.mxu0 %v257
    %460 = vmatpush1.bf16.msra.mxu0 %v256
    %461 = vmatprep.subr.bf16.mxu0 %v263
    %462 = vmatpush1.bf16.msra.mxu0 %v262
    %463 = vmatprep.subr.bf16.mxu0 %v269
    %464 = vmatpush1.bf16.msra.mxu0 %v268
    %465 = vmatprep.subr.bf16.mxu0 %v275
    %466 = vmatpush1.bf16.msra.mxu0 %v274
    %467 = vmatprep.subr.bf16.mxu0 %v281
    %468 = vmatpush1.bf16.msra.mxu0 %v280
    %469 = vmatprep.subr.bf16.mxu0 %v287
    %470 = vmatpush1.bf16.msra.mxu0 %v286
    %471 = vmatprep.subr.bf16.mxu0 %v293
    %472 = vmatpush1.bf16.msra.mxu0 %v292
    %473 = vmatprep.subr.bf16.mxu0 %v299
    %474 = vmatpush1.bf16.msra.mxu0 %v298
    %475 = vmatprep.subr.bf16.mxu0 %v305
    %476 = vmatpush1.bf16.msra.mxu0 %v304
    %477 = vmatprep.subr.bf16.mxu0 %v311
    %478 = vmatpush1.bf16.msra.mxu0 %v310
    %479 = vmatprep.subr.bf16.mxu0 %v317
    %480 = vmatpush1.bf16.msra.mxu0 %v316
    %481 = vmatprep.subr.bf16.mxu0 %v323
    %482 = vmatpush1.bf16.msra.mxu0 %v322
    %483 = vmatprep.subr.bf16.mxu0 %v329
    %484 = vmatpush1.bf16.msra.mxu0 %v328
    %485 = vmatprep.subr.bf16.mxu0 %v335
    %486 = vmatpush1.bf16.msra.mxu0 %v334
    %487 = vmatprep.subr.bf16.mxu0 %v341
    %488 = vmatpush1.bf16.msra.mxu0 %v340
    %489 = vmatprep.mubr.bf16.mxu0 %v47
    %490 = vmatmul.mubr.bf16.gmra.mrb[0].mxu0 %v46
    %v491 = vpop.f32.mrb[0].mxu0
    %v492 = vadd.f32 %v357, %v491
    %v493 = vpop.f32.mrb[0].mxu0
    %v494 = vadd.f32 %v361, %v493
    %v495 = vpop.f32.mrb[0].mxu0
    %v496 = vadd.f32 %v357, %v495
    %v497 = vpop.f32.mrb[0].mxu0
    %v498 = vadd.f32 %v361, %v497
    %499 = vmatprep.mubr.bf16.mxu0 %v49
    %500 = vmatmul.mubr.bf16.gmra.mrb[0].mxu0 %v48
    %v501 = vpop.f32.mrb[0].mxu0
    %v502 = vadd.f32 %v357, %v501
    %v503 = vpop.f32.mrb[0].mxu0
    %v504 = vadd.f32 %v361, %v503
    %v505 = vpop.f32.mrb[0].mxu0
    %v506 = vadd.f32 %v357, %v505
    %v507 = vpop.f32.mrb[0].mxu0
    %v508 = vadd.f32 %v361, %v507
    %509 = vmatprep.mubr.bf16.mxu0 %v51
    %510 = vmatmul.mubr.bf16.gmra.mrb[0].mxu0 %v50
    %v511 = vpop.f32.mrb[0].mxu0
    %v512 = vadd.f32 %v357, %v511
    %v513 = vpop.f32.mrb[0].mxu0
    %v514 = vadd.f32 %v361, %v513
    %v515 = vpop.f32.mrb[0].mxu0
    %v516 = vadd.f32 %v357, %v515
    %v517 = vpop.f32.mrb[0].mxu0
    %v518 = vadd.f32 %v361, %v517
    %519 = vmatprep.mubr.bf16.mxu0 %v53
    %520 = vmatmul.mubr.bf16.gmra.mrb[0].mxu0 %v52
    %v521 = vpop.f32.mrb[0].mxu0
    %v522 = vadd.f32 %v357, %v521
    %v523 = vpop.f32.mrb[0].mxu0
    %v524 = vadd.f32 %v361, %v523
    %v525 = vpop.f32.mrb[0].mxu0
    %v526 = vadd.f32 %v357, %v525
    %v527 = vpop.f32.mrb[0].mxu0
    %v528 = vadd.f32 %v361, %v527
    %529 = vmatprep.mubr.bf16.mxu0 %v55
    %530 = vmatmul.mubr.bf16.gmra.mrb[0].mxu0 %v54
    %v531 = vpop.f32.mrb[0].mxu0
    %v532 = vadd.f32 %v357, %v531
    %v533 = vpop.f32.mrb[0].mxu0
    %v534 = vadd.f32 %v361, %v533
    %v535 = vpop.f32.mrb[0].mxu0
    %v536 = vpop.f32.mrb[0].mxu0
    %537 = vdwg.mxu0
    %538 = vmatprep.subr.bf16.mxu0 %v253
    %539 = vmatpush1.bf16.msra.mxu0 %v252
    %540 = vmatprep.subr.bf16.mxu0 %v259
    %541 = vmatpush1.bf16.msra.mxu0 %v258
    %542 = vmatprep.subr.bf16.mxu0 %v265
    %543 = vmatpush1.bf16.msra.mxu0 %v264
    %544 = vmatprep.subr.bf16.mxu0 %v271
    %545 = vmatpush1.bf16.msra.mxu0 %v270
    %546 = vmatprep.subr.bf16.mxu0 %v277
    %547 = vmatpush1.bf16.msra.mxu0 %v276
    %548 = vmatprep.subr.bf16.mxu0 %v283
    %549 = vmatpush1.bf16.msra.mxu0 %v282
    %550 = vmatprep.subr.bf16.mxu0 %v289
    %551 = vmatpush1.bf16.msra.mxu0 %v288
    %552 = vmatprep.subr.bf16.mxu0 %v295
    %553 = vmatpush1.bf16.msra.mxu0 %v294
    %554 = vmatprep.subr.bf16.mxu0 %v301
    %555 = vmatpush1.bf16.msra.mxu0 %v300
    %556 = vmatprep.subr.bf16.mxu0 %v307
    %557 = vmatpush1.bf16.msra.mxu0 %v306
    %558 = vmatprep.subr.bf16.mxu0 %v313
    %559 = vmatpush1.bf16.msra.mxu0 %v312
    %560 = vmatprep.subr.bf16.mxu0 %v319
    %561 = vmatpush1.bf16.msra.mxu0 %v318
    %562 = vmatprep.subr.bf16.mxu0 %v325
    %563 = vmatpush1.bf16.msra.mxu0 %v324
    %564 = vmatprep.subr.bf16.mxu0 %v331
    %565 = vmatpush1.bf16.msra.mxu0 %v330
    %566 = vmatprep.subr.bf16.mxu0 %v337
    %567 = vmatpush1.bf16.msra.mxu0 %v336
    %568 = vmatprep.subr.bf16.mxu0 %v343
    %569 = vmatpush1.bf16.msra.mxu0 %v342
    %570 = vmatprep.mubr.bf16.mxu0 %v47
    %571 = vmatmul.mubr.bf16.gmra.mrb[0].mxu0 %v46
    %v572 = vpop.f32.mrb[0].mxu0
    %v573 = vadd.f32 %v365, %v572
    %v574 = vpop.f32.mrb[0].mxu0
    %v575 = vadd.f32 %v369, %v574
    %v576 = vpop.f32.mrb[0].mxu0
    %v577 = vadd.f32 %v365, %v576
    %v578 = vpop.f32.mrb[0].mxu0
    %v579 = vadd.f32 %v369, %v578
    %580 = vmatprep.mubr.bf16.mxu0 %v49
    %581 = vmatmul.mubr.bf16.gmra.mrb[0].mxu0 %v48
    %v582 = vpop.f32.mrb[0].mxu0
    %v583 = vadd.f32 %v365, %v582
    %v584 = vpop.f32.mrb[0].mxu0
    %v585 = vadd.f32 %v369, %v584
    %v586 = vpop.f32.mrb[0].mxu0
    %v587 = vadd.f32 %v365, %v586
    %v588 = vpop.f32.mrb[0].mxu0
    %v589 = vadd.f32 %v369, %v588
    %590 = vmatprep.mubr.bf16.mxu0 %v51
    %591 = vmatmul.mubr.bf16.gmra.mrb[0].mxu0 %v50
    %v592 = vpop.f32.mrb[0].mxu0
    %v593 = vadd.f32 %v365, %v592
    %v594 = vpop.f32.mrb[0].mxu0
    %v595 = vadd.f32 %v369, %v594
    %v596 = vpop.f32.mrb[0].mxu0
    %v597 = vadd.f32 %v365, %v596
    %v598 = vpop.f32.mrb[0].mxu0
    %v599 = vadd.f32 %v369, %v598
    %600 = vmatprep.mubr.bf16.mxu0 %v53
    %601 = vmatmul.mubr.bf16.gmra.mrb[0].mxu0 %v52
    %v602 = vpop.f32.mrb[0].mxu0
    %v603 = vadd.f32 %v365, %v602
    %v604 = vpop.f32.mrb[0].mxu0
    %v605 = vadd.f32 %v369, %v604
    %v606 = vpop.f32.mrb[0].mxu0
    %v607 = vadd.f32 %v365, %v606
    %v608 = vpop.f32.mrb[0].mxu0
    %v609 = vadd.f32 %v369, %v608
    %610 = vmatprep.mubr.bf16.mxu0 %v55
    %611 = vmatmul.mubr.bf16.gmra.mrb[0].mxu0 %v54
    %v612 = vpop.f32.mrb[0].mxu0
    %v613 = vadd.f32 %v365, %v612
    %v614 = vpop.f32.mrb[0].mxu0
    %v615 = vadd.f32 %v369, %v614
    %v616 = vpop.f32.mrb[0].mxu0
    %v617 = vpop.f32.mrb[0].mxu0
    %618 = vdwg.mxu0
    %619 = vst [vmem:[%s3] sm:$0xff] %v411
    %620 = vst [vmem:[%s3 + $0x8] sm:$0xff] %v413
    %621 = vst [vmem:[%s3 + $0x10] sm:$0xff] %v492
    %622 = vst [vmem:[%s3 + $0x18] sm:$0xff] %v494
    %623 = vst [vmem:[%s3 + $0x20] sm:$0xff] %v573
    %624 = vst [vmem:[%s3 + $0x28] sm:$0xff] %v575
    %625 = vst [vmem:[%s3 + $0x30] sm:$0xff] %v415
    %626 = vst [vmem:[%s3 + $0x38] sm:$0xff] %v417
    %627 = vst [vmem:[%s3 + $0x40] sm:$0xff] %v496
    %628 = vst [vmem:[%s3 + $0x48] sm:$0xff] %v498
    %629 = vst [vmem:[%s3 + $0x50] sm:$0xff] %v577
    %630 = vst [vmem:[%s3 + $0x58] sm:$0xff] %v579
    %631 = vst [vmem:[%s3 + $0x60] sm:$0xff] %v421
    %632 = vst [vmem:[%s3 + $0x68] sm:$0xff] %v423
    %633 = vst [vmem:[%s3 + $0x70] sm:$0xff] %v502
    %634 = vst [vmem:[%s3 + $0x78] sm:$0xff] %v504
    %635 = vst [vmem:[%s3 + $0x80] sm:$0xff] %v583
    %636 = vst [vmem:[%s3 + $0x88] sm:$0xff] %v585
    %637 = vst [vmem:[%s3 + $0x90] sm:$0xff] %v425
    %638 = vst [vmem:[%s3 + $0x98] sm:$0xff] %v427
    %639 = vst [vmem:[%s3 + $0xa0] sm:$0xff] %v506
    %640 = vst [vmem:[%s3 + $0xa8] sm:$0xff] %v508
    %641 = vst [vmem:[%s3 + $0xb0] sm:$0xff] %v587
    %642 = vst [vmem:[%s3 + $0xb8] sm:$0xff] %v589
    %643 = vst [vmem:[%s3 + $0xc0] sm:$0xff] %v431
    %644 = vst [vmem:[%s3 + $0xc8] sm:$0xff] %v433
    %645 = vst [vmem:[%s3 + $0xd0] sm:$0xff] %v512
    %646 = vst [vmem:[%s3 + $0xd8] sm:$0xff] %v514
    %647 = vst [vmem:[%s3 + $0xe0] sm:$0xff] %v593
    %648 = vst [vmem:[%s3 + $0xe8] sm:$0xff] %v595
    %649 = vst [vmem:[%s3 + $0xf0] sm:$0xff] %v435
    %650 = vst [vmem:[%s3 + $0xf8] sm:$0xff] %v437
    %651 = vst [vmem:[%s3 + $0x100] sm:$0xff] %v516
    %652 = vst [vmem:[%s3 + $0x108] sm:$0xff] %v518
    %653 = vst [vmem:[%s3 + $0x110] sm:$0xff] %v597
    %654 = vst [vmem:[%s3 + $0x118] sm:$0xff] %v599
    %655 = vst [vmem:[%s3 + $0x120] sm:$0xff] %v441
    %656 = vst [vmem:[%s3 + $0x128] sm:$0xff] %v443
    %657 = vst [vmem:[%s3 + $0x130] sm:$0xff] %v522
    %658 = vst [vmem:[%s3 + $0x138] sm:$0xff] %v524
    %659 = vst [vmem:[%s3 + $0x140] sm:$0xff] %v603
    %660 = vst [vmem:[%s3 + $0x148] sm:$0xff] %v605
    %661 = vst [vmem:[%s3 + $0x150] sm:$0xff] %v445
    %662 = vst [vmem:[%s3 + $0x158] sm:$0xff] %v447
    %663 = vst [vmem:[%s3 + $0x160] sm:$0xff] %v526
    %664 = vst [vmem:[%s3 + $0x168] sm:$0xff] %v528
    %665 = vst [vmem:[%s3 + $0x170] sm:$0xff] %v607
    %666 = vst [vmem:[%s3 + $0x178] sm:$0xff] %v609
    %667 = vst [vmem:[%s3 + $0x180] sm:$0x3] %v451
    %668 = vst [vmem:[%s3 + $0x188] sm:$0x3] %v453
    %669 = vst [vmem:[%s3 + $0x190] sm:$0x3] %v532
    %670 = vst [vmem:[%s3 + $0x198] sm:$0x3] %v534
    %671 = vst [vmem:[%s3 + $0x1a0] sm:$0x3] %v613
    %672 = vst [vmem:[%s3 + $0x1a8] sm:$0x3] %v615
    // Predicated region
    $region18: #{forward.24} parent=1 // pred_check
      _
    $region19: #{forward.24} parent=1 // pred_check_branch
      %674 = sbr.rel (0) target = $region21
    $region20: #{forward.24} parent=1 // pred_region
      _
    $region21: #{forward.24} parent=1 // pred_fallthru
      _
    // Predicated region
    $region22: #{forward.24} parent=1 // pred_check
      _
    $region23: #{forward.24} parent=1 // pred_check_branch
      %676 = sbr.rel (0) target = $region25
    $region24: #{forward.24} parent=1 // pred_region
      _
    $region25: #{forward.24} parent=1 // pred_fallthru
      _
    %677 = vsyncpa [#allocation3], 1

// kernel: forward.25
$region0: #{forward.25}
  #allocation0 [shape = 'u32[]', space=smem, size = 0x4, offset = 0x4, fixed_abs, tag = 'smem constant byte address 0x4 - core index']
  #allocation1 [shape = 'u32[144,128]{1,0:T(1,128)}', space=vmem, size = 0x12000, scoped, tag = 'internal scratch']
  #allocation2 [shape = 'f32[33,4]{1,0:T(8,128)}', space=vmem, size = 0x5000, scoped, tag = 'scratch operand']
  #allocation3 [shape = 'f32[33,4]{1,0:T(8,128)}', space=vmem, size = 0x5000, scoped, tag = 'scratch operand']
  #allocation4 [shape = 'f32[33,256]{1,0:T(8,128)}', space=vmem, size = 0xa000, scoped, tag = 'scratch operand']
  %s0 = inlined_call_operand.vmem [shape: f32[2,33,256], index: 0, kind: input, shape index: {}]
  %s1 = inlined_call_operand.vmem [shape: f32[2,33,256], index: 1, kind: input, shape index: {}]
  %s2 = inlined_call_operand.vmem [shape: f32[2,33,256], index: 2, kind: input, shape index: {}]
  %s3 = inlined_call_operand.vmem [shape: f32[2,33,256], index: 3, kind: output, shape index: {}]
  %s4 = sld [smem:[#allocation0]]
  $region53: #{forward.25} parent=0
    _
  %s6 = ssub.s32 1, %s4
  %s7 = scalar_select 0, %s6, %s4
  loop: start=0, step=1, limit=4
  $region2: #{forward.25} parent=0 // loop_pre_header
    _
  $region3: #{forward.25} parent=0 // loop_header
    %s9 = sphi 0, %s13
    %p10 = scmp.ge.s32.totalorder %s9, 4
    %s16 = sphi 0, %s35
    %s17 = sphi 0, %s31
    %s18 = sphi 0, %s27
    %s19 = sphi 0, %s16
    %s20 = sphi 0, %s17
    %s21 = sphi 0, %s18
    %s22 = sphi 0, %s19
    %s23 = sphi 0, %s20
    %s24 = sphi 0, %s21
    %s40 = sphi 0, %s42
    %s43 = sphi 0, %s40
    %s44 = sphi 0, %s43
    %s60 = sphi 0, %s44
    %s68 = sphi 0, %s70
    %s71 = sphi 0, %s68
    %s72 = sphi 0, %s71
    %s88 = sphi 0, %s72
    %s96 = sphi 0, %s98
    %s99 = sphi 0, %s96
    %s100 = sphi 0, %s99
    %s116 = sphi 0, %s100
    %s124 = sphi 0, %s126
    %s127 = sphi 0, %s124
    %s128 = sphi 0, %s127
    %s144 = sphi 0, %s128
  $region4: #{forward.25} parent=0 // loop_header_branch
    %12 = sbr.rel (%p10) target = $region8
  $region5: #{forward.25} parent=0 // loop_body
    %s14 = ssub.s32 %s9, 1
    %s15 = ssub.s32 %s9, 2
    %s25 = sadd.s32 1, %s18
    %p26 = scmp.ge.s32.totalorder %s25, 1
    %s27 = scalar_select %p26, 0, %s25
    %s28 = sadd.s32 1, %s17
    %s29 = scalar_select %p26, %s28, %s17
    %p30 = scmp.ge.s32.totalorder %s29, 1
    %s31 = scalar_select %p30, 0, %s29
    %s32 = sadd.s32 1, %s16
    %s33 = scalar_select %p30, %s32, %s16
    %p34 = scmp.ge.s32.totalorder %s33, 2
    %s35 = scalar_select %p34, 0, %s33
    %s36 = ssub.s32 %s16, %s35
    %s37 = ssub.s32 %s17, %s31
    %s38 = sor.u32 %s36, %s37
    %p39 = scmp.eq.s32.totalorder %s38, 0
    %s41 = sadd.s32 %s40, 1
    %s42 = scalar_select %p39, %s40, %s41
    %p45 = pneg %p39
    %p46 = scmp.eq.s32.totalorder %s9, 1
    %p47 = por %p45, %p46
    %p48 = scmp.ne.s32.totalorder %s40, %s43
    %p49 = scmp.eq.s32.totalorder %s9, 0
    %p50 = por %p48, %p49
    %p51 = scmp.ne.s32.totalorder %s40, %s43
    %p52 = scmp.eq.s32.totalorder %s14, 1
    %p53 = por %p51, %p52
    %p54 = scmp.ne.s32.totalorder %s43, %s44
    %p55 = scmp.eq.s32.totalorder %s14, 0
    %p56 = por %p54, %p55
    %p57 = scmp.ne.s32.totalorder %s43, %s44
    %p58 = scmp.eq.s32.totalorder %s15, 1
    %p59 = por %p57, %p58
    %p61 = scmp.ne.s32.totalorder %s44, %s60
    %p62 = scmp.eq.s32.totalorder %s15, 0
    %p63 = por %p61, %p62
    %s64 = ssub.s32 %s16, %s35
    %s65 = ssub.s32 %s18, %s27
    %s66 = sor.u32 %s64, %s65
    %p67 = scmp.eq.s32.totalorder %s66, 0
    %s69 = sadd.s32 %s68, 1
    %s70 = scalar_select %p67, %s68, %s69
    %p73 = pneg %p67
    %p74 = scmp.eq.s32.totalorder %s9, 1
    %p75 = por %p73, %p74
    %p76 = scmp.ne.s32.totalorder %s68, %s71
    %p77 = scmp.eq.s32.totalorder %s9, 0
    %p78 = por %p76, %p77
    %p79 = scmp.ne.s32.totalorder %s68, %s71
    %p80 = scmp.eq.s32.totalorder %s14, 1
    %p81 = por %p79, %p80
    %p82 = scmp.ne.s32.totalorder %s71, %s72
    %p83 = scmp.eq.s32.totalorder %s14, 0
    %p84 = por %p82, %p83
    %p85 = scmp.ne.s32.totalorder %s71, %s72
    %p86 = scmp.eq.s32.totalorder %s15, 1
    %p87 = por %p85, %p86
    %p89 = scmp.ne.s32.totalorder %s72, %s88
    %p90 = scmp.eq.s32.totalorder %s15, 0
    %p91 = por %p89, %p90
    %s92 = ssub.s32 %s16, %s35
    %s93 = ssub.s32 %s18, %s27
    %s94 = sor.u32 %s92, %s93
    %p95 = scmp.eq.s32.totalorder %s94, 0
    %s97 = sadd.s32 %s96, 1
    %s98 = scalar_select %p95, %s96, %s97
    %p101 = pneg %p95
    %p102 = scmp.eq.s32.totalorder %s9, 1
    %p103 = por %p101, %p102
    %p104 = scmp.ne.s32.totalorder %s96, %s99
    %p105 = scmp.eq.s32.totalorder %s9, 0
    %p106 = por %p104, %p105
    %p107 = scmp.ne.s32.totalorder %s96, %s99
    %p108 = scmp.eq.s32.totalorder %s14, 1
    %p109 = por %p107, %p108
    %p110 = scmp.ne.s32.totalorder %s99, %s100
    %p111 = scmp.eq.s32.totalorder %s14, 0
    %p112 = por %p110, %p111
    %p113 = scmp.ne.s32.totalorder %s99, %s100
    %p114 = scmp.eq.s32.totalorder %s15, 1
    %p115 = por %p113, %p114
    %p117 = scmp.ne.s32.totalorder %s100, %s116
    %p118 = scmp.eq.s32.totalorder %s15, 0
    %p119 = por %p117, %p118
    %s120 = ssub.s32 %s16, %s35
    %s121 = ssub.s32 %s17, %s31
    %s122 = sor.u32 %s120, %s121
    %p123 = scmp.eq.s32.totalorder %s122, 0
    %s125 = sadd.s32 %s124, 1
    %s126 = scalar_select %p123, %s124, %s125
    %p129 = pneg %p123
    %p130 = scmp.eq.s32.totalorder %s9, 1
    %p131 = por %p129, %p130
    %p132 = scmp.ne.s32.totalorder %s124, %s127
    %p133 = scmp.eq.s32.totalorder %s9, 0
    %p134 = por %p132, %p133
    %p135 = scmp.ne.s32.totalorder %s124, %s127
    %p136 = scmp.eq.s32.totalorder %s14, 1
    %p137 = por %p135, %p136
    %p138 = scmp.ne.s32.totalorder %s127, %s128
    %p139 = scmp.eq.s32.totalorder %s14, 0
    %p140 = por %p138, %p139
    %p141 = scmp.ne.s32.totalorder %s127, %s128
    %p142 = scmp.eq.s32.totalorder %s15, 1
    %p143 = por %p141, %p142
    %p145 = scmp.ne.s32.totalorder %s128, %s144
    %p146 = scmp.eq.s32.totalorder %s15, 0
    %p147 = por %p145, %p146
    %p148 = scmp.le.s32.totalorder 1, %s9
    %p149 = scmp.lt.s32.totalorder %s9, 3
    %p150 = pnand %p148, %p149
    %p151 = pneg %p150
    // Predicated region
    $region9: #{forward.25} parent=5 // pred_check
      _
    $region10: #{forward.25} parent=5 // pred_check_branch
      %153 = sbr.rel (%p150) target = $region12
    $region11: #{forward.25} parent=5 // pred_region
      %s154 = ssub.s32 %s9, 1
    $region12: #{forward.25} parent=5 // pred_fallthru
      _
    %p155 = scmp.lt.s32.totalorder %s9, 2
    // Predicated region
    $region13: #{forward.25} parent=5 // pred_check
      %p156 = pneg %p155
    $region14: #{forward.25} parent=5 // pred_check_branch
      %158 = sbr.rel (%p156) target = $region16
    $region15: #{forward.25} parent=5 // pred_region
      // Predicated region
      $region17: #{forward.25} parent=15 // pred_check
        %p159 = pneg %p50
      $region18: #{forward.25} parent=15 // pred_check_branch
        %161 = sbr.rel (%p159) target = $region20
      $region19: #{forward.25} parent=15 // pred_region
        %s162 = smul.u32 5, %s17
        %p163 = scmp.lt.s32.totalorder %s16, 1
        %s164 = scalar_select %p163, %s16, 1
        %p165 = scmp.lt.s32.totalorder %s162, 4
        %s166 = scalar_select %p165, %s162, 4
        %s167 = smul.addr %s166, 2
        %s168 = smul.addr %s164, 10
        %s169 = sadd.s32 %s167, %s168
        %s170 = smul.addr %s169, 8
        %s171 = scalar_lea.vmem %s0, %s170
        %s172 = smul.u32 5, %s17
      $region20: #{forward.25} parent=15 // pred_fallthru
        _
      // Predicated region
      $region21: #{forward.25} parent=15 // pred_check
        %p173 = pneg %p78
      $region22: #{forward.25} parent=15 // pred_check_branch
        %175 = sbr.rel (%p173) target = $region24
      $region23: #{forward.25} parent=15 // pred_region
        %s176 = smul.u32 5, %s18
        %p177 = scmp.lt.s32.totalorder %s16, 1
        %s178 = scalar_select %p177, %s16, 1
        %p179 = scmp.lt.s32.totalorder %s176, 4
        %s180 = scalar_select %p179, %s176, 4
        %s181 = smul.addr %s180, 2
        %s182 = smul.addr %s178, 10
        %s183 = sadd.s32 %s181, %s182
        %s184 = smul.addr %s183, 8
        %s185 = scalar_lea.vmem %s1, %s184
        %s186 = smul.u32 5, %s18
      $region24: #{forward.25} parent=15 // pred_fallthru
        _
      // Predicated region
      $region25: #{forward.25} parent=15 // pred_check
        %p187 = pneg %p106
      $region26: #{forward.25} parent=15 // pred_check_branch
        %189 = sbr.rel (%p187) target = $region28
      $region27: #{forward.25} parent=15 // pred_region
        %s190 = smul.u32 5, %s18
        %p191 = scmp.lt.s32.totalorder %s16, 1
        %s192 = scalar_select %p191, %s16, 1
        %p193 = scmp.lt.s32.totalorder %s190, 4
        %s194 = scalar_select %p193, %s190, 4
        %s195 = smul.addr %s194, 2
        %s196 = smul.addr %s192, 10
        %s197 = sadd.s32 %s195, %s196
        %s198 = smul.addr %s197, 8
        %s199 = scalar_lea.vmem %s2, %s198
        %s200 = smul.u32 5, %s18
      $region28: #{forward.25} parent=15 // pred_fallthru
        _
    $region16: #{forward.25} parent=5 // pred_fallthru
      _
    %p201 = scmp.le.s32.totalorder 1, %s9
    %p202 = scmp.lt.s32.totalorder %s9, 3
    %p203 = pnand %p201, %p202
    %p204 = pneg %p203
    // Predicated region
    $region29: #{forward.25} parent=5 // pred_check
      _
    $region30: #{forward.25} parent=5 // pred_check_branch
      %206 = sbr.rel (%p203) target = $region32
    $region31: #{forward.25} parent=5 // pred_region
      %s207 = ssub.s32 %s9, 1
      %s208 = smul.u32 5, %s20
      %p209 = scmp.lt.s32.totalorder %s19, 1
      %s210 = scalar_select %p209, %s19, 1
      %p211 = scmp.lt.s32.totalorder %s208, 4
      %s212 = scalar_select %p211, %s208, 4
      %s213 = smul.addr %s212, 2
      %s214 = smul.addr %s210, 10
      %s215 = sadd.s32 %s213, %s214
      %s216 = smul.addr %s215, 8
      %s217 = scalar_lea.vmem %s0, %s216
      %p218 = pneg %p56
      %p219 = pneg %p53
      %s220 = smul.u32 5, %s21
      %p221 = scmp.lt.s32.totalorder %s19, 1
      %s222 = scalar_select %p221, %s19, 1
      %p223 = scmp.lt.s32.totalorder %s220, 4
      %s224 = scalar_select %p223, %s220, 4
      %s225 = smul.addr %s224, 2
      %s226 = smul.addr %s222, 10
      %s227 = sadd.s32 %s225, %s226
      %s228 = smul.addr %s227, 8
      %s229 = scalar_lea.vmem %s1, %s228
      %p230 = pneg %p84
      %p231 = pneg %p81
      %s232 = smul.u32 5, %s21
      %p233 = scmp.lt.s32.totalorder %s19, 1
      %s234 = scalar_select %p233, %s19, 1
      %p235 = scmp.lt.s32.totalorder %s232, 4
      %s236 = scalar_select %p235, %s232, 4
      %s237 = smul.addr %s236, 2
      %s238 = smul.addr %s234, 10
      %s239 = sadd.s32 %s237, %s238
      %s240 = smul.addr %s239, 8
      %s241 = scalar_lea.vmem %s2, %s240
      %p242 = pneg %p112
      %p243 = pneg %p109
      %p244 = pneg %p140
      %p245 = pneg %p137
      %s246 = smul.u32 5, %s20
      %p247 = scmp.lt.s32.totalorder %s19, 1
      %s248 = scalar_select %p247, %s19, 1
      %p249 = scmp.lt.s32.totalorder %s246, 4
      %s250 = scalar_select %p249, %s246, 4
      %s251 = smul.addr %s250, 2
      %s252 = smul.addr %s248, 10
      %s253 = sadd.s32 %s251, %s252
      %s254 = smul.addr %s253, 8
      %s255 = scalar_lea.vmem %s3, %s254
      %s256 = smul.u32 5, %s20
      %p257 = scmp.lt.s32.totalorder %s19, 1
      %s258 = scalar_select %p257, %s19, 1
      %p259 = scmp.lt.s32.totalorder %s256, 4
      %s260 = scalar_select %p259, %s256, 4
      %s261 = smul.addr %s260, 2
      %s262 = smul.addr %s258, 10
      %s263 = sadd.s32 %s261, %s262
      %s264 = smul.addr %s263, 8
      %s265 = scalar_lea.vmem %s0, %s264
      %s266 = smul.u32 5, %s20
      %s267 = smul.u32 5, %s21
      %p268 = scmp.lt.s32.totalorder %s19, 1
      %s269 = scalar_select %p268, %s19, 1
      %p270 = scmp.lt.s32.totalorder %s267, 4
      %s271 = scalar_select %p270, %s267, 4
      %s272 = smul.addr %s271, 2
      %s273 = smul.addr %s269, 10
      %s274 = sadd.s32 %s272, %s273
      %s275 = smul.addr %s274, 8
      %s276 = scalar_lea.vmem %s1, %s275
      %s277 = smul.u32 5, %s21
      %s278 = smul.u32 5, %s21
      %p279 = scmp.lt.s32.totalorder %s19, 1
      %s280 = scalar_select %p279, %s19, 1
      %p281 = scmp.lt.s32.totalorder %s278, 4
      %s282 = scalar_select %p281, %s278, 4
      %s283 = smul.addr %s282, 2
      %s284 = smul.addr %s280, 10
      %s285 = sadd.s32 %s283, %s284
      %s286 = smul.addr %s285, 8
      %s287 = scalar_lea.vmem %s2, %s286
      %s288 = smul.u32 5, %s21
      %s289 = smul.u32 5, %s20
      %p290 = scmp.lt.s32.totalorder %s19, 1
      %s291 = scalar_select %p290, %s19, 1
      %p292 = scmp.lt.s32.totalorder %s289, 4
      %s293 = scalar_select %p292, %s289, 4
      %s294 = smul.addr %s293, 2
      %s295 = smul.addr %s291, 10
      %s296 = sadd.s32 %s294, %s295
      %s297 = smul.addr %s296, 8
      %s298 = scalar_lea.vmem %s3, %s297
      %s299 = smul.u32 5, %s20
      %p301 = scmp.eq.s32.totalorder %s21, 0
      // Predicated region
      $region33: #{forward.25} parent=31 // pred_check
        %p302 = pneg %p301
      $region34: #{forward.25} parent=31 // pred_check_branch
        %304 = sbr.rel (%p302) target = $region36
      $region35: #{forward.25} parent=31 // pred_region
        %vm305 = vcmask 31744
        %306 = vst.msk [vmem:[#allocation2] sm:$0xff] %vm305, -1e+30
        %307 = vst.msk [vmem:[#allocation2 + $0x8] sm:$0xff] %vm305, -1e+30
        %308 = vst.msk [vmem:[#allocation2 + $0x10] sm:$0xff] %vm305, -1e+30
        %309 = vst.msk [vmem:[#allocation2 + $0x18] sm:$0xff] %vm305, -1e+30
        %vm310 = vcmask 24576
        %311 = vst.msk [vmem:[#allocation2 + $0x20] sm:$0x1] %vm310, -1e+30
        %312 = vst.msk [vmem:[#allocation3] sm:$0xff] %vm305, 0.0
        %313 = vst.msk [vmem:[#allocation3 + $0x8] sm:$0xff] %vm305, 0.0
        %314 = vst.msk [vmem:[#allocation3 + $0x10] sm:$0xff] %vm305, 0.0
        %315 = vst.msk [vmem:[#allocation3 + $0x18] sm:$0xff] %vm305, 0.0
        %316 = vst.msk [vmem:[#allocation3 + $0x20] sm:$0x1] %vm310, 0.0
        %317 = vst [vmem:[#allocation4] sm:$0xff] 0.0
        %318 = vst [vmem:[#allocation4 + $0x8] sm:$0xff] 0.0
        %319 = vst [vmem:[#allocation4 + $0x10] sm:$0xff] 0.0
        %320 = vst [vmem:[#allocation4 + $0x18] sm:$0xff] 0.0
        %321 = vst [vmem:[#allocation4 + $0x20] sm:$0xff] 0.0
        %322 = vst [vmem:[#allocation4 + $0x28] sm:$0xff] 0.0
        %323 = vst [vmem:[#allocation4 + $0x30] sm:$0xff] 0.0
        %324 = vst [vmem:[#allocation4 + $0x38] sm:$0xff] 0.0
        %325 = vst [vmem:[#allocation4 + $0x40] sm:$0x1] 0.0
        %326 = vst [vmem:[#allocation4 + $0x48] sm:$0x1] 0.0
      $region36: #{forward.25} parent=31 // pred_fallthru
        _
      %v327 = vld [vmem:[%s265] sm:$0xff]
      %v328 = vld [vmem:[%s265 + $0x8] sm:$0xff]
      %v329 = vld [vmem:[%s265 + $0x10] sm:$0xff]
      %v330 = vld [vmem:[%s265 + $0x18] sm:$0xff]
      %v331 = vld [vmem:[%s265 + $0x20] sm:$0xff]
      %v332 = vld [vmem:[%s265 + $0x28] sm:$0xff]
      %v333 = vld [vmem:[%s265 + $0x30] sm:$0xff]
      %v334 = vld [vmem:[%s265 + $0x38] sm:$0xff]
      %v335 = vld [vmem:[%s265 + $0x40] sm:$0x1]
      %v336 = vld [vmem:[%s265 + $0x48] sm:$0x1]
      %v337 = vld [vmem:[%s276] sm:$0xff]
      %v338 = vld [vmem:[%s276 + $0x8] sm:$0xff]
      %v339 = vld [vmem:[%s276 + $0x10] sm:$0xff]
      %v340 = vld [vmem:[%s276 + $0x18] sm:$0xff]
      %v341 = vld [vmem:[%s276 + $0x20] sm:$0xff]
      %v342 = vld [vmem:[%s276 + $0x28] sm:$0xff]
      %v343 = vld [vmem:[%s276 + $0x30] sm:$0xff]
      %v344 = vld [vmem:[%s276 + $0x38] sm:$0xff]
      %v345 = vld [vmem:[%s276 + $0x40] sm:$0x1]
      %v346 = vld [vmem:[%s276 + $0x48] sm:$0x1]
      %v347 = vld [vmem:[%s287] sm:$0xff]
      %v348 = vld [vmem:[%s287 + $0x8] sm:$0xff]
      %v349 = vld [vmem:[%s287 + $0x10] sm:$0xff]
      %v350 = vld [vmem:[%s287 + $0x18] sm:$0xff]
      %v351 = vld [vmem:[%s287 + $0x20] sm:$0xff]
      %v352 = vld [vmem:[%s287 + $0x28] sm:$0xff]
      %v353 = vld [vmem:[%s287 + $0x30] sm:$0xff]
      %v354 = vld [vmem:[%s287 + $0x38] sm:$0xff]
      %v355 = vld [vmem:[%s287 + $0x40] sm:$0x1]
      %v356 = vld [vmem:[%s287 + $0x48] sm:$0x1]
      %v357 = vmul.f32 %v327, 0.125
      %v358 = vmul.f32 %v329, 0.125
      %v359 = vmul.f32 %v331, 0.125
      %v360 = vmul.f32 %v333, 0.125
      %v361 = vmul.f32 %v335, 0.125
      %v362 = vpack.c.bf16 %v358, %v357
      %v363 = vpack.c.bf16 %v360, %v359
      %v364 = vpack.c.bf16 %v361, %v361
      %v365 = vpack.c.bf16 %v339, %v337
      %v366 = vpack.c.bf16 %v343, %v341
      %v367 = vpack.c.bf16 %v345, %v345
      %v368 = vpack.c.bf16 %v349, %v347
      %v369 = vpack.c.bf16 %v353, %v351
      %v370 = vpack.c.bf16 %v355, %v355
      %vm371 = vcmask 523264
      %v373 = vsel %vm371, %v362, 0
      %v376 = vsel %vm371, %v363, 0
      %v379 = vsel %vm371, %v364, 0
      %v382 = vsel %vm371, %v365, 0
      %v385 = vsel %vm371, %v366, 0
      %v388 = vsel %vm371, %v367, 0
      %390 = vmatprep.subr.bf16.mxu0 0
      %391 = vmatpush1.bf16.xpose.msra.mxu0 %v382
      %392 = vmatprep.subr.bf16.mxu0 0
      %393 = vmatpush1.bf16.xpose.msra.mxu0 %v385
      %394 = vmatprep.subr.bf16.mxu0 0
      %395 = vmatpush1.bf16.xpose.msra.mxu0 %v388
      %396 = vmatprep.subr.bf16.mxu0 0
      %397 = vmatpush1.bf16.xpose.msra.mxu0 0
      %398 = vmatprep.subr.bf16.mxu0 0
      %399 = vmatpush1.bf16.xpose.msra.mxu0 0
      %400 = vmatprep.subr.bf16.mxu0 0
      %401 = vmatpush1.bf16.xpose.msra.mxu0 0
      %402 = vmatprep.subr.bf16.mxu0 0
      %403 = vmatpush1.bf16.xpose.msra.mxu0 0
      %404 = vmatprep.subr.bf16.mxu0 0
      %405 = vmatpush1.bf16.xpose.msra.mxu0 0
      %406 = vmatprep.subr.bf16.mxu0 0
      %407 = vmatpush1.bf16.xpose.msra.mxu0 0
      %408 = vmatprep.subr.bf16.mxu0 0
      %409 = vmatpush1.bf16.xpose.msra.mxu0 0
      %410 = vmatprep.subr.bf16.mxu0 0
      %411 = vmatpush1.bf16.xpose.msra.mxu0 0
      %412 = vmatprep.subr.bf16.mxu0 0
      %413 = vmatpush1.bf16.xpose.msra.mxu0 0
      %414 = vmatprep.subr.bf16.mxu0 0
      %415 = vmatpush1.bf16.xpose.msra.mxu0 0
      %416 = vmatprep.subr.bf16.mxu0 0
      %417 = vmatpush1.bf16.xpose.msra.mxu0 0
      %418 = vmatprep.subr.bf16.mxu0 0
      %419 = vmatpush1.bf16.xpose.msra.mxu0 0
      %420 = vmatprep.subr.bf16.mxu0 0
      %421 = vmatpush1.bf16.xpose.msra.mxu0 0
      %422 = vmatprep.mubr.bf16.mxu0 0
      %423 = vmatmul.mubr.bf16.gmra.mrb[0].mxu0 %v373
      %v424 = vpop.f32.mrb[0].mxu0
      %v425 = vadd.f32 0.0, %v424
      %v426 = vpop.f32.mrb[0].mxu0
      %v427 = vpop.f32.mrb[0].mxu0
      %v428 = vadd.f32 0.0, %v427
      %v429 = vpop.f32.mrb[0].mxu0
      %430 = vmatprep.mubr.bf16.mxu0 0
      %431 = vmatmul.mubr.bf16.gmra.mrb[0].mxu0 %v376
      %v432 = vpop.f32.mrb[0].mxu0
      %v433 = vadd.f32 0.0, %v432
      %v434 = vpop.f32.mrb[0].mxu0
      %v435 = vpop.f32.mrb[0].mxu0
      %v436 = vadd.f32 0.0, %v435
      %v437 = vpop.f32.mrb[0].mxu0
      %438 = vmatprep.mubr.bf16.mxu0 0
      %439 = vmatmul.mubr.bf16.gmra.mrb[0].mxu0 %v379
      %v440 = vpop.f32.mrb[0].mxu0
      %v441 = vadd.f32 0.0, %v440
      %v442 = vpop.f32.mrb[0].mxu0
      %v443 = vpop.f32.mrb[0].mxu0
      %v444 = vpop.f32.mrb[0].mxu0
      %445 = vdwg.mxu0
      %v446 = vld [vmem:[#allocation2] sm:$0xff]
      %v447 = vld [vmem:[#allocation2 + $0x8] sm:$0xff]
      %v448 = vld [vmem:[#allocation2 + $0x10] sm:$0xff]
      %v449 = vld [vmem:[#allocation2 + $0x18] sm:$0xff]
      %v450 = vld [vmem:[#allocation2 + $0x20] sm:$0x1]
      %vm451 = vcmask 269312
      %v452 = vsel %vm451, %v425, -inf
      %453 = vmax.xlane.f32.xlu0 %v452
      %v454 = vpop.xlane.xlu0 %453
      %v455 = vsel %vm451, %v428, -inf
      %456 = vmax.xlane.f32.xlu0 %v455
      %v457 = vpop.xlane.xlu0 %456
      %v458 = vsel %vm451, %v433, -inf
      %459 = vmax.xlane.f32.xlu0 %v458
      %v460 = vpop.xlane.xlu0 %459
      %v461 = vsel %vm451, %v436, -inf
      %462 = vmax.xlane.f32.xlu0 %v461
      %v463 = vpop.xlane.xlu0 %462
      %vm464 = vcmask 262144
      %v465 = vsel %vm464, %v441, -inf
      %466 = vmax.xlane.f32.xlu0 %v465
      %v467 = vpop.xlane.xlu0 %466
      %v468 = vmax.f32 %v446, %v454
      %v469 = vmax.f32 %v447, %v457
      %v470 = vmax.f32 %v448, %v460
      %v471 = vmax.f32 %v449, %v463
      %v472 = vmax.f32 %v450, %v467
      %v473 = vsub.f32 %v446, %v468
      %v474 = vsub.f32 %v447, %v469
      %v475 = vsub.f32 %v448, %v470
      %v476 = vsub.f32 %v449, %v471
      %v477 = vsub.f32 %v450, %v472
      %v478 = vmul.f32 %v473, 1.442695
      %v479 = vpow.pop %v478
      %v480 = vmul.f32 %v474, 1.442695
      %v481 = vpow.pop %v480
      %v482 = vmul.f32 %v475, 1.442695
      %v483 = vpow.pop %v482
      %v484 = vmul.f32 %v476, 1.442695
      %v485 = vpow.pop %v484
      %v486 = vmul.f32 %v477, 1.442695
      %v487 = vpow.pop %v486
      %489 = vset.pattern.permute.xlu0 0
      %490 = vperm.xlu0 %489, %v468
      %v491 = vpop.permute.xlu0 %490
      %494 = vset.pattern.permute.xlu0 0
      %495 = vperm.xlu0 %494, %v469
      %v496 = vpop.permute.xlu0 %495
      %499 = vset.pattern.permute.xlu0 0
      %500 = vperm.xlu0 %499, %v470
      %v501 = vpop.permute.xlu0 %500
      %504 = vset.pattern.permute.xlu0 0
      %505 = vperm.xlu0 %504, %v471
      %v506 = vpop.permute.xlu0 %505
      %509 = vset.pattern.permute.xlu0 0
      %510 = vperm.xlu0 %509, %v472
      %v511 = vpop.permute.xlu0 %510
      %v513 = vsub.f32 %v425, %v491
      %v514 = vsub.f32 %v428, %v496
      %v515 = vsub.f32 %v433, %v501
      %v516 = vsub.f32 %v436, %v506
      %v517 = vsub.f32 %v441, %v511
      %v518 = vmul.f32 %v513, 1.442695
      %v519 = vpow.pop %v518
      %v520 = vmul.f32 %v514, 1.442695
      %v521 = vpow.pop %v520
      %v522 = vmul.f32 %v515, 1.442695
      %v523 = vpow.pop %v522
      %v524 = vmul.f32 %v516, 1.442695
      %v525 = vpow.pop %v524
      %v526 = vmul.f32 %v517, 1.442695
      %v527 = vpow.pop %v526
      %v528 = vld [vmem:[#allocation3] sm:$0xff]
      %v529 = vld [vmem:[#allocation3 + $0x8] sm:$0xff]
      %v530 = vld [vmem:[#allocation3 + $0x10] sm:$0xff]
      %v531 = vld [vmem:[#allocation3 + $0x18] sm:$0xff]
      %v532 = vld [vmem:[#allocation3 + $0x20] sm:$0x1]
      %v533 = vmul.f32 %v479, %v528
      %v534 = vmul.f32 %v481, %v529
      %v535 = vmul.f32 %v483, %v530
      %v536 = vmul.f32 %v485, %v531
      %v537 = vmul.f32 %v487, %v532
      %v538 = vsel %vm451, %v519, 0.0
      %539 = vadd.xlane.f32.xlu0 %v538
      %v540 = vpop.xlane.xlu0 %539
      %v541 = vsel %vm451, %v521, 0.0
      %542 = vadd.xlane.f32.xlu0 %v541
      %v543 = vpop.xlane.xlu0 %542
      %v544 = vsel %vm451, %v523, 0.0
      %545 = vadd.xlane.f32.xlu0 %v544
      %v546 = vpop.xlane.xlu0 %545
      %v547 = vsel %vm451, %v525, 0.0
      %548 = vadd.xlane.f32.xlu0 %v547
      %v549 = vpop.xlane.xlu0 %548
      %v550 = vsel %vm464, %v527, 0.0
      %551 = vadd.xlane.f32.xlu0 %v550
      %v552 = vpop.xlane.xlu0 %551
      %v553 = vadd.f32 %v533, %v540
      %v554 = vadd.f32 %v534, %v543
      %v555 = vadd.f32 %v535, %v546
      %v556 = vadd.f32 %v536, %v549
      %v557 = vadd.f32 %v537, %v552
      %vm558 = vcmask 7168
      %559 = vst.msk [vmem:[#allocation3] sm:$0xff] %vm558, %v553
      %560 = vst.msk [vmem:[#allocation3 + $0x8] sm:$0xff] %vm558, %v554
      %561 = vst.msk [vmem:[#allocation3 + $0x10] sm:$0xff] %vm558, %v555
      %562 = vst.msk [vmem:[#allocation3 + $0x18] sm:$0xff] %vm558, %v556
      %vm563 = vcmask 0
      %564 = vst.msk [vmem:[#allocation3 + $0x20] sm:$0x1] %vm563, %v557
      %v565 = vld [vmem:[#allocation4] sm:$0xff]
      %v566 = vld [vmem:[#allocation4 + $0x10] sm:$0xff]
      %v567 = vld [vmem:[#allocation4 + $0x20] sm:$0xff]
      %v568 = vld [vmem:[#allocation4 + $0x30] sm:$0xff]
      %v569 = vld [vmem:[#allocation4 + $0x40] sm:$0x1]
      %571 = vset.pattern.permute.xlu0 0
      %572 = vperm.xlu0 %571, %v479
      %v573 = vpop.permute.xlu0 %572
      %576 = vset.pattern.permute.xlu0 0
      %577 = vperm.xlu0 %576, %v481
      %v578 = vpop.permute.xlu0 %577
      %581 = vset.pattern.permute.xlu0 0
      %582 = vperm.xlu0 %581, %v483
      %v583 = vpop.permute.xlu0 %582
      %586 = vset.pattern.permute.xlu0 0
      %587 = vperm.xlu0 %586, %v485
      %v588 = vpop.permute.xlu0 %587
      %591 = vset.pattern.permute.xlu0 0
      %592 = vperm.xlu0 %591, %v487
      %v593 = vpop.permute.xlu0 %592
      %v595 = vmul.f32 %v573, %v565
      %v596 = vmul.f32 %v578, %v566
      %v597 = vmul.f32 %v583, %v567
      %v598 = vmul.f32 %v588, %v568
      %v599 = vmul.f32 %v593, %v569
      %v600 = vpack.c.bf16 %v521, %v519
      %v601 = vpack.c.bf16 %v525, %v523
      %v602 = vpack.c.bf16 %v527, %v527
      %v604 = vsel %vm451, %v600, 0
      %v607 = vsel %vm451, %v601, 0
      %v610 = vsel %vm451, %v602, 0
      %vm612 = vcmask 1040384
      %v613 = vsel 0, 4294967295, 65535
      %v614 = vsel %vm612, %v613, 0
      %v616 = vand.u32 %v370, %v614
      %618 = vmatprep.subr.bf16.mxu0 0
      %619 = vmatpush1.bf16.msra.mxu0 %v368
      %620 = vmatprep.subr.bf16.mxu0 0
      %621 = vmatpush1.bf16.msra.mxu0 %v369
      %622 = vmatprep.subr.bf16.mxu0 0
      %623 = vmatpush1.bf16.msra.mxu0 %v616
      %624 = vmatprep.subr.bf16.mxu0 0
      %625 = vmatpush1.bf16.msra.mxu0 0
      %626 = vmatprep.subr.bf16.mxu0 0
      %627 = vmatpush1.bf16.msra.mxu0 0
      %628 = vmatprep.subr.bf16.mxu0 0
      %629 = vmatpush1.bf16.msra.mxu0 0
      %630 = vmatprep.subr.bf16.mxu0 0
      %631 = vmatpush1.bf16.msra.mxu0 0
      %632 = vmatprep.subr.bf16.mxu0 0
      %633 = vmatpush1.bf16.msra.mxu0 0
      %634 = vmatprep.subr.bf16.mxu0 0
      %635 = vmatpush1.bf16.msra.mxu0 0
      %636 = vmatprep.subr.bf16.mxu0 0
      %637 = vmatpush1.bf16.msra.mxu0 0
      %638 = vmatprep.subr.bf16.mxu0 0
      %639 = vmatpush1.bf16.msra.mxu0 0
      %640 = vmatprep.subr.bf16.mxu0 0
      %641 = vmatpush1.bf16.msra.mxu0 0
      %642 = vmatprep.subr.bf16.mxu0 0
      %643 = vmatpush1.bf16.msra.mxu0 0
      %644 = vmatprep.subr.bf16.mxu0 0
      %645 = vmatpush1.bf16.msra.mxu0 0
      %646 = vmatprep.subr.bf16.mxu0 0
      %647 = vmatpush1.bf16.msra.mxu0 0
      %648 = vmatprep.subr.bf16.mxu0 0
      %649 = vmatpush1.bf16.msra.mxu0 0
      %650 = vmatprep.mubr.bf16.mxu0 0
      %651 = vmatmul.mubr.bf16.gmra.mrb[0].mxu0 %v604
      %v652 = vpop.f32.mrb[0].mxu0
      %v653 = vadd.f32 0.0, %v652
      %v654 = vpop.f32.mrb[0].mxu0
      %v655 = vpop.f32.mrb[0].mxu0
      %v656 = vadd.f32 0.0, %v655
      %v657 = vpop.f32.mrb[0].mxu0
      %658 = vmatprep.mubr.bf16.mxu0 0
      %659 = vmatmul.mubr.bf16.gmra.mrb[0].mxu0 %v607
      %v660 = vpop.f32.mrb[0].mxu0
      %v661 = vadd.f32 0.0, %v660
      %v662 = vpop.f32.mrb[0].mxu0
      %v663 = vpop.f32.mrb[0].mxu0
      %v664 = vadd.f32 0.0, %v663
      %v665 = vpop.f32.mrb[0].mxu0
      %666 = vmatprep.mubr.bf16.mxu0 0
      %667 = vmatmul.mubr.bf16.gmra.mrb[0].mxu0 %v610
      %v668 = vpop.f32.mrb[0].mxu0
      %v669 = vadd.f32 0.0, %v668
      %v670 = vpop.f32.mrb[0].mxu0
      %v671 = vpop.f32.mrb[0].mxu0
      %v672 = vpop.f32.mrb[0].mxu0
      %673 = vdwg.mxu0
      %v674 = vadd.f32 %v595, %v653
      %v675 = vadd.f32 %v596, %v656
      %v676 = vadd.f32 %v597, %v661
      %v677 = vadd.f32 %v598, %v664
      %v678 = vadd.f32 %v599, %v669
      %679 = vst.msk [vmem:[#allocation4] sm:$0xff] %vm371, %v674
      %680 = vst.msk [vmem:[#allocation4 + $0x10] sm:$0xff] %vm371, %v675
      %681 = vst.msk [vmem:[#allocation4 + $0x20] sm:$0xff] %vm371, %v676
      %682 = vst.msk [vmem:[#allocation4 + $0x30] sm:$0xff] %vm371, %v677
      %vm683 = vcmask 516096
      %684 = vst.msk [vmem:[#allocation4 + $0x40] sm:$0x1] %vm683, %v678
      %685 = vst.msk [vmem:[#allocation2] sm:$0xff] %vm558, %v468
      %686 = vst.msk [vmem:[#allocation2 + $0x8] sm:$0xff] %vm558, %v469
      %687 = vst.msk [vmem:[#allocation2 + $0x10] sm:$0xff] %vm558, %v470
      %688 = vst.msk [vmem:[#allocation2 + $0x18] sm:$0xff] %vm558, %v471
      %689 = vst.msk [vmem:[#allocation2 + $0x20] sm:$0x1] %vm563, %v472
      %693 = vrot.lane.b32.xlu0 %v362, 64
      %v694 = vpop.permute.xlu0 %693
      %695 = vrot.lane.b32.xlu0 %v363, 64
      %v696 = vpop.permute.xlu0 %695
      %697 = vrot.lane.b32.xlu0 %v364, 64
      %v698 = vpop.permute.xlu0 %697
      %702 = vrot.lane.b32.xlu0 %v365, 64
      %v703 = vpop.permute.xlu0 %702
      %704 = vrot.lane.b32.xlu0 %v366, 64
      %v705 = vpop.permute.xlu0 %704
      %706 = vrot.lane.b32.xlu0 %v367, 64
      %v707 = vpop.permute.xlu0 %706
      %v709 = vsel %vm371, %v694, 0
      %v712 = vsel %vm371, %v696, 0
      %v715 = vsel %vm371, %v698, 0
      %v718 = vsel %vm371, %v703, 0
      %v721 = vsel %vm371, %v705, 0
      %v724 = vsel %vm371, %v707, 0
      %726 = vmatprep.subr.bf16.mxu0 0
      %727 = vmatpush1.bf16.xpose.msra.mxu0 %v718
      %728 = vmatprep.subr.bf16.mxu0 0
      %729 = vmatpush1.bf16.xpose.msra.mxu0 %v721
      %730 = vmatprep.subr.bf16.mxu0 0
      %731 = vmatpush1.bf16.xpose.msra.mxu0 %v724
      %732 = vmatprep.subr.bf16.mxu0 0
      %733 = vmatpush1.bf16.xpose.msra.mxu0 0
      %734 = vmatprep.subr.bf16.mxu0 0
      %735 = vmatpush1.bf16.xpose.msra.mxu0 0
      %736 = vmatprep.subr.bf16.mxu0 0
      %737 = vmatpush1.bf16.xpose.msra.mxu0 0
      %738 = vmatprep.subr.bf16.mxu0 0
      %739 = vmatpush1.bf16.xpose.msra.mxu0 0
      %740 = vmatprep.subr.bf16.mxu0 0
      %741 = vmatpush1.bf16.xpose.msra.mxu0 0
      %742 = vmatprep.subr.bf16.mxu0 0
      %743 = vmatpush1.bf16.xpose.msra.mxu0 0
      %744 = vmatprep.subr.bf16.mxu0 0
      %745 = vmatpush1.bf16.xpose.msra.mxu0 0
      %746 = vmatprep.subr.bf16.mxu0 0
      %747 = vmatpush1.bf16.xpose.msra.mxu0 0
      %748 = vmatprep.subr.bf16.mxu0 0
      %749 = vmatpush1.bf16.xpose.msra.mxu0 0
      %750 = vmatprep.subr.bf16.mxu0 0
      %751 = vmatpush1.bf16.xpose.msra.mxu0 0
      %752 = vmatprep.subr.bf16.mxu0 0
      %753 = vmatpush1.bf16.xpose.msra.mxu0 0
      %754 = vmatprep.subr.bf16.mxu0 0
      %755 = vmatpush1.bf16.xpose.msra.mxu0 0
      %756 = vmatprep.subr.bf16.mxu0 0
      %757 = vmatpush1.bf16.xpose.msra.mxu0 0
      %758 = vmatprep.mubr.bf16.mxu0 0
      %759 = vmatmul.mubr.bf16.gmra.mrb[0].mxu0 %v709
      %v760 = vpop.f32.mrb[0].mxu0
      %v761 = vadd.f32 0.0, %v760
      %v762 = vpop.f32.mrb[0].mxu0
      %v763 = vpop.f32.mrb[0].mxu0
      %v764 = vadd.f32 0.0, %v763
      %v765 = vpop.f32.mrb[0].mxu0
      %766 = vmatprep.mubr.bf16.mxu0 0
      %767 = vmatmul.mubr.bf16.gmra.mrb[0].mxu0 %v712
      %v768 = vpop.f32.mrb[0].mxu0
      %v769 = vadd.f32 0.0, %v768
      %v770 = vpop.f32.mrb[0].mxu0
      %v771 = vpop.f32.mrb[0].mxu0
      %v772 = vadd.f32 0.0, %v771
      %v773 = vpop.f32.mrb[0].mxu0
      %774 = vmatprep.mubr.bf16.mxu0 0
      %775 = vmatmul.mubr.bf16.gmra.mrb[0].mxu0 %v715
      %v776 = vpop.f32.mrb[0].mxu0
      %v777 = vadd.f32 0.0, %v776
      %v778 = vpop.f32.mrb[0].mxu0
      %v779 = vpop.f32.mrb[0].mxu0
      %v780 = vpop.f32.mrb[0].mxu0
      %781 = vdwg.mxu0
      %v782 = vld [vmem:[#allocation2] sm:$0xff]
      %v783 = vld [vmem:[#allocation2 + $0x8] sm:$0xff]
      %v784 = vld [vmem:[#allocation2 + $0x10] sm:$0xff]
      %v785 = vld [vmem:[#allocation2 + $0x18] sm:$0xff]
      %v786 = vld [vmem:[#allocation2 + $0x20] sm:$0x1]
      %v787 = vsel %vm451, %v761, -inf
      %788 = vmax.xlane.f32.xlu0 %v787
      %v789 = vpop.xlane.xlu0 %788
      %v790 = vsel %vm451, %v764, -inf
      %791 = vmax.xlane.f32.xlu0 %v790
      %v792 = vpop.xlane.xlu0 %791
      %v793 = vsel %vm451, %v769, -inf
      %794 = vmax.xlane.f32.xlu0 %v793
      %v795 = vpop.xlane.xlu0 %794
      %v796 = vsel %vm451, %v772, -inf
      %797 = vmax.xlane.f32.xlu0 %v796
      %v798 = vpop.xlane.xlu0 %797
      %v799 = vsel %vm464, %v777, -inf
      %800 = vmax.xlane.f32.xlu0 %v799
      %v801 = vpop.xlane.xlu0 %800
      %v802 = vmax.f32 %v782, %v789
      %v803 = vmax.f32 %v783, %v792
      %v804 = vmax.f32 %v784, %v795
      %v805 = vmax.f32 %v785, %v798
      %v806 = vmax.f32 %v786, %v801
      %v807 = vsub.f32 %v782, %v802
      %v808 = vsub.f32 %v783, %v803
      %v809 = vsub.f32 %v784, %v804
      %v810 = vsub.f32 %v785, %v805
      %v811 = vsub.f32 %v786, %v806
      %v812 = vmul.f32 %v807, 1.442695
      %v813 = vpow.pop %v812
      %v814 = vmul.f32 %v808, 1.442695
      %v815 = vpow.pop %v814
      %v816 = vmul.f32 %v809, 1.442695
      %v817 = vpow.pop %v816
      %v818 = vmul.f32 %v810, 1.442695
      %v819 = vpow.pop %v818
      %v820 = vmul.f32 %v811, 1.442695
      %v821 = vpow.pop %v820
      %823 = vset.pattern.permute.xlu0 1
      %824 = vperm.xlu0 %823, %v802
      %v825 = vpop.permute.xlu0 %824
      %828 = vset.pattern.permute.xlu0 1
      %829 = vperm.xlu0 %828, %v803
      %v830 = vpop.permute.xlu0 %829
      %833 = vset.pattern.permute.xlu0 1
      %834 = vperm.xlu0 %833, %v804
      %v835 = vpop.permute.xlu0 %834
      %838 = vset.pattern.permute.xlu0 1
      %839 = vperm.xlu0 %838, %v805
      %v840 = vpop.permute.xlu0 %839
      %843 = vset.pattern.permute.xlu0 1
      %844 = vperm.xlu0 %843, %v806
      %v845 = vpop.permute.xlu0 %844
      %v847 = vsub.f32 %v761, %v825
      %v848 = vsub.f32 %v764, %v830
      %v849 = vsub.f32 %v769, %v835
      %v850 = vsub.f32 %v772, %v840
      %v851 = vsub.f32 %v777, %v845
      %v852 = vmul.f32 %v847, 1.442695
      %v853 = vpow.pop %v852
      %v854 = vmul.f32 %v848, 1.442695
      %v855 = vpow.pop %v854
      %v856 = vmul.f32 %v849, 1.442695
      %v857 = vpow.pop %v856
      %v858 = vmul.f32 %v850, 1.442695
      %v859 = vpow.pop %v858
      %v860 = vmul.f32 %v851, 1.442695
      %v861 = vpow.pop %v860
      %v862 = vld [vmem:[#allocation3] sm:$0xff]
      %v863 = vld [vmem:[#allocation3 + $0x8] sm:$0xff]
      %v864 = vld [vmem:[#allocation3 + $0x10] sm:$0xff]
      %v865 = vld [vmem:[#allocation3 + $0x18] sm:$0xff]
      %v866 = vld [vmem:[#allocation3 + $0x20] sm:$0x1]
      %v867 = vmul.f32 %v813, %v862
      %v868 = vmul.f32 %v815, %v863
      %v869 = vmul.f32 %v817, %v864
      %v870 = vmul.f32 %v819, %v865
      %v871 = vmul.f32 %v821, %v866
      %v872 = vsel %vm451, %v853, 0.0
      %873 = vadd.xlane.f32.xlu0 %v872
      %v874 = vpop.xlane.xlu0 %873
      %v875 = vsel %vm451, %v855, 0.0
      %876 = vadd.xlane.f32.xlu0 %v875
      %v877 = vpop.xlane.xlu0 %876
      %v878 = vsel %vm451, %v857, 0.0
      %879 = vadd.xlane.f32.xlu0 %v878
      %v880 = vpop.xlane.xlu0 %879
      %v881 = vsel %vm451, %v859, 0.0
      %882 = vadd.xlane.f32.xlu0 %v881
      %v883 = vpop.xlane.xlu0 %882
      %v884 = vsel %vm464, %v861, 0.0
      %885 = vadd.xlane.f32.xlu0 %v884
      %v886 = vpop.xlane.xlu0 %885
      %v887 = vadd.f32 %v867, %v874
      %v888 = vadd.f32 %v868, %v877
      %v889 = vadd.f32 %v869, %v880
      %v890 = vadd.f32 %v870, %v883
      %v891 = vadd.f32 %v871, %v886
      %vm892 = vcmask 15368
      %893 = vst.msk [vmem:[#allocation3] sm:$0xff] %vm892, %v887
      %894 = vst.msk [vmem:[#allocation3 + $0x8] sm:$0xff] %vm892, %v888
      %895 = vst.msk [vmem:[#allocation3 + $0x10] sm:$0xff] %vm892, %v889
      %896 = vst.msk [vmem:[#allocation3 + $0x18] sm:$0xff] %vm892, %v890
      %vm897 = vcmask 8200
      %898 = vst.msk [vmem:[#allocation3 + $0x20] sm:$0x1] %vm897, %v891
      %v899 = vld [vmem:[#allocation4] sm:$0xff]
      %v900 = vld [vmem:[#allocation4 + $0x10] sm:$0xff]
      %v901 = vld [vmem:[#allocation4 + $0x20] sm:$0xff]
      %v902 = vld [vmem:[#allocation4 + $0x30] sm:$0xff]
      %v903 = vld [vmem:[#allocation4 + $0x40] sm:$0x1]
      %905 = vset.pattern.permute.xlu0 1
      %906 = vperm.xlu0 %905, %v813
      %v907 = vpop.permute.xlu0 %906
      %910 = vset.pattern.permute.xlu0 1
      %911 = vperm.xlu0 %910, %v815
      %v912 = vpop.permute.xlu0 %911
      %915 = vset.pattern.permute.xlu0 1
      %916 = vperm.xlu0 %915, %v817
      %v917 = vpop.permute.xlu0 %916
      %920 = vset.pattern.permute.xlu0 1
      %921 = vperm.xlu0 %920, %v819
      %v922 = vpop.permute.xlu0 %921
      %925 = vset.pattern.permute.xlu0 1
      %926 = vperm.xlu0 %925, %v821
      %v927 = vpop.permute.xlu0 %926
      %v929 = vmul.f32 %v907, %v899
      %v930 = vmul.f32 %v912, %v900
      %v931 = vmul.f32 %v917, %v901
      %v932 = vmul.f32 %v922, %v902
      %v933 = vmul.f32 %v927, %v903
      %v934 = vpack.c.bf16 %v855, %v853
      %v935 = vpack.c.bf16 %v859, %v857
      %v936 = vpack.c.bf16 %v861, %v861
      %940 = vrot.lane.b32.xlu0 %v368, 64
      %v941 = vpop.permute.xlu0 %940
      %942 = vrot.lane.b32.xlu0 %v369, 64
      %v943 = vpop.permute.xlu0 %942
      %944 = vrot.lane.b32.xlu0 %v370, 64
      %v945 = vpop.permute.xlu0 %944
      %v949 = vsel %vm451, %v934, 0
      %v952 = vsel %vm451, %v935, 0
      %v955 = vsel %vm451, %v936, 0
      %v958 = vand.u32 %v945, %v614
      %960 = vmatprep.subr.bf16.mxu0 0
      %961 = vmatpush1.bf16.msra.mxu0 %v941
      %962 = vmatprep.subr.bf16.mxu0 0
      %963 = vmatpush1.bf16.msra.mxu0 %v943
      %964 = vmatprep.subr.bf16.mxu0 0
      %965 = vmatpush1.bf16.msra.mxu0 %v958
      %966 = vmatprep.subr.bf16.mxu0 0
      %967 = vmatpush1.bf16.msra.mxu0 0
      %968 = vmatprep.subr.bf16.mxu0 0
      %969 = vmatpush1.bf16.msra.mxu0 0
      %970 = vmatprep.subr.bf16.mxu0 0
      %971 = vmatpush1.bf16.msra.mxu0 0
      %972 = vmatprep.subr.bf16.mxu0 0
      %973 = vmatpush1.bf16.msra.mxu0 0
      %974 = vmatprep.subr.bf16.mxu0 0
      %975 = vmatpush1.bf16.msra.mxu0 0
      %976 = vmatprep.subr.bf16.mxu0 0
      %977 = vmatpush1.bf16.msra.mxu0 0
      %978 = vmatprep.subr.bf16.mxu0 0
      %979 = vmatpush1.bf16.msra.mxu0 0
      %980 = vmatprep.subr.bf16.mxu0 0
      %981 = vmatpush1.bf16.msra.mxu0 0
      %982 = vmatprep.subr.bf16.mxu0 0
      %983 = vmatpush1.bf16.msra.mxu0 0
      %984 = vmatprep.subr.bf16.mxu0 0
      %985 = vmatpush1.bf16.msra.mxu0 0
      %986 = vmatprep.subr.bf16.mxu0 0
      %987 = vmatpush1.bf16.msra.mxu0 0
      %988 = vmatprep.subr.bf16.mxu0 0
      %989 = vmatpush1.bf16.msra.mxu0 0
      %990 = vmatprep.subr.bf16.mxu0 0
      %991 = vmatpush1.bf16.msra.mxu0 0
      %992 = vmatprep.mubr.bf16.mxu0 0
      %993 = vmatmul.mubr.bf16.gmra.mrb[0].mxu0 %v949
      %v994 = vpop.f32.mrb[0].mxu0
      %v995 = vadd.f32 0.0, %v994
      %v996 = vpop.f32.mrb[0].mxu0
      %v997 = vpop.f32.mrb[0].mxu0
      %v998 = vadd.f32 0.0, %v997
      %v999 = vpop.f32.mrb[0].mxu0
      %1000 = vmatprep.mubr.bf16.mxu0 0
      %1001 = vmatmul.mubr.bf16.gmra.mrb[0].mxu0 %v952
      %v1002 = vpop.f32.mrb[0].mxu0
      %v1003 = vadd.f32 0.0, %v1002
      %v1004 = vpop.f32.mrb[0].mxu0
      %v1005 = vpop.f32.mrb[0].mxu0
      %v1006 = vadd.f32 0.0, %v1005
      %v1007 = vpop.f32.mrb[0].mxu0
      %1008 = vmatprep.mubr.bf16.mxu0 0
      %1009 = vmatmul.mubr.bf16.gmra.mrb[0].mxu0 %v955
      %v1010 = vpop.f32.mrb[0].mxu0
      %v1011 = vadd.f32 0.0, %v1010
      %v1012 = vpop.f32.mrb[0].mxu0
      %v1013 = vpop.f32.mrb[0].mxu0
      %v1014 = vpop.f32.mrb[0].mxu0
      %1015 = vdwg.mxu0
      %1021 = vrot.lane.b32.xlu0 %v995, 64
      %v1022 = vpop.permute.xlu0 %1021
      %1023 = vrot.lane.b32.xlu0 %v998, 64
      %v1024 = vpop.permute.xlu0 %1023
      %1025 = vrot.lane.b32.xlu0 %v1003, 64
      %v1026 = vpop.permute.xlu0 %1025
      %1027 = vrot.lane.b32.xlu0 %v1006, 64
      %v1028 = vpop.permute.xlu0 %1027
      %1029 = vrot.lane.b32.xlu0 %v1011, 64
      %v1030 = vpop.permute.xlu0 %1029
      %v1036 = vadd.f32 %v929, %v1022
      %v1037 = vadd.f32 %v930, %v1024
      %v1038 = vadd.f32 %v931, %v1026
      %v1039 = vadd.f32 %v932, %v1028
      %v1040 = vadd.f32 %v933, %v1030
      %vm1041 = vcmask 1048064
      %1042 = vst.msk [vmem:[#allocation4] sm:$0xff] %vm1041, %v1036
      %1043 = vst.msk [vmem:[#allocation4 + $0x10] sm:$0xff] %vm1041, %v1037
      %1044 = vst.msk [vmem:[#allocation4 + $0x20] sm:$0xff] %vm1041, %v1038
      %1045 = vst.msk [vmem:[#allocation4 + $0x30] sm:$0xff] %vm1041, %v1039
      %vm1046 = vcmask 1040896
      %1047 = vst.msk [vmem:[#allocation4 + $0x40] sm:$0x1] %vm1046, %v1040
      %1048 = vst.msk [vmem:[#allocation2] sm:$0xff] %vm892, %v802
      %1049 = vst.msk [vmem:[#allocation2 + $0x8] sm:$0xff] %vm892, %v803
      %1050 = vst.msk [vmem:[#allocation2 + $0x10] sm:$0xff] %vm892, %v804
      %1051 = vst.msk [vmem:[#allocation2 + $0x18] sm:$0xff] %vm892, %v805
      %1052 = vst.msk [vmem:[#allocation2 + $0x20] sm:$0x1] %vm897, %v806
      %v1053 = vmul.f32 %v328, 0.125
      %v1054 = vmul.f32 %v330, 0.125
      %v1055 = vmul.f32 %v332, 0.125
      %v1056 = vmul.f32 %v334, 0.125
      %v1057 = vmul.f32 %v336, 0.125
      %v1058 = vpack.c.bf16 %v1054, %v1053
      %v1059 = vpack.c.bf16 %v1056, %v1055
      %v1060 = vpack.c.bf16 %v1057, %v1057
      %v1061 = vpack.c.bf16 %v340, %v338
      %v1062 = vpack.c.bf16 %v344, %v342
      %v1063 = vpack.c.bf16 %v346, %v346
      %v1064 = vpack.c.bf16 %v350, %v348
      %v1065 = vpack.c.bf16 %v354, %v352
      %v1066 = vpack.c.bf16 %v356, %v356
      %v1068 = vsel %vm371, %v1058, 0
      %v1071 = vsel %vm371, %v1059, 0
      %v1074 = vsel %vm371, %v1060, 0
      %v1077 = vsel %vm371, %v1061, 0
      %v1080 = vsel %vm371, %v1062, 0
      %v1083 = vsel %vm371, %v1063, 0
      %1085 = vmatprep.subr.bf16.mxu0 0
      %1086 = vmatpush1.bf16.xpose.msra.mxu0 %v1077
      %1087 = vmatprep.subr.bf16.mxu0 0
      %1088 = vmatpush1.bf16.xpose.msra.mxu0 %v1080
      %1089 = vmatprep.subr.bf16.mxu0 0
      %1090 = vmatpush1.bf16.xpose.msra.mxu0 %v1083
      %1091 = vmatprep.subr.bf16.mxu0 0
      %1092 = vmatpush1.bf16.xpose.msra.mxu0 0
      %1093 = vmatprep.subr.bf16.mxu0 0
      %1094 = vmatpush1.bf16.xpose.msra.mxu0 0
      %1095 = vmatprep.subr.bf16.mxu0 0
      %1096 = vmatpush1.bf16.xpose.msra.mxu0 0
      %1097 = vmatprep.subr.bf16.mxu0 0
      %1098 = vmatpush1.bf16.xpose.msra.mxu0 0
      %1099 = vmatprep.subr.bf16.mxu0 0
      %1100 = vmatpush1.bf16.xpose.msra.mxu0 0
      %1101 = vmatprep.subr.bf16.mxu0 0
      %1102 = vmatpush1.bf16.xpose.msra.mxu0 0
      %1103 = vmatprep.subr.bf16.mxu0 0
      %1104 = vmatpush1.bf16.xpose.msra.mxu0 0
      %1105 = vmatprep.subr.bf16.mxu0 0
      %1106 = vmatpush1.bf16.xpose.msra.mxu0 0
      %1107 = vmatprep.subr.bf16.mxu0 0
      %1108 = vmatpush1.bf16.xpose.msra.mxu0 0
      %1109 = vmatprep.subr.bf16.mxu0 0
      %1110 = vmatpush1.bf16.xpose.msra.mxu0 0
      %1111 = vmatprep.subr.bf16.mxu0 0
      %1112 = vmatpush1.bf16.xpose.msra.mxu0 0
      %1113 = vmatprep.subr.bf16.mxu0 0
      %1114 = vmatpush1.bf16.xpose.msra.mxu0 0
      %1115 = vmatprep.subr.bf16.mxu0 0
      %1116 = vmatpush1.bf16.xpose.msra.mxu0 0
      %1117 = vmatprep.mubr.bf16.mxu0 0
      %1118 = vmatmul.mubr.bf16.gmra.mrb[0].mxu0 %v1068
      %v1119 = vpop.f32.mrb[0].mxu0
      %v1120 = vadd.f32 0.0, %v1119
      %v1121 = vpop.f32.mrb[0].mxu0
      %v1122 = vpop.f32.mrb[0].mxu0
      %v1123 = vadd.f32 0.0, %v1122
      %v1124 = vpop.f32.mrb[0].mxu0
      %1125 = vmatprep.mubr.bf16.mxu0 0
      %1126 = vmatmul.mubr.bf16.gmra.mrb[0].mxu0 %v1071
      %v1127 = vpop.f32.mrb[0].mxu0
      %v1128 = vadd.f32 0.0, %v1127
      %v1129 = vpop.f32.mrb[0].mxu0
      %v1130 = vpop.f32.mrb[0].mxu0
      %v1131 = vadd.f32 0.0, %v1130
      %v1132 = vpop.f32.mrb[0].mxu0
      %1133 = vmatprep.mubr.bf16.mxu0 0
      %1134 = vmatmul.mubr.bf16.gmra.mrb[0].mxu0 %v1074
      %v1135 = vpop.f32.mrb[0].mxu0
      %v1136 = vadd.f32 0.0, %v1135
      %v1137 = vpop.f32.mrb[0].mxu0
      %v1138 = vpop.f32.mrb[0].mxu0
      %v1139 = vpop.f32.mrb[0].mxu0
      %1140 = vdwg.mxu0
      %v1141 = vld [vmem:[#allocation2] sm:$0xff]
      %v1142 = vld [vmem:[#allocation2 + $0x8] sm:$0xff]
      %v1143 = vld [vmem:[#allocation2 + $0x10] sm:$0xff]
      %v1144 = vld [vmem:[#allocation2 + $0x18] sm:$0xff]
      %v1145 = vld [vmem:[#allocation2 + $0x20] sm:$0x1]
      %v1146 = vsel %vm451, %v1120, -inf
      %1147 = vmax.xlane.f32.xlu0 %v1146
      %v1148 = vpop.xlane.xlu0 %1147
      %v1149 = vsel %vm451, %v1123, -inf
      %1150 = vmax.xlane.f32.xlu0 %v1149
      %v1151 = vpop.xlane.xlu0 %1150
      %v1152 = vsel %vm451, %v1128, -inf
      %1153 = vmax.xlane.f32.xlu0 %v1152
      %v1154 = vpop.xlane.xlu0 %1153
      %v1155 = vsel %vm451, %v1131, -inf
      %1156 = vmax.xlane.f32.xlu0 %v1155
      %v1157 = vpop.xlane.xlu0 %1156
      %v1158 = vsel %vm464, %v1136, -inf
      %1159 = vmax.xlane.f32.xlu0 %v1158
      %v1160 = vpop.xlane.xlu0 %1159
      %v1161 = vmax.f32 %v1141, %v1148
      %v1162 = vmax.f32 %v1142, %v1151
      %v1163 = vmax.f32 %v1143, %v1154
      %v1164 = vmax.f32 %v1144, %v1157
      %v1165 = vmax.f32 %v1145, %v1160
      %v1166 = vsub.f32 %v1141, %v1161
      %v1167 = vsub.f32 %v1142, %v1162
      %v1168 = vsub.f32 %v1143, %v1163
      %v1169 = vsub.f32 %v1144, %v1164
      %v1170 = vsub.f32 %v1145, %v1165
      %v1171 = vmul.f32 %v1166, 1.442695
      %v1172 = vpow.pop %v1171
      %v1173 = vmul.f32 %v1167, 1.442695
      %v1174 = vpow.pop %v1173
      %v1175 = vmul.f32 %v1168, 1.442695
      %v1176 = vpow.pop %v1175
      %v1177 = vmul.f32 %v1169, 1.442695
      %v1178 = vpow.pop %v1177
      %v1179 = vmul.f32 %v1170, 1.442695
      %v1180 = vpow.pop %v1179
      %1182 = vset.pattern.permute.xlu0 2
      %1183 = vperm.xlu0 %1182, %v1161
      %v1184 = vpop.permute.xlu0 %1183
      %1187 = vset.pattern.permute.xlu0 2
      %1188 = vperm.xlu0 %1187, %v1162
      %v1189 = vpop.permute.xlu0 %1188
      %1192 = vset.pattern.permute.xlu0 2
      %1193 = vperm.xlu0 %1192, %v1163
      %v1194 = vpop.permute.xlu0 %1193
      %1197 = vset.pattern.permute.xlu0 2
      %1198 = vperm.xlu0 %1197, %v1164
      %v1199 = vpop.permute.xlu0 %1198
      %1202 = vset.pattern.permute.xlu0 2
      %1203 = vperm.xlu0 %1202, %v1165
      %v1204 = vpop.permute.xlu0 %1203
      %v1206 = vsub.f32 %v1120, %v1184
      %v1207 = vsub.f32 %v1123, %v1189
      %v1208 = vsub.f32 %v1128, %v1194
      %v1209 = vsub.f32 %v1131, %v1199
      %v1210 = vsub.f32 %v1136, %v1204
      %v1211 = vmul.f32 %v1206, 1.442695
      %v1212 = vpow.pop %v1211
      %v1213 = vmul.f32 %v1207, 1.442695
      %v1214 = vpow.pop %v1213
      %v1215 = vmul.f32 %v1208, 1.442695
      %v1216 = vpow.pop %v1215
      %v1217 = vmul.f32 %v1209, 1.442695
      %v1218 = vpow.pop %v1217
      %v1219 = vmul.f32 %v1210, 1.442695
      %v1220 = vpow.pop %v1219
      %v1221 = vld [vmem:[#allocation3] sm:$0xff]
      %v1222 = vld [vmem:[#allocation3 + $0x8] sm:$0xff]
      %v1223 = vld [vmem:[#allocation3 + $0x10] sm:$0xff]
      %v1224 = vld [vmem:[#allocation3 + $0x18] sm:$0xff]
      %v1225 = vld [vmem:[#allocation3 + $0x20] sm:$0x1]
      %v1226 = vmul.f32 %v1172, %v1221
      %v1227 = vmul.f32 %v1174, %v1222
      %v1228 = vmul.f32 %v1176, %v1223
      %v1229 = vmul.f32 %v1178, %v1224
      %v1230 = vmul.f32 %v1180, %v1225
      %v1231 = vsel %vm451, %v1212, 0.0
      %1232 = vadd.xlane.f32.xlu0 %v1231
      %v1233 = vpop.xlane.xlu0 %1232
      %v1234 = vsel %vm451, %v1214, 0.0
      %1235 = vadd.xlane.f32.xlu0 %v1234
      %v1236 = vpop.xlane.xlu0 %1235
      %v1237 = vsel %vm451, %v1216, 0.0
      %1238 = vadd.xlane.f32.xlu0 %v1237
      %v1239 = vpop.xlane.xlu0 %1238
      %v1240 = vsel %vm451, %v1218, 0.0
      %1241 = vadd.xlane.f32.xlu0 %v1240
      %v1242 = vpop.xlane.xlu0 %1241
      %v1243 = vsel %vm464, %v1220, 0.0
      %1244 = vadd.xlane.f32.xlu0 %v1243
      %v1245 = vpop.xlane.xlu0 %1244
      %v1246 = vadd.f32 %v1226, %v1233
      %v1247 = vadd.f32 %v1227, %v1236
      %v1248 = vadd.f32 %v1228, %v1239
      %v1249 = vadd.f32 %v1229, %v1242
      %v1250 = vadd.f32 %v1230, %v1245
      %vm1251 = vcmask 23568
      %1252 = vst.msk [vmem:[#allocation3] sm:$0xff] %vm1251, %v1246
      %1253 = vst.msk [vmem:[#allocation3 + $0x8] sm:$0xff] %vm1251, %v1247
      %1254 = vst.msk [vmem:[#allocation3 + $0x10] sm:$0xff] %vm1251, %v1248
      %1255 = vst.msk [vmem:[#allocation3 + $0x18] sm:$0xff] %vm1251, %v1249
      %vm1256 = vcmask 16400
      %1257 = vst.msk [vmem:[#allocation3 + $0x20] sm:$0x1] %vm1256, %v1250
      %v1258 = vld [vmem:[#allocation4 + $0x8] sm:$0xff]
      %v1259 = vld [vmem:[#allocation4 + $0x18] sm:$0xff]
      %v1260 = vld [vmem:[#allocation4 + $0x28] sm:$0xff]
      %v1261 = vld [vmem:[#allocation4 + $0x38] sm:$0xff]
      %v1262 = vld [vmem:[#allocation4 + $0x48] sm:$0x1]
      %1264 = vset.pattern.permute.xlu0 2
      %1265 = vperm.xlu0 %1264, %v1172
      %v1266 = vpop.permute.xlu0 %1265
      %1269 = vset.pattern.permute.xlu0 2
      %1270 = vperm.xlu0 %1269, %v1174
      %v1271 = vpop.permute.xlu0 %1270
      %1274 = vset.pattern.permute.xlu0 2
      %1275 = vperm.xlu0 %1274, %v1176
      %v1276 = vpop.permute.xlu0 %1275
      %1279 = vset.pattern.permute.xlu0 2
      %1280 = vperm.xlu0 %1279, %v1178
      %v1281 = vpop.permute.xlu0 %1280
      %1284 = vset.pattern.permute.xlu0 2
      %1285 = vperm.xlu0 %1284, %v1180
      %v1286 = vpop.permute.xlu0 %1285
      %v1288 = vmul.f32 %v1266, %v1258
      %v1289 = vmul.f32 %v1271, %v1259
      %v1290 = vmul.f32 %v1276, %v1260
      %v1291 = vmul.f32 %v1281, %v1261
      %v1292 = vmul.f32 %v1286, %v1262
      %v1293 = vpack.c.bf16 %v1214, %v1212
      %v1294 = vpack.c.bf16 %v1218, %v1216
      %v1295 = vpack.c.bf16 %v1220, %v1220
      %v1297 = vsel %vm451, %v1293, 0
      %v1300 = vsel %vm451, %v1294, 0
      %v1303 = vsel %vm451, %v1295, 0
      %v1306 = vand.u32 %v1066, %v614
      %1308 = vmatprep.subr.bf16.mxu0 0
      %1309 = vmatpush1.bf16.msra.mxu0 %v1064
      %1310 = vmatprep.subr.bf16.mxu0 0
      %1311 = vmatpush1.bf16.msra.mxu0 %v1065
      %1312 = vmatprep.subr.bf16.mxu0 0
      %1313 = vmatpush1.bf16.msra.mxu0 %v1306
      %1314 = vmatprep.subr.bf16.mxu0 0
      %1315 = vmatpush1.bf16.msra.mxu0 0
      %1316 = vmatprep.subr.bf16.mxu0 0
      %1317 = vmatpush1.bf16.msra.mxu0 0
      %1318 = vmatprep.subr.bf16.mxu0 0
      %1319 = vmatpush1.bf16.msra.mxu0 0
      %1320 = vmatprep.subr.bf16.mxu0 0
      %1321 = vmatpush1.bf16.msra.mxu0 0
      %1322 = vmatprep.subr.bf16.mxu0 0
      %1323 = vmatpush1.bf16.msra.mxu0 0
      %1324 = vmatprep.subr.bf16.mxu0 0
      %1325 = vmatpush1.bf16.msra.mxu0 0
      %1326 = vmatprep.subr.bf16.mxu0 0
      %1327 = vmatpush1.bf16.msra.mxu0 0
      %1328 = vmatprep.subr.bf16.mxu0 0
      %1329 = vmatpush1.bf16.msra.mxu0 0
      %1330 = vmatprep.subr.bf16.mxu0 0
      %1331 = vmatpush1.bf16.msra.mxu0 0
      %1332 = vmatprep.subr.bf16.mxu0 0
      %1333 = vmatpush1.bf16.msra.mxu0 0
      %1334 = vmatprep.subr.bf16.mxu0 0
      %1335 = vmatpush1.bf16.msra.mxu0 0
      %1336 = vmatprep.subr.bf16.mxu0 0
      %1337 = vmatpush1.bf16.msra.mxu0 0
      %1338 = vmatprep.subr.bf16.mxu0 0
      %1339 = vmatpush1.bf16.msra.mxu0 0
      %1340 = vmatprep.mubr.bf16.mxu0 0
      %1341 = vmatmul.mubr.bf16.gmra.mrb[0].mxu0 %v1297
      %v1342 = vpop.f32.mrb[0].mxu0
      %v1343 = vadd.f32 0.0, %v1342
      %v1344 = vpop.f32.mrb[0].mxu0
      %v1345 = vpop.f32.mrb[0].mxu0
      %v1346 = vadd.f32 0.0, %v1345
      %v1347 = vpop.f32.mrb[0].mxu0
      %1348 = vmatprep.mubr.bf16.mxu0 0
      %1349 = vmatmul.mubr.bf16.gmra.mrb[0].mxu0 %v1300
      %v1350 = vpop.f32.mrb[0].mxu0
      %v1351 = vadd.f32 0.0, %v1350
      %v1352 = vpop.f32.mrb[0].mxu0
      %v1353 = vpop.f32.mrb[0].mxu0
      %v1354 = vadd.f32 0.0, %v1353
      %v1355 = vpop.f32.mrb[0].mxu0
      %1356 = vmatprep.mubr.bf16.mxu0 0
      %1357 = vmatmul.mubr.bf16.gmra.mrb[0].mxu0 %v1303
      %v1358 = vpop.f32.mrb[0].mxu0
      %v1359 = vadd.f32 0.0, %v1358
      %v1360 = vpop.f32.mrb[0].mxu0
      %v1361 = vpop.f32.mrb[0].mxu0
      %v1362 = vpop.f32.mrb[0].mxu0
      %1363 = vdwg.mxu0
      %v1364 = vadd.f32 %v1288, %v1343
      %v1365 = vadd.f32 %v1289, %v1346
      %v1366 = vadd.f32 %v1290, %v1351
      %v1367 = vadd.f32 %v1291, %v1354
      %v1368 = vadd.f32 %v1292, %v1359
      %1369 = vst.msk [vmem:[#allocation4 + $0x8] sm:$0xff] %vm371, %v1364
      %1370 = vst.msk [vmem:[#allocation4 + $0x18] sm:$0xff] %vm371, %v1365
      %1371 = vst.msk [vmem:[#allocation4 + $0x28] sm:$0xff] %vm371, %v1366
      %1372 = vst.msk [vmem:[#allocation4 + $0x38] sm:$0xff] %vm371, %v1367
      %1373 = vst.msk [vmem:[#allocation4 + $0x48] sm:$0x1] %vm683, %v1368
      %1374 = vst.msk [vmem:[#allocation2] sm:$0xff] %vm1251, %v1161
      %1375 = vst.msk [vmem:[#allocation2 + $0x8] sm:$0xff] %vm1251, %v1162
      %1376 = vst.msk [vmem:[#allocation2 + $0x10] sm:$0xff] %vm1251, %v1163
      %1377 = vst.msk [vmem:[#allocation2 + $0x18] sm:$0xff] %vm1251, %v1164
      %1378 = vst.msk [vmem:[#allocation2 + $0x20] sm:$0x1] %vm1256, %v1165
      %1382 = vrot.lane.b32.xlu0 %v1058, 64
      %v1383 = vpop.permute.xlu0 %1382
      %1384 = vrot.lane.b32.xlu0 %v1059, 64
      %v1385 = vpop.permute.xlu0 %1384
      %1386 = vrot.lane.b32.xlu0 %v1060, 64
      %v1387 = vpop.permute.xlu0 %1386
      %1391 = vrot.lane.b32.xlu0 %v1061, 64
      %v1392 = vpop.permute.xlu0 %1391
      %1393 = vrot.lane.b32.xlu0 %v1062, 64
      %v1394 = vpop.permute.xlu0 %1393
      %1395 = vrot.lane.b32.xlu0 %v1063, 64
      %v1396 = vpop.permute.xlu0 %1395
      %v1398 = vsel %vm371, %v1383, 0
      %v1401 = vsel %vm371, %v1385, 0
      %v1404 = vsel %vm371, %v1387, 0
      %v1407 = vsel %vm371, %v1392, 0
      %v1410 = vsel %vm371, %v1394, 0
      %v1413 = vsel %vm371, %v1396, 0
      %1415 = vmatprep.subr.bf16.mxu0 0
      %1416 = vmatpush1.bf16.xpose.msra.mxu0 %v1407
      %1417 = vmatprep.subr.bf16.mxu0 0
      %1418 = vmatpush1.bf16.xpose.msra.mxu0 %v1410
      %1419 = vmatprep.subr.bf16.mxu0 0
      %1420 = vmatpush1.bf16.xpose.msra.mxu0 %v1413
      %1421 = vmatprep.subr.bf16.mxu0 0
      %1422 = vmatpush1.bf16.xpose.msra.mxu0 0
      %1423 = vmatprep.subr.bf16.mxu0 0
      %1424 = vmatpush1.bf16.xpose.msra.mxu0 0
      %1425 = vmatprep.subr.bf16.mxu0 0
      %1426 = vmatpush1.bf16.xpose.msra.mxu0 0
      %1427 = vmatprep.subr.bf16.mxu0 0
      %1428 = vmatpush1.bf16.xpose.msra.mxu0 0
      %1429 = vmatprep.subr.bf16.mxu0 0
      %1430 = vmatpush1.bf16.xpose.msra.mxu0 0
      %1431 = vmatprep.subr.bf16.mxu0 0
      %1432 = vmatpush1.bf16.xpose.msra.mxu0 0
      %1433 = vmatprep.subr.bf16.mxu0 0
      %1434 = vmatpush1.bf16.xpose.msra.mxu0 0
      %1435 = vmatprep.subr.bf16.mxu0 0
      %1436 = vmatpush1.bf16.xpose.msra.mxu0 0
      %1437 = vmatprep.subr.bf16.mxu0 0
      %1438 = vmatpush1.bf16.xpose.msra.mxu0 0
      %1439 = vmatprep.subr.bf16.mxu0 0
      %1440 = vmatpush1.bf16.xpose.msra.mxu0 0
      %1441 = vmatprep.subr.bf16.mxu0 0
      %1442 = vmatpush1.bf16.xpose.msra.mxu0 0
      %1443 = vmatprep.subr.bf16.mxu0 0
      %1444 = vmatpush1.bf16.xpose.msra.mxu0 0
      %1445 = vmatprep.subr.bf16.mxu0 0
      %1446 = vmatpush1.bf16.xpose.msra.mxu0 0
      %1447 = vmatprep.mubr.bf16.mxu0 0
      %1448 = vmatmul.mubr.bf16.gmra.mrb[0].mxu0 %v1398
      %v1449 = vpop.f32.mrb[0].mxu0
      %v1450 = vadd.f32 0.0, %v1449
      %v1451 = vpop.f32.mrb[0].mxu0
      %v1452 = vpop.f32.mrb[0].mxu0
      %v1453 = vadd.f32 0.0, %v1452
      %v1454 = vpop.f32.mrb[0].mxu0
      %1455 = vmatprep.mubr.bf16.mxu0 0
      %1456 = vmatmul.mubr.bf16.gmra.mrb[0].mxu0 %v1401
      %v1457 = vpop.f32.mrb[0].mxu0
      %v1458 = vadd.f32 0.0, %v1457
      %v1459 = vpop.f32.mrb[0].mxu0
      %v1460 = vpop.f32.mrb[0].mxu0
      %v1461 = vadd.f32 0.0, %v1460
      %v1462 = vpop.f32.mrb[0].mxu0
      %1463 = vmatprep.mubr.bf16.mxu0 0
      %1464 = vmatmul.mubr.bf16.gmra.mrb[0].mxu0 %v1404
      %v1465 = vpop.f32.mrb[0].mxu0
      %v1466 = vadd.f32 0.0, %v1465
      %v1467 = vpop.f32.mrb[0].mxu0
      %v1468 = vpop.f32.mrb[0].mxu0
      %v1469 = vpop.f32.mrb[0].mxu0
      %1470 = vdwg.mxu0
      %v1471 = vld [vmem:[#allocation2] sm:$0xff]
      %v1472 = vld [vmem:[#allocation2 + $0x8] sm:$0xff]
      %v1473 = vld [vmem:[#allocation2 + $0x10] sm:$0xff]
      %v1474 = vld [vmem:[#allocation2 + $0x18] sm:$0xff]
      %v1475 = vld [vmem:[#allocation2 + $0x20] sm:$0x1]
      %v1476 = vsel %vm451, %v1450, -inf
      %1477 = vmax.xlane.f32.xlu0 %v1476
      %v1478 = vpop.xlane.xlu0 %1477
      %v1479 = vsel %vm451, %v1453, -inf
      %1480 = vmax.xlane.f32.xlu0 %v1479
      %v1481 = vpop.xlane.xlu0 %1480
      %v1482 = vsel %vm451, %v1458, -inf
      %1483 = vmax.xlane.f32.xlu0 %v1482
      %v1484 = vpop.xlane.xlu0 %1483
      %v1485 = vsel %vm451, %v1461, -inf
      %1486 = vmax.xlane.f32.xlu0 %v1485
      %v1487 = vpop.xlane.xlu0 %1486
      %v1488 = vsel %vm464, %v1466, -inf
      %1489 = vmax.xlane.f32.xlu0 %v1488
      %v1490 = vpop.xlane.xlu0 %1489
      %v1491 = vmax.f32 %v1471, %v1478
      %v1492 = vmax.f32 %v1472, %v1481
      %v1493 = vmax.f32 %v1473, %v1484
      %v1494 = vmax.f32 %v1474, %v1487
      %v1495 = vmax.f32 %v1475, %v1490
      %v1496 = vsub.f32 %v1471, %v1491
      %v1497 = vsub.f32 %v1472, %v1492
      %v1498 = vsub.f32 %v1473, %v1493
      %v1499 = vsub.f32 %v1474, %v1494
      %v1500 = vsub.f32 %v1475, %v1495
      %v1501 = vmul.f32 %v1496, 1.442695
      %v1502 = vpow.pop %v1501
      %v1503 = vmul.f32 %v1497, 1.442695
      %v1504 = vpow.pop %v1503
      %v1505 = vmul.f32 %v1498, 1.442695
      %v1506 = vpow.pop %v1505
      %v1507 = vmul.f32 %v1499, 1.442695
      %v1508 = vpow.pop %v1507
      %v1509 = vmul.f32 %v1500, 1.442695
      %v1510 = vpow.pop %v1509
      %1512 = vset.pattern.permute.xlu0 3
      %1513 = vperm.xlu0 %1512, %v1491
      %v1514 = vpop.permute.xlu0 %1513
      %1517 = vset.pattern.permute.xlu0 3
      %1518 = vperm.xlu0 %1517, %v1492
      %v1519 = vpop.permute.xlu0 %1518
      %1522 = vset.pattern.permute.xlu0 3
      %1523 = vperm.xlu0 %1522, %v1493
      %v1524 = vpop.permute.xlu0 %1523
      %1527 = vset.pattern.permute.xlu0 3
      %1528 = vperm.xlu0 %1527, %v1494
      %v1529 = vpop.permute.xlu0 %1528
      %1532 = vset.pattern.permute.xlu0 3
      %1533 = vperm.xlu0 %1532, %v1495
      %v1534 = vpop.permute.xlu0 %1533
      %v1536 = vsub.f32 %v1450, %v1514
      %v1537 = vsub.f32 %v1453, %v1519
      %v1538 = vsub.f32 %v1458, %v1524
      %v1539 = vsub.f32 %v1461, %v1529
      %v1540 = vsub.f32 %v1466, %v1534
      %v1541 = vmul.f32 %v1536, 1.442695
      %v1542 = vpow.pop %v1541
      %v1543 = vmul.f32 %v1537, 1.442695
      %v1544 = vpow.pop %v1543
      %v1545 = vmul.f32 %v1538, 1.442695
      %v1546 = vpow.pop %v1545
      %v1547 = vmul.f32 %v1539, 1.442695
      %v1548 = vpow.pop %v1547
      %v1549 = vmul.f32 %v1540, 1.442695
      %v1550 = vpow.pop %v1549
      %v1551 = vld [vmem:[#allocation3] sm:$0xff]
      %v1552 = vld [vmem:[#allocation3 + $0x8] sm:$0xff]
      %v1553 = vld [vmem:[#allocation3 + $0x10] sm:$0xff]
      %v1554 = vld [vmem:[#allocation3 + $0x18] sm:$0xff]
      %v1555 = vld [vmem:[#allocation3 + $0x20] sm:$0x1]
      %v1556 = vmul.f32 %v1502, %v1551
      %v1557 = vmul.f32 %v1504, %v1552
      %v1558 = vmul.f32 %v1506, %v1553
      %v1559 = vmul.f32 %v1508, %v1554
      %v1560 = vmul.f32 %v1510, %v1555
      %v1561 = vsel %vm451, %v1542, 0.0
      %1562 = vadd.xlane.f32.xlu0 %v1561
      %v1563 = vpop.xlane.xlu0 %1562
      %v1564 = vsel %vm451, %v1544, 0.0
      %1565 = vadd.xlane.f32.xlu0 %v1564
      %v1566 = vpop.xlane.xlu0 %1565
      %v1567 = vsel %vm451, %v1546, 0.0
      %1568 = vadd.xlane.f32.xlu0 %v1567
      %v1569 = vpop.xlane.xlu0 %1568
      %v1570 = vsel %vm451, %v1548, 0.0
      %1571 = vadd.xlane.f32.xlu0 %v1570
      %v1572 = vpop.xlane.xlu0 %1571
      %v1573 = vsel %vm464, %v1550, 0.0
      %1574 = vadd.xlane.f32.xlu0 %v1573
      %v1575 = vpop.xlane.xlu0 %1574
      %v1576 = vadd.f32 %v1556, %v1563
      %v1577 = vadd.f32 %v1557, %v1566
      %v1578 = vadd.f32 %v1558, %v1569
      %v1579 = vadd.f32 %v1559, %v1572
      %v1580 = vadd.f32 %v1560, %v1575
      %vm1581 = vcmask 31768
      %1582 = vst.msk [vmem:[#allocation3] sm:$0xff] %vm1581, %v1576
      %1583 = vst.msk [vmem:[#allocation3 + $0x8] sm:$0xff] %vm1581, %v1577
      %1584 = vst.msk [vmem:[#allocation3 + $0x10] sm:$0xff] %vm1581, %v1578
      %1585 = vst.msk [vmem:[#allocation3 + $0x18] sm:$0xff] %vm1581, %v1579
      %vm1586 = vcmask 24600
      %1587 = vst.msk [vmem:[#allocation3 + $0x20] sm:$0x1] %vm1586, %v1580
      %v1588 = vld [vmem:[#allocation4 + $0x8] sm:$0xff]
      %v1589 = vld [vmem:[#allocation4 + $0x18] sm:$0xff]
      %v1590 = vld [vmem:[#allocation4 + $0x28] sm:$0xff]
      %v1591 = vld [vmem:[#allocation4 + $0x38] sm:$0xff]
      %v1592 = vld [vmem:[#allocation4 + $0x48] sm:$0x1]
      %1594 = vset.pattern.permute.xlu0 3
      %1595 = vperm.xlu0 %1594, %v1502
      %v1596 = vpop.permute.xlu0 %1595
      %1599 = vset.pattern.permute.xlu0 3
      %1600 = vperm.xlu0 %1599, %v1504
      %v1601 = vpop.permute.xlu0 %1600
      %1604 = vset.pattern.permute.xlu0 3
      %1605 = vperm.xlu0 %1604, %v1506
      %v1606 = vpop.permute.xlu0 %1605
      %1609 = vset.pattern.permute.xlu0 3
      %1610 = vperm.xlu0 %1609, %v1508
      %v1611 = vpop.permute.xlu0 %1610
      %1614 = vset.pattern.permute.xlu0 3
      %1615 = vperm.xlu0 %1614, %v1510
      %v1616 = vpop.permute.xlu0 %1615
      %v1618 = vmul.f32 %v1596, %v1588
      %v1619 = vmul.f32 %v1601, %v1589
      %v1620 = vmul.f32 %v1606, %v1590
      %v1621 = vmul.f32 %v1611, %v1591
      %v1622 = vmul.f32 %v1616, %v1592
      %v1623 = vpack.c.bf16 %v1544, %v1542
      %v1624 = vpack.c.bf16 %v1548, %v1546
      %v1625 = vpack.c.bf16 %v1550, %v1550
      %1629 = vrot.lane.b32.xlu0 %v1064, 64
      %v1630 = vpop.permute.xlu0 %1629
      %1631 = vrot.lane.b32.xlu0 %v1065, 64
      %v1632 = vpop.permute.xlu0 %1631
      %1633 = vrot.lane.b32.xlu0 %v1066, 64
      %v1634 = vpop.permute.xlu0 %1633
      %v1638 = vsel %vm451, %v1623, 0
      %v1641 = vsel %vm451, %v1624, 0
      %v1644 = vsel %vm451, %v1625, 0
      %v1647 = vand.u32 %v1634, %v614
      %1649 = vmatprep.subr.bf16.mxu0 0
      %1650 = vmatpush1.bf16.msra.mxu0 %v1630
      %1651 = vmatprep.subr.bf16.mxu0 0
      %1652 = vmatpush1.bf16.msra.mxu0 %v1632
      %1653 = vmatprep.subr.bf16.mxu0 0
      %1654 = vmatpush1.bf16.msra.mxu0 %v1647
      %1655 = vmatprep.subr.bf16.mxu0 0
      %1656 = vmatpush1.bf16.msra.mxu0 0
      %1657 = vmatprep.subr.bf16.mxu0 0
      %1658 = vmatpush1.bf16.msra.mxu0 0
      %1659 = vmatprep.subr.bf16.mxu0 0
      %1660 = vmatpush1.bf16.msra.mxu0 0
      %1661 = vmatprep.subr.bf16.mxu0 0
      %1662 = vmatpush1.bf16.msra.mxu0 0
      %1663 = vmatprep.subr.bf16.mxu0 0
      %1664 = vmatpush1.bf16.msra.mxu0 0
      %1665 = vmatprep.subr.bf16.mxu0 0
      %1666 = vmatpush1.bf16.msra.mxu0 0
      %1667 = vmatprep.subr.bf16.mxu0 0
      %1668 = vmatpush1.bf16.msra.mxu0 0
      %1669 = vmatprep.subr.bf16.mxu0 0
      %1670 = vmatpush1.bf16.msra.mxu0 0
      %1671 = vmatprep.subr.bf16.mxu0 0
      %1672 = vmatpush1.bf16.msra.mxu0 0
      %1673 = vmatprep.subr.bf16.mxu0 0
      %1674 = vmatpush1.bf16.msra.mxu0 0
      %1675 = vmatprep.subr.bf16.mxu0 0
      %1676 = vmatpush1.bf16.msra.mxu0 0
      %1677 = vmatprep.subr.bf16.mxu0 0
      %1678 = vmatpush1.bf16.msra.mxu0 0
      %1679 = vmatprep.subr.bf16.mxu0 0
      %1680 = vmatpush1.bf16.msra.mxu0 0
      %1681 = vmatprep.mubr.bf16.mxu0 0
      %1682 = vmatmul.mubr.bf16.gmra.mrb[0].mxu0 %v1638
      %v1683 = vpop.f32.mrb[0].mxu0
      %v1684 = vadd.f32 0.0, %v1683
      %v1685 = vpop.f32.mrb[0].mxu0
      %v1686 = vpop.f32.mrb[0].mxu0
      %v1687 = vadd.f32 0.0, %v1686
      %v1688 = vpop.f32.mrb[0].mxu0
      %1689 = vmatprep.mubr.bf16.mxu0 0
      %1690 = vmatmul.mubr.bf16.gmra.mrb[0].mxu0 %v1641
      %v1691 = vpop.f32.mrb[0].mxu0
      %v1692 = vadd.f32 0.0, %v1691
      %v1693 = vpop.f32.mrb[0].mxu0
      %v1694 = vpop.f32.mrb[0].mxu0
      %v1695 = vadd.f32 0.0, %v1694
      %v1696 = vpop.f32.mrb[0].mxu0
      %1697 = vmatprep.mubr.bf16.mxu0 0
      %1698 = vmatmul.mubr.bf16.gmra.mrb[0].mxu0 %v1644
      %v1699 = vpop.f32.mrb[0].mxu0
      %v1700 = vadd.f32 0.0, %v1699
      %v1701 = vpop.f32.mrb[0].mxu0
      %v1702 = vpop.f32.mrb[0].mxu0
      %v1703 = vpop.f32.mrb[0].mxu0
      %1704 = vdwg.mxu0
      %1710 = vrot.lane.b32.xlu0 %v1684, 64
      %v1711 = vpop.permute.xlu0 %1710
      %1712 = vrot.lane.b32.xlu0 %v1687, 64
      %v1713 = vpop.permute.xlu0 %1712
      %1714 = vrot.lane.b32.xlu0 %v1692, 64
      %v1715 = vpop.permute.xlu0 %1714
      %1716 = vrot.lane.b32.xlu0 %v1695, 64
      %v1717 = vpop.permute.xlu0 %1716
      %1718 = vrot.lane.b32.xlu0 %v1700, 64
      %v1719 = vpop.permute.xlu0 %1718
      %v1725 = vadd.f32 %v1618, %v1711
      %v1726 = vadd.f32 %v1619, %v1713
      %v1727 = vadd.f32 %v1620, %v1715
      %v1728 = vadd.f32 %v1621, %v1717
      %v1729 = vadd.f32 %v1622, %v1719
      %1730 = vst.msk [vmem:[#allocation4 + $0x8] sm:$0xff] %vm1041, %v1725
      %1731 = vst.msk [vmem:[#allocation4 + $0x18] sm:$0xff] %vm1041, %v1726
      %1732 = vst.msk [vmem:[#allocation4 + $0x28] sm:$0xff] %vm1041, %v1727
      %1733 = vst.msk [vmem:[#allocation4 + $0x38] sm:$0xff] %vm1041, %v1728
      %1734 = vst.msk [vmem:[#allocation4 + $0x48] sm:$0x1] %vm1046, %v1729
      %1735 = vst.msk [vmem:[#allocation2] sm:$0xff] %vm1581, %v1491
      %1736 = vst.msk [vmem:[#allocation2 + $0x8] sm:$0xff] %vm1581, %v1492
      %1737 = vst.msk [vmem:[#allocation2 + $0x10] sm:$0xff] %vm1581, %v1493
      %1738 = vst.msk [vmem:[#allocation2 + $0x18] sm:$0xff] %vm1581, %v1494
      %1739 = vst.msk [vmem:[#allocation2 + $0x20] sm:$0x1] %vm1586, %v1495
      // Predicated region
      $region37: #{forward.25} parent=31 // pred_check
        %p1740 = pneg %p301
      $region38: #{forward.25} parent=31 // pred_check_branch
        %1742 = sbr.rel (%p1740) target = $region40
      $region39: #{forward.25} parent=31 // pred_region
        %v1743 = vld [vmem:[#allocation3] sm:$0xff]
        %v1744 = vld [vmem:[#allocation3 + $0x8] sm:$0xff]
        %v1745 = vld [vmem:[#allocation3 + $0x10] sm:$0xff]
        %v1746 = vld [vmem:[#allocation3 + $0x18] sm:$0xff]
        %v1747 = vld [vmem:[#allocation3 + $0x20] sm:$0x1]
        %v1748 = vrcp.pop %v1743
        %v1749 = vrcp.pop %v1744
        %v1750 = vrcp.pop %v1745
        %v1751 = vrcp.pop %v1746
        %v1752 = vrcp.pop %v1747
        %v1753 = vld [vmem:[#allocation4] sm:$0xff]
        %v1754 = vld [vmem:[#allocation4 + $0x10] sm:$0xff]
        %v1755 = vld [vmem:[#allocation4 + $0x20] sm:$0xff]
        %v1756 = vld [vmem:[#allocation4 + $0x30] sm:$0xff]
        %v1757 = vld [vmem:[#allocation4 + $0x40] sm:$0x1]
        %1759 = vset.pattern.permute.xlu0 0
        %1760 = vperm.xlu0 %1759, %v1748
        %v1761 = vpop.permute.xlu0 %1760
        %1764 = vset.pattern.permute.xlu0 0
        %1765 = vperm.xlu0 %1764, %v1749
        %v1766 = vpop.permute.xlu0 %1765
        %1769 = vset.pattern.permute.xlu0 0
        %1770 = vperm.xlu0 %1769, %v1750
        %v1771 = vpop.permute.xlu0 %1770
        %1774 = vset.pattern.permute.xlu0 0
        %1775 = vperm.xlu0 %1774, %v1751
        %v1776 = vpop.permute.xlu0 %1775
        %1779 = vset.pattern.permute.xlu0 0
        %1780 = vperm.xlu0 %1779, %v1752
        %v1781 = vpop.permute.xlu0 %1780
        %v1783 = vmul.f32 %v1753, %v1761
        %v1784 = vmul.f32 %v1754, %v1766
        %v1785 = vmul.f32 %v1755, %v1771
        %v1786 = vmul.f32 %v1756, %v1776
        %v1787 = vmul.f32 %v1757, %v1781
        %1788 = vset.pattern.permute.xlu0 1
        %1789 = vperm.xlu0 %1788, %v1748
        %v1790 = vpop.permute.xlu0 %1789
        %1792 = vset.pattern.permute.xlu0 1
        %1793 = vperm.xlu0 %1792, %v1749
        %v1794 = vpop.permute.xlu0 %1793
        %1796 = vset.pattern.permute.xlu0 1
        %1797 = vperm.xlu0 %1796, %v1750
        %v1798 = vpop.permute.xlu0 %1797
        %1800 = vset.pattern.permute.xlu0 1
        %1801 = vperm.xlu0 %1800, %v1751
        %v1802 = vpop.permute.xlu0 %1801
        %1804 = vset.pattern.permute.xlu0 1
        %1805 = vperm.xlu0 %1804, %v1752
        %v1806 = vpop.permute.xlu0 %1805
        %v1808 = vmul.f32 %v1753, %v1790
        %v1809 = vmul.f32 %v1754, %v1794
        %v1810 = vmul.f32 %v1755, %v1798
        %v1811 = vmul.f32 %v1756, %v1802
        %v1812 = vmul.f32 %v1757, %v1806
        %v1813 = vld [vmem:[#allocation4 + $0x8] sm:$0xff]
        %v1814 = vld [vmem:[#allocation4 + $0x18] sm:$0xff]
        %v1815 = vld [vmem:[#allocation4 + $0x28] sm:$0xff]
        %v1816 = vld [vmem:[#allocation4 + $0x38] sm:$0xff]
        %v1817 = vld [vmem:[#allocation4 + $0x48] sm:$0x1]
        %1818 = vset.pattern.permute.xlu0 2
        %1819 = vperm.xlu0 %1818, %v1748
        %v1820 = vpop.permute.xlu0 %1819
        %1822 = vset.pattern.permute.xlu0 2
        %1823 = vperm.xlu0 %1822, %v1749
        %v1824 = vpop.permute.xlu0 %1823
        %1826 = vset.pattern.permute.xlu0 2
        %1827 = vperm.xlu0 %1826, %v1750
        %v1828 = vpop.permute.xlu0 %1827
        %1830 = vset.pattern.permute.xlu0 2
        %1831 = vperm.xlu0 %1830, %v1751
        %v1832 = vpop.permute.xlu0 %1831
        %1834 = vset.pattern.permute.xlu0 2
        %1835 = vperm.xlu0 %1834, %v1752
        %v1836 = vpop.permute.xlu0 %1835
        %v1838 = vmul.f32 %v1813, %v1820
        %v1839 = vmul.f32 %v1814, %v1824
        %v1840 = vmul.f32 %v1815, %v1828
        %v1841 = vmul.f32 %v1816, %v1832
        %v1842 = vmul.f32 %v1817, %v1836
        %1843 = vset.pattern.permute.xlu0 3
        %1844 = vperm.xlu0 %1843, %v1748
        %v1845 = vpop.permute.xlu0 %1844
        %1847 = vset.pattern.permute.xlu0 3
        %1848 = vperm.xlu0 %1847, %v1749
        %v1849 = vpop.permute.xlu0 %1848
        %1851 = vset.pattern.permute.xlu0 3
        %1852 = vperm.xlu0 %1851, %v1750
        %v1853 = vpop.permute.xlu0 %1852
        %1855 = vset.pattern.permute.xlu0 3
        %1856 = vperm.xlu0 %1855, %v1751
        %v1857 = vpop.permute.xlu0 %1856
        %1859 = vset.pattern.permute.xlu0 3
        %1860 = vperm.xlu0 %1859, %v1752
        %v1861 = vpop.permute.xlu0 %1860
        %v1863 = vmul.f32 %v1813, %v1845
        %v1864 = vmul.f32 %v1814, %v1849
        %v1865 = vmul.f32 %v1815, %v1853
        %v1866 = vmul.f32 %v1816, %v1857
        %v1867 = vmul.f32 %v1817, %v1861
        %v1868 = vsel %vm371, %v1783, %v1808
        %v1869 = vsel %vm371, %v1784, %v1809
        %v1870 = vsel %vm371, %v1785, %v1810
        %v1871 = vsel %vm371, %v1786, %v1811
        %v1872 = vsel %vm371, %v1787, %v1812
        %v1873 = vsel %vm371, %v1838, %v1863
        %v1874 = vsel %vm371, %v1839, %v1864
        %v1875 = vsel %vm371, %v1840, %v1865
        %v1876 = vsel %vm371, %v1841, %v1866
        %v1877 = vsel %vm371, %v1842, %v1867
        %1878 = vst [vmem:[%s298] sm:$0xff] %v1868
        %1879 = vst [vmem:[%s298 + $0x8] sm:$0xff] %v1873
        %1880 = vst [vmem:[%s298 + $0x10] sm:$0xff] %v1869
        %1881 = vst [vmem:[%s298 + $0x18] sm:$0xff] %v1874
        %1882 = vst [vmem:[%s298 + $0x20] sm:$0xff] %v1870
        %1883 = vst [vmem:[%s298 + $0x28] sm:$0xff] %v1875
        %1884 = vst [vmem:[%s298 + $0x30] sm:$0xff] %v1871
        %1885 = vst [vmem:[%s298 + $0x38] sm:$0xff] %v1876
        %1886 = vst [vmem:[%s298 + $0x40] sm:$0x1] %v1872
        %1887 = vst [vmem:[%s298 + $0x48] sm:$0x1] %v1877
      $region40: #{forward.25} parent=31 // pred_fallthru
        _
      %s1888 = smul.u32 5, %s20
      %p1889 = scmp.lt.s32.totalorder %s19, 1
      %s1890 = scalar_select %p1889, %s19, 1
      %p1891 = scmp.lt.s32.totalorder %s1888, 4
      %s1892 = scalar_select %p1891, %s1888, 4
      %s1893 = smul.addr %s1892, 2
      %s1894 = smul.addr %s1890, 10
      %s1895 = sadd.s32 %s1893, %s1894
      %s1896 = smul.addr %s1895, 8
      %s1897 = scalar_lea.vmem %s3, %s1896
      // Predicated region
      $region41: #{forward.25} parent=31 // pred_check
        %p1898 = pneg %p137
      $region42: #{forward.25} parent=31 // pred_check_branch
        %1900 = sbr.rel (%p1898) target = $region44
      $region43: #{forward.25} parent=31 // pred_region
        %s1901 = smul.u32 5, %s20
      $region44: #{forward.25} parent=31 // pred_fallthru
        _
    $region32: #{forward.25} parent=5 // pred_fallthru
      _
    %p1902 = scmp.le.s32.totalorder 2, %s9
    // Predicated region
    $region45: #{forward.25} parent=5 // pred_check
      %p1903 = pneg %p1902
    $region46: #{forward.25} parent=5 // pred_check_branch
      %1905 = sbr.rel (%p1903) target = $region48
    $region47: #{forward.25} parent=5 // pred_region
      %s1906 = ssub.s32 %s9, 2
      // Predicated region
      $region49: #{forward.25} parent=47 // pred_check
        %p1907 = pneg %p143
      $region50: #{forward.25} parent=47 // pred_check_branch
        %1909 = sbr.rel (%p1907) target = $region52
      $region51: #{forward.25} parent=47 // pred_region
        %s1910 = smul.u32 5, %s23
        %p1911 = scmp.lt.s32.totalorder %s22, 1
        %s1912 = scalar_select %p1911, %s22, 1
        %p1913 = scmp.lt.s32.totalorder %s1910, 4
        %s1914 = scalar_select %p1913, %s1910, 4
        %s1915 = smul.addr %s1914, 2
        %s1916 = smul.addr %s1912, 10
        %s1917 = sadd.s32 %s1915, %s1916
        %s1918 = smul.addr %s1917, 8
        %s1919 = scalar_lea.vmem %s3, %s1918
      $region52: #{forward.25} parent=47 // pred_fallthru
        _
    $region48: #{forward.25} parent=5 // pred_fallthru
      _
  $region6: #{forward.25} parent=0 // loop_footer
    %s13 = sadd.s32 1, %s9
  $region7: #{forward.25} parent=0 // loop_footer_branch
    %8 = sbr.rel target = $region3
  $region8: #{forward.25} parent=0 // loop_exit
    _

// kernel: forward.27
$region0: #{forward.27}
  #allocation0 [shape = 'u32[]', space=smem, size = 0x4, offset = 0x4, fixed_abs, tag = 'smem constant byte address 0x4 - core index']
  #allocation1 [shape = 'u32[144,128]{1,0:T(1,128)}', space=vmem, size = 0x12000, scoped, tag = 'internal scratch']
  %s0 = inlined_call_operand.vmem [shape: f32[66,256], index: 0, kind: input, shape index: {}]
  %s1 = inlined_call_operand.hbm [shape: f32[256,512], index: 1, kind: input, shape index: {}]
  %s2 = inlined_call_operand.hbm [shape: f32[1,512], index: 2, kind: input, shape index: {}]
  %s3 = inlined_call_operand.hbm [shape: f32[512,256], index: 3, kind: input, shape index: {}]
  %s4 = inlined_call_operand.hbm [shape: f32[1,256], index: 4, kind: input, shape index: {}]
  %s5 = inlined_call_operand.hbm [shape: f32[1,256], index: 5, kind: input, shape index: {}]
  %s6 = inlined_call_operand.hbm [shape: f32[1,256], index: 6, kind: input, shape index: {}]
  %s7 = inlined_call_operand.vmem [shape: f32[66,256], index: 7, kind: output, shape index: {}]
  %s8 = sld [smem:[#allocation0]]
  $region62: #{forward.27} parent=0
    _
  %s10 = ssub.s32 1, %s8
  %s11 = scalar_select 0, %s10, %s8
  $region1: #{forward.27} parent=0
    #allocation2 [shape = 'u8[524288]{0}', space=vmem, size = 0x80000, scoped, tag = 'input window, operand 1, single buffered']
    #allocation3 [shape = 's32[1]{0}', space=sflag, size = 0x4, scoped, tag = 'scoped memory for forward.27']
    #allocation4 [shape = 'u8[2048]{0}', space=vmem, size = 0x800, scoped, tag = 'input window, operand 2, single buffered']
    #allocation5 [shape = 's32[1]{0}', space=sflag, size = 0x4, scoped, tag = 'scoped memory for forward.27']
    #allocation6 [shape = 'u8[524288]{0}', space=vmem, size = 0x80000, scoped, tag = 'input window, operand 3, single buffered']
    #allocation7 [shape = 'u8[1024]{0}', space=vmem, size = 0x400, scoped, tag = 'input window, operand 4, single buffered']
    #allocation8 [shape = 's32[1]{0}', space=sflag, size = 0x4, scoped, tag = 'scoped memory for forward.27']
    #allocation9 [shape = 'u8[1024]{0}', space=vmem, size = 0x400, scoped, tag = 'input window, operand 5, single buffered']
    #allocation10 [shape = 'u8[1024]{0}', space=vmem, size = 0x400, scoped, tag = 'input window, operand 6, single buffered']
    #allocation11 [shape = 's32[1]{0}', space=sflag, size = 0x4, scoped, tag = 'scoped memory for forward.27']
    %12 = vsyncpa [#allocation3], 0
    %13 = vsyncpa [#allocation5], 0
    %14 = vsyncpa [#allocation8], 0
    %15 = vsyncpa [#allocation11], 0
    // Predicated region
    $region2: #{forward.27} parent=1 // pred_check
      _
    $region3: #{forward.27} parent=1 // pred_check_branch
      %17 = sbr.rel (0) target = $region5
    $region4: #{forward.27} parent=1 // pred_region
      _
    $region5: #{forward.27} parent=1 // pred_fallthru
      _
    // Predicated region
    $region6: #{forward.27} parent=1 // pred_check
      _
    $region7: #{forward.27} parent=1 // pred_check_branch
      %19 = sbr.rel (0) target = $region9
    $region8: #{forward.27} parent=1 // pred_region
      %s21 = ssub.s32 16384, 16384
      %22 = vsyncadd [#allocation3], %s21
      %s23 = sshll.u32 [#allocation2], 4
      %s24 = int_to_ptr.vmem [resolvable:$true] %s23
      %29 = dma.hbm_to_vmem [thread:$0]  %s1, 16384, %s24, [#allocation3], 512, 512, 32
    $region9: #{forward.27} parent=1 // pred_fallthru
      _
    // Predicated region
    $region10: #{forward.27} parent=1 // pred_check
      _
    $region11: #{forward.27} parent=1 // pred_check_branch
      %31 = sbr.rel (0) target = $region13
    $region12: #{forward.27} parent=1 // pred_region
      %s33 = ssub.s32 64, 64
      %34 = vsyncadd [#allocation5], %s33
      %s36 = sshll.u32 [#allocation4], 4
      %s37 = int_to_ptr.vmem [resolvable:$true] %s36
      %39 = dma.hbm_to_vmem [thread:$0]  %s2, 64, %s37, [#allocation5]
    $region13: #{forward.27} parent=1 // pred_fallthru
      _
    // Predicated region
    $region14: #{forward.27} parent=1 // pred_check
      _
    $region15: #{forward.27} parent=1 // pred_check_branch
      %41 = sbr.rel (0) target = $region17
    $region16: #{forward.27} parent=1 // pred_region
      %s43 = ssub.s32 16384, 16384
      %44 = vsyncadd [#allocation5], %s43
      %s45 = sshll.u32 [#allocation6], 4
      %s46 = int_to_ptr.vmem [resolvable:$true] %s45
      %51 = dma.hbm_to_vmem [thread:$0]  %s3, 16384, %s46, [#allocation5], 256, 256, 16
    $region17: #{forward.27} parent=1 // pred_fallthru
      _
    // Predicated region
    $region18: #{forward.27} parent=1 // pred_check
      _
    $region19: #{forward.27} parent=1 // pred_check_branch
      %53 = sbr.rel (0) target = $region21
    $region20: #{forward.27} parent=1 // pred_region
      %s55 = ssub.s32 32, 32
      %56 = vsyncadd [#allocation8], %s55
      %s58 = sshll.u32 [#allocation7], 4
      %s59 = int_to_ptr.vmem [resolvable:$true] %s58
      %61 = dma.hbm_to_vmem [thread:$0]  %s4, 32, %s59, [#allocation8]
    $region21: #{forward.27} parent=1 // pred_fallthru
      _
    // Predicated region
    $region22: #{forward.27} parent=1 // pred_check
      _
    $region23: #{forward.27} parent=1 // pred_check_branch
      %63 = sbr.rel (0) target = $region25
    $region24: #{forward.27} parent=1 // pred_region
      %s65 = ssub.s32 32, 32
      %66 = vsyncadd [#allocation8], %s65
      %s68 = sshll.u32 [#allocation9], 4
      %s69 = int_to_ptr.vmem [resolvable:$true] %s68
      %71 = dma.hbm_to_vmem [thread:$0]  %s5, 32, %s69, [#allocation8]
    $region25: #{forward.27} parent=1 // pred_fallthru
      _
    // Predicated region
    $region26: #{forward.27} parent=1 // pred_check
      _
    $region27: #{forward.27} parent=1 // pred_check_branch
      %73 = sbr.rel (0) target = $region29
    $region28: #{forward.27} parent=1 // pred_region
      %s75 = ssub.s32 32, 32
      %76 = vsyncadd [#allocation11], %s75
      %s78 = sshll.u32 [#allocation10], 4
      %s79 = int_to_ptr.vmem [resolvable:$true] %s78
      %81 = dma.hbm_to_vmem [thread:$0]  %s6, 32, %s79, [#allocation11]
    $region29: #{forward.27} parent=1 // pred_fallthru
      _
    // Predicated region
    $region30: #{forward.27} parent=1 // pred_check
      _
    $region31: #{forward.27} parent=1 // pred_check_branch
      %83 = sbr.rel (0) target = $region33
    $region32: #{forward.27} parent=1 // pred_region
      %84 = dma.done [#allocation3], 16384
    $region33: #{forward.27} parent=1 // pred_fallthru
      _
    // Predicated region
    $region34: #{forward.27} parent=1 // pred_check
      _
    $region35: #{forward.27} parent=1 // pred_check_branch
      %86 = sbr.rel (0) target = $region37
    $region36: #{forward.27} parent=1 // pred_region
      %87 = dma.done [#allocation5], 64
    $region37: #{forward.27} parent=1 // pred_fallthru
      _
    // Predicated region
    $region38: #{forward.27} parent=1 // pred_check
      _
    $region39: #{forward.27} parent=1 // pred_check_branch
      %89 = sbr.rel (0) target = $region41
    $region40: #{forward.27} parent=1 // pred_region
      %90 = dma.done [#allocation5], 16384
    $region41: #{forward.27} parent=1 // pred_fallthru
      _
    // Predicated region
    $region42: #{forward.27} parent=1 // pred_check
      _
    $region43: #{forward.27} parent=1 // pred_check_branch
      %92 = sbr.rel (0) target = $region45
    $region44: #{forward.27} parent=1 // pred_region
      %93 = dma.done [#allocation8], 32
    $region45: #{forward.27} parent=1 // pred_fallthru
      _
    // Predicated region
    $region46: #{forward.27} parent=1 // pred_check
      _
    $region47: #{forward.27} parent=1 // pred_check_branch
      %95 = sbr.rel (0) target = $region49
    $region48: #{forward.27} parent=1 // pred_region
      %96 = dma.done [#allocation8], 32
    $region49: #{forward.27} parent=1 // pred_fallthru
      _
    // Predicated region
    $region50: #{forward.27} parent=1 // pred_check
      _
    $region51: #{forward.27} parent=1 // pred_check_branch
      %98 = sbr.rel (0) target = $region53
    $region52: #{forward.27} parent=1 // pred_region
      %99 = dma.done [#allocation11], 32
    $region53: #{forward.27} parent=1 // pred_fallthru
      _
    %v100 = vld [vmem:[%s0] sm:$0xff]
    %v101 = vld [vmem:[%s0 + $0x8] sm:$0xff]
    %v102 = vld [vmem:[%s0 + $0x10] sm:$0xff]
    %v103 = vld [vmem:[%s0 + $0x18] sm:$0xff]
    %v104 = vld [vmem:[%s0 + $0x20] sm:$0xff]
    %v105 = vld [vmem:[%s0 + $0x28] sm:$0xff]
    %v106 = vld [vmem:[%s0 + $0x30] sm:$0xff]
    %v107 = vld [vmem:[%s0 + $0x38] sm:$0xff]
    %v108 = vld [vmem:[%s0 + $0x40] sm:$0xff]
    %v109 = vld [vmem:[%s0 + $0x48] sm:$0xff]
    %v110 = vld [vmem:[%s0 + $0x50] sm:$0xff]
    %v111 = vld [vmem:[%s0 + $0x58] sm:$0xff]
    %v112 = vld [vmem:[%s0 + $0x60] sm:$0xff]
    %v113 = vld [vmem:[%s0 + $0x68] sm:$0xff]
    %v114 = vld [vmem:[%s0 + $0x70] sm:$0xff]
    %v115 = vld [vmem:[%s0 + $0x78] sm:$0xff]
    %v116 = vld [vmem:[%s0 + $0x80] sm:$0x3]
    %v117 = vld [vmem:[%s0 + $0x88] sm:$0x3]
    %v118 = vpack.c.bf16 %v102, %v100
    %v119 = vpack.c.bf16 %v103, %v101
    %v120 = vpack.c.bf16 %v106, %v104
    %v121 = vpack.c.bf16 %v107, %v105
    %v122 = vpack.c.bf16 %v110, %v108
    %v123 = vpack.c.bf16 %v111, %v109
    %v124 = vpack.c.bf16 %v114, %v112
    %v125 = vpack.c.bf16 %v115, %v113
    %v126 = vpack.c.bf16 %v116, %v116
    %v127 = vpack.c.bf16 %v117, %v117
    %v128 = vld [vmem:[#allocation2] sm:$0xff]
    %v129 = vld [vmem:[#allocation2 + $0x8] sm:$0xff]
    %v130 = vld [vmem:[#allocation2 + $0x10] sm:$0xff]
    %v131 = vld [vmem:[#allocation2 + $0x18] sm:$0xff]
    %v132 = vld [vmem:[#allocation2 + $0x20] sm:$0xff]
    %v133 = vld [vmem:[#allocation2 + $0x28] sm:$0xff]
    %v134 = vld [vmem:[#allocation2 + $0x30] sm:$0xff]
    %v135 = vld [vmem:[#allocation2 + $0x38] sm:$0xff]
    %v136 = vld [vmem:[#allocation2 + $0x40] sm:$0xff]
    %v137 = vld [vmem:[#allocation2 + $0x48] sm:$0xff]
    %v138 = vld [vmem:[#allocation2 + $0x50] sm:$0xff]
    %v139 = vld [vmem:[#allocation2 + $0x58] sm:$0xff]
    %v140 = vld [vmem:[#allocation2 + $0x60] sm:$0xff]
    %v141 = vld [vmem:[#allocation2 + $0x68] sm:$0xff]
    %v142 = vld [vmem:[#allocation2 + $0x70] sm:$0xff]
    %v143 = vld [vmem:[#allocation2 + $0x78] sm:$0xff]
    %v144 = vld [vmem:[#allocation2 + $0x80] sm:$0xff]
    %v145 = vld [vmem:[#allocation2 + $0x88] sm:$0xff]
    %v146 = vld [vmem:[#allocation2 + $0x90] sm:$0xff]
    %v147 = vld [vmem:[#allocation2 + $0x98] sm:$0xff]
    %v148 = vld [vmem:[#allocation2 + $0xa0] sm:$0xff]
    %v149 = vld [vmem:[#allocation2 + $0xa8] sm:$0xff]
    %v150 = vld [vmem:[#allocation2 + $0xb0] sm:$0xff]
    %v151 = vld [vmem:[#allocation2 + $0xb8] sm:$0xff]
    %v152 = vld [vmem:[#allocation2 + $0xc0] sm:$0xff]
    %v153 = vld [vmem:[#allocation2 + $0xc8] sm:$0xff]
    %v154 = vld [vmem:[#allocation2 + $0xd0] sm:$0xff]
    %v155 = vld [vmem:[#allocation2 + $0xd8] sm:$0xff]
    %v156 = vld [vmem:[#allocation2 + $0xe0] sm:$0xff]
    %v157 = vld [vmem:[#allocation2 + $0xe8] sm:$0xff]
    %v158 = vld [vmem:[#allocation2 + $0xf0] sm:$0xff]
    %v159 = vld [vmem:[#allocation2 + $0xf8] sm:$0xff]
    %v160 = vld [vmem:[#allocation2 + $0x100] sm:$0xff]
    %v161 = vld [vmem:[#allocation2 + $0x108] sm:$0xff]
    %v162 = vld [vmem:[#allocation2 + $0x110] sm:$0xff]
    %v163 = vld [vmem:[#allocation2 + $0x118] sm:$0xff]
    %v164 = vld [vmem:[#allocation2 + $0x120] sm:$0xff]
    %v165 = vld [vmem:[#allocation2 + $0x128] sm:$0xff]
    %v166 = vld [vmem:[#allocation2 + $0x130] sm:$0xff]
    %v167 = vld [vmem:[#allocation2 + $0x138] sm:$0xff]
    %v168 = vld [vmem:[#allocation2 + $0x140] sm:$0xff]
    %v169 = vld [vmem:[#allocation2 + $0x148] sm:$0xff]
    %v170 = vld [vmem:[#allocation2 + $0x150] sm:$0xff]
    %v171 = vld [vmem:[#allocation2 + $0x158] sm:$0xff]
    %v172 = vld [vmem:[#allocation2 + $0x160] sm:$0xff]
    %v173 = vld [vmem:[#allocation2 + $0x168] sm:$0xff]
    %v174 = vld [vmem:[#allocation2 + $0x170] sm:$0xff]
    %v175 = vld [vmem:[#allocation2 + $0x178] sm:$0xff]
    %v176 = vld [vmem:[#allocation2 + $0x180] sm:$0xff]
    %v177 = vld [vmem:[#allocation2 + $0x188] sm:$0xff]
    %v178 = vld [vmem:[#allocation2 + $0x190] sm:$0xff]
    %v179 = vld [vmem:[#allocation2 + $0x198] sm:$0xff]
    %v180 = vld [vmem:[#allocation2 + $0x1a0] sm:$0xff]
    %v181 = vld [vmem:[#allocation2 + $0x1a8] sm:$0xff]
    %v182 = vld [vmem:[#allocation2 + $0x1b0] sm:$0xff]
    %v183 = vld [vmem:[#allocation2 + $0x1b8] sm:$0xff]
    %v184 = vld [vmem:[#allocation2 + $0x1c0] sm:$0xff]
    %v185 = vld [vmem:[#allocation2 + $0x1c8] sm:$0xff]
    %v186 = vld [vmem:[#allocation2 + $0x1d0] sm:$0xff]
    %v187 = vld [vmem:[#allocation2 + $0x1d8] sm:$0xff]
    %v188 = vld [vmem:[#allocation2 + $0x1e0] sm:$0xff]
    %v189 = vld [vmem:[#allocation2 + $0x1e8] sm:$0xff]
    %v190 = vld [vmem:[#allocation2 + $0x1f0] sm:$0xff]
    %v191 = vld [vmem:[#allocation2 + $0x1f8] sm:$0xff]
    %v192 = vld [vmem:[#allocation2 + $0x200] sm:$0xff]
    %v193 = vld [vmem:[#allocation2 + $0x208] sm:$0xff]
    %v194 = vld [vmem:[#allocation2 + $0x210] sm:$0xff]
    %v195 = vld [vmem:[#allocation2 + $0x218] sm:$0xff]
    %v196 = vld [vmem:[#allocation2 + $0x220] sm:$0xff]
    %v197 = vld [vmem:[#allocation2 + $0x228] sm:$0xff]
    %v198 = vld [vmem:[#allocation2 + $0x230] sm:$0xff]
    %v199 = vld [vmem:[#allocation2 + $0x238] sm:$0xff]
    %v200 = vld [vmem:[#allocation2 + $0x240] sm:$0xff]
    %v201 = vld [vmem:[#allocation2 + $0x248] sm:$0xff]
    %v202 = vld [vmem:[#allocation2 + $0x250] sm:$0xff]
    %v203 = vld [vmem:[#allocation2 + $0x258] sm:$0xff]
    %v204 = vld [vmem:[#allocation2 + $0x260] sm:$0xff]
    %v205 = vld [vmem:[#allocation2 + $0x268] sm:$0xff]
    %v206 = vld [vmem:[#allocation2 + $0x270] sm:$0xff]
    %v207 = vld [vmem:[#allocation2 + $0x278] sm:$0xff]
    %v208 = vld [vmem:[#allocation2 + $0x280] sm:$0xff]
    %v209 = vld [vmem:[#allocation2 + $0x288] sm:$0xff]
    %v210 = vld [vmem:[#allocation2 + $0x290] sm:$0xff]
    %v211 = vld [vmem:[#allocation2 + $0x298] sm:$0xff]
    %v212 = vld [vmem:[#allocation2 + $0x2a0] sm:$0xff]
    %v213 = vld [vmem:[#allocation2 + $0x2a8] sm:$0xff]
    %v214 = vld [vmem:[#allocation2 + $0x2b0] sm:$0xff]
    %v215 = vld [vmem:[#allocation2 + $0x2b8] sm:$0xff]
    %v216 = vld [vmem:[#allocation2 + $0x2c0] sm:$0xff]
    %v217 = vld [vmem:[#allocation2 + $0x2c8] sm:$0xff]
    %v218 = vld [vmem:[#allocation2 + $0x2d0] sm:$0xff]
    %v219 = vld [vmem:[#allocation2 + $0x2d8] sm:$0xff]
    %v220 = vld [vmem:[#allocation2 + $0x2e0] sm:$0xff]
    %v221 = vld [vmem:[#allocation2 + $0x2e8] sm:$0xff]
    %v222 = vld [vmem:[#allocation2 + $0x2f0] sm:$0xff]
    %v223 = vld [vmem:[#allocation2 + $0x2f8] sm:$0xff]
    %v224 = vld [vmem:[#allocation2 + $0x300] sm:$0xff]
    %v225 = vld [vmem:[#allocation2 + $0x308] sm:$0xff]
    %v226 = vld [vmem:[#allocation2 + $0x310] sm:$0xff]
    %v227 = vld [vmem:[#allocation2 + $0x318] sm:$0xff]
    %v228 = vld [vmem:[#allocation2 + $0x320] sm:$0xff]
    %v229 = vld [vmem:[#allocation2 + $0x328] sm:$0xff]
    %v230 = vld [vmem:[#allocation2 + $0x330] sm:$0xff]
    %v231 = vld [vmem:[#allocation2 + $0x338] sm:$0xff]
    %v232 = vld [vmem:[#allocation2 + $0x340] sm:$0xff]
    %v233 = vld [vmem:[#allocation2 + $0x348] sm:$0xff]
    %v234 = vld [vmem:[#allocation2 + $0x350] sm:$0xff]
    %v235 = vld [vmem:[#allocation2 + $0x358] sm:$0xff]
    %v236 = vld [vmem:[#allocation2 + $0x360] sm:$0xff]
    %v237 = vld [vmem:[#allocation2 + $0x368] sm:$0xff]
    %v238 = vld [vmem:[#allocation2 + $0x370] sm:$0xff]
    %v239 = vld [vmem:[#allocation2 + $0x378] sm:$0xff]
    %v240 = vld [vmem:[#allocation2 + $0x380] sm:$0xff]
    %v241 = vld [vmem:[#allocation2 + $0x388] sm:$0xff]
    %v242 = vld [vmem:[#allocation2 + $0x390] sm:$0xff]
    %v243 = vld [vmem:[#allocation2 + $0x398] sm:$0xff]
    %v244 = vld [vmem:[#allocation2 + $0x3a0] sm:$0xff]
    %v245 = vld [vmem:[#allocation2 + $0x3a8] sm:$0xff]
    %v246 = vld [vmem:[#allocation2 + $0x3b0] sm:$0xff]
    %v247 = vld [vmem:[#allocation2 + $0x3b8] sm:$0xff]
    %v248 = vld [vmem:[#allocation2 + $0x3c0] sm:$0xff]
    %v249 = vld [vmem:[#allocation2 + $0x3c8] sm:$0xff]
    %v250 = vld [vmem:[#allocation2 + $0x3d0] sm:$0xff]
    %v251 = vld [vmem:[#allocation2 + $0x3d8] sm:$0xff]
    %v252 = vld [vmem:[#allocation2 + $0x3e0] sm:$0xff]
    %v253 = vld [vmem:[#allocation2 + $0x3e8] sm:$0xff]
    %v254 = vld [vmem:[#allocation2 + $0x3f0] sm:$0xff]
    %v255 = vld [vmem:[#allocation2 + $0x3f8] sm:$0xff]
    %v256 = vpack.c.bf16 %v132, %v128
    %v257 = vpack.c.bf16 %v133, %v129
    %v258 = vpack.c.bf16 %v134, %v130
    %v259 = vpack.c.bf16 %v135, %v131
    %v260 = vpack.c.bf16 %v140, %v136
    %v261 = vpack.c.bf16 %v141, %v137
    %v262 = vpack.c.bf16 %v142, %v138
    %v263 = vpack.c.bf16 %v143, %v139
    %v264 = vpack.c.bf16 %v148, %v144
    %v265 = vpack.c.bf16 %v149, %v145
    %v266 = vpack.c.bf16 %v150, %v146
    %v267 = vpack.c.bf16 %v151, %v147
    %v268 = vpack.c.bf16 %v156, %v152
    %v269 = vpack.c.bf16 %v157, %v153
    %v270 = vpack.c.bf16 %v158, %v154
    %v271 = vpack.c.bf16 %v159, %v155
    %v272 = vpack.c.bf16 %v164, %v160
    %v273 = vpack.c.bf16 %v165, %v161
    %v274 = vpack.c.bf16 %v166, %v162
    %v275 = vpack.c.bf16 %v167, %v163
    %v276 = vpack.c.bf16 %v172, %v168
    %v277 = vpack.c.bf16 %v173, %v169
    %v278 = vpack.c.bf16 %v174, %v170
    %v279 = vpack.c.bf16 %v175, %v171
    %v280 = vpack.c.bf16 %v180, %v176
    %v281 = vpack.c.bf16 %v181, %v177
    %v282 = vpack.c.bf16 %v182, %v178
    %v283 = vpack.c.bf16 %v183, %v179
    %v284 = vpack.c.bf16 %v188, %v184
    %v285 = vpack.c.bf16 %v189, %v185
    %v286 = vpack.c.bf16 %v190, %v186
    %v287 = vpack.c.bf16 %v191, %v187
    %v288 = vpack.c.bf16 %v196, %v192
    %v289 = vpack.c.bf16 %v197, %v193
    %v290 = vpack.c.bf16 %v198, %v194
    %v291 = vpack.c.bf16 %v199, %v195
    %v292 = vpack.c.bf16 %v204, %v200
    %v293 = vpack.c.bf16 %v205, %v201
    %v294 = vpack.c.bf16 %v206, %v202
    %v295 = vpack.c.bf16 %v207, %v203
    %v296 = vpack.c.bf16 %v212, %v208
    %v297 = vpack.c.bf16 %v213, %v209
    %v298 = vpack.c.bf16 %v214, %v210
    %v299 = vpack.c.bf16 %v215, %v211
    %v300 = vpack.c.bf16 %v220, %v216
    %v301 = vpack.c.bf16 %v221, %v217
    %v302 = vpack.c.bf16 %v222, %v218
    %v303 = vpack.c.bf16 %v223, %v219
    %v304 = vpack.c.bf16 %v228, %v224
    %v305 = vpack.c.bf16 %v229, %v225
    %v306 = vpack.c.bf16 %v230, %v226
    %v307 = vpack.c.bf16 %v231, %v227
    %v308 = vpack.c.bf16 %v236, %v232
    %v309 = vpack.c.bf16 %v237, %v233
    %v310 = vpack.c.bf16 %v238, %v234
    %v311 = vpack.c.bf16 %v239, %v235
    %v312 = vpack.c.bf16 %v244, %v240
    %v313 = vpack.c.bf16 %v245, %v241
    %v314 = vpack.c.bf16 %v246, %v242
    %v315 = vpack.c.bf16 %v247, %v243
    %v316 = vpack.c.bf16 %v252, %v248
    %v317 = vpack.c.bf16 %v253, %v249
    %v318 = vpack.c.bf16 %v254, %v250
    %v319 = vpack.c.bf16 %v255, %v251
    %v320 = vld [vmem:[#allocation4] sm:$0xf]
    %v322 = vlaneseq
    %v323 = vshrl.u32 %v322, 7
    %v324 = vsub.s32 0, %v323
    %v325 = vrot.slane %v320, %v324
    %v326 = vlaneseq
    %v327 = vshrl.u32 %v326, 7
    %v328 = vsub.s32 1, %v327
    %v329 = vrot.slane %v320, %v328
    %v330 = vlaneseq
    %v331 = vshrl.u32 %v330, 7
    %v332 = vsub.s32 2, %v331
    %v333 = vrot.slane %v320, %v332
    %v334 = vlaneseq
    %v335 = vshrl.u32 %v334, 7
    %v336 = vsub.s32 3, %v335
    %v337 = vrot.slane %v320, %v336
    %342 = vmatprep.subr.bf16.mxu0 %v257
    %343 = vmatpush1.bf16.msra.mxu0 %v256
    %344 = vmatprep.subr.bf16.mxu0 %v261
    %345 = vmatpush1.bf16.msra.mxu0 %v260
    %346 = vmatprep.subr.bf16.mxu0 %v265
    %347 = vmatpush1.bf16.msra.mxu0 %v264
    %348 = vmatprep.subr.bf16.mxu0 %v269
    %349 = vmatpush1.bf16.msra.mxu0 %v268
    %350 = vmatprep.subr.bf16.mxu0 %v273
    %351 = vmatpush1.bf16.msra.mxu0 %v272
    %352 = vmatprep.subr.bf16.mxu0 %v277
    %353 = vmatpush1.bf16.msra.mxu0 %v276
    %354 = vmatprep.subr.bf16.mxu0 %v281
    %355 = vmatpush1.bf16.msra.mxu0 %v280
    %356 = vmatprep.subr.bf16.mxu0 %v285
    %357 = vmatpush1.bf16.msra.mxu0 %v284
    %358 = vmatprep.subr.bf16.mxu0 %v289
    %359 = vmatpush1.bf16.msra.mxu0 %v288
    %360 = vmatprep.subr.bf16.mxu0 %v293
    %361 = vmatpush1.bf16.msra.mxu0 %v292
    %362 = vmatprep.subr.bf16.mxu0 %v297
    %363 = vmatpush1.bf16.msra.mxu0 %v296
    %364 = vmatprep.subr.bf16.mxu0 %v301
    %365 = vmatpush1.bf16.msra.mxu0 %v300
    %366 = vmatprep.subr.bf16.mxu0 %v305
    %367 = vmatpush1.bf16.msra.mxu0 %v304
    %368 = vmatprep.subr.bf16.mxu0 %v309
    %369 = vmatpush1.bf16.msra.mxu0 %v308
    %370 = vmatprep.subr.bf16.mxu0 %v313
    %371 = vmatpush1.bf16.msra.mxu0 %v312
    %372 = vmatprep.subr.bf16.mxu0 %v317
    %373 = vmatpush1.bf16.msra.mxu0 %v316
    %374 = vmatprep.mubr.bf16.mxu0 %v119
    %375 = vmatmul.mubr.bf16.gmra.mrb[0].mxu0 %v118
    %v376 = vpop.f32.mrb[0].mxu0
    %v377 = vadd.f32 %v325, %v376
    %v378 = vpop.f32.mrb[0].mxu0
    %v379 = vadd.f32 %v329, %v378
    %v380 = vpop.f32.mrb[0].mxu0
    %v381 = vadd.f32 %v325, %v380
    %v382 = vpop.f32.mrb[0].mxu0
    %v383 = vadd.f32 %v329, %v382
    %384 = vmatprep.mubr.bf16.mxu0 %v121
    %385 = vmatmul.mubr.bf16.gmra.mrb[0].mxu0 %v120
    %v386 = vpop.f32.mrb[0].mxu0
    %v387 = vadd.f32 %v325, %v386
    %v388 = vpop.f32.mrb[0].mxu0
    %v389 = vadd.f32 %v329, %v388
    %v390 = vpop.f32.mrb[0].mxu0
    %v391 = vadd.f32 %v325, %v390
    %v392 = vpop.f32.mrb[0].mxu0
    %v393 = vadd.f32 %v329, %v392
    %394 = vmatprep.mubr.bf16.mxu0 %v123
    %395 = vmatmul.mubr.bf16.gmra.mrb[0].mxu0 %v122
    %v396 = vpop.f32.mrb[0].mxu0
    %v397 = vadd.f32 %v325, %v396
    %v398 = vpop.f32.mrb[0].mxu0
    %v399 = vadd.f32 %v329, %v398
    %v400 = vpop.f32.mrb[0].mxu0
    %v401 = vadd.f32 %v325, %v400
    %v402 = vpop.f32.mrb[0].mxu0
    %v403 = vadd.f32 %v329, %v402
    %404 = vmatprep.mubr.bf16.mxu0 %v125
    %405 = vmatmul.mubr.bf16.gmra.mrb[0].mxu0 %v124
    %v406 = vpop.f32.mrb[0].mxu0
    %v407 = vadd.f32 %v325, %v406
    %v408 = vpop.f32.mrb[0].mxu0
    %v409 = vadd.f32 %v329, %v408
    %v410 = vpop.f32.mrb[0].mxu0
    %v411 = vadd.f32 %v325, %v410
    %v412 = vpop.f32.mrb[0].mxu0
    %v413 = vadd.f32 %v329, %v412
    %414 = vmatprep.mubr.bf16.mxu0 %v127
    %415 = vmatmul.mubr.bf16.gmra.mrb[0].mxu0 %v126
    %v416 = vpop.f32.mrb[0].mxu0
    %v417 = vadd.f32 %v325, %v416
    %v418 = vpop.f32.mrb[0].mxu0
    %v419 = vadd.f32 %v329, %v418
    %v420 = vpop.f32.mrb[0].mxu0
    %v421 = vpop.f32.mrb[0].mxu0
    %422 = vdwg.mxu0
    %423 = vmatprep.subr.bf16.mxu0 %v259
    %424 = vmatpush1.bf16.msra.mxu0 %v258
    %425 = vmatprep.subr.bf16.mxu0 %v263
    %426 = vmatpush1.bf16.msra.mxu0 %v262
    %427 = vmatprep.subr.bf16.mxu0 %v267
    %428 = vmatpush1.bf16.msra.mxu0 %v266
    %429 = vmatprep.subr.bf16.mxu0 %v271
    %430 = vmatpush1.bf16.msra.mxu0 %v270
    %431 = vmatprep.subr.bf16.mxu0 %v275
    %432 = vmatpush1.bf16.msra.mxu0 %v274
    %433 = vmatprep.subr.bf16.mxu0 %v279
    %434 = vmatpush1.bf16.msra.mxu0 %v278
    %435 = vmatprep.subr.bf16.mxu0 %v283
    %436 = vmatpush1.bf16.msra.mxu0 %v282
    %437 = vmatprep.subr.bf16.mxu0 %v287
    %438 = vmatpush1.bf16.msra.mxu0 %v286
    %439 = vmatprep.subr.bf16.mxu0 %v291
    %440 = vmatpush1.bf16.msra.mxu0 %v290
    %441 = vmatprep.subr.bf16.mxu0 %v295
    %442 = vmatpush1.bf16.msra.mxu0 %v294
    %443 = vmatprep.subr.bf16.mxu0 %v299
    %444 = vmatpush1.bf16.msra.mxu0 %v298
    %445 = vmatprep.subr.bf16.mxu0 %v303
    %446 = vmatpush1.bf16.msra.mxu0 %v302
    %447 = vmatprep.subr.bf16.mxu0 %v307
    %448 = vmatpush1.bf16.msra.mxu0 %v306
    %449 = vmatprep.subr.bf16.mxu0 %v311
    %450 = vmatpush1.bf16.msra.mxu0 %v310
    %451 = vmatprep.subr.bf16.mxu0 %v315
    %452 = vmatpush1.bf16.msra.mxu0 %v314
    %453 = vmatprep.subr.bf16.mxu0 %v319
    %454 = vmatpush1.bf16.msra.mxu0 %v318
    %455 = vmatprep.mubr.bf16.mxu0 %v119
    %456 = vmatmul.mubr.bf16.gmra.mrb[0].mxu0 %v118
    %v457 = vpop.f32.mrb[0].mxu0
    %v458 = vadd.f32 %v333, %v457
    %v459 = vpop.f32.mrb[0].mxu0
    %v460 = vadd.f32 %v337, %v459
    %v461 = vpop.f32.mrb[0].mxu0
    %v462 = vadd.f32 %v333, %v461
    %v463 = vpop.f32.mrb[0].mxu0
    %v464 = vadd.f32 %v337, %v463
    %465 = vmatprep.mubr.bf16.mxu0 %v121
    %466 = vmatmul.mubr.bf16.gmra.mrb[0].mxu0 %v120
    %v467 = vpop.f32.mrb[0].mxu0
    %v468 = vadd.f32 %v333, %v467
    %v469 = vpop.f32.mrb[0].mxu0
    %v470 = vadd.f32 %v337, %v469
    %v471 = vpop.f32.mrb[0].mxu0
    %v472 = vadd.f32 %v333, %v471
    %v473 = vpop.f32.mrb[0].mxu0
    %v474 = vadd.f32 %v337, %v473
    %475 = vmatprep.mubr.bf16.mxu0 %v123
    %476 = vmatmul.mubr.bf16.gmra.mrb[0].mxu0 %v122
    %v477 = vpop.f32.mrb[0].mxu0
    %v478 = vadd.f32 %v333, %v477
    %v479 = vpop.f32.mrb[0].mxu0
    %v480 = vadd.f32 %v337, %v479
    %v481 = vpop.f32.mrb[0].mxu0
    %v482 = vadd.f32 %v333, %v481
    %v483 = vpop.f32.mrb[0].mxu0
    %v484 = vadd.f32 %v337, %v483
    %485 = vmatprep.mubr.bf16.mxu0 %v125
    %486 = vmatmul.mubr.bf16.gmra.mrb[0].mxu0 %v124
    %v487 = vpop.f32.mrb[0].mxu0
    %v488 = vadd.f32 %v333, %v487
    %v489 = vpop.f32.mrb[0].mxu0
    %v490 = vadd.f32 %v337, %v489
    %v491 = vpop.f32.mrb[0].mxu0
    %v492 = vadd.f32 %v333, %v491
    %v493 = vpop.f32.mrb[0].mxu0
    %v494 = vadd.f32 %v337, %v493
    %495 = vmatprep.mubr.bf16.mxu0 %v127
    %496 = vmatmul.mubr.bf16.gmra.mrb[0].mxu0 %v126
    %v497 = vpop.f32.mrb[0].mxu0
    %v498 = vadd.f32 %v333, %v497
    %v499 = vpop.f32.mrb[0].mxu0
    %v500 = vadd.f32 %v337, %v499
    %v501 = vpop.f32.mrb[0].mxu0
    %v502 = vpop.f32.mrb[0].mxu0
    %503 = vdwg.mxu0
    %v504 = vmax.f32 %v377, 0.0
    %v505 = vmax.f32 %v379, 0.0
    %v506 = vmax.f32 %v458, 0.0
    %v507 = vmax.f32 %v460, 0.0
    %v508 = vmax.f32 %v381, 0.0
    %v509 = vmax.f32 %v383, 0.0
    %v510 = vmax.f32 %v462, 0.0
    %v511 = vmax.f32 %v464, 0.0
    %v512 = vmax.f32 %v387, 0.0
    %v513 = vmax.f32 %v389, 0.0
    %v514 = vmax.f32 %v468, 0.0
    %v515 = vmax.f32 %v470, 0.0
    %v516 = vmax.f32 %v391, 0.0
    %v517 = vmax.f32 %v393, 0.0
    %v518 = vmax.f32 %v472, 0.0
    %v519 = vmax.f32 %v474, 0.0
    %v520 = vmax.f32 %v397, 0.0
    %v521 = vmax.f32 %v399, 0.0
    %v522 = vmax.f32 %v478, 0.0
    %v523 = vmax.f32 %v480, 0.0
    %v524 = vmax.f32 %v401, 0.0
    %v525 = vmax.f32 %v403, 0.0
    %v526 = vmax.f32 %v482, 0.0
    %v527 = vmax.f32 %v484, 0.0
    %v528 = vmax.f32 %v407, 0.0
    %v529 = vmax.f32 %v409, 0.0
    %v530 = vmax.f32 %v488, 0.0
    %v531 = vmax.f32 %v490, 0.0
    %v532 = vmax.f32 %v411, 0.0
    %v533 = vmax.f32 %v413, 0.0
    %v534 = vmax.f32 %v492, 0.0
    %v535 = vmax.f32 %v494, 0.0
    %v536 = vmax.f32 %v417, 0.0
    %v537 = vmax.f32 %v419, 0.0
    %v538 = vmax.f32 %v498, 0.0
    %v539 = vmax.f32 %v500, 0.0
    %v540 = vpack.c.bf16 %v508, %v504
    %v541 = vpack.c.bf16 %v509, %v505
    %v542 = vpack.c.bf16 %v510, %v506
    %v543 = vpack.c.bf16 %v511, %v507
    %v544 = vpack.c.bf16 %v516, %v512
    %v545 = vpack.c.bf16 %v517, %v513
    %v546 = vpack.c.bf16 %v518, %v514
    %v547 = vpack.c.bf16 %v519, %v515
    %v548 = vpack.c.bf16 %v524, %v520
    %v549 = vpack.c.bf16 %v525, %v521
    %v550 = vpack.c.bf16 %v526, %v522
    %v551 = vpack.c.bf16 %v527, %v523
    %v552 = vpack.c.bf16 %v532, %v528
    %v553 = vpack.c.bf16 %v533, %v529
    %v554 = vpack.c.bf16 %v534, %v530
    %v555 = vpack.c.bf16 %v535, %v531
    %v556 = vpack.c.bf16 %v536, %v536
    %v557 = vpack.c.bf16 %v537, %v537
    %v558 = vpack.c.bf16 %v538, %v538
    %v559 = vpack.c.bf16 %v539, %v539
    %v560 = vld [vmem:[#allocation6] sm:$0xff]
    %v561 = vld [vmem:[#allocation6 + $0x8] sm:$0xff]
    %v562 = vld [vmem:[#allocation6 + $0x10] sm:$0xff]
    %v563 = vld [vmem:[#allocation6 + $0x18] sm:$0xff]
    %v564 = vld [vmem:[#allocation6 + $0x20] sm:$0xff]
    %v565 = vld [vmem:[#allocation6 + $0x28] sm:$0xff]
    %v566 = vld [vmem:[#allocation6 + $0x30] sm:$0xff]
    %v567 = vld [vmem:[#allocation6 + $0x38] sm:$0xff]
    %v568 = vld [vmem:[#allocation6 + $0x40] sm:$0xff]
    %v569 = vld [vmem:[#allocation6 + $0x48] sm:$0xff]
    %v570 = vld [vmem:[#allocation6 + $0x50] sm:$0xff]
    %v571 = vld [vmem:[#allocation6 + $0x58] sm:$0xff]
    %v572 = vld [vmem:[#allocation6 + $0x60] sm:$0xff]
    %v573 = vld [vmem:[#allocation6 + $0x68] sm:$0xff]
    %v574 = vld [vmem:[#allocation6 + $0x70] sm:$0xff]
    %v575 = vld [vmem:[#allocation6 + $0x78] sm:$0xff]
    %v576 = vld [vmem:[#allocation6 + $0x80] sm:$0xff]
    %v577 = vld [vmem:[#allocation6 + $0x88] sm:$0xff]
    %v578 = vld [vmem:[#allocation6 + $0x90] sm:$0xff]
    %v579 = vld [vmem:[#allocation6 + $0x98] sm:$0xff]
    %v580 = vld [vmem:[#allocation6 + $0xa0] sm:$0xff]
    %v581 = vld [vmem:[#allocation6 + $0xa8] sm:$0xff]
    %v582 = vld [vmem:[#allocation6 + $0xb0] sm:$0xff]
    %v583 = vld [vmem:[#allocation6 + $0xb8] sm:$0xff]
    %v584 = vld [vmem:[#allocation6 + $0xc0] sm:$0xff]
    %v585 = vld [vmem:[#allocation6 + $0xc8] sm:$0xff]
    %v586 = vld [vmem:[#allocation6 + $0xd0] sm:$0xff]
    %v587 = vld [vmem:[#allocation6 + $0xd8] sm:$0xff]
    %v588 = vld [vmem:[#allocation6 + $0xe0] sm:$0xff]
    %v589 = vld [vmem:[#allocation6 + $0xe8] sm:$0xff]
    %v590 = vld [vmem:[#allocation6 + $0xf0] sm:$0xff]
    %v591 = vld [vmem:[#allocation6 + $0xf8] sm:$0xff]
    %v592 = vld [vmem:[#allocation6 + $0x100] sm:$0xff]
    %v593 = vld [vmem:[#allocation6 + $0x108] sm:$0xff]
    %v594 = vld [vmem:[#allocation6 + $0x110] sm:$0xff]
    %v595 = vld [vmem:[#allocation6 + $0x118] sm:$0xff]
    %v596 = vld [vmem:[#allocation6 + $0x120] sm:$0xff]
    %v597 = vld [vmem:[#allocation6 + $0x128] sm:$0xff]
    %v598 = vld [vmem:[#allocation6 + $0x130] sm:$0xff]
    %v599 = vld [vmem:[#allocation6 + $0x138] sm:$0xff]
    %v600 = vld [vmem:[#allocation6 + $0x140] sm:$0xff]
    %v601 = vld [vmem:[#allocation6 + $0x148] sm:$0xff]
    %v602 = vld [vmem:[#allocation6 + $0x150] sm:$0xff]
    %v603 = vld [vmem:[#allocation6 + $0x158] sm:$0xff]
    %v604 = vld [vmem:[#allocation6 + $0x160] sm:$0xff]
    %v605 = vld [vmem:[#allocation6 + $0x168] sm:$0xff]
    %v606 = vld [vmem:[#allocation6 + $0x170] sm:$0xff]
    %v607 = vld [vmem:[#allocation6 + $0x178] sm:$0xff]
    %v608 = vld [vmem:[#allocation6 + $0x180] sm:$0xff]
    %v609 = vld [vmem:[#allocation6 + $0x188] sm:$0xff]
    %v610 = vld [vmem:[#allocation6 + $0x190] sm:$0xff]
    %v611 = vld [vmem:[#allocation6 + $0x198] sm:$0xff]
    %v612 = vld [vmem:[#allocation6 + $0x1a0] sm:$0xff]
    %v613 = vld [vmem:[#allocation6 + $0x1a8] sm:$0xff]
    %v614 = vld [vmem:[#allocation6 + $0x1b0] sm:$0xff]
    %v615 = vld [vmem:[#allocation6 + $0x1b8] sm:$0xff]
    %v616 = vld [vmem:[#allocation6 + $0x1c0] sm:$0xff]
    %v617 = vld [vmem:[#allocation6 + $0x1c8] sm:$0xff]
    %v618 = vld [vmem:[#allocation6 + $0x1d0] sm:$0xff]
    %v619 = vld [vmem:[#allocation6 + $0x1d8] sm:$0xff]
    %v620 = vld [vmem:[#allocation6 + $0x1e0] sm:$0xff]
    %v621 = vld [vmem:[#allocation6 + $0x1e8] sm:$0xff]
    %v622 = vld [vmem:[#allocation6 + $0x1f0] sm:$0xff]
    %v623 = vld [vmem:[#allocation6 + $0x1f8] sm:$0xff]
    %v624 = vld [vmem:[#allocation6 + $0x200] sm:$0xff]
    %v625 = vld [vmem:[#allocation6 + $0x208] sm:$0xff]
    %v626 = vld [vmem:[#allocation6 + $0x210] sm:$0xff]
    %v627 = vld [vmem:[#allocation6 + $0x218] sm:$0xff]
    %v628 = vld [vmem:[#allocation6 + $0x220] sm:$0xff]
    %v629 = vld [vmem:[#allocation6 + $0x228] sm:$0xff]
    %v630 = vld [vmem:[#allocation6 + $0x230] sm:$0xff]
    %v631 = vld [vmem:[#allocation6 + $0x238] sm:$0xff]
    %v632 = vld [vmem:[#allocation6 + $0x240] sm:$0xff]
    %v633 = vld [vmem:[#allocation6 + $0x248] sm:$0xff]
    %v634 = vld [vmem:[#allocation6 + $0x250] sm:$0xff]
    %v635 = vld [vmem:[#allocation6 + $0x258] sm:$0xff]
    %v636 = vld [vmem:[#allocation6 + $0x260] sm:$0xff]
    %v637 = vld [vmem:[#allocation6 + $0x268] sm:$0xff]
    %v638 = vld [vmem:[#allocation6 + $0x270] sm:$0xff]
    %v639 = vld [vmem:[#allocation6 + $0x278] sm:$0xff]
    %v640 = vld [vmem:[#allocation6 + $0x280] sm:$0xff]
    %v641 = vld [vmem:[#allocation6 + $0x288] sm:$0xff]
    %v642 = vld [vmem:[#allocation6 + $0x290] sm:$0xff]
    %v643 = vld [vmem:[#allocation6 + $0x298] sm:$0xff]
    %v644 = vld [vmem:[#allocation6 + $0x2a0] sm:$0xff]
    %v645 = vld [vmem:[#allocation6 + $0x2a8] sm:$0xff]
    %v646 = vld [vmem:[#allocation6 + $0x2b0] sm:$0xff]
    %v647 = vld [vmem:[#allocation6 + $0x2b8] sm:$0xff]
    %v648 = vld [vmem:[#allocation6 + $0x2c0] sm:$0xff]
    %v649 = vld [vmem:[#allocation6 + $0x2c8] sm:$0xff]
    %v650 = vld [vmem:[#allocation6 + $0x2d0] sm:$0xff]
    %v651 = vld [vmem:[#allocation6 + $0x2d8] sm:$0xff]
    %v652 = vld [vmem:[#allocation6 + $0x2e0] sm:$0xff]
    %v653 = vld [vmem:[#allocation6 + $0x2e8] sm:$0xff]
    %v654 = vld [vmem:[#allocation6 + $0x2f0] sm:$0xff]
    %v655 = vld [vmem:[#allocation6 + $0x2f8] sm:$0xff]
    %v656 = vld [vmem:[#allocation6 + $0x300] sm:$0xff]
    %v657 = vld [vmem:[#allocation6 + $0x308] sm:$0xff]
    %v658 = vld [vmem:[#allocation6 + $0x310] sm:$0xff]
    %v659 = vld [vmem:[#allocation6 + $0x318] sm:$0xff]
    %v660 = vld [vmem:[#allocation6 + $0x320] sm:$0xff]
    %v661 = vld [vmem:[#allocation6 + $0x328] sm:$0xff]
    %v662 = vld [vmem:[#allocation6 + $0x330] sm:$0xff]
    %v663 = vld [vmem:[#allocation6 + $0x338] sm:$0xff]
    %v664 = vld [vmem:[#allocation6 + $0x340] sm:$0xff]
    %v665 = vld [vmem:[#allocation6 + $0x348] sm:$0xff]
    %v666 = vld [vmem:[#allocation6 + $0x350] sm:$0xff]
    %v667 = vld [vmem:[#allocation6 + $0x358] sm:$0xff]
    %v668 = vld [vmem:[#allocation6 + $0x360] sm:$0xff]
    %v669 = vld [vmem:[#allocation6 + $0x368] sm:$0xff]
    %v670 = vld [vmem:[#allocation6 + $0x370] sm:$0xff]
    %v671 = vld [vmem:[#allocation6 + $0x378] sm:$0xff]
    %v672 = vld [vmem:[#allocation6 + $0x380] sm:$0xff]
    %v673 = vld [vmem:[#allocation6 + $0x388] sm:$0xff]
    %v674 = vld [vmem:[#allocation6 + $0x390] sm:$0xff]
    %v675 = vld [vmem:[#allocation6 + $0x398] sm:$0xff]
    %v676 = vld [vmem:[#allocation6 + $0x3a0] sm:$0xff]
    %v677 = vld [vmem:[#allocation6 + $0x3a8] sm:$0xff]
    %v678 = vld [vmem:[#allocation6 + $0x3b0] sm:$0xff]
    %v679 = vld [vmem:[#allocation6 + $0x3b8] sm:$0xff]
    %v680 = vld [vmem:[#allocation6 + $0x3c0] sm:$0xff]
    %v681 = vld [vmem:[#allocation6 + $0x3c8] sm:$0xff]
    %v682 = vld [vmem:[#allocation6 + $0x3d0] sm:$0xff]
    %v683 = vld [vmem:[#allocation6 + $0x3d8] sm:$0xff]
    %v684 = vld [vmem:[#allocation6 + $0x3e0] sm:$0xff]
    %v685 = vld [vmem:[#allocation6 + $0x3e8] sm:$0xff]
    %v686 = vld [vmem:[#allocation6 + $0x3f0] sm:$0xff]
    %v687 = vld [vmem:[#allocation6 + $0x3f8] sm:$0xff]
    %v688 = vpack.c.bf16 %v562, %v560
    %v689 = vpack.c.bf16 %v563, %v561
    %v690 = vpack.c.bf16 %v566, %v564
    %v691 = vpack.c.bf16 %v567, %v565
    %v692 = vpack.c.bf16 %v570, %v568
    %v693 = vpack.c.bf16 %v571, %v569
    %v694 = vpack.c.bf16 %v574, %v572
    %v695 = vpack.c.bf16 %v575, %v573
    %v696 = vpack.c.bf16 %v578, %v576
    %v697 = vpack.c.bf16 %v579, %v577
    %v698 = vpack.c.bf16 %v582, %v580
    %v699 = vpack.c.bf16 %v583, %v581
    %v700 = vpack.c.bf16 %v586, %v584
    %v701 = vpack.c.bf16 %v587, %v585
    %v702 = vpack.c.bf16 %v590, %v588
    %v703 = vpack.c.bf16 %v591, %v589
    %v704 = vpack.c.bf16 %v594, %v592
    %v705 = vpack.c.bf16 %v595, %v593
    %v706 = vpack.c.bf16 %v598, %v596
    %v707 = vpack.c.bf16 %v599, %v597
    %v708 = vpack.c.bf16 %v602, %v600
    %v709 = vpack.c.bf16 %v603, %v601
    %v710 = vpack.c.bf16 %v606, %v604
    %v711 = vpack.c.bf16 %v607, %v605
    %v712 = vpack.c.bf16 %v610, %v608
    %v713 = vpack.c.bf16 %v611, %v609
    %v714 = vpack.c.bf16 %v614, %v612
    %v715 = vpack.c.bf16 %v615, %v613
    %v716 = vpack.c.bf16 %v618, %v616
    %v717 = vpack.c.bf16 %v619, %v617
    %v718 = vpack.c.bf16 %v622, %v620
    %v719 = vpack.c.bf16 %v623, %v621
    %v720 = vpack.c.bf16 %v626, %v624
    %v721 = vpack.c.bf16 %v627, %v625
    %v722 = vpack.c.bf16 %v630, %v628
    %v723 = vpack.c.bf16 %v631, %v629
    %v724 = vpack.c.bf16 %v634, %v632
    %v725 = vpack.c.bf16 %v635, %v633
    %v726 = vpack.c.bf16 %v638, %v636
    %v727 = vpack.c.bf16 %v639, %v637
    %v728 = vpack.c.bf16 %v642, %v640
    %v729 = vpack.c.bf16 %v643, %v641
    %v730 = vpack.c.bf16 %v646, %v644
    %v731 = vpack.c.bf16 %v647, %v645
    %v732 = vpack.c.bf16 %v650, %v648
    %v733 = vpack.c.bf16 %v651, %v649
    %v734 = vpack.c.bf16 %v654, %v652
    %v735 = vpack.c.bf16 %v655, %v653
    %v736 = vpack.c.bf16 %v658, %v656
    %v737 = vpack.c.bf16 %v659, %v657
    %v738 = vpack.c.bf16 %v662, %v660
    %v739 = vpack.c.bf16 %v663, %v661
    %v740 = vpack.c.bf16 %v666, %v664
    %v741 = vpack.c.bf16 %v667, %v665
    %v742 = vpack.c.bf16 %v670, %v668
    %v743 = vpack.c.bf16 %v671, %v669
    %v744 = vpack.c.bf16 %v674, %v672
    %v745 = vpack.c.bf16 %v675, %v673
    %v746 = vpack.c.bf16 %v678, %v676
    %v747 = vpack.c.bf16 %v679, %v677
    %v748 = vpack.c.bf16 %v682, %v680
    %v749 = vpack.c.bf16 %v683, %v681
    %v750 = vpack.c.bf16 %v686, %v684
    %v751 = vpack.c.bf16 %v687, %v685
    %v752 = vld [vmem:[#allocation7] sm:$0x3]
    %v754 = vlaneseq
    %v755 = vshrl.u32 %v754, 7
    %v756 = vsub.s32 0, %v755
    %v757 = vrot.slane %v752, %v756
    %v758 = vlaneseq
    %v759 = vshrl.u32 %v758, 7
    %v760 = vsub.s32 1, %v759
    %v761 = vrot.slane %v752, %v760
    %764 = vmatprep.subr.bf16.mxu0 %v689
    %765 = vmatpush1.bf16.msra.mxu0 %v688
    %766 = vmatprep.subr.bf16.mxu0 %v691
    %767 = vmatpush1.bf16.msra.mxu0 %v690
    %768 = vmatprep.subr.bf16.mxu0 %v693
    %769 = vmatpush1.bf16.msra.mxu0 %v692
    %770 = vmatprep.subr.bf16.mxu0 %v695
    %771 = vmatpush1.bf16.msra.mxu0 %v694
    %772 = vmatprep.subr.bf16.mxu0 %v697
    %773 = vmatpush1.bf16.msra.mxu0 %v696
    %774 = vmatprep.subr.bf16.mxu0 %v699
    %775 = vmatpush1.bf16.msra.mxu0 %v698
    %776 = vmatprep.subr.bf16.mxu0 %v701
    %777 = vmatpush1.bf16.msra.mxu0 %v700
    %778 = vmatprep.subr.bf16.mxu0 %v703
    %779 = vmatpush1.bf16.msra.mxu0 %v702
    %780 = vmatprep.subr.bf16.mxu0 %v705
    %781 = vmatpush1.bf16.msra.mxu0 %v704
    %782 = vmatprep.subr.bf16.mxu0 %v707
    %783 = vmatpush1.bf16.msra.mxu0 %v706
    %784 = vmatprep.subr.bf16.mxu0 %v709
    %785 = vmatpush1.bf16.msra.mxu0 %v708
    %786 = vmatprep.subr.bf16.mxu0 %v711
    %787 = vmatpush1.bf16.msra.mxu0 %v710
    %788 = vmatprep.subr.bf16.mxu0 %v713
    %789 = vmatpush1.bf16.msra.mxu0 %v712
    %790 = vmatprep.subr.bf16.mxu0 %v715
    %791 = vmatpush1.bf16.msra.mxu0 %v714
    %792 = vmatprep.subr.bf16.mxu0 %v717
    %793 = vmatpush1.bf16.msra.mxu0 %v716
    %794 = vmatprep.subr.bf16.mxu0 %v719
    %795 = vmatpush1.bf16.msra.mxu0 %v718
    %796 = vmatprep.mubr.bf16.mxu0 %v541
    %797 = vmatmul.mubr.bf16.gmra.mrb[0].mxu0 %v540
    %v798 = vpop.f32.mrb[0].mxu0
    %v799 = vadd.f32 %v757, %v798
    %v800 = vpop.f32.mrb[0].mxu0
    %v801 = vadd.f32 %v761, %v800
    %v802 = vpop.f32.mrb[0].mxu0
    %v803 = vadd.f32 %v757, %v802
    %v804 = vpop.f32.mrb[0].mxu0
    %v805 = vadd.f32 %v761, %v804
    %806 = vmatprep.mubr.bf16.mxu0 %v545
    %807 = vmatmul.mubr.bf16.gmra.mrb[0].mxu0 %v544
    %v808 = vpop.f32.mrb[0].mxu0
    %v809 = vadd.f32 %v757, %v808
    %v810 = vpop.f32.mrb[0].mxu0
    %v811 = vadd.f32 %v761, %v810
    %v812 = vpop.f32.mrb[0].mxu0
    %v813 = vadd.f32 %v757, %v812
    %v814 = vpop.f32.mrb[0].mxu0
    %v815 = vadd.f32 %v761, %v814
    %816 = vmatprep.mubr.bf16.mxu0 %v549
    %817 = vmatmul.mubr.bf16.gmra.mrb[0].mxu0 %v548
    %v818 = vpop.f32.mrb[0].mxu0
    %v819 = vadd.f32 %v757, %v818
    %v820 = vpop.f32.mrb[0].mxu0
    %v821 = vadd.f32 %v761, %v820
    %v822 = vpop.f32.mrb[0].mxu0
    %v823 = vadd.f32 %v757, %v822
    %v824 = vpop.f32.mrb[0].mxu0
    %v825 = vadd.f32 %v761, %v824
    %826 = vmatprep.mubr.bf16.mxu0 %v553
    %827 = vmatmul.mubr.bf16.gmra.mrb[0].mxu0 %v552
    %v828 = vpop.f32.mrb[0].mxu0
    %v829 = vadd.f32 %v757, %v828
    %v830 = vpop.f32.mrb[0].mxu0
    %v831 = vadd.f32 %v761, %v830
    %v832 = vpop.f32.mrb[0].mxu0
    %v833 = vadd.f32 %v757, %v832
    %v834 = vpop.f32.mrb[0].mxu0
    %v835 = vadd.f32 %v761, %v834
    %836 = vmatprep.mubr.bf16.mxu0 %v557
    %837 = vmatmul.mubr.bf16.gmra.mrb[0].mxu0 %v556
    %v838 = vpop.f32.mrb[0].mxu0
    %v839 = vadd.f32 %v757, %v838
    %v840 = vpop.f32.mrb[0].mxu0
    %v841 = vadd.f32 %v761, %v840
    %v842 = vpop.f32.mrb[0].mxu0
    %v843 = vpop.f32.mrb[0].mxu0
    %844 = vdwg.mxu0
    %845 = vmatprep.subr.bf16.mxu0 %v721
    %846 = vmatpush1.bf16.msra.mxu0 %v720
    %847 = vmatprep.subr.bf16.mxu0 %v723
    %848 = vmatpush1.bf16.msra.mxu0 %v722
    %849 = vmatprep.subr.bf16.mxu0 %v725
    %850 = vmatpush1.bf16.msra.mxu0 %v724
    %851 = vmatprep.subr.bf16.mxu0 %v727
    %852 = vmatpush1.bf16.msra.mxu0 %v726
    %853 = vmatprep.subr.bf16.mxu0 %v729
    %854 = vmatpush1.bf16.msra.mxu0 %v728
    %855 = vmatprep.subr.bf16.mxu0 %v731
    %856 = vmatpush1.bf16.msra.mxu0 %v730
    %857 = vmatprep.subr.bf16.mxu0 %v733
    %858 = vmatpush1.bf16.msra.mxu0 %v732
    %859 = vmatprep.subr.bf16.mxu0 %v735
    %860 = vmatpush1.bf16.msra.mxu0 %v734
    %861 = vmatprep.subr.bf16.mxu0 %v737
    %862 = vmatpush1.bf16.msra.mxu0 %v736
    %863 = vmatprep.subr.bf16.mxu0 %v739
    %864 = vmatpush1.bf16.msra.mxu0 %v738
    %865 = vmatprep.subr.bf16.mxu0 %v741
    %866 = vmatpush1.bf16.msra.mxu0 %v740
    %867 = vmatprep.subr.bf16.mxu0 %v743
    %868 = vmatpush1.bf16.msra.mxu0 %v742
    %869 = vmatprep.subr.bf16.mxu0 %v745
    %870 = vmatpush1.bf16.msra.mxu0 %v744
    %871 = vmatprep.subr.bf16.mxu0 %v747
    %872 = vmatpush1.bf16.msra.mxu0 %v746
    %873 = vmatprep.subr.bf16.mxu0 %v749
    %874 = vmatpush1.bf16.msra.mxu0 %v748
    %875 = vmatprep.subr.bf16.mxu0 %v751
    %876 = vmatpush1.bf16.msra.mxu0 %v750
    %877 = vmatprep.mubr.bf16.mxu0 %v543
    %878 = vmatmul.mubr.bf16.gmra.mrb[0].mxu0 %v542
    %v879 = vpop.f32.mrb[0].mxu0
    %v880 = vadd.f32 %v799, %v879
    %v881 = vpop.f32.mrb[0].mxu0
    %v882 = vadd.f32 %v801, %v881
    %v883 = vpop.f32.mrb[0].mxu0
    %v884 = vadd.f32 %v803, %v883
    %v885 = vpop.f32.mrb[0].mxu0
    %v886 = vadd.f32 %v805, %v885
    %887 = vmatprep.mubr.bf16.mxu0 %v547
    %888 = vmatmul.mubr.bf16.gmra.mrb[0].mxu0 %v546
    %v889 = vpop.f32.mrb[0].mxu0
    %v890 = vadd.f32 %v809, %v889
    %v891 = vpop.f32.mrb[0].mxu0
    %v892 = vadd.f32 %v811, %v891
    %v893 = vpop.f32.mrb[0].mxu0
    %v894 = vadd.f32 %v813, %v893
    %v895 = vpop.f32.mrb[0].mxu0
    %v896 = vadd.f32 %v815, %v895
    %897 = vmatprep.mubr.bf16.mxu0 %v551
    %898 = vmatmul.mubr.bf16.gmra.mrb[0].mxu0 %v550
    %v899 = vpop.f32.mrb[0].mxu0
    %v900 = vadd.f32 %v819, %v899
    %v901 = vpop.f32.mrb[0].mxu0
    %v902 = vadd.f32 %v821, %v901
    %v903 = vpop.f32.mrb[0].mxu0
    %v904 = vadd.f32 %v823, %v903
    %v905 = vpop.f32.mrb[0].mxu0
    %v906 = vadd.f32 %v825, %v905
    %907 = vmatprep.mubr.bf16.mxu0 %v555
    %908 = vmatmul.mubr.bf16.gmra.mrb[0].mxu0 %v554
    %v909 = vpop.f32.mrb[0].mxu0
    %v910 = vadd.f32 %v829, %v909
    %v911 = vpop.f32.mrb[0].mxu0
    %v912 = vadd.f32 %v831, %v911
    %v913 = vpop.f32.mrb[0].mxu0
    %v914 = vadd.f32 %v833, %v913
    %v915 = vpop.f32.mrb[0].mxu0
    %v916 = vadd.f32 %v835, %v915
    %917 = vmatprep.mubr.bf16.mxu0 %v559
    %918 = vmatmul.mubr.bf16.gmra.mrb[0].mxu0 %v558
    %v919 = vpop.f32.mrb[0].mxu0
    %v920 = vadd.f32 %v839, %v919
    %v921 = vpop.f32.mrb[0].mxu0
    %v922 = vadd.f32 %v841, %v921
    %v923 = vpop.f32.mrb[0].mxu0
    %v924 = vpop.f32.mrb[0].mxu0
    %925 = vdwg.mxu0
    %v926 = vadd.f32 %v880, %v100
    %v927 = vadd.f32 %v882, %v101
    %v928 = vadd.f32 %v884, %v102
    %v929 = vadd.f32 %v886, %v103
    %v930 = vadd.f32 %v890, %v104
    %v931 = vadd.f32 %v892, %v105
    %v932 = vadd.f32 %v894, %v106
    %v933 = vadd.f32 %v896, %v107
    %v934 = vadd.f32 %v900, %v108
    %v935 = vadd.f32 %v902, %v109
    %v936 = vadd.f32 %v904, %v110
    %v937 = vadd.f32 %v906, %v111
    %v938 = vadd.f32 %v910, %v112
    %v939 = vadd.f32 %v912, %v113
    %v940 = vadd.f32 %v914, %v114
    %v941 = vadd.f32 %v916, %v115
    %v942 = vadd.f32 %v920, %v116
    %v943 = vadd.f32 %v922, %v117
    %v944 = vld [vmem:[#allocation9] sm:$0x3]
    %v945 = vld [vmem:[#allocation10] sm:$0x3]
    %v946 = vadd.f32 %v926, %v927
    %947 = vadd.xlane.f32.xlu0 %v946
    %v948 = vpop.xlane.xlu0 %947
    %v949 = vadd.f32 %v928, %v929
    %950 = vadd.xlane.f32.xlu0 %v949
    %v951 = vpop.xlane.xlu0 %950
    %v952 = vadd.f32 %v930, %v931
    %953 = vadd.xlane.f32.xlu0 %v952
    %v954 = vpop.xlane.xlu0 %953
    %v955 = vadd.f32 %v932, %v933
    %956 = vadd.xlane.f32.xlu0 %v955
    %v957 = vpop.xlane.xlu0 %956
    %v958 = vadd.f32 %v934, %v935
    %959 = vadd.xlane.f32.xlu0 %v958
    %v960 = vpop.xlane.xlu0 %959
    %v961 = vadd.f32 %v936, %v937
    %962 = vadd.xlane.f32.xlu0 %v961
    %v963 = vpop.xlane.xlu0 %962
    %v964 = vadd.f32 %v938, %v939
    %965 = vadd.xlane.f32.xlu0 %v964
    %v966 = vpop.xlane.xlu0 %965
    %v967 = vadd.f32 %v940, %v941
    %968 = vadd.xlane.f32.xlu0 %v967
    %v969 = vpop.xlane.xlu0 %968
    %vm970 = vcmask 1041408
    %v971 = vsel %vm970, %v942, 0.0
    %v972 = vsel %vm970, %v943, 0.0
    %v973 = vadd.f32 %v971, %v972
    %974 = vadd.xlane.f32.xlu0 %v973
    %v975 = vpop.xlane.xlu0 %974
    %v976 = vrcp.pop 256.0
    %v977 = vmul.f32 %v948, %v976
    %v978 = vmul.f32 %v951, %v976
    %v979 = vmul.f32 %v954, %v976
    %v980 = vmul.f32 %v957, %v976
    %v981 = vmul.f32 %v960, %v976
    %v982 = vmul.f32 %v963, %v976
    %v983 = vmul.f32 %v966, %v976
    %v984 = vmul.f32 %v969, %v976
    %v985 = vmul.f32 %v975, %v976
    %v986 = vsub.f32 %v926, %v977
    %v987 = vsub.f32 %v927, %v977
    %v988 = vsub.f32 %v928, %v978
    %v989 = vsub.f32 %v929, %v978
    %v990 = vsub.f32 %v930, %v979
    %v991 = vsub.f32 %v931, %v979
    %v992 = vsub.f32 %v932, %v980
    %v993 = vsub.f32 %v933, %v980
    %v994 = vsub.f32 %v934, %v981
    %v995 = vsub.f32 %v935, %v981
    %v996 = vsub.f32 %v936, %v982
    %v997 = vsub.f32 %v937, %v982
    %v998 = vsub.f32 %v938, %v983
    %v999 = vsub.f32 %v939, %v983
    %v1000 = vsub.f32 %v940, %v984
    %v1001 = vsub.f32 %v941, %v984
    %v1002 = vsub.f32 %v942, %v985
    %v1003 = vsub.f32 %v943, %v985
    %v1004 = vmul.f32 %v986, %v986
    %v1005 = vmul.f32 %v987, %v987
    %v1006 = vmul.f32 %v988, %v988
    %v1007 = vmul.f32 %v989, %v989
    %v1008 = vmul.f32 %v990, %v990
    %v1009 = vmul.f32 %v991, %v991
    %v1010 = vmul.f32 %v992, %v992
    %v1011 = vmul.f32 %v993, %v993
    %v1012 = vmul.f32 %v994, %v994
    %v1013 = vmul.f32 %v995, %v995
    %v1014 = vmul.f32 %v996, %v996
    %v1015 = vmul.f32 %v997, %v997
    %v1016 = vmul.f32 %v998, %v998
    %v1017 = vmul.f32 %v999, %v999
    %v1018 = vmul.f32 %v1000, %v1000
    %v1019 = vmul.f32 %v1001, %v1001
    %v1020 = vmul.f32 %v1002, %v1002
    %v1021 = vmul.f32 %v1003, %v1003
    %v1022 = vadd.f32 %v1004, %v1005
    %1023 = vadd.xlane.f32.xlu0 %v1022
    %v1024 = vpop.xlane.xlu0 %1023
    %v1025 = vadd.f32 %v1006, %v1007
    %1026 = vadd.xlane.f32.xlu0 %v1025
    %v1027 = vpop.xlane.xlu0 %1026
    %v1028 = vadd.f32 %v1008, %v1009
    %1029 = vadd.xlane.f32.xlu0 %v1028
    %v1030 = vpop.xlane.xlu0 %1029
    %v1031 = vadd.f32 %v1010, %v1011
    %1032 = vadd.xlane.f32.xlu0 %v1031
    %v1033 = vpop.xlane.xlu0 %1032
    %v1034 = vadd.f32 %v1012, %v1013
    %1035 = vadd.xlane.f32.xlu0 %v1034
    %v1036 = vpop.xlane.xlu0 %1035
    %v1037 = vadd.f32 %v1014, %v1015
    %1038 = vadd.xlane.f32.xlu0 %v1037
    %v1039 = vpop.xlane.xlu0 %1038
    %v1040 = vadd.f32 %v1016, %v1017
    %1041 = vadd.xlane.f32.xlu0 %v1040
    %v1042 = vpop.xlane.xlu0 %1041
    %v1043 = vadd.f32 %v1018, %v1019
    %1044 = vadd.xlane.f32.xlu0 %v1043
    %v1045 = vpop.xlane.xlu0 %1044
    %v1046 = vsel %vm970, %v1020, 0.0
    %v1047 = vsel %vm970, %v1021, 0.0
    %v1048 = vadd.f32 %v1046, %v1047
    %1049 = vadd.xlane.f32.xlu0 %v1048
    %v1050 = vpop.xlane.xlu0 %1049
    %v1051 = vmul.f32 %v1024, %v976
    %v1052 = vmul.f32 %v1027, %v976
    %v1053 = vmul.f32 %v1030, %v976
    %v1054 = vmul.f32 %v1033, %v976
    %v1055 = vmul.f32 %v1036, %v976
    %v1056 = vmul.f32 %v1039, %v976
    %v1057 = vmul.f32 %v1042, %v976
    %v1058 = vmul.f32 %v1045, %v976
    %v1059 = vmul.f32 %v1050, %v976
    %v1060 = vadd.f32 %v1051, 1e-05
    %v1061 = vadd.f32 %v1052, 1e-05
    %v1062 = vadd.f32 %v1053, 1e-05
    %v1063 = vadd.f32 %v1054, 1e-05
    %v1064 = vadd.f32 %v1055, 1e-05
    %v1065 = vadd.f32 %v1056, 1e-05
    %v1066 = vadd.f32 %v1057, 1e-05
    %v1067 = vadd.f32 %v1058, 1e-05
    %v1068 = vadd.f32 %v1059, 1e-05
    %v1069 = vrsqrt.pop %v1060
    %v1070 = vrsqrt.pop %v1061
    %v1071 = vrsqrt.pop %v1062
    %v1072 = vrsqrt.pop %v1063
    %v1073 = vrsqrt.pop %v1064
    %v1074 = vrsqrt.pop %v1065
    %v1075 = vrsqrt.pop %v1066
    %v1076 = vrsqrt.pop %v1067
    %v1077 = vrsqrt.pop %v1068
    %v1078 = vmul.f32 %v986, %v1069
    %v1079 = vmul.f32 %v987, %v1069
    %v1080 = vmul.f32 %v988, %v1070
    %v1081 = vmul.f32 %v989, %v1070
    %v1082 = vmul.f32 %v990, %v1071
    %v1083 = vmul.f32 %v991, %v1071
    %v1084 = vmul.f32 %v992, %v1072
    %v1085 = vmul.f32 %v993, %v1072
    %v1086 = vmul.f32 %v994, %v1073
    %v1087 = vmul.f32 %v995, %v1073
    %v1088 = vmul.f32 %v996, %v1074
    %v1089 = vmul.f32 %v997, %v1074
    %v1090 = vmul.f32 %v998, %v1075
    %v1091 = vmul.f32 %v999, %v1075
    %v1092 = vmul.f32 %v1000, %v1076
    %v1093 = vmul.f32 %v1001, %v1076
    %v1094 = vmul.f32 %v1002, %v1077
    %v1095 = vmul.f32 %v1003, %v1077
    %v1097 = vlaneseq
    %v1098 = vshrl.u32 %v1097, 7
    %v1099 = vsub.s32 0, %v1098
    %v1100 = vrot.slane %v944, %v1099
    %v1101 = vlaneseq
    %v1102 = vshrl.u32 %v1101, 7
    %v1103 = vsub.s32 1, %v1102
    %v1104 = vrot.slane %v944, %v1103
    %v1107 = vmul.f32 %v1078, %v1100
    %v1108 = vmul.f32 %v1079, %v1104
    %v1109 = vmul.f32 %v1080, %v1100
    %v1110 = vmul.f32 %v1081, %v1104
    %v1111 = vmul.f32 %v1082, %v1100
    %v1112 = vmul.f32 %v1083, %v1104
    %v1113 = vmul.f32 %v1084, %v1100
    %v1114 = vmul.f32 %v1085, %v1104
    %v1115 = vmul.f32 %v1086, %v1100
    %v1116 = vmul.f32 %v1087, %v1104
    %v1117 = vmul.f32 %v1088, %v1100
    %v1118 = vmul.f32 %v1089, %v1104
    %v1119 = vmul.f32 %v1090, %v1100
    %v1120 = vmul.f32 %v1091, %v1104
    %v1121 = vmul.f32 %v1092, %v1100
    %v1122 = vmul.f32 %v1093, %v1104
    %v1123 = vmul.f32 %v1094, %v1100
    %v1124 = vmul.f32 %v1095, %v1104
    %v1126 = vlaneseq
    %v1127 = vshrl.u32 %v1126, 7
    %v1128 = vsub.s32 0, %v1127
    %v1129 = vrot.slane %v945, %v1128
    %v1130 = vlaneseq
    %v1131 = vshrl.u32 %v1130, 7
    %v1132 = vsub.s32 1, %v1131
    %v1133 = vrot.slane %v945, %v1132
    %v1136 = vadd.f32 %v1107, %v1129
    %v1137 = vadd.f32 %v1108, %v1133
    %v1138 = vadd.f32 %v1109, %v1129
    %v1139 = vadd.f32 %v1110, %v1133
    %v1140 = vadd.f32 %v1111, %v1129
    %v1141 = vadd.f32 %v1112, %v1133
    %v1142 = vadd.f32 %v1113, %v1129
    %v1143 = vadd.f32 %v1114, %v1133
    %v1144 = vadd.f32 %v1115, %v1129
    %v1145 = vadd.f32 %v1116, %v1133
    %v1146 = vadd.f32 %v1117, %v1129
    %v1147 = vadd.f32 %v1118, %v1133
    %v1148 = vadd.f32 %v1119, %v1129
    %v1149 = vadd.f32 %v1120, %v1133
    %v1150 = vadd.f32 %v1121, %v1129
    %v1151 = vadd.f32 %v1122, %v1133
    %v1152 = vadd.f32 %v1123, %v1129
    %v1153 = vadd.f32 %v1124, %v1133
    %1154 = vst [vmem:[%s7] sm:$0xff] %v1136
    %1155 = vst [vmem:[%s7 + $0x8] sm:$0xff] %v1137
    %1156 = vst [vmem:[%s7 + $0x10] sm:$0xff] %v1138
    %1157 = vst [vmem:[%s7 + $0x18] sm:$0xff] %v1139
    %1158 = vst [vmem:[%s7 + $0x20] sm:$0xff] %v1140
    %1159 = vst [vmem:[%s7 + $0x28] sm:$0xff] %v1141
    %1160 = vst [vmem:[%s7 + $0x30] sm:$0xff] %v1142
    %1161 = vst [vmem:[%s7 + $0x38] sm:$0xff] %v1143
    %1162 = vst [vmem:[%s7 + $0x40] sm:$0xff] %v1144
    %1163 = vst [vmem:[%s7 + $0x48] sm:$0xff] %v1145
    %1164 = vst [vmem:[%s7 + $0x50] sm:$0xff] %v1146
    %1165 = vst [vmem:[%s7 + $0x58] sm:$0xff] %v1147
    %1166 = vst [vmem:[%s7 + $0x60] sm:$0xff] %v1148
    %1167 = vst [vmem:[%s7 + $0x68] sm:$0xff] %v1149
    %1168 = vst [vmem:[%s7 + $0x70] sm:$0xff] %v1150
    %1169 = vst [vmem:[%s7 + $0x78] sm:$0xff] %v1151
    %1170 = vst [vmem:[%s7 + $0x80] sm:$0x3] %v1152
    %1171 = vst [vmem:[%s7 + $0x88] sm:$0x3] %v1153
    // Predicated region
    $region54: #{forward.27} parent=1 // pred_check
      _
    $region55: #{forward.27} parent=1 // pred_check_branch
      %1173 = sbr.rel (0) target = $region57
    $region56: #{forward.27} parent=1 // pred_region
      _
    $region57: #{forward.27} parent=1 // pred_fallthru
      _
    // Predicated region
    $region58: #{forward.27} parent=1 // pred_check
      _
    $region59: #{forward.27} parent=1 // pred_check_branch
      %1175 = sbr.rel (0) target = $region61
    $region60: #{forward.27} parent=1 // pred_region
      _
    $region61: #{forward.27} parent=1 // pred_fallthru
      _
    %1176 = vsyncpa [#allocation3], 1
    %1177 = vsyncpa [#allocation5], 1
    %1178 = vsyncpa [#allocation8], 1
    %1179 = vsyncpa [#allocation11], 1

// kernel: forward.34
$region0: #{forward.34}
  #allocation0 [shape = 'u32[]', space=smem, size = 0x4, offset = 0x4, fixed_abs, tag = 'smem constant byte address 0x4 - core index']
  #allocation1 [shape = 'u32[144,128]{1,0:T(1,128)}', space=vmem, size = 0x12000, scoped, tag = 'internal scratch']
  %s0 = inlined_call_operand.vmem [shape: f32[66,256], index: 0, kind: input, shape index: {}]
  %s1 = inlined_call_operand.vmem [shape: f32[66,256], index: 1, kind: input, shape index: {}]
  %s2 = inlined_call_operand.vmem [shape: f32[256,256], index: 2, kind: input, shape index: {}]
  %s3 = inlined_call_operand.vmem [shape: f32[1,256], index: 3, kind: input, shape index: {}]
  %s4 = inlined_call_operand.vmem [shape: f32[1,256], index: 4, kind: input, shape index: {}]
  %s5 = inlined_call_operand.vmem [shape: f32[1,256], index: 5, kind: input, shape index: {}]
  %s6 = inlined_call_operand.vmem [shape: f32[66,256], index: 6, kind: output, shape index: {}]
  %s7 = sld [smem:[#allocation0]]
  $region34: #{forward.34} parent=0
    _
  %s9 = ssub.s32 1, %s7
  %s10 = scalar_select 0, %s9, %s7
  // Predicated region
  $region2: #{forward.34} parent=0 // pred_check
    _
  $region3: #{forward.34} parent=0 // pred_check_branch
    %12 = sbr.rel (0) target = $region5
  $region4: #{forward.34} parent=0 // pred_region
    _
  $region5: #{forward.34} parent=0 // pred_fallthru
    _
  // Predicated region
  $region6: #{forward.34} parent=0 // pred_check
    _
  $region7: #{forward.34} parent=0 // pred_check_branch
    %14 = sbr.rel (0) target = $region9
  $region8: #{forward.34} parent=0 // pred_region
    _
  $region9: #{forward.34} parent=0 // pred_fallthru
    _
  // Predicated region
  $region10: #{forward.34} parent=0 // pred_check
    _
  $region11: #{forward.34} parent=0 // pred_check_branch
    %16 = sbr.rel (0) target = $region13
  $region12: #{forward.34} parent=0 // pred_region
    _
  $region13: #{forward.34} parent=0 // pred_fallthru
    _
  // Predicated region
  $region14: #{forward.34} parent=0 // pred_check
    _
  $region15: #{forward.34} parent=0 // pred_check_branch
    %18 = sbr.rel (0) target = $region17
  $region16: #{forward.34} parent=0 // pred_region
    _
  $region17: #{forward.34} parent=0 // pred_fallthru
    _
  // Predicated region
  $region18: #{forward.34} parent=0 // pred_check
    _
  $region19: #{forward.34} parent=0 // pred_check_branch
    %20 = sbr.rel (0) target = $region21
  $region20: #{forward.34} parent=0 // pred_region
    _
  $region21: #{forward.34} parent=0 // pred_fallthru
    _
  // Predicated region
  $region22: #{forward.34} parent=0 // pred_check
    _
  $region23: #{forward.34} parent=0 // pred_check_branch
    %22 = sbr.rel (0) target = $region25
  $region24: #{forward.34} parent=0 // pred_region
    _
  $region25: #{forward.34} parent=0 // pred_fallthru
    _
  %v23 = vld [vmem:[%s0] sm:$0xff]
  %v24 = vld [vmem:[%s0 + $0x8] sm:$0xff]
  %v25 = vld [vmem:[%s0 + $0x10] sm:$0xff]
  %v26 = vld [vmem:[%s0 + $0x18] sm:$0xff]
  %v27 = vld [vmem:[%s0 + $0x20] sm:$0xff]
  %v28 = vld [vmem:[%s0 + $0x28] sm:$0xff]
  %v29 = vld [vmem:[%s0 + $0x30] sm:$0xff]
  %v30 = vld [vmem:[%s0 + $0x38] sm:$0xff]
  %v31 = vld [vmem:[%s0 + $0x40] sm:$0xff]
  %v32 = vld [vmem:[%s0 + $0x48] sm:$0xff]
  %v33 = vld [vmem:[%s0 + $0x50] sm:$0xff]
  %v34 = vld [vmem:[%s0 + $0x58] sm:$0xff]
  %v35 = vld [vmem:[%s0 + $0x60] sm:$0xff]
  %v36 = vld [vmem:[%s0 + $0x68] sm:$0xff]
  %v37 = vld [vmem:[%s0 + $0x70] sm:$0xff]
  %v38 = vld [vmem:[%s0 + $0x78] sm:$0xff]
  %v39 = vld [vmem:[%s0 + $0x80] sm:$0x3]
  %v40 = vld [vmem:[%s0 + $0x88] sm:$0x3]
  %v41 = vpack.c.bf16 %v25, %v23
  %v42 = vpack.c.bf16 %v26, %v24
  %v43 = vpack.c.bf16 %v29, %v27
  %v44 = vpack.c.bf16 %v30, %v28
  %v45 = vpack.c.bf16 %v33, %v31
  %v46 = vpack.c.bf16 %v34, %v32
  %v47 = vpack.c.bf16 %v37, %v35
  %v48 = vpack.c.bf16 %v38, %v36
  %v49 = vpack.c.bf16 %v39, %v39
  %v50 = vpack.c.bf16 %v40, %v40
  %v51 = vld [vmem:[%s2] sm:$0xff]
  %v52 = vld [vmem:[%s2 + $0x8] sm:$0xff]
  %v53 = vld [vmem:[%s2 + $0x10] sm:$0xff]
  %v54 = vld [vmem:[%s2 + $0x18] sm:$0xff]
  %v55 = vld [vmem:[%s2 + $0x20] sm:$0xff]
  %v56 = vld [vmem:[%s2 + $0x28] sm:$0xff]
  %v57 = vld [vmem:[%s2 + $0x30] sm:$0xff]
  %v58 = vld [vmem:[%s2 + $0x38] sm:$0xff]
  %v59 = vld [vmem:[%s2 + $0x40] sm:$0xff]
  %v60 = vld [vmem:[%s2 + $0x48] sm:$0xff]
  %v61 = vld [vmem:[%s2 + $0x50] sm:$0xff]
  %v62 = vld [vmem:[%s2 + $0x58] sm:$0xff]
  %v63 = vld [vmem:[%s2 + $0x60] sm:$0xff]
  %v64 = vld [vmem:[%s2 + $0x68] sm:$0xff]
  %v65 = vld [vmem:[%s2 + $0x70] sm:$0xff]
  %v66 = vld [vmem:[%s2 + $0x78] sm:$0xff]
  %v67 = vld [vmem:[%s2 + $0x80] sm:$0xff]
  %v68 = vld [vmem:[%s2 + $0x88] sm:$0xff]
  %v69 = vld [vmem:[%s2 + $0x90] sm:$0xff]
  %v70 = vld [vmem:[%s2 + $0x98] sm:$0xff]
  %v71 = vld [vmem:[%s2 + $0xa0] sm:$0xff]
  %v72 = vld [vmem:[%s2 + $0xa8] sm:$0xff]
  %v73 = vld [vmem:[%s2 + $0xb0] sm:$0xff]
  %v74 = vld [vmem:[%s2 + $0xb8] sm:$0xff]
  %v75 = vld [vmem:[%s2 + $0xc0] sm:$0xff]
  %v76 = vld [vmem:[%s2 + $0xc8] sm:$0xff]
  %v77 = vld [vmem:[%s2 + $0xd0] sm:$0xff]
  %v78 = vld [vmem:[%s2 + $0xd8] sm:$0xff]
  %v79 = vld [vmem:[%s2 + $0xe0] sm:$0xff]
  %v80 = vld [vmem:[%s2 + $0xe8] sm:$0xff]
  %v81 = vld [vmem:[%s2 + $0xf0] sm:$0xff]
  %v82 = vld [vmem:[%s2 + $0xf8] sm:$0xff]
  %v83 = vld [vmem:[%s2 + $0x100] sm:$0xff]
  %v84 = vld [vmem:[%s2 + $0x108] sm:$0xff]
  %v85 = vld [vmem:[%s2 + $0x110] sm:$0xff]
  %v86 = vld [vmem:[%s2 + $0x118] sm:$0xff]
  %v87 = vld [vmem:[%s2 + $0x120] sm:$0xff]
  %v88 = vld [vmem:[%s2 + $0x128] sm:$0xff]
  %v89 = vld [vmem:[%s2 + $0x130] sm:$0xff]
  %v90 = vld [vmem:[%s2 + $0x138] sm:$0xff]
  %v91 = vld [vmem:[%s2 + $0x140] sm:$0xff]
  %v92 = vld [vmem:[%s2 + $0x148] sm:$0xff]
  %v93 = vld [vmem:[%s2 + $0x150] sm:$0xff]
  %v94 = vld [vmem:[%s2 + $0x158] sm:$0xff]
  %v95 = vld [vmem:[%s2 + $0x160] sm:$0xff]
  %v96 = vld [vmem:[%s2 + $0x168] sm:$0xff]
  %v97 = vld [vmem:[%s2 + $0x170] sm:$0xff]
  %v98 = vld [vmem:[%s2 + $0x178] sm:$0xff]
  %v99 = vld [vmem:[%s2 + $0x180] sm:$0xff]
  %v100 = vld [vmem:[%s2 + $0x188] sm:$0xff]
  %v101 = vld [vmem:[%s2 + $0x190] sm:$0xff]
  %v102 = vld [vmem:[%s2 + $0x198] sm:$0xff]
  %v103 = vld [vmem:[%s2 + $0x1a0] sm:$0xff]
  %v104 = vld [vmem:[%s2 + $0x1a8] sm:$0xff]
  %v105 = vld [vmem:[%s2 + $0x1b0] sm:$0xff]
  %v106 = vld [vmem:[%s2 + $0x1b8] sm:$0xff]
  %v107 = vld [vmem:[%s2 + $0x1c0] sm:$0xff]
  %v108 = vld [vmem:[%s2 + $0x1c8] sm:$0xff]
  %v109 = vld [vmem:[%s2 + $0x1d0] sm:$0xff]
  %v110 = vld [vmem:[%s2 + $0x1d8] sm:$0xff]
  %v111 = vld [vmem:[%s2 + $0x1e0] sm:$0xff]
  %v112 = vld [vmem:[%s2 + $0x1e8] sm:$0xff]
  %v113 = vld [vmem:[%s2 + $0x1f0] sm:$0xff]
  %v114 = vld [vmem:[%s2 + $0x1f8] sm:$0xff]
  %v115 = vpack.c.bf16 %v53, %v51
  %v116 = vpack.c.bf16 %v54, %v52
  %v117 = vpack.c.bf16 %v57, %v55
  %v118 = vpack.c.bf16 %v58, %v56
  %v119 = vpack.c.bf16 %v61, %v59
  %v120 = vpack.c.bf16 %v62, %v60
  %v121 = vpack.c.bf16 %v65, %v63
  %v122 = vpack.c.bf16 %v66, %v64
  %v123 = vpack.c.bf16 %v69, %v67
  %v124 = vpack.c.bf16 %v70, %v68
  %v125 = vpack.c.bf16 %v73, %v71
  %v126 = vpack.c.bf16 %v74, %v72
  %v127 = vpack.c.bf16 %v77, %v75
  %v128 = vpack.c.bf16 %v78, %v76
  %v129 = vpack.c.bf16 %v81, %v79
  %v130 = vpack.c.bf16 %v82, %v80
  %v131 = vpack.c.bf16 %v85, %v83
  %v132 = vpack.c.bf16 %v86, %v84
  %v133 = vpack.c.bf16 %v89, %v87
  %v134 = vpack.c.bf16 %v90, %v88
  %v135 = vpack.c.bf16 %v93, %v91
  %v136 = vpack.c.bf16 %v94, %v92
  %v137 = vpack.c.bf16 %v97, %v95
  %v138 = vpack.c.bf16 %v98, %v96
  %v139 = vpack.c.bf16 %v101, %v99
  %v140 = vpack.c.bf16 %v102, %v100
  %v141 = vpack.c.bf16 %v105, %v103
  %v142 = vpack.c.bf16 %v106, %v104
  %v143 = vpack.c.bf16 %v109, %v107
  %v144 = vpack.c.bf16 %v110, %v108
  %v145 = vpack.c.bf16 %v113, %v111
  %v146 = vpack.c.bf16 %v114, %v112
  %v147 = vld [vmem:[%s3] sm:$0x3]
  %v149 = vlaneseq
  %v150 = vshrl.u32 %v149, 7
  %v151 = vsub.s32 0, %v150
  %v152 = vrot.slane %v147, %v151
  %v153 = vlaneseq
  %v154 = vshrl.u32 %v153, 7
  %v155 = vsub.s32 1, %v154
  %v156 = vrot.slane %v147, %v155
  %159 = vmatprep.subr.bf16.mxu0 %v116
  %160 = vmatpush1.bf16.msra.mxu0 %v115
  %161 = vmatprep.subr.bf16.mxu0 %v118
  %162 = vmatpush1.bf16.msra.mxu0 %v117
  %163 = vmatprep.subr.bf16.mxu0 %v120
  %164 = vmatpush1.bf16.msra.mxu0 %v119
  %165 = vmatprep.subr.bf16.mxu0 %v122
  %166 = vmatpush1.bf16.msra.mxu0 %v121
  %167 = vmatprep.subr.bf16.mxu0 %v124
  %168 = vmatpush1.bf16.msra.mxu0 %v123
  %169 = vmatprep.subr.bf16.mxu0 %v126
  %170 = vmatpush1.bf16.msra.mxu0 %v125
  %171 = vmatprep.subr.bf16.mxu0 %v128
  %172 = vmatpush1.bf16.msra.mxu0 %v127
  %173 = vmatprep.subr.bf16.mxu0 %v130
  %174 = vmatpush1.bf16.msra.mxu0 %v129
  %175 = vmatprep.subr.bf16.mxu0 %v132
  %176 = vmatpush1.bf16.msra.mxu0 %v131
  %177 = vmatprep.subr.bf16.mxu0 %v134
  %178 = vmatpush1.bf16.msra.mxu0 %v133
  %179 = vmatprep.subr.bf16.mxu0 %v136
  %180 = vmatpush1.bf16.msra.mxu0 %v135
  %181 = vmatprep.subr.bf16.mxu0 %v138
  %182 = vmatpush1.bf16.msra.mxu0 %v137
  %183 = vmatprep.subr.bf16.mxu0 %v140
  %184 = vmatpush1.bf16.msra.mxu0 %v139
  %185 = vmatprep.subr.bf16.mxu0 %v142
  %186 = vmatpush1.bf16.msra.mxu0 %v141
  %187 = vmatprep.subr.bf16.mxu0 %v144
  %188 = vmatpush1.bf16.msra.mxu0 %v143
  %189 = vmatprep.subr.bf16.mxu0 %v146
  %190 = vmatpush1.bf16.msra.mxu0 %v145
  %191 = vmatprep.mubr.bf16.mxu0 %v42
  %192 = vmatmul.mubr.bf16.gmra.mrb[0].mxu0 %v41
  %v193 = vpop.f32.mrb[0].mxu0
  %v194 = vadd.f32 %v152, %v193
  %v195 = vpop.f32.mrb[0].mxu0
  %v196 = vadd.f32 %v156, %v195
  %v197 = vpop.f32.mrb[0].mxu0
  %v198 = vadd.f32 %v152, %v197
  %v199 = vpop.f32.mrb[0].mxu0
  %v200 = vadd.f32 %v156, %v199
  %201 = vmatprep.mubr.bf16.mxu0 %v44
  %202 = vmatmul.mubr.bf16.gmra.mrb[0].mxu0 %v43
  %v203 = vpop.f32.mrb[0].mxu0
  %v204 = vadd.f32 %v152, %v203
  %v205 = vpop.f32.mrb[0].mxu0
  %v206 = vadd.f32 %v156, %v205
  %v207 = vpop.f32.mrb[0].mxu0
  %v208 = vadd.f32 %v152, %v207
  %v209 = vpop.f32.mrb[0].mxu0
  %v210 = vadd.f32 %v156, %v209
  %211 = vmatprep.mubr.bf16.mxu0 %v46
  %212 = vmatmul.mubr.bf16.gmra.mrb[0].mxu0 %v45
  %v213 = vpop.f32.mrb[0].mxu0
  %v214 = vadd.f32 %v152, %v213
  %v215 = vpop.f32.mrb[0].mxu0
  %v216 = vadd.f32 %v156, %v215
  %v217 = vpop.f32.mrb[0].mxu0
  %v218 = vadd.f32 %v152, %v217
  %v219 = vpop.f32.mrb[0].mxu0
  %v220 = vadd.f32 %v156, %v219
  %221 = vmatprep.mubr.bf16.mxu0 %v48
  %222 = vmatmul.mubr.bf16.gmra.mrb[0].mxu0 %v47
  %v223 = vpop.f32.mrb[0].mxu0
  %v224 = vadd.f32 %v152, %v223
  %v225 = vpop.f32.mrb[0].mxu0
  %v226 = vadd.f32 %v156, %v225
  %v227 = vpop.f32.mrb[0].mxu0
  %v228 = vadd.f32 %v152, %v227
  %v229 = vpop.f32.mrb[0].mxu0
  %v230 = vadd.f32 %v156, %v229
  %231 = vmatprep.mubr.bf16.mxu0 %v50
  %232 = vmatmul.mubr.bf16.gmra.mrb[0].mxu0 %v49
  %v233 = vpop.f32.mrb[0].mxu0
  %v234 = vadd.f32 %v152, %v233
  %v235 = vpop.f32.mrb[0].mxu0
  %v236 = vadd.f32 %v156, %v235
  %v237 = vpop.f32.mrb[0].mxu0
  %v238 = vpop.f32.mrb[0].mxu0
  %239 = vdwg.mxu0
  %v240 = vld [vmem:[%s1] sm:$0xff]
  %v241 = vld [vmem:[%s1 + $0x8] sm:$0xff]
  %v242 = vld [vmem:[%s1 + $0x10] sm:$0xff]
  %v243 = vld [vmem:[%s1 + $0x18] sm:$0xff]
  %v244 = vld [vmem:[%s1 + $0x20] sm:$0xff]
  %v245 = vld [vmem:[%s1 + $0x28] sm:$0xff]
  %v246 = vld [vmem:[%s1 + $0x30] sm:$0xff]
  %v247 = vld [vmem:[%s1 + $0x38] sm:$0xff]
  %v248 = vld [vmem:[%s1 + $0x40] sm:$0xff]
  %v249 = vld [vmem:[%s1 + $0x48] sm:$0xff]
  %v250 = vld [vmem:[%s1 + $0x50] sm:$0xff]
  %v251 = vld [vmem:[%s1 + $0x58] sm:$0xff]
  %v252 = vld [vmem:[%s1 + $0x60] sm:$0xff]
  %v253 = vld [vmem:[%s1 + $0x68] sm:$0xff]
  %v254 = vld [vmem:[%s1 + $0x70] sm:$0xff]
  %v255 = vld [vmem:[%s1 + $0x78] sm:$0xff]
  %v256 = vld [vmem:[%s1 + $0x80] sm:$0x3]
  %v257 = vld [vmem:[%s1 + $0x88] sm:$0x3]
  %v258 = vadd.f32 %v194, %v240
  %v259 = vadd.f32 %v196, %v241
  %v260 = vadd.f32 %v198, %v242
  %v261 = vadd.f32 %v200, %v243
  %v262 = vadd.f32 %v204, %v244
  %v263 = vadd.f32 %v206, %v245
  %v264 = vadd.f32 %v208, %v246
  %v265 = vadd.f32 %v210, %v247
  %v266 = vadd.f32 %v214, %v248
  %v267 = vadd.f32 %v216, %v249
  %v268 = vadd.f32 %v218, %v250
  %v269 = vadd.f32 %v220, %v251
  %v270 = vadd.f32 %v224, %v252
  %v271 = vadd.f32 %v226, %v253
  %v272 = vadd.f32 %v228, %v254
  %v273 = vadd.f32 %v230, %v255
  %v274 = vadd.f32 %v234, %v256
  %v275 = vadd.f32 %v236, %v257
  %v276 = vld [vmem:[%s4] sm:$0x3]
  %v277 = vld [vmem:[%s5] sm:$0x3]
  %v278 = vadd.f32 %v258, %v259
  %279 = vadd.xlane.f32.xlu0 %v278
  %v280 = vpop.xlane.xlu0 %279
  %v281 = vadd.f32 %v260, %v261
  %282 = vadd.xlane.f32.xlu0 %v281
  %v283 = vpop.xlane.xlu0 %282
  %v284 = vadd.f32 %v262, %v263
  %285 = vadd.xlane.f32.xlu0 %v284
  %v286 = vpop.xlane.xlu0 %285
  %v287 = vadd.f32 %v264, %v265
  %288 = vadd.xlane.f32.xlu0 %v287
  %v289 = vpop.xlane.xlu0 %288
  %v290 = vadd.f32 %v266, %v267
  %291 = vadd.xlane.f32.xlu0 %v290
  %v292 = vpop.xlane.xlu0 %291
  %v293 = vadd.f32 %v268, %v269
  %294 = vadd.xlane.f32.xlu0 %v293
  %v295 = vpop.xlane.xlu0 %294
  %v296 = vadd.f32 %v270, %v271
  %297 = vadd.xlane.f32.xlu0 %v296
  %v298 = vpop.xlane.xlu0 %297
  %v299 = vadd.f32 %v272, %v273
  %300 = vadd.xlane.f32.xlu0 %v299
  %v301 = vpop.xlane.xlu0 %300
  %vm302 = vcmask 1041408
  %v303 = vsel %vm302, %v274, 0.0
  %v304 = vsel %vm302, %v275, 0.0
  %v305 = vadd.f32 %v303, %v304
  %306 = vadd.xlane.f32.xlu0 %v305
  %v307 = vpop.xlane.xlu0 %306
  %v308 = vrcp.pop 256.0
  %v309 = vmul.f32 %v280, %v308
  %v310 = vmul.f32 %v283, %v308
  %v311 = vmul.f32 %v286, %v308
  %v312 = vmul.f32 %v289, %v308
  %v313 = vmul.f32 %v292, %v308
  %v314 = vmul.f32 %v295, %v308
  %v315 = vmul.f32 %v298, %v308
  %v316 = vmul.f32 %v301, %v308
  %v317 = vmul.f32 %v307, %v308
  %v318 = vsub.f32 %v258, %v309
  %v319 = vsub.f32 %v259, %v309
  %v320 = vsub.f32 %v260, %v310
  %v321 = vsub.f32 %v261, %v310
  %v322 = vsub.f32 %v262, %v311
  %v323 = vsub.f32 %v263, %v311
  %v324 = vsub.f32 %v264, %v312
  %v325 = vsub.f32 %v265, %v312
  %v326 = vsub.f32 %v266, %v313
  %v327 = vsub.f32 %v267, %v313
  %v328 = vsub.f32 %v268, %v314
  %v329 = vsub.f32 %v269, %v314
  %v330 = vsub.f32 %v270, %v315
  %v331 = vsub.f32 %v271, %v315
  %v332 = vsub.f32 %v272, %v316
  %v333 = vsub.f32 %v273, %v316
  %v334 = vsub.f32 %v274, %v317
  %v335 = vsub.f32 %v275, %v317
  %v336 = vmul.f32 %v318, %v318
  %v337 = vmul.f32 %v319, %v319
  %v338 = vmul.f32 %v320, %v320
  %v339 = vmul.f32 %v321, %v321
  %v340 = vmul.f32 %v322, %v322
  %v341 = vmul.f32 %v323, %v323
  %v342 = vmul.f32 %v324, %v324
  %v343 = vmul.f32 %v325, %v325
  %v344 = vmul.f32 %v326, %v326
  %v345 = vmul.f32 %v327, %v327
  %v346 = vmul.f32 %v328, %v328
  %v347 = vmul.f32 %v329, %v329
  %v348 = vmul.f32 %v330, %v330
  %v349 = vmul.f32 %v331, %v331
  %v350 = vmul.f32 %v332, %v332
  %v351 = vmul.f32 %v333, %v333
  %v352 = vmul.f32 %v334, %v334
  %v353 = vmul.f32 %v335, %v335
  %v354 = vadd.f32 %v336, %v337
  %355 = vadd.xlane.f32.xlu0 %v354
  %v356 = vpop.xlane.xlu0 %355
  %v357 = vadd.f32 %v338, %v339
  %358 = vadd.xlane.f32.xlu0 %v357
  %v359 = vpop.xlane.xlu0 %358
  %v360 = vadd.f32 %v340, %v341
  %361 = vadd.xlane.f32.xlu0 %v360
  %v362 = vpop.xlane.xlu0 %361
  %v363 = vadd.f32 %v342, %v343
  %364 = vadd.xlane.f32.xlu0 %v363
  %v365 = vpop.xlane.xlu0 %364
  %v366 = vadd.f32 %v344, %v345
  %367 = vadd.xlane.f32.xlu0 %v366
  %v368 = vpop.xlane.xlu0 %367
  %v369 = vadd.f32 %v346, %v347
  %370 = vadd.xlane.f32.xlu0 %v369
  %v371 = vpop.xlane.xlu0 %370
  %v372 = vadd.f32 %v348, %v349
  %373 = vadd.xlane.f32.xlu0 %v372
  %v374 = vpop.xlane.xlu0 %373
  %v375 = vadd.f32 %v350, %v351
  %376 = vadd.xlane.f32.xlu0 %v375
  %v377 = vpop.xlane.xlu0 %376
  %v378 = vsel %vm302, %v352, 0.0
  %v379 = vsel %vm302, %v353, 0.0
  %v380 = vadd.f32 %v378, %v379
  %381 = vadd.xlane.f32.xlu0 %v380
  %v382 = vpop.xlane.xlu0 %381
  %v383 = vmul.f32 %v356, %v308
  %v384 = vmul.f32 %v359, %v308
  %v385 = vmul.f32 %v362, %v308
  %v386 = vmul.f32 %v365, %v308
  %v387 = vmul.f32 %v368, %v308
  %v388 = vmul.f32 %v371, %v308
  %v389 = vmul.f32 %v374, %v308
  %v390 = vmul.f32 %v377, %v308
  %v391 = vmul.f32 %v382, %v308
  %v392 = vadd.f32 %v383, 1e-05
  %v393 = vadd.f32 %v384, 1e-05
  %v394 = vadd.f32 %v385, 1e-05
  %v395 = vadd.f32 %v386, 1e-05
  %v396 = vadd.f32 %v387, 1e-05
  %v397 = vadd.f32 %v388, 1e-05
  %v398 = vadd.f32 %v389, 1e-05
  %v399 = vadd.f32 %v390, 1e-05
  %v400 = vadd.f32 %v391, 1e-05
  %v401 = vrsqrt.pop %v392
  %v402 = vrsqrt.pop %v393
  %v403 = vrsqrt.pop %v394
  %v404 = vrsqrt.pop %v395
  %v405 = vrsqrt.pop %v396
  %v406 = vrsqrt.pop %v397
  %v407 = vrsqrt.pop %v398
  %v408 = vrsqrt.pop %v399
  %v409 = vrsqrt.pop %v400
  %v410 = vmul.f32 %v318, %v401
  %v411 = vmul.f32 %v319, %v401
  %v412 = vmul.f32 %v320, %v402
  %v413 = vmul.f32 %v321, %v402
  %v414 = vmul.f32 %v322, %v403
  %v415 = vmul.f32 %v323, %v403
  %v416 = vmul.f32 %v324, %v404
  %v417 = vmul.f32 %v325, %v404
  %v418 = vmul.f32 %v326, %v405
  %v419 = vmul.f32 %v327, %v405
  %v420 = vmul.f32 %v328, %v406
  %v421 = vmul.f32 %v329, %v406
  %v422 = vmul.f32 %v330, %v407
  %v423 = vmul.f32 %v331, %v407
  %v424 = vmul.f32 %v332, %v408
  %v425 = vmul.f32 %v333, %v408
  %v426 = vmul.f32 %v334, %v409
  %v427 = vmul.f32 %v335, %v409
  %v429 = vlaneseq
  %v430 = vshrl.u32 %v429, 7
  %v431 = vsub.s32 0, %v430
  %v432 = vrot.slane %v276, %v431
  %v433 = vlaneseq
  %v434 = vshrl.u32 %v433, 7
  %v435 = vsub.s32 1, %v434
  %v436 = vrot.slane %v276, %v435
  %v439 = vmul.f32 %v410, %v432
  %v440 = vmul.f32 %v411, %v436
  %v441 = vmul.f32 %v412, %v432
  %v442 = vmul.f32 %v413, %v436
  %v443 = vmul.f32 %v414, %v432
  %v444 = vmul.f32 %v415, %v436
  %v445 = vmul.f32 %v416, %v432
  %v446 = vmul.f32 %v417, %v436
  %v447 = vmul.f32 %v418, %v432
  %v448 = vmul.f32 %v419, %v436
  %v449 = vmul.f32 %v420, %v432
  %v450 = vmul.f32 %v421, %v436
  %v451 = vmul.f32 %v422, %v432
  %v452 = vmul.f32 %v423, %v436
  %v453 = vmul.f32 %v424, %v432
  %v454 = vmul.f32 %v425, %v436
  %v455 = vmul.f32 %v426, %v432
  %v456 = vmul.f32 %v427, %v436
  %v458 = vlaneseq
  %v459 = vshrl.u32 %v458, 7
  %v460 = vsub.s32 0, %v459
  %v461 = vrot.slane %v277, %v460
  %v462 = vlaneseq
  %v463 = vshrl.u32 %v462, 7
  %v464 = vsub.s32 1, %v463
  %v465 = vrot.slane %v277, %v464
  %v468 = vadd.f32 %v439, %v461
  %v469 = vadd.f32 %v440, %v465
  %v470 = vadd.f32 %v441, %v461
  %v471 = vadd.f32 %v442, %v465
  %v472 = vadd.f32 %v443, %v461
  %v473 = vadd.f32 %v444, %v465
  %v474 = vadd.f32 %v445, %v461
  %v475 = vadd.f32 %v446, %v465
  %v476 = vadd.f32 %v447, %v461
  %v477 = vadd.f32 %v448, %v465
  %v478 = vadd.f32 %v449, %v461
  %v479 = vadd.f32 %v450, %v465
  %v480 = vadd.f32 %v451, %v461
  %v481 = vadd.f32 %v452, %v465
  %v482 = vadd.f32 %v453, %v461
  %v483 = vadd.f32 %v454, %v465
  %v484 = vadd.f32 %v455, %v461
  %v485 = vadd.f32 %v456, %v465
  %486 = vst [vmem:[%s6] sm:$0xff] %v468
  %487 = vst [vmem:[%s6 + $0x8] sm:$0xff] %v469
  %488 = vst [vmem:[%s6 + $0x10] sm:$0xff] %v470
  %489 = vst [vmem:[%s6 + $0x18] sm:$0xff] %v471
  %490 = vst [vmem:[%s6 + $0x20] sm:$0xff] %v472
  %491 = vst [vmem:[%s6 + $0x28] sm:$0xff] %v473
  %492 = vst [vmem:[%s6 + $0x30] sm:$0xff] %v474
  %493 = vst [vmem:[%s6 + $0x38] sm:$0xff] %v475
  %494 = vst [vmem:[%s6 + $0x40] sm:$0xff] %v476
  %495 = vst [vmem:[%s6 + $0x48] sm:$0xff] %v477
  %496 = vst [vmem:[%s6 + $0x50] sm:$0xff] %v478
  %497 = vst [vmem:[%s6 + $0x58] sm:$0xff] %v479
  %498 = vst [vmem:[%s6 + $0x60] sm:$0xff] %v480
  %499 = vst [vmem:[%s6 + $0x68] sm:$0xff] %v481
  %500 = vst [vmem:[%s6 + $0x70] sm:$0xff] %v482
  %501 = vst [vmem:[%s6 + $0x78] sm:$0xff] %v483
  %502 = vst [vmem:[%s6 + $0x80] sm:$0x3] %v484
  %503 = vst [vmem:[%s6 + $0x88] sm:$0x3] %v485
  // Predicated region
  $region26: #{forward.34} parent=0 // pred_check
    _
  $region27: #{forward.34} parent=0 // pred_check_branch
    %505 = sbr.rel (0) target = $region29
  $region28: #{forward.34} parent=0 // pred_region
    _
  $region29: #{forward.34} parent=0 // pred_fallthru
    _
  // Predicated region
  $region30: #{forward.34} parent=0 // pred_check
    _
  $region31: #{forward.34} parent=0 // pred_check_branch
    %507 = sbr.rel (0) target = $region33
  $region32: #{forward.34} parent=0 // pred_region
    _
  $region33: #{forward.34} parent=0 // pred_fallthru
    _

// kernel: forward.35
$region0: #{forward.35}
  #allocation0 [shape = 'u32[]', space=smem, size = 0x4, offset = 0x4, fixed_abs, tag = 'smem constant byte address 0x4 - core index']
  #allocation1 [shape = 'u32[144,128]{1,0:T(1,128)}', space=vmem, size = 0x12000, scoped, tag = 'internal scratch']
  %s0 = inlined_call_operand.vmem [shape: f32[66,256], index: 0, kind: input, shape index: {}]
  %s1 = inlined_call_operand.vmem [shape: f32[256,512], index: 1, kind: input, shape index: {}]
  %s2 = inlined_call_operand.vmem [shape: f32[1,512], index: 2, kind: input, shape index: {}]
  %s3 = inlined_call_operand.vmem [shape: f32[512,256], index: 3, kind: input, shape index: {}]
  %s4 = inlined_call_operand.hbm [shape: f32[1,256], index: 4, kind: input, shape index: {}]
  %s5 = inlined_call_operand.hbm [shape: f32[1,256], index: 5, kind: input, shape index: {}]
  %s6 = inlined_call_operand.hbm [shape: f32[1,256], index: 6, kind: input, shape index: {}]
  %s7 = inlined_call_operand.vmem [shape: f32[66,256], index: 7, kind: output, shape index: {}]
  %s8 = sld [smem:[#allocation0]]
  $region50: #{forward.35} parent=0
    _
  %s10 = ssub.s32 1, %s8
  %s11 = scalar_select 0, %s10, %s8
  $region1: #{forward.35} parent=0
    #allocation2 [shape = 'u8[1024]{0}', space=vmem, size = 0x400, scoped, tag = 'input window, operand 4, single buffered']
    #allocation3 [shape = 's32[1]{0}', space=sflag, size = 0x4, scoped, tag = 'scoped memory for forward.35']
    #allocation4 [shape = 'u8[1024]{0}', space=vmem, size = 0x400, scoped, tag = 'input window, operand 5, single buffered']
    #allocation5 [shape = 's32[1]{0}', space=sflag, size = 0x4, scoped, tag = 'scoped memory for forward.35']
    #allocation6 [shape = 'u8[1024]{0}', space=vmem, size = 0x400, scoped, tag = 'input window, operand 6, single buffered']
    %12 = vsyncpa [#allocation3], 0
    %13 = vsyncpa [#allocation5], 0
    // Predicated region
    $region2: #{forward.35} parent=1 // pred_check
      _
    $region3: #{forward.35} parent=1 // pred_check_branch
      %15 = sbr.rel (0) target = $region5
    $region4: #{forward.35} parent=1 // pred_region
      _
    $region5: #{forward.35} parent=1 // pred_fallthru
      _
    // Predicated region
    $region6: #{forward.35} parent=1 // pred_check
      _
    $region7: #{forward.35} parent=1 // pred_check_branch
      %17 = sbr.rel (0) target = $region9
    $region8: #{forward.35} parent=1 // pred_region
      _
    $region9: #{forward.35} parent=1 // pred_fallthru
      _
    // Predicated region
    $region10: #{forward.35} parent=1 // pred_check
      _
    $region11: #{forward.35} parent=1 // pred_check_branch
      %19 = sbr.rel (0) target = $region13
    $region12: #{forward.35} parent=1 // pred_region
      _
    $region13: #{forward.35} parent=1 // pred_fallthru
      _
    // Predicated region
    $region14: #{forward.35} parent=1 // pred_check
      _
    $region15: #{forward.35} parent=1 // pred_check_branch
      %21 = sbr.rel (0) target = $region17
    $region16: #{forward.35} parent=1 // pred_region
      _
    $region17: #{forward.35} parent=1 // pred_fallthru
      _
    // Predicated region
    $region18: #{forward.35} parent=1 // pred_check
      _
    $region19: #{forward.35} parent=1 // pred_check_branch
      %23 = sbr.rel (0) target = $region21
    $region20: #{forward.35} parent=1 // pred_region
      %s25 = ssub.s32 32, 32
      %26 = vsyncadd [#allocation3], %s25
      %s28 = sshll.u32 [#allocation2], 4
      %s29 = int_to_ptr.vmem [resolvable:$true] %s28
      %31 = dma.hbm_to_vmem [thread:$0]  %s4, 32, %s29, [#allocation3]
    $region21: #{forward.35} parent=1 // pred_fallthru
      _
    // Predicated region
    $region22: #{forward.35} parent=1 // pred_check
      _
    $region23: #{forward.35} parent=1 // pred_check_branch
      %33 = sbr.rel (0) target = $region25
    $region24: #{forward.35} parent=1 // pred_region
      %s35 = ssub.s32 32, 32
      %36 = vsyncadd [#allocation5], %s35
      %s38 = sshll.u32 [#allocation4], 4
      %s39 = int_to_ptr.vmem [resolvable:$true] %s38
      %41 = dma.hbm_to_vmem [thread:$0]  %s5, 32, %s39, [#allocation5]
    $region25: #{forward.35} parent=1 // pred_fallthru
      _
    // Predicated region
    $region26: #{forward.35} parent=1 // pred_check
      _
    $region27: #{forward.35} parent=1 // pred_check_branch
      %43 = sbr.rel (0) target = $region29
    $region28: #{forward.35} parent=1 // pred_region
      %s45 = ssub.s32 32, 32
      %46 = vsyncadd [#allocation5], %s45
      %s48 = sshll.u32 [#allocation6], 4
      %s49 = int_to_ptr.vmem [resolvable:$true] %s48
      %51 = dma.hbm_to_vmem [thread:$0]  %s6, 32, %s49, [#allocation5]
    $region29: #{forward.35} parent=1 // pred_fallthru
      _
    // Predicated region
    $region30: #{forward.35} parent=1 // pred_check
      _
    $region31: #{forward.35} parent=1 // pred_check_branch
      %53 = sbr.rel (0) target = $region33
    $region32: #{forward.35} parent=1 // pred_region
      %54 = dma.done [#allocation3], 32
    $region33: #{forward.35} parent=1 // pred_fallthru
      _
    // Predicated region
    $region34: #{forward.35} parent=1 // pred_check
      _
    $region35: #{forward.35} parent=1 // pred_check_branch
      %56 = sbr.rel (0) target = $region37
    $region36: #{forward.35} parent=1 // pred_region
      %57 = dma.done [#allocation5], 32
    $region37: #{forward.35} parent=1 // pred_fallthru
      _
    // Predicated region
    $region38: #{forward.35} parent=1 // pred_check
      _
    $region39: #{forward.35} parent=1 // pred_check_branch
      %59 = sbr.rel (0) target = $region41
    $region40: #{forward.35} parent=1 // pred_region
      %60 = dma.done [#allocation5], 32
    $region41: #{forward.35} parent=1 // pred_fallthru
      _
    %v61 = vld [vmem:[%s0] sm:$0xff]
    %v62 = vld [vmem:[%s0 + $0x8] sm:$0xff]
    %v63 = vld [vmem:[%s0 + $0x10] sm:$0xff]
    %v64 = vld [vmem:[%s0 + $0x18] sm:$0xff]
    %v65 = vld [vmem:[%s0 + $0x20] sm:$0xff]
    %v66 = vld [vmem:[%s0 + $0x28] sm:$0xff]
    %v67 = vld [vmem:[%s0 + $0x30] sm:$0xff]
    %v68 = vld [vmem:[%s0 + $0x38] sm:$0xff]
    %v69 = vld [vmem:[%s0 + $0x40] sm:$0xff]
    %v70 = vld [vmem:[%s0 + $0x48] sm:$0xff]
    %v71 = vld [vmem:[%s0 + $0x50] sm:$0xff]
    %v72 = vld [vmem:[%s0 + $0x58] sm:$0xff]
    %v73 = vld [vmem:[%s0 + $0x60] sm:$0xff]
    %v74 = vld [vmem:[%s0 + $0x68] sm:$0xff]
    %v75 = vld [vmem:[%s0 + $0x70] sm:$0xff]
    %v76 = vld [vmem:[%s0 + $0x78] sm:$0xff]
    %v77 = vld [vmem:[%s0 + $0x80] sm:$0x3]
    %v78 = vld [vmem:[%s0 + $0x88] sm:$0x3]
    %v79 = vpack.c.bf16 %v63, %v61
    %v80 = vpack.c.bf16 %v64, %v62
    %v81 = vpack.c.bf16 %v67, %v65
    %v82 = vpack.c.bf16 %v68, %v66
    %v83 = vpack.c.bf16 %v71, %v69
    %v84 = vpack.c.bf16 %v72, %v70
    %v85 = vpack.c.bf16 %v75, %v73
    %v86 = vpack.c.bf16 %v76, %v74
    %v87 = vpack.c.bf16 %v77, %v77
    %v88 = vpack.c.bf16 %v78, %v78
    %v89 = vld [vmem:[%s1] sm:$0xff]
    %v90 = vld [vmem:[%s1 + $0x8] sm:$0xff]
    %v91 = vld [vmem:[%s1 + $0x10] sm:$0xff]
    %v92 = vld [vmem:[%s1 + $0x18] sm:$0xff]
    %v93 = vld [vmem:[%s1 + $0x20] sm:$0xff]
    %v94 = vld [vmem:[%s1 + $0x28] sm:$0xff]
    %v95 = vld [vmem:[%s1 + $0x30] sm:$0xff]
    %v96 = vld [vmem:[%s1 + $0x38] sm:$0xff]
    %v97 = vld [vmem:[%s1 + $0x40] sm:$0xff]
    %v98 = vld [vmem:[%s1 + $0x48] sm:$0xff]
    %v99 = vld [vmem:[%s1 + $0x50] sm:$0xff]
    %v100 = vld [vmem:[%s1 + $0x58] sm:$0xff]
    %v101 = vld [vmem:[%s1 + $0x60] sm:$0xff]
    %v102 = vld [vmem:[%s1 + $0x68] sm:$0xff]
    %v103 = vld [vmem:[%s1 + $0x70] sm:$0xff]
    %v104 = vld [vmem:[%s1 + $0x78] sm:$0xff]
    %v105 = vld [vmem:[%s1 + $0x80] sm:$0xff]
    %v106 = vld [vmem:[%s1 + $0x88] sm:$0xff]
    %v107 = vld [vmem:[%s1 + $0x90] sm:$0xff]
    %v108 = vld [vmem:[%s1 + $0x98] sm:$0xff]
    %v109 = vld [vmem:[%s1 + $0xa0] sm:$0xff]
    %v110 = vld [vmem:[%s1 + $0xa8] sm:$0xff]
    %v111 = vld [vmem:[%s1 + $0xb0] sm:$0xff]
    %v112 = vld [vmem:[%s1 + $0xb8] sm:$0xff]
    %v113 = vld [vmem:[%s1 + $0xc0] sm:$0xff]
    %v114 = vld [vmem:[%s1 + $0xc8] sm:$0xff]
    %v115 = vld [vmem:[%s1 + $0xd0] sm:$0xff]
    %v116 = vld [vmem:[%s1 + $0xd8] sm:$0xff]
    %v117 = vld [vmem:[%s1 + $0xe0] sm:$0xff]
    %v118 = vld [vmem:[%s1 + $0xe8] sm:$0xff]
    %v119 = vld [vmem:[%s1 + $0xf0] sm:$0xff]
    %v120 = vld [vmem:[%s1 + $0xf8] sm:$0xff]
    %v121 = vld [vmem:[%s1 + $0x100] sm:$0xff]
    %v122 = vld [vmem:[%s1 + $0x108] sm:$0xff]
    %v123 = vld [vmem:[%s1 + $0x110] sm:$0xff]
    %v124 = vld [vmem:[%s1 + $0x118] sm:$0xff]
    %v125 = vld [vmem:[%s1 + $0x120] sm:$0xff]
    %v126 = vld [vmem:[%s1 + $0x128] sm:$0xff]
    %v127 = vld [vmem:[%s1 + $0x130] sm:$0xff]
    %v128 = vld [vmem:[%s1 + $0x138] sm:$0xff]
    %v129 = vld [vmem:[%s1 + $0x140] sm:$0xff]
    %v130 = vld [vmem:[%s1 + $0x148] sm:$0xff]
    %v131 = vld [vmem:[%s1 + $0x150] sm:$0xff]
    %v132 = vld [vmem:[%s1 + $0x158] sm:$0xff]
    %v133 = vld [vmem:[%s1 + $0x160] sm:$0xff]
    %v134 = vld [vmem:[%s1 + $0x168] sm:$0xff]
    %v135 = vld [vmem:[%s1 + $0x170] sm:$0xff]
    %v136 = vld [vmem:[%s1 + $0x178] sm:$0xff]
    %v137 = vld [vmem:[%s1 + $0x180] sm:$0xff]
    %v138 = vld [vmem:[%s1 + $0x188] sm:$0xff]
    %v139 = vld [vmem:[%s1 + $0x190] sm:$0xff]
    %v140 = vld [vmem:[%s1 + $0x198] sm:$0xff]
    %v141 = vld [vmem:[%s1 + $0x1a0] sm:$0xff]
    %v142 = vld [vmem:[%s1 + $0x1a8] sm:$0xff]
    %v143 = vld [vmem:[%s1 + $0x1b0] sm:$0xff]
    %v144 = vld [vmem:[%s1 + $0x1b8] sm:$0xff]
    %v145 = vld [vmem:[%s1 + $0x1c0] sm:$0xff]
    %v146 = vld [vmem:[%s1 + $0x1c8] sm:$0xff]
    %v147 = vld [vmem:[%s1 + $0x1d0] sm:$0xff]
    %v148 = vld [vmem:[%s1 + $0x1d8] sm:$0xff]
    %v149 = vld [vmem:[%s1 + $0x1e0] sm:$0xff]
    %v150 = vld [vmem:[%s1 + $0x1e8] sm:$0xff]
    %v151 = vld [vmem:[%s1 + $0x1f0] sm:$0xff]
    %v152 = vld [vmem:[%s1 + $0x1f8] sm:$0xff]
    %v153 = vld [vmem:[%s1 + $0x200] sm:$0xff]
    %v154 = vld [vmem:[%s1 + $0x208] sm:$0xff]
    %v155 = vld [vmem:[%s1 + $0x210] sm:$0xff]
    %v156 = vld [vmem:[%s1 + $0x218] sm:$0xff]
    %v157 = vld [vmem:[%s1 + $0x220] sm:$0xff]
    %v158 = vld [vmem:[%s1 + $0x228] sm:$0xff]
    %v159 = vld [vmem:[%s1 + $0x230] sm:$0xff]
    %v160 = vld [vmem:[%s1 + $0x238] sm:$0xff]
    %v161 = vld [vmem:[%s1 + $0x240] sm:$0xff]
    %v162 = vld [vmem:[%s1 + $0x248] sm:$0xff]
    %v163 = vld [vmem:[%s1 + $0x250] sm:$0xff]
    %v164 = vld [vmem:[%s1 + $0x258] sm:$0xff]
    %v165 = vld [vmem:[%s1 + $0x260] sm:$0xff]
    %v166 = vld [vmem:[%s1 + $0x268] sm:$0xff]
    %v167 = vld [vmem:[%s1 + $0x270] sm:$0xff]
    %v168 = vld [vmem:[%s1 + $0x278] sm:$0xff]
    %v169 = vld [vmem:[%s1 + $0x280] sm:$0xff]
    %v170 = vld [vmem:[%s1 + $0x288] sm:$0xff]
    %v171 = vld [vmem:[%s1 + $0x290] sm:$0xff]
    %v172 = vld [vmem:[%s1 + $0x298] sm:$0xff]
    %v173 = vld [vmem:[%s1 + $0x2a0] sm:$0xff]
    %v174 = vld [vmem:[%s1 + $0x2a8] sm:$0xff]
    %v175 = vld [vmem:[%s1 + $0x2b0] sm:$0xff]
    %v176 = vld [vmem:[%s1 + $0x2b8] sm:$0xff]
    %v177 = vld [vmem:[%s1 + $0x2c0] sm:$0xff]
    %v178 = vld [vmem:[%s1 + $0x2c8] sm:$0xff]
    %v179 = vld [vmem:[%s1 + $0x2d0] sm:$0xff]
    %v180 = vld [vmem:[%s1 + $0x2d8] sm:$0xff]
    %v181 = vld [vmem:[%s1 + $0x2e0] sm:$0xff]
    %v182 = vld [vmem:[%s1 + $0x2e8] sm:$0xff]
    %v183 = vld [vmem:[%s1 + $0x2f0] sm:$0xff]
    %v184 = vld [vmem:[%s1 + $0x2f8] sm:$0xff]
    %v185 = vld [vmem:[%s1 + $0x300] sm:$0xff]
    %v186 = vld [vmem:[%s1 + $0x308] sm:$0xff]
    %v187 = vld [vmem:[%s1 + $0x310] sm:$0xff]
    %v188 = vld [vmem:[%s1 + $0x318] sm:$0xff]
    %v189 = vld [vmem:[%s1 + $0x320] sm:$0xff]
    %v190 = vld [vmem:[%s1 + $0x328] sm:$0xff]
    %v191 = vld [vmem:[%s1 + $0x330] sm:$0xff]
    %v192 = vld [vmem:[%s1 + $0x338] sm:$0xff]
    %v193 = vld [vmem:[%s1 + $0x340] sm:$0xff]
    %v194 = vld [vmem:[%s1 + $0x348] sm:$0xff]
    %v195 = vld [vmem:[%s1 + $0x350] sm:$0xff]
    %v196 = vld [vmem:[%s1 + $0x358] sm:$0xff]
    %v197 = vld [vmem:[%s1 + $0x360] sm:$0xff]
    %v198 = vld [vmem:[%s1 + $0x368] sm:$0xff]
    %v199 = vld [vmem:[%s1 + $0x370] sm:$0xff]
    %v200 = vld [vmem:[%s1 + $0x378] sm:$0xff]
    %v201 = vld [vmem:[%s1 + $0x380] sm:$0xff]
    %v202 = vld [vmem:[%s1 + $0x388] sm:$0xff]
    %v203 = vld [vmem:[%s1 + $0x390] sm:$0xff]
    %v204 = vld [vmem:[%s1 + $0x398] sm:$0xff]
    %v205 = vld [vmem:[%s1 + $0x3a0] sm:$0xff]
    %v206 = vld [vmem:[%s1 + $0x3a8] sm:$0xff]
    %v207 = vld [vmem:[%s1 + $0x3b0] sm:$0xff]
    %v208 = vld [vmem:[%s1 + $0x3b8] sm:$0xff]
    %v209 = vld [vmem:[%s1 + $0x3c0] sm:$0xff]
    %v210 = vld [vmem:[%s1 + $0x3c8] sm:$0xff]
    %v211 = vld [vmem:[%s1 + $0x3d0] sm:$0xff]
    %v212 = vld [vmem:[%s1 + $0x3d8] sm:$0xff]
    %v213 = vld [vmem:[%s1 + $0x3e0] sm:$0xff]
    %v214 = vld [vmem:[%s1 + $0x3e8] sm:$0xff]
    %v215 = vld [vmem:[%s1 + $0x3f0] sm:$0xff]
    %v216 = vld [vmem:[%s1 + $0x3f8] sm:$0xff]
    %v217 = vpack.c.bf16 %v93, %v89
    %v218 = vpack.c.bf16 %v94, %v90
    %v219 = vpack.c.bf16 %v95, %v91
    %v220 = vpack.c.bf16 %v96, %v92
    %v221 = vpack.c.bf16 %v101, %v97
    %v222 = vpack.c.bf16 %v102, %v98
    %v223 = vpack.c.bf16 %v103, %v99
    %v224 = vpack.c.bf16 %v104, %v100
    %v225 = vpack.c.bf16 %v109, %v105
    %v226 = vpack.c.bf16 %v110, %v106
    %v227 = vpack.c.bf16 %v111, %v107
    %v228 = vpack.c.bf16 %v112, %v108
    %v229 = vpack.c.bf16 %v117, %v113
    %v230 = vpack.c.bf16 %v118, %v114
    %v231 = vpack.c.bf16 %v119, %v115
    %v232 = vpack.c.bf16 %v120, %v116
    %v233 = vpack.c.bf16 %v125, %v121
    %v234 = vpack.c.bf16 %v126, %v122
    %v235 = vpack.c.bf16 %v127, %v123
    %v236 = vpack.c.bf16 %v128, %v124
    %v237 = vpack.c.bf16 %v133, %v129
    %v238 = vpack.c.bf16 %v134, %v130
    %v239 = vpack.c.bf16 %v135, %v131
    %v240 = vpack.c.bf16 %v136, %v132
    %v241 = vpack.c.bf16 %v141, %v137
    %v242 = vpack.c.bf16 %v142, %v138
    %v243 = vpack.c.bf16 %v143, %v139
    %v244 = vpack.c.bf16 %v144, %v140
    %v245 = vpack.c.bf16 %v149, %v145
    %v246 = vpack.c.bf16 %v150, %v146
    %v247 = vpack.c.bf16 %v151, %v147
    %v248 = vpack.c.bf16 %v152, %v148
    %v249 = vpack.c.bf16 %v157, %v153
    %v250 = vpack.c.bf16 %v158, %v154
    %v251 = vpack.c.bf16 %v159, %v155
    %v252 = vpack.c.bf16 %v160, %v156
    %v253 = vpack.c.bf16 %v165, %v161
    %v254 = vpack.c.bf16 %v166, %v162
    %v255 = vpack.c.bf16 %v167, %v163
    %v256 = vpack.c.bf16 %v168, %v164
    %v257 = vpack.c.bf16 %v173, %v169
    %v258 = vpack.c.bf16 %v174, %v170
    %v259 = vpack.c.bf16 %v175, %v171
    %v260 = vpack.c.bf16 %v176, %v172
    %v261 = vpack.c.bf16 %v181, %v177
    %v262 = vpack.c.bf16 %v182, %v178
    %v263 = vpack.c.bf16 %v183, %v179
    %v264 = vpack.c.bf16 %v184, %v180
    %v265 = vpack.c.bf16 %v189, %v185
    %v266 = vpack.c.bf16 %v190, %v186
    %v267 = vpack.c.bf16 %v191, %v187
    %v268 = vpack.c.bf16 %v192, %v188
    %v269 = vpack.c.bf16 %v197, %v193
    %v270 = vpack.c.bf16 %v198, %v194
    %v271 = vpack.c.bf16 %v199, %v195
    %v272 = vpack.c.bf16 %v200, %v196
    %v273 = vpack.c.bf16 %v205, %v201
    %v274 = vpack.c.bf16 %v206, %v202
    %v275 = vpack.c.bf16 %v207, %v203
    %v276 = vpack.c.bf16 %v208, %v204
    %v277 = vpack.c.bf16 %v213, %v209
    %v278 = vpack.c.bf16 %v214, %v210
    %v279 = vpack.c.bf16 %v215, %v211
    %v280 = vpack.c.bf16 %v216, %v212
    %v281 = vld [vmem:[%s2] sm:$0xf]
    %v283 = vlaneseq
    %v284 = vshrl.u32 %v283, 7
    %v285 = vsub.s32 0, %v284
    %v286 = vrot.slane %v281, %v285
    %v287 = vlaneseq
    %v288 = vshrl.u32 %v287, 7
    %v289 = vsub.s32 1, %v288
    %v290 = vrot.slane %v281, %v289
    %v291 = vlaneseq
    %v292 = vshrl.u32 %v291, 7
    %v293 = vsub.s32 2, %v292
    %v294 = vrot.slane %v281, %v293
    %v295 = vlaneseq
    %v296 = vshrl.u32 %v295, 7
    %v297 = vsub.s32 3, %v296
    %v298 = vrot.slane %v281, %v297
    %303 = vmatprep.subr.bf16.mxu0 %v218
    %304 = vmatpush1.bf16.msra.mxu0 %v217
    %305 = vmatprep.subr.bf16.mxu0 %v222
    %306 = vmatpush1.bf16.msra.mxu0 %v221
    %307 = vmatprep.subr.bf16.mxu0 %v226
    %308 = vmatpush1.bf16.msra.mxu0 %v225
    %309 = vmatprep.subr.bf16.mxu0 %v230
    %310 = vmatpush1.bf16.msra.mxu0 %v229
    %311 = vmatprep.subr.bf16.mxu0 %v234
    %312 = vmatpush1.bf16.msra.mxu0 %v233
    %313 = vmatprep.subr.bf16.mxu0 %v238
    %314 = vmatpush1.bf16.msra.mxu0 %v237
    %315 = vmatprep.subr.bf16.mxu0 %v242
    %316 = vmatpush1.bf16.msra.mxu0 %v241
    %317 = vmatprep.subr.bf16.mxu0 %v246
    %318 = vmatpush1.bf16.msra.mxu0 %v245
    %319 = vmatprep.subr.bf16.mxu0 %v250
    %320 = vmatpush1.bf16.msra.mxu0 %v249
    %321 = vmatprep.subr.bf16.mxu0 %v254
    %322 = vmatpush1.bf16.msra.mxu0 %v253
    %323 = vmatprep.subr.bf16.mxu0 %v258
    %324 = vmatpush1.bf16.msra.mxu0 %v257
    %325 = vmatprep.subr.bf16.mxu0 %v262
    %326 = vmatpush1.bf16.msra.mxu0 %v261
    %327 = vmatprep.subr.bf16.mxu0 %v266
    %328 = vmatpush1.bf16.msra.mxu0 %v265
    %329 = vmatprep.subr.bf16.mxu0 %v270
    %330 = vmatpush1.bf16.msra.mxu0 %v269
    %331 = vmatprep.subr.bf16.mxu0 %v274
    %332 = vmatpush1.bf16.msra.mxu0 %v273
    %333 = vmatprep.subr.bf16.mxu0 %v278
    %334 = vmatpush1.bf16.msra.mxu0 %v277
    %335 = vmatprep.mubr.bf16.mxu0 %v80
    %336 = vmatmul.mubr.bf16.gmra.mrb[0].mxu0 %v79
    %v337 = vpop.f32.mrb[0].mxu0
    %v338 = vadd.f32 %v286, %v337
    %v339 = vpop.f32.mrb[0].mxu0
    %v340 = vadd.f32 %v290, %v339
    %v341 = vpop.f32.mrb[0].mxu0
    %v342 = vadd.f32 %v286, %v341
    %v343 = vpop.f32.mrb[0].mxu0
    %v344 = vadd.f32 %v290, %v343
    %345 = vmatprep.mubr.bf16.mxu0 %v82
    %346 = vmatmul.mubr.bf16.gmra.mrb[0].mxu0 %v81
    %v347 = vpop.f32.mrb[0].mxu0
    %v348 = vadd.f32 %v286, %v347
    %v349 = vpop.f32.mrb[0].mxu0
    %v350 = vadd.f32 %v290, %v349
    %v351 = vpop.f32.mrb[0].mxu0
    %v352 = vadd.f32 %v286, %v351
    %v353 = vpop.f32.mrb[0].mxu0
    %v354 = vadd.f32 %v290, %v353
    %355 = vmatprep.mubr.bf16.mxu0 %v84
    %356 = vmatmul.mubr.bf16.gmra.mrb[0].mxu0 %v83
    %v357 = vpop.f32.mrb[0].mxu0
    %v358 = vadd.f32 %v286, %v357
    %v359 = vpop.f32.mrb[0].mxu0
    %v360 = vadd.f32 %v290, %v359
    %v361 = vpop.f32.mrb[0].mxu0
    %v362 = vadd.f32 %v286, %v361
    %v363 = vpop.f32.mrb[0].mxu0
    %v364 = vadd.f32 %v290, %v363
    %365 = vmatprep.mubr.bf16.mxu0 %v86
    %366 = vmatmul.mubr.bf16.gmra.mrb[0].mxu0 %v85
    %v367 = vpop.f32.mrb[0].mxu0
    %v368 = vadd.f32 %v286, %v367
    %v369 = vpop.f32.mrb[0].mxu0
    %v370 = vadd.f32 %v290, %v369
    %v371 = vpop.f32.mrb[0].mxu0
    %v372 = vadd.f32 %v286, %v371
    %v373 = vpop.f32.mrb[0].mxu0
    %v374 = vadd.f32 %v290, %v373
    %375 = vmatprep.mubr.bf16.mxu0 %v88
    %376 = vmatmul.mubr.bf16.gmra.mrb[0].mxu0 %v87
    %v377 = vpop.f32.mrb[0].mxu0
    %v378 = vadd.f32 %v286, %v377
    %v379 = vpop.f32.mrb[0].mxu0
    %v380 = vadd.f32 %v290, %v379
    %v381 = vpop.f32.mrb[0].mxu0
    %v382 = vpop.f32.mrb[0].mxu0
    %383 = vdwg.mxu0
    %384 = vmatprep.subr.bf16.mxu0 %v220
    %385 = vmatpush1.bf16.msra.mxu0 %v219
    %386 = vmatprep.subr.bf16.mxu0 %v224
    %387 = vmatpush1.bf16.msra.mxu0 %v223
    %388 = vmatprep.subr.bf16.mxu0 %v228
    %389 = vmatpush1.bf16.msra.mxu0 %v227
    %390 = vmatprep.subr.bf16.mxu0 %v232
    %391 = vmatpush1.bf16.msra.mxu0 %v231
    %392 = vmatprep.subr.bf16.mxu0 %v236
    %393 = vmatpush1.bf16.msra.mxu0 %v235
    %394 = vmatprep.subr.bf16.mxu0 %v240
    %395 = vmatpush1.bf16.msra.mxu0 %v239
    %396 = vmatprep.subr.bf16.mxu0 %v244
    %397 = vmatpush1.bf16.msra.mxu0 %v243
    %398 = vmatprep.subr.bf16.mxu0 %v248
    %399 = vmatpush1.bf16.msra.mxu0 %v247
    %400 = vmatprep.subr.bf16.mxu0 %v252
    %401 = vmatpush1.bf16.msra.mxu0 %v251
    %402 = vmatprep.subr.bf16.mxu0 %v256
    %403 = vmatpush1.bf16.msra.mxu0 %v255
    %404 = vmatprep.subr.bf16.mxu0 %v260
    %405 = vmatpush1.bf16.msra.mxu0 %v259
    %406 = vmatprep.subr.bf16.mxu0 %v264
    %407 = vmatpush1.bf16.msra.mxu0 %v263
    %408 = vmatprep.subr.bf16.mxu0 %v268
    %409 = vmatpush1.bf16.msra.mxu0 %v267
    %410 = vmatprep.subr.bf16.mxu0 %v272
    %411 = vmatpush1.bf16.msra.mxu0 %v271
    %412 = vmatprep.subr.bf16.mxu0 %v276
    %413 = vmatpush1.bf16.msra.mxu0 %v275
    %414 = vmatprep.subr.bf16.mxu0 %v280
    %415 = vmatpush1.bf16.msra.mxu0 %v279
    %416 = vmatprep.mubr.bf16.mxu0 %v80
    %417 = vmatmul.mubr.bf16.gmra.mrb[0].mxu0 %v79
    %v418 = vpop.f32.mrb[0].mxu0
    %v419 = vadd.f32 %v294, %v418
    %v420 = vpop.f32.mrb[0].mxu0
    %v421 = vadd.f32 %v298, %v420
    %v422 = vpop.f32.mrb[0].mxu0
    %v423 = vadd.f32 %v294, %v422
    %v424 = vpop.f32.mrb[0].mxu0
    %v425 = vadd.f32 %v298, %v424
    %426 = vmatprep.mubr.bf16.mxu0 %v82
    %427 = vmatmul.mubr.bf16.gmra.mrb[0].mxu0 %v81
    %v428 = vpop.f32.mrb[0].mxu0
    %v429 = vadd.f32 %v294, %v428
    %v430 = vpop.f32.mrb[0].mxu0
    %v431 = vadd.f32 %v298, %v430
    %v432 = vpop.f32.mrb[0].mxu0
    %v433 = vadd.f32 %v294, %v432
    %v434 = vpop.f32.mrb[0].mxu0
    %v435 = vadd.f32 %v298, %v434
    %436 = vmatprep.mubr.bf16.mxu0 %v84
    %437 = vmatmul.mubr.bf16.gmra.mrb[0].mxu0 %v83
    %v438 = vpop.f32.mrb[0].mxu0
    %v439 = vadd.f32 %v294, %v438
    %v440 = vpop.f32.mrb[0].mxu0
    %v441 = vadd.f32 %v298, %v440
    %v442 = vpop.f32.mrb[0].mxu0
    %v443 = vadd.f32 %v294, %v442
    %v444 = vpop.f32.mrb[0].mxu0
    %v445 = vadd.f32 %v298, %v444
    %446 = vmatprep.mubr.bf16.mxu0 %v86
    %447 = vmatmul.mubr.bf16.gmra.mrb[0].mxu0 %v85
    %v448 = vpop.f32.mrb[0].mxu0
    %v449 = vadd.f32 %v294, %v448
    %v450 = vpop.f32.mrb[0].mxu0
    %v451 = vadd.f32 %v298, %v450
    %v452 = vpop.f32.mrb[0].mxu0
    %v453 = vadd.f32 %v294, %v452
    %v454 = vpop.f32.mrb[0].mxu0
    %v455 = vadd.f32 %v298, %v454
    %456 = vmatprep.mubr.bf16.mxu0 %v88
    %457 = vmatmul.mubr.bf16.gmra.mrb[0].mxu0 %v87
    %v458 = vpop.f32.mrb[0].mxu0
    %v459 = vadd.f32 %v294, %v458
    %v460 = vpop.f32.mrb[0].mxu0
    %v461 = vadd.f32 %v298, %v460
    %v462 = vpop.f32.mrb[0].mxu0
    %v463 = vpop.f32.mrb[0].mxu0
    %464 = vdwg.mxu0
    %v465 = vmax.f32 %v338, 0.0
    %v466 = vmax.f32 %v340, 0.0
    %v467 = vmax.f32 %v419, 0.0
    %v468 = vmax.f32 %v421, 0.0
    %v469 = vmax.f32 %v342, 0.0
    %v470 = vmax.f32 %v344, 0.0
    %v471 = vmax.f32 %v423, 0.0
    %v472 = vmax.f32 %v425, 0.0
    %v473 = vmax.f32 %v348, 0.0
    %v474 = vmax.f32 %v350, 0.0
    %v475 = vmax.f32 %v429, 0.0
    %v476 = vmax.f32 %v431, 0.0
    %v477 = vmax.f32 %v352, 0.0
    %v478 = vmax.f32 %v354, 0.0
    %v479 = vmax.f32 %v433, 0.0
    %v480 = vmax.f32 %v435, 0.0
    %v481 = vmax.f32 %v358, 0.0
    %v482 = vmax.f32 %v360, 0.0
    %v483 = vmax.f32 %v439, 0.0
    %v484 = vmax.f32 %v441, 0.0
    %v485 = vmax.f32 %v362, 0.0
    %v486 = vmax.f32 %v364, 0.0
    %v487 = vmax.f32 %v443, 0.0
    %v488 = vmax.f32 %v445, 0.0
    %v489 = vmax.f32 %v368, 0.0
    %v490 = vmax.f32 %v370, 0.0
    %v491 = vmax.f32 %v449, 0.0
    %v492 = vmax.f32 %v451, 0.0
    %v493 = vmax.f32 %v372, 0.0
    %v494 = vmax.f32 %v374, 0.0
    %v495 = vmax.f32 %v453, 0.0
    %v496 = vmax.f32 %v455, 0.0
    %v497 = vmax.f32 %v378, 0.0
    %v498 = vmax.f32 %v380, 0.0
    %v499 = vmax.f32 %v459, 0.0
    %v500 = vmax.f32 %v461, 0.0
    %v501 = vpack.c.bf16 %v469, %v465
    %v502 = vpack.c.bf16 %v470, %v466
    %v503 = vpack.c.bf16 %v471, %v467
    %v504 = vpack.c.bf16 %v472, %v468
    %v505 = vpack.c.bf16 %v477, %v473
    %v506 = vpack.c.bf16 %v478, %v474
    %v507 = vpack.c.bf16 %v479, %v475
    %v508 = vpack.c.bf16 %v480, %v476
    %v509 = vpack.c.bf16 %v485, %v481
    %v510 = vpack.c.bf16 %v486, %v482
    %v511 = vpack.c.bf16 %v487, %v483
    %v512 = vpack.c.bf16 %v488, %v484
    %v513 = vpack.c.bf16 %v493, %v489
    %v514 = vpack.c.bf16 %v494, %v490
    %v515 = vpack.c.bf16 %v495, %v491
    %v516 = vpack.c.bf16 %v496, %v492
    %v517 = vpack.c.bf16 %v497, %v497
    %v518 = vpack.c.bf16 %v498, %v498
    %v519 = vpack.c.bf16 %v499, %v499
    %v520 = vpack.c.bf16 %v500, %v500
    %v521 = vld [vmem:[%s3] sm:$0xff]
    %v522 = vld [vmem:[%s3 + $0x8] sm:$0xff]
    %v523 = vld [vmem:[%s3 + $0x10] sm:$0xff]
    %v524 = vld [vmem:[%s3 + $0x18] sm:$0xff]
    %v525 = vld [vmem:[%s3 + $0x20] sm:$0xff]
    %v526 = vld [vmem:[%s3 + $0x28] sm:$0xff]
    %v527 = vld [vmem:[%s3 + $0x30] sm:$0xff]
    %v528 = vld [vmem:[%s3 + $0x38] sm:$0xff]
    %v529 = vld [vmem:[%s3 + $0x40] sm:$0xff]
    %v530 = vld [vmem:[%s3 + $0x48] sm:$0xff]
    %v531 = vld [vmem:[%s3 + $0x50] sm:$0xff]
    %v532 = vld [vmem:[%s3 + $0x58] sm:$0xff]
    %v533 = vld [vmem:[%s3 + $0x60] sm:$0xff]
    %v534 = vld [vmem:[%s3 + $0x68] sm:$0xff]
    %v535 = vld [vmem:[%s3 + $0x70] sm:$0xff]
    %v536 = vld [vmem:[%s3 + $0x78] sm:$0xff]
    %v537 = vld [vmem:[%s3 + $0x80] sm:$0xff]
    %v538 = vld [vmem:[%s3 + $0x88] sm:$0xff]
    %v539 = vld [vmem:[%s3 + $0x90] sm:$0xff]
    %v540 = vld [vmem:[%s3 + $0x98] sm:$0xff]
    %v541 = vld [vmem:[%s3 + $0xa0] sm:$0xff]
    %v542 = vld [vmem:[%s3 + $0xa8] sm:$0xff]
    %v543 = vld [vmem:[%s3 + $0xb0] sm:$0xff]
    %v544 = vld [vmem:[%s3 + $0xb8] sm:$0xff]
    %v545 = vld [vmem:[%s3 + $0xc0] sm:$0xff]
    %v546 = vld [vmem:[%s3 + $0xc8] sm:$0xff]
    %v547 = vld [vmem:[%s3 + $0xd0] sm:$0xff]
    %v548 = vld [vmem:[%s3 + $0xd8] sm:$0xff]
    %v549 = vld [vmem:[%s3 + $0xe0] sm:$0xff]
    %v550 = vld [vmem:[%s3 + $0xe8] sm:$0xff]
    %v551 = vld [vmem:[%s3 + $0xf0] sm:$0xff]
    %v552 = vld [vmem:[%s3 + $0xf8] sm:$0xff]
    %v553 = vld [vmem:[%s3 + $0x100] sm:$0xff]
    %v554 = vld [vmem:[%s3 + $0x108] sm:$0xff]
    %v555 = vld [vmem:[%s3 + $0x110] sm:$0xff]
    %v556 = vld [vmem:[%s3 + $0x118] sm:$0xff]
    %v557 = vld [vmem:[%s3 + $0x120] sm:$0xff]
    %v558 = vld [vmem:[%s3 + $0x128] sm:$0xff]
    %v559 = vld [vmem:[%s3 + $0x130] sm:$0xff]
    %v560 = vld [vmem:[%s3 + $0x138] sm:$0xff]
    %v561 = vld [vmem:[%s3 + $0x140] sm:$0xff]
    %v562 = vld [vmem:[%s3 + $0x148] sm:$0xff]
    %v563 = vld [vmem:[%s3 + $0x150] sm:$0xff]
    %v564 = vld [vmem:[%s3 + $0x158] sm:$0xff]
    %v565 = vld [vmem:[%s3 + $0x160] sm:$0xff]
    %v566 = vld [vmem:[%s3 + $0x168] sm:$0xff]
    %v567 = vld [vmem:[%s3 + $0x170] sm:$0xff]
    %v568 = vld [vmem:[%s3 + $0x178] sm:$0xff]
    %v569 = vld [vmem:[%s3 + $0x180] sm:$0xff]
    %v570 = vld [vmem:[%s3 + $0x188] sm:$0xff]
    %v571 = vld [vmem:[%s3 + $0x190] sm:$0xff]
    %v572 = vld [vmem:[%s3 + $0x198] sm:$0xff]
    %v573 = vld [vmem:[%s3 + $0x1a0] sm:$0xff]
    %v574 = vld [vmem:[%s3 + $0x1a8] sm:$0xff]
    %v575 = vld [vmem:[%s3 + $0x1b0] sm:$0xff]
    %v576 = vld [vmem:[%s3 + $0x1b8] sm:$0xff]
    %v577 = vld [vmem:[%s3 + $0x1c0] sm:$0xff]
    %v578 = vld [vmem:[%s3 + $0x1c8] sm:$0xff]
    %v579 = vld [vmem:[%s3 + $0x1d0] sm:$0xff]
    %v580 = vld [vmem:[%s3 + $0x1d8] sm:$0xff]
    %v581 = vld [vmem:[%s3 + $0x1e0] sm:$0xff]
    %v582 = vld [vmem:[%s3 + $0x1e8] sm:$0xff]
    %v583 = vld [vmem:[%s3 + $0x1f0] sm:$0xff]
    %v584 = vld [vmem:[%s3 + $0x1f8] sm:$0xff]
    %v585 = vld [vmem:[%s3 + $0x200] sm:$0xff]
    %v586 = vld [vmem:[%s3 + $0x208] sm:$0xff]
    %v587 = vld [vmem:[%s3 + $0x210] sm:$0xff]
    %v588 = vld [vmem:[%s3 + $0x218] sm:$0xff]
    %v589 = vld [vmem:[%s3 + $0x220] sm:$0xff]
    %v590 = vld [vmem:[%s3 + $0x228] sm:$0xff]
    %v591 = vld [vmem:[%s3 + $0x230] sm:$0xff]
    %v592 = vld [vmem:[%s3 + $0x238] sm:$0xff]
    %v593 = vld [vmem:[%s3 + $0x240] sm:$0xff]
    %v594 = vld [vmem:[%s3 + $0x248] sm:$0xff]
    %v595 = vld [vmem:[%s3 + $0x250] sm:$0xff]
    %v596 = vld [vmem:[%s3 + $0x258] sm:$0xff]
    %v597 = vld [vmem:[%s3 + $0x260] sm:$0xff]
    %v598 = vld [vmem:[%s3 + $0x268] sm:$0xff]
    %v599 = vld [vmem:[%s3 + $0x270] sm:$0xff]
    %v600 = vld [vmem:[%s3 + $0x278] sm:$0xff]
    %v601 = vld [vmem:[%s3 + $0x280] sm:$0xff]
    %v602 = vld [vmem:[%s3 + $0x288] sm:$0xff]
    %v603 = vld [vmem:[%s3 + $0x290] sm:$0xff]
    %v604 = vld [vmem:[%s3 + $0x298] sm:$0xff]
    %v605 = vld [vmem:[%s3 + $0x2a0] sm:$0xff]
    %v606 = vld [vmem:[%s3 + $0x2a8] sm:$0xff]
    %v607 = vld [vmem:[%s3 + $0x2b0] sm:$0xff]
    %v608 = vld [vmem:[%s3 + $0x2b8] sm:$0xff]
    %v609 = vld [vmem:[%s3 + $0x2c0] sm:$0xff]
    %v610 = vld [vmem:[%s3 + $0x2c8] sm:$0xff]
    %v611 = vld [vmem:[%s3 + $0x2d0] sm:$0xff]
    %v612 = vld [vmem:[%s3 + $0x2d8] sm:$0xff]
    %v613 = vld [vmem:[%s3 + $0x2e0] sm:$0xff]
    %v614 = vld [vmem:[%s3 + $0x2e8] sm:$0xff]
    %v615 = vld [vmem:[%s3 + $0x2f0] sm:$0xff]
    %v616 = vld [vmem:[%s3 + $0x2f8] sm:$0xff]
    %v617 = vld [vmem:[%s3 + $0x300] sm:$0xff]
    %v618 = vld [vmem:[%s3 + $0x308] sm:$0xff]
    %v619 = vld [vmem:[%s3 + $0x310] sm:$0xff]
    %v620 = vld [vmem:[%s3 + $0x318] sm:$0xff]
    %v621 = vld [vmem:[%s3 + $0x320] sm:$0xff]
    %v622 = vld [vmem:[%s3 + $0x328] sm:$0xff]
    %v623 = vld [vmem:[%s3 + $0x330] sm:$0xff]
    %v624 = vld [vmem:[%s3 + $0x338] sm:$0xff]
    %v625 = vld [vmem:[%s3 + $0x340] sm:$0xff]
    %v626 = vld [vmem:[%s3 + $0x348] sm:$0xff]
    %v627 = vld [vmem:[%s3 + $0x350] sm:$0xff]
    %v628 = vld [vmem:[%s3 + $0x358] sm:$0xff]
    %v629 = vld [vmem:[%s3 + $0x360] sm:$0xff]
    %v630 = vld [vmem:[%s3 + $0x368] sm:$0xff]
    %v631 = vld [vmem:[%s3 + $0x370] sm:$0xff]
    %v632 = vld [vmem:[%s3 + $0x378] sm:$0xff]
    %v633 = vld [vmem:[%s3 + $0x380] sm:$0xff]
    %v634 = vld [vmem:[%s3 + $0x388] sm:$0xff]
    %v635 = vld [vmem:[%s3 + $0x390] sm:$0xff]
    %v636 = vld [vmem:[%s3 + $0x398] sm:$0xff]
    %v637 = vld [vmem:[%s3 + $0x3a0] sm:$0xff]
    %v638 = vld [vmem:[%s3 + $0x3a8] sm:$0xff]
    %v639 = vld [vmem:[%s3 + $0x3b0] sm:$0xff]
    %v640 = vld [vmem:[%s3 + $0x3b8] sm:$0xff]
    %v641 = vld [vmem:[%s3 + $0x3c0] sm:$0xff]
    %v642 = vld [vmem:[%s3 + $0x3c8] sm:$0xff]
    %v643 = vld [vmem:[%s3 + $0x3d0] sm:$0xff]
    %v644 = vld [vmem:[%s3 + $0x3d8] sm:$0xff]
    %v645 = vld [vmem:[%s3 + $0x3e0] sm:$0xff]
    %v646 = vld [vmem:[%s3 + $0x3e8] sm:$0xff]
    %v647 = vld [vmem:[%s3 + $0x3f0] sm:$0xff]
    %v648 = vld [vmem:[%s3 + $0x3f8] sm:$0xff]
    %v649 = vpack.c.bf16 %v523, %v521
    %v650 = vpack.c.bf16 %v524, %v522
    %v651 = vpack.c.bf16 %v527, %v525
    %v652 = vpack.c.bf16 %v528, %v526
    %v653 = vpack.c.bf16 %v531, %v529
    %v654 = vpack.c.bf16 %v532, %v530
    %v655 = vpack.c.bf16 %v535, %v533
    %v656 = vpack.c.bf16 %v536, %v534
    %v657 = vpack.c.bf16 %v539, %v537
    %v658 = vpack.c.bf16 %v540, %v538
    %v659 = vpack.c.bf16 %v543, %v541
    %v660 = vpack.c.bf16 %v544, %v542
    %v661 = vpack.c.bf16 %v547, %v545
    %v662 = vpack.c.bf16 %v548, %v546
    %v663 = vpack.c.bf16 %v551, %v549
    %v664 = vpack.c.bf16 %v552, %v550
    %v665 = vpack.c.bf16 %v555, %v553
    %v666 = vpack.c.bf16 %v556, %v554
    %v667 = vpack.c.bf16 %v559, %v557
    %v668 = vpack.c.bf16 %v560, %v558
    %v669 = vpack.c.bf16 %v563, %v561
    %v670 = vpack.c.bf16 %v564, %v562
    %v671 = vpack.c.bf16 %v567, %v565
    %v672 = vpack.c.bf16 %v568, %v566
    %v673 = vpack.c.bf16 %v571, %v569
    %v674 = vpack.c.bf16 %v572, %v570
    %v675 = vpack.c.bf16 %v575, %v573
    %v676 = vpack.c.bf16 %v576, %v574
    %v677 = vpack.c.bf16 %v579, %v577
    %v678 = vpack.c.bf16 %v580, %v578
    %v679 = vpack.c.bf16 %v583, %v581
    %v680 = vpack.c.bf16 %v584, %v582
    %v681 = vpack.c.bf16 %v587, %v585
    %v682 = vpack.c.bf16 %v588, %v586
    %v683 = vpack.c.bf16 %v591, %v589
    %v684 = vpack.c.bf16 %v592, %v590
    %v685 = vpack.c.bf16 %v595, %v593
    %v686 = vpack.c.bf16 %v596, %v594
    %v687 = vpack.c.bf16 %v599, %v597
    %v688 = vpack.c.bf16 %v600, %v598
    %v689 = vpack.c.bf16 %v603, %v601
    %v690 = vpack.c.bf16 %v604, %v602
    %v691 = vpack.c.bf16 %v607, %v605
    %v692 = vpack.c.bf16 %v608, %v606
    %v693 = vpack.c.bf16 %v611, %v609
    %v694 = vpack.c.bf16 %v612, %v610
    %v695 = vpack.c.bf16 %v615, %v613
    %v696 = vpack.c.bf16 %v616, %v614
    %v697 = vpack.c.bf16 %v619, %v617
    %v698 = vpack.c.bf16 %v620, %v618
    %v699 = vpack.c.bf16 %v623, %v621
    %v700 = vpack.c.bf16 %v624, %v622
    %v701 = vpack.c.bf16 %v627, %v625
    %v702 = vpack.c.bf16 %v628, %v626
    %v703 = vpack.c.bf16 %v631, %v629
    %v704 = vpack.c.bf16 %v632, %v630
    %v705 = vpack.c.bf16 %v635, %v633
    %v706 = vpack.c.bf16 %v636, %v634
    %v707 = vpack.c.bf16 %v639, %v637
    %v708 = vpack.c.bf16 %v640, %v638
    %v709 = vpack.c.bf16 %v643, %v641
    %v710 = vpack.c.bf16 %v644, %v642
    %v711 = vpack.c.bf16 %v647, %v645
    %v712 = vpack.c.bf16 %v648, %v646
    %v713 = vld [vmem:[#allocation2] sm:$0x3]
    %v715 = vlaneseq
    %v716 = vshrl.u32 %v715, 7
    %v717 = vsub.s32 0, %v716
    %v718 = vrot.slane %v713, %v717
    %v719 = vlaneseq
    %v720 = vshrl.u32 %v719, 7
    %v721 = vsub.s32 1, %v720
    %v722 = vrot.slane %v713, %v721
    %725 = vmatprep.subr.bf16.mxu0 %v650
    %726 = vmatpush1.bf16.msra.mxu0 %v649
    %727 = vmatprep.subr.bf16.mxu0 %v652
    %728 = vmatpush1.bf16.msra.mxu0 %v651
    %729 = vmatprep.subr.bf16.mxu0 %v654
    %730 = vmatpush1.bf16.msra.mxu0 %v653
    %731 = vmatprep.subr.bf16.mxu0 %v656
    %732 = vmatpush1.bf16.msra.mxu0 %v655
    %733 = vmatprep.subr.bf16.mxu0 %v658
    %734 = vmatpush1.bf16.msra.mxu0 %v657
    %735 = vmatprep.subr.bf16.mxu0 %v660
    %736 = vmatpush1.bf16.msra.mxu0 %v659
    %737 = vmatprep.subr.bf16.mxu0 %v662
    %738 = vmatpush1.bf16.msra.mxu0 %v661
    %739 = vmatprep.subr.bf16.mxu0 %v664
    %740 = vmatpush1.bf16.msra.mxu0 %v663
    %741 = vmatprep.subr.bf16.mxu0 %v666
    %742 = vmatpush1.bf16.msra.mxu0 %v665
    %743 = vmatprep.subr.bf16.mxu0 %v668
    %744 = vmatpush1.bf16.msra.mxu0 %v667
    %745 = vmatprep.subr.bf16.mxu0 %v670
    %746 = vmatpush1.bf16.msra.mxu0 %v669
    %747 = vmatprep.subr.bf16.mxu0 %v672
    %748 = vmatpush1.bf16.msra.mxu0 %v671
    %749 = vmatprep.subr.bf16.mxu0 %v674
    %750 = vmatpush1.bf16.msra.mxu0 %v673
    %751 = vmatprep.subr.bf16.mxu0 %v676
    %752 = vmatpush1.bf16.msra.mxu0 %v675
    %753 = vmatprep.subr.bf16.mxu0 %v678
    %754 = vmatpush1.bf16.msra.mxu0 %v677
    %755 = vmatprep.subr.bf16.mxu0 %v680
    %756 = vmatpush1.bf16.msra.mxu0 %v679
    %757 = vmatprep.mubr.bf16.mxu0 %v502
    %758 = vmatmul.mubr.bf16.gmra.mrb[0].mxu0 %v501
    %v759 = vpop.f32.mrb[0].mxu0
    %v760 = vadd.f32 %v718, %v759
    %v761 = vpop.f32.mrb[0].mxu0
    %v762 = vadd.f32 %v722, %v761
    %v763 = vpop.f32.mrb[0].mxu0
    %v764 = vadd.f32 %v718, %v763
    %v765 = vpop.f32.mrb[0].mxu0
    %v766 = vadd.f32 %v722, %v765
    %767 = vmatprep.mubr.bf16.mxu0 %v506
    %768 = vmatmul.mubr.bf16.gmra.mrb[0].mxu0 %v505
    %v769 = vpop.f32.mrb[0].mxu0
    %v770 = vadd.f32 %v718, %v769
    %v771 = vpop.f32.mrb[0].mxu0
    %v772 = vadd.f32 %v722, %v771
    %v773 = vpop.f32.mrb[0].mxu0
    %v774 = vadd.f32 %v718, %v773
    %v775 = vpop.f32.mrb[0].mxu0
    %v776 = vadd.f32 %v722, %v775
    %777 = vmatprep.mubr.bf16.mxu0 %v510
    %778 = vmatmul.mubr.bf16.gmra.mrb[0].mxu0 %v509
    %v779 = vpop.f32.mrb[0].mxu0
    %v780 = vadd.f32 %v718, %v779
    %v781 = vpop.f32.mrb[0].mxu0
    %v782 = vadd.f32 %v722, %v781
    %v783 = vpop.f32.mrb[0].mxu0
    %v784 = vadd.f32 %v718, %v783
    %v785 = vpop.f32.mrb[0].mxu0
    %v786 = vadd.f32 %v722, %v785
    %787 = vmatprep.mubr.bf16.mxu0 %v514
    %788 = vmatmul.mubr.bf16.gmra.mrb[0].mxu0 %v513
    %v789 = vpop.f32.mrb[0].mxu0
    %v790 = vadd.f32 %v718, %v789
    %v791 = vpop.f32.mrb[0].mxu0
    %v792 = vadd.f32 %v722, %v791
    %v793 = vpop.f32.mrb[0].mxu0
    %v794 = vadd.f32 %v718, %v793
    %v795 = vpop.f32.mrb[0].mxu0
    %v796 = vadd.f32 %v722, %v795
    %797 = vmatprep.mubr.bf16.mxu0 %v518
    %798 = vmatmul.mubr.bf16.gmra.mrb[0].mxu0 %v517
    %v799 = vpop.f32.mrb[0].mxu0
    %v800 = vadd.f32 %v718, %v799
    %v801 = vpop.f32.mrb[0].mxu0
    %v802 = vadd.f32 %v722, %v801
    %v803 = vpop.f32.mrb[0].mxu0
    %v804 = vpop.f32.mrb[0].mxu0
    %805 = vdwg.mxu0
    %806 = vmatprep.subr.bf16.mxu0 %v682
    %807 = vmatpush1.bf16.msra.mxu0 %v681
    %808 = vmatprep.subr.bf16.mxu0 %v684
    %809 = vmatpush1.bf16.msra.mxu0 %v683
    %810 = vmatprep.subr.bf16.mxu0 %v686
    %811 = vmatpush1.bf16.msra.mxu0 %v685
    %812 = vmatprep.subr.bf16.mxu0 %v688
    %813 = vmatpush1.bf16.msra.mxu0 %v687
    %814 = vmatprep.subr.bf16.mxu0 %v690
    %815 = vmatpush1.bf16.msra.mxu0 %v689
    %816 = vmatprep.subr.bf16.mxu0 %v692
    %817 = vmatpush1.bf16.msra.mxu0 %v691
    %818 = vmatprep.subr.bf16.mxu0 %v694
    %819 = vmatpush1.bf16.msra.mxu0 %v693
    %820 = vmatprep.subr.bf16.mxu0 %v696
    %821 = vmatpush1.bf16.msra.mxu0 %v695
    %822 = vmatprep.subr.bf16.mxu0 %v698
    %823 = vmatpush1.bf16.msra.mxu0 %v697
    %824 = vmatprep.subr.bf16.mxu0 %v700
    %825 = vmatpush1.bf16.msra.mxu0 %v699
    %826 = vmatprep.subr.bf16.mxu0 %v702
    %827 = vmatpush1.bf16.msra.mxu0 %v701
    %828 = vmatprep.subr.bf16.mxu0 %v704
    %829 = vmatpush1.bf16.msra.mxu0 %v703
    %830 = vmatprep.subr.bf16.mxu0 %v706
    %831 = vmatpush1.bf16.msra.mxu0 %v705
    %832 = vmatprep.subr.bf16.mxu0 %v708
    %833 = vmatpush1.bf16.msra.mxu0 %v707
    %834 = vmatprep.subr.bf16.mxu0 %v710
    %835 = vmatpush1.bf16.msra.mxu0 %v709
    %836 = vmatprep.subr.bf16.mxu0 %v712
    %837 = vmatpush1.bf16.msra.mxu0 %v711
    %838 = vmatprep.mubr.bf16.mxu0 %v504
    %839 = vmatmul.mubr.bf16.gmra.mrb[0].mxu0 %v503
    %v840 = vpop.f32.mrb[0].mxu0
    %v841 = vadd.f32 %v760, %v840
    %v842 = vpop.f32.mrb[0].mxu0
    %v843 = vadd.f32 %v762, %v842
    %v844 = vpop.f32.mrb[0].mxu0
    %v845 = vadd.f32 %v764, %v844
    %v846 = vpop.f32.mrb[0].mxu0
    %v847 = vadd.f32 %v766, %v846
    %848 = vmatprep.mubr.bf16.mxu0 %v508
    %849 = vmatmul.mubr.bf16.gmra.mrb[0].mxu0 %v507
    %v850 = vpop.f32.mrb[0].mxu0
    %v851 = vadd.f32 %v770, %v850
    %v852 = vpop.f32.mrb[0].mxu0
    %v853 = vadd.f32 %v772, %v852
    %v854 = vpop.f32.mrb[0].mxu0
    %v855 = vadd.f32 %v774, %v854
    %v856 = vpop.f32.mrb[0].mxu0
    %v857 = vadd.f32 %v776, %v856
    %858 = vmatprep.mubr.bf16.mxu0 %v512
    %859 = vmatmul.mubr.bf16.gmra.mrb[0].mxu0 %v511
    %v860 = vpop.f32.mrb[0].mxu0
    %v861 = vadd.f32 %v780, %v860
    %v862 = vpop.f32.mrb[0].mxu0
    %v863 = vadd.f32 %v782, %v862
    %v864 = vpop.f32.mrb[0].mxu0
    %v865 = vadd.f32 %v784, %v864
    %v866 = vpop.f32.mrb[0].mxu0
    %v867 = vadd.f32 %v786, %v866
    %868 = vmatprep.mubr.bf16.mxu0 %v516
    %869 = vmatmul.mubr.bf16.gmra.mrb[0].mxu0 %v515
    %v870 = vpop.f32.mrb[0].mxu0
    %v871 = vadd.f32 %v790, %v870
    %v872 = vpop.f32.mrb[0].mxu0
    %v873 = vadd.f32 %v792, %v872
    %v874 = vpop.f32.mrb[0].mxu0
    %v875 = vadd.f32 %v794, %v874
    %v876 = vpop.f32.mrb[0].mxu0
    %v877 = vadd.f32 %v796, %v876
    %878 = vmatprep.mubr.bf16.mxu0 %v520
    %879 = vmatmul.mubr.bf16.gmra.mrb[0].mxu0 %v519
    %v880 = vpop.f32.mrb[0].mxu0
    %v881 = vadd.f32 %v800, %v880
    %v882 = vpop.f32.mrb[0].mxu0
    %v883 = vadd.f32 %v802, %v882
    %v884 = vpop.f32.mrb[0].mxu0
    %v885 = vpop.f32.mrb[0].mxu0
    %886 = vdwg.mxu0
    %v887 = vadd.f32 %v841, %v61
    %v888 = vadd.f32 %v843, %v62
    %v889 = vadd.f32 %v845, %v63
    %v890 = vadd.f32 %v847, %v64
    %v891 = vadd.f32 %v851, %v65
    %v892 = vadd.f32 %v853, %v66
    %v893 = vadd.f32 %v855, %v67
    %v894 = vadd.f32 %v857, %v68
    %v895 = vadd.f32 %v861, %v69
    %v896 = vadd.f32 %v863, %v70
    %v897 = vadd.f32 %v865, %v71
    %v898 = vadd.f32 %v867, %v72
    %v899 = vadd.f32 %v871, %v73
    %v900 = vadd.f32 %v873, %v74
    %v901 = vadd.f32 %v875, %v75
    %v902 = vadd.f32 %v877, %v76
    %v903 = vadd.f32 %v881, %v77
    %v904 = vadd.f32 %v883, %v78
    %v905 = vld [vmem:[#allocation4] sm:$0x3]
    %v906 = vld [vmem:[#allocation6] sm:$0x3]
    %v907 = vadd.f32 %v887, %v888
    %908 = vadd.xlane.f32.xlu0 %v907
    %v909 = vpop.xlane.xlu0 %908
    %v910 = vadd.f32 %v889, %v890
    %911 = vadd.xlane.f32.xlu0 %v910
    %v912 = vpop.xlane.xlu0 %911
    %v913 = vadd.f32 %v891, %v892
    %914 = vadd.xlane.f32.xlu0 %v913
    %v915 = vpop.xlane.xlu0 %914
    %v916 = vadd.f32 %v893, %v894
    %917 = vadd.xlane.f32.xlu0 %v916
    %v918 = vpop.xlane.xlu0 %917
    %v919 = vadd.f32 %v895, %v896
    %920 = vadd.xlane.f32.xlu0 %v919
    %v921 = vpop.xlane.xlu0 %920
    %v922 = vadd.f32 %v897, %v898
    %923 = vadd.xlane.f32.xlu0 %v922
    %v924 = vpop.xlane.xlu0 %923
    %v925 = vadd.f32 %v899, %v900
    %926 = vadd.xlane.f32.xlu0 %v925
    %v927 = vpop.xlane.xlu0 %926
    %v928 = vadd.f32 %v901, %v902
    %929 = vadd.xlane.f32.xlu0 %v928
    %v930 = vpop.xlane.xlu0 %929
    %vm931 = vcmask 1041408
    %v932 = vsel %vm931, %v903, 0.0
    %v933 = vsel %vm931, %v904, 0.0
    %v934 = vadd.f32 %v932, %v933
    %935 = vadd.xlane.f32.xlu0 %v934
    %v936 = vpop.xlane.xlu0 %935
    %v937 = vrcp.pop 256.0
    %v938 = vmul.f32 %v909, %v937
    %v939 = vmul.f32 %v912, %v937
    %v940 = vmul.f32 %v915, %v937
    %v941 = vmul.f32 %v918, %v937
    %v942 = vmul.f32 %v921, %v937
    %v943 = vmul.f32 %v924, %v937
    %v944 = vmul.f32 %v927, %v937
    %v945 = vmul.f32 %v930, %v937
    %v946 = vmul.f32 %v936, %v937
    %v947 = vsub.f32 %v887, %v938
    %v948 = vsub.f32 %v888, %v938
    %v949 = vsub.f32 %v889, %v939
    %v950 = vsub.f32 %v890, %v939
    %v951 = vsub.f32 %v891, %v940
    %v952 = vsub.f32 %v892, %v940
    %v953 = vsub.f32 %v893, %v941
    %v954 = vsub.f32 %v894, %v941
    %v955 = vsub.f32 %v895, %v942
    %v956 = vsub.f32 %v896, %v942
    %v957 = vsub.f32 %v897, %v943
    %v958 = vsub.f32 %v898, %v943
    %v959 = vsub.f32 %v899, %v944
    %v960 = vsub.f32 %v900, %v944
    %v961 = vsub.f32 %v901, %v945
    %v962 = vsub.f32 %v902, %v945
    %v963 = vsub.f32 %v903, %v946
    %v964 = vsub.f32 %v904, %v946
    %v965 = vmul.f32 %v947, %v947
    %v966 = vmul.f32 %v948, %v948
    %v967 = vmul.f32 %v949, %v949
    %v968 = vmul.f32 %v950, %v950
    %v969 = vmul.f32 %v951, %v951
    %v970 = vmul.f32 %v952, %v952
    %v971 = vmul.f32 %v953, %v953
    %v972 = vmul.f32 %v954, %v954
    %v973 = vmul.f32 %v955, %v955
    %v974 = vmul.f32 %v956, %v956
    %v975 = vmul.f32 %v957, %v957
    %v976 = vmul.f32 %v958, %v958
    %v977 = vmul.f32 %v959, %v959
    %v978 = vmul.f32 %v960, %v960
    %v979 = vmul.f32 %v961, %v961
    %v980 = vmul.f32 %v962, %v962
    %v981 = vmul.f32 %v963, %v963
    %v982 = vmul.f32 %v964, %v964
    %v983 = vadd.f32 %v965, %v966
    %984 = vadd.xlane.f32.xlu0 %v983
    %v985 = vpop.xlane.xlu0 %984
    %v986 = vadd.f32 %v967, %v968
    %987 = vadd.xlane.f32.xlu0 %v986
    %v988 = vpop.xlane.xlu0 %987
    %v989 = vadd.f32 %v969, %v970
    %990 = vadd.xlane.f32.xlu0 %v989
    %v991 = vpop.xlane.xlu0 %990
    %v992 = vadd.f32 %v971, %v972
    %993 = vadd.xlane.f32.xlu0 %v992
    %v994 = vpop.xlane.xlu0 %993
    %v995 = vadd.f32 %v973, %v974
    %996 = vadd.xlane.f32.xlu0 %v995
    %v997 = vpop.xlane.xlu0 %996
    %v998 = vadd.f32 %v975, %v976
    %999 = vadd.xlane.f32.xlu0 %v998
    %v1000 = vpop.xlane.xlu0 %999
    %v1001 = vadd.f32 %v977, %v978
    %1002 = vadd.xlane.f32.xlu0 %v1001
    %v1003 = vpop.xlane.xlu0 %1002
    %v1004 = vadd.f32 %v979, %v980
    %1005 = vadd.xlane.f32.xlu0 %v1004
    %v1006 = vpop.xlane.xlu0 %1005
    %v1007 = vsel %vm931, %v981, 0.0
    %v1008 = vsel %vm931, %v982, 0.0
    %v1009 = vadd.f32 %v1007, %v1008
    %1010 = vadd.xlane.f32.xlu0 %v1009
    %v1011 = vpop.xlane.xlu0 %1010
    %v1012 = vmul.f32 %v985, %v937
    %v1013 = vmul.f32 %v988, %v937
    %v1014 = vmul.f32 %v991, %v937
    %v1015 = vmul.f32 %v994, %v937
    %v1016 = vmul.f32 %v997, %v937
    %v1017 = vmul.f32 %v1000, %v937
    %v1018 = vmul.f32 %v1003, %v937
    %v1019 = vmul.f32 %v1006, %v937
    %v1020 = vmul.f32 %v1011, %v937
    %v1021 = vadd.f32 %v1012, 1e-05
    %v1022 = vadd.f32 %v1013, 1e-05
    %v1023 = vadd.f32 %v1014, 1e-05
    %v1024 = vadd.f32 %v1015, 1e-05
    %v1025 = vadd.f32 %v1016, 1e-05
    %v1026 = vadd.f32 %v1017, 1e-05
    %v1027 = vadd.f32 %v1018, 1e-05
    %v1028 = vadd.f32 %v1019, 1e-05
    %v1029 = vadd.f32 %v1020, 1e-05
    %v1030 = vrsqrt.pop %v1021
    %v1031 = vrsqrt.pop %v1022
    %v1032 = vrsqrt.pop %v1023
    %v1033 = vrsqrt.pop %v1024
    %v1034 = vrsqrt.pop %v1025
    %v1035 = vrsqrt.pop %v1026
    %v1036 = vrsqrt.pop %v1027
    %v1037 = vrsqrt.pop %v1028
    %v1038 = vrsqrt.pop %v1029
    %v1039 = vmul.f32 %v947, %v1030
    %v1040 = vmul.f32 %v948, %v1030
    %v1041 = vmul.f32 %v949, %v1031
    %v1042 = vmul.f32 %v950, %v1031
    %v1043 = vmul.f32 %v951, %v1032
    %v1044 = vmul.f32 %v952, %v1032
    %v1045 = vmul.f32 %v953, %v1033
    %v1046 = vmul.f32 %v954, %v1033
    %v1047 = vmul.f32 %v955, %v1034
    %v1048 = vmul.f32 %v956, %v1034
    %v1049 = vmul.f32 %v957, %v1035
    %v1050 = vmul.f32 %v958, %v1035
    %v1051 = vmul.f32 %v959, %v1036
    %v1052 = vmul.f32 %v960, %v1036
    %v1053 = vmul.f32 %v961, %v1037
    %v1054 = vmul.f32 %v962, %v1037
    %v1055 = vmul.f32 %v963, %v1038
    %v1056 = vmul.f32 %v964, %v1038
    %v1058 = vlaneseq
    %v1059 = vshrl.u32 %v1058, 7
    %v1060 = vsub.s32 0, %v1059
    %v1061 = vrot.slane %v905, %v1060
    %v1062 = vlaneseq
    %v1063 = vshrl.u32 %v1062, 7
    %v1064 = vsub.s32 1, %v1063
    %v1065 = vrot.slane %v905, %v1064
    %v1068 = vmul.f32 %v1039, %v1061
    %v1069 = vmul.f32 %v1040, %v1065
    %v1070 = vmul.f32 %v1041, %v1061
    %v1071 = vmul.f32 %v1042, %v1065
    %v1072 = vmul.f32 %v1043, %v1061
    %v1073 = vmul.f32 %v1044, %v1065
    %v1074 = vmul.f32 %v1045, %v1061
    %v1075 = vmul.f32 %v1046, %v1065
    %v1076 = vmul.f32 %v1047, %v1061
    %v1077 = vmul.f32 %v1048, %v1065
    %v1078 = vmul.f32 %v1049, %v1061
    %v1079 = vmul.f32 %v1050, %v1065
    %v1080 = vmul.f32 %v1051, %v1061
    %v1081 = vmul.f32 %v1052, %v1065
    %v1082 = vmul.f32 %v1053, %v1061
    %v1083 = vmul.f32 %v1054, %v1065
    %v1084 = vmul.f32 %v1055, %v1061
    %v1085 = vmul.f32 %v1056, %v1065
    %v1087 = vlaneseq
    %v1088 = vshrl.u32 %v1087, 7
    %v1089 = vsub.s32 0, %v1088
    %v1090 = vrot.slane %v906, %v1089
    %v1091 = vlaneseq
    %v1092 = vshrl.u32 %v1091, 7
    %v1093 = vsub.s32 1, %v1092
    %v1094 = vrot.slane %v906, %v1093
    %v1097 = vadd.f32 %v1068, %v1090
    %v1098 = vadd.f32 %v1069, %v1094
    %v1099 = vadd.f32 %v1070, %v1090
    %v1100 = vadd.f32 %v1071, %v1094
    %v1101 = vadd.f32 %v1072, %v1090
    %v1102 = vadd.f32 %v1073, %v1094
    %v1103 = vadd.f32 %v1074, %v1090
    %v1104 = vadd.f32 %v1075, %v1094
    %v1105 = vadd.f32 %v1076, %v1090
    %v1106 = vadd.f32 %v1077, %v1094
    %v1107 = vadd.f32 %v1078, %v1090
    %v1108 = vadd.f32 %v1079, %v1094
    %v1109 = vadd.f32 %v1080, %v1090
    %v1110 = vadd.f32 %v1081, %v1094
    %v1111 = vadd.f32 %v1082, %v1090
    %v1112 = vadd.f32 %v1083, %v1094
    %v1113 = vadd.f32 %v1084, %v1090
    %v1114 = vadd.f32 %v1085, %v1094
    %1115 = vst [vmem:[%s7] sm:$0xff] %v1097
    %1116 = vst [vmem:[%s7 + $0x8] sm:$0xff] %v1098
    %1117 = vst [vmem:[%s7 + $0x10] sm:$0xff] %v1099
    %1118 = vst [vmem:[%s7 + $0x18] sm:$0xff] %v1100
    %1119 = vst [vmem:[%s7 + $0x20] sm:$0xff] %v1101
    %1120 = vst [vmem:[%s7 + $0x28] sm:$0xff] %v1102
    %1121 = vst [vmem:[%s7 + $0x30] sm:$0xff] %v1103
    %1122 = vst [vmem:[%s7 + $0x38] sm:$0xff] %v1104
    %1123 = vst [vmem:[%s7 + $0x40] sm:$0xff] %v1105
    %1124 = vst [vmem:[%s7 + $0x48] sm:$0xff] %v1106
    %1125 = vst [vmem:[%s7 + $0x50] sm:$0xff] %v1107
    %1126 = vst [vmem:[%s7 + $0x58] sm:$0xff] %v1108
    %1127 = vst [vmem:[%s7 + $0x60] sm:$0xff] %v1109
    %1128 = vst [vmem:[%s7 + $0x68] sm:$0xff] %v1110
    %1129 = vst [vmem:[%s7 + $0x70] sm:$0xff] %v1111
    %1130 = vst [vmem:[%s7 + $0x78] sm:$0xff] %v1112
    %1131 = vst [vmem:[%s7 + $0x80] sm:$0x3] %v1113
    %1132 = vst [vmem:[%s7 + $0x88] sm:$0x3] %v1114
    // Predicated region
    $region42: #{forward.35} parent=1 // pred_check
      _
    $region43: #{forward.35} parent=1 // pred_check_branch
      %1134 = sbr.rel (0) target = $region45
    $region44: #{forward.35} parent=1 // pred_region
      _
    $region45: #{forward.35} parent=1 // pred_fallthru
      _
    // Predicated region
    $region46: #{forward.35} parent=1 // pred_check
      _
    $region47: #{forward.35} parent=1 // pred_check_branch
      %1136 = sbr.rel (0) target = $region49
    $region48: #{forward.35} parent=1 // pred_region
      _
    $region49: #{forward.35} parent=1 // pred_fallthru
      _
    %1137 = vsyncpa [#allocation3], 1
    %1138 = vsyncpa [#allocation5], 1

// kernel: forward.36
$region0: #{forward.36}
  #allocation0 [shape = 'u32[]', space=smem, size = 0x4, offset = 0x4, fixed_abs, tag = 'smem constant byte address 0x4 - core index']
  #allocation1 [shape = 'u32[144,128]{1,0:T(1,128)}', space=vmem, size = 0x12000, scoped, tag = 'internal scratch']
  %s0 = inlined_call_operand.vmem [shape: f32[66,256], index: 0, kind: input, shape index: {}]
  %s1 = inlined_call_operand.vmem [shape: f32[256,768], index: 1, kind: input, shape index: {}]
  %s2 = inlined_call_operand.vmem [shape: f32[1,768], index: 2, kind: input, shape index: {}]
  %s3 = inlined_call_operand.vmem [shape: f32[66,768], index: 3, kind: output, shape index: {}]
  %s4 = sld [smem:[#allocation0]]
  $region22: #{forward.36} parent=0
    _
  %s6 = ssub.s32 1, %s4
  %s7 = scalar_select 0, %s6, %s4
  // Predicated region
  $region2: #{forward.36} parent=0 // pred_check
    _
  $region3: #{forward.36} parent=0 // pred_check_branch
    %9 = sbr.rel (0) target = $region5
  $region4: #{forward.36} parent=0 // pred_region
    _
  $region5: #{forward.36} parent=0 // pred_fallthru
    _
  // Predicated region
  $region6: #{forward.36} parent=0 // pred_check
    _
  $region7: #{forward.36} parent=0 // pred_check_branch
    %11 = sbr.rel (0) target = $region9
  $region8: #{forward.36} parent=0 // pred_region
    _
  $region9: #{forward.36} parent=0 // pred_fallthru
    _
  // Predicated region
  $region10: #{forward.36} parent=0 // pred_check
    _
  $region11: #{forward.36} parent=0 // pred_check_branch
    %13 = sbr.rel (0) target = $region13
  $region12: #{forward.36} parent=0 // pred_region
    _
  $region13: #{forward.36} parent=0 // pred_fallthru
    _
  %v14 = vld [vmem:[%s0] sm:$0xff]
  %v15 = vld [vmem:[%s0 + $0x8] sm:$0xff]
  %v16 = vld [vmem:[%s0 + $0x10] sm:$0xff]
  %v17 = vld [vmem:[%s0 + $0x18] sm:$0xff]
  %v18 = vld [vmem:[%s0 + $0x20] sm:$0xff]
  %v19 = vld [vmem:[%s0 + $0x28] sm:$0xff]
  %v20 = vld [vmem:[%s0 + $0x30] sm:$0xff]
  %v21 = vld [vmem:[%s0 + $0x38] sm:$0xff]
  %v22 = vld [vmem:[%s0 + $0x40] sm:$0xff]
  %v23 = vld [vmem:[%s0 + $0x48] sm:$0xff]
  %v24 = vld [vmem:[%s0 + $0x50] sm:$0xff]
  %v25 = vld [vmem:[%s0 + $0x58] sm:$0xff]
  %v26 = vld [vmem:[%s0 + $0x60] sm:$0xff]
  %v27 = vld [vmem:[%s0 + $0x68] sm:$0xff]
  %v28 = vld [vmem:[%s0 + $0x70] sm:$0xff]
  %v29 = vld [vmem:[%s0 + $0x78] sm:$0xff]
  %v30 = vld [vmem:[%s0 + $0x80] sm:$0x3]
  %v31 = vld [vmem:[%s0 + $0x88] sm:$0x3]
  %v32 = vpack.c.bf16 %v16, %v14
  %v33 = vpack.c.bf16 %v17, %v15
  %v34 = vpack.c.bf16 %v20, %v18
  %v35 = vpack.c.bf16 %v21, %v19
  %v36 = vpack.c.bf16 %v24, %v22
  %v37 = vpack.c.bf16 %v25, %v23
  %v38 = vpack.c.bf16 %v28, %v26
  %v39 = vpack.c.bf16 %v29, %v27
  %v40 = vpack.c.bf16 %v30, %v30
  %v41 = vpack.c.bf16 %v31, %v31
  %v42 = vld [vmem:[%s1] sm:$0xff]
  %v43 = vld [vmem:[%s1 + $0x8] sm:$0xff]
  %v44 = vld [vmem:[%s1 + $0x10] sm:$0xff]
  %v45 = vld [vmem:[%s1 + $0x18] sm:$0xff]
  %v46 = vld [vmem:[%s1 + $0x20] sm:$0xff]
  %v47 = vld [vmem:[%s1 + $0x28] sm:$0xff]
  %v48 = vld [vmem:[%s1 + $0x30] sm:$0xff]
  %v49 = vld [vmem:[%s1 + $0x38] sm:$0xff]
  %v50 = vld [vmem:[%s1 + $0x40] sm:$0xff]
  %v51 = vld [vmem:[%s1 + $0x48] sm:$0xff]
  %v52 = vld [vmem:[%s1 + $0x50] sm:$0xff]
  %v53 = vld [vmem:[%s1 + $0x58] sm:$0xff]
  %v54 = vld [vmem:[%s1 + $0x60] sm:$0xff]
  %v55 = vld [vmem:[%s1 + $0x68] sm:$0xff]
  %v56 = vld [vmem:[%s1 + $0x70] sm:$0xff]
  %v57 = vld [vmem:[%s1 + $0x78] sm:$0xff]
  %v58 = vld [vmem:[%s1 + $0x80] sm:$0xff]
  %v59 = vld [vmem:[%s1 + $0x88] sm:$0xff]
  %v60 = vld [vmem:[%s1 + $0x90] sm:$0xff]
  %v61 = vld [vmem:[%s1 + $0x98] sm:$0xff]
  %v62 = vld [vmem:[%s1 + $0xa0] sm:$0xff]
  %v63 = vld [vmem:[%s1 + $0xa8] sm:$0xff]
  %v64 = vld [vmem:[%s1 + $0xb0] sm:$0xff]
  %v65 = vld [vmem:[%s1 + $0xb8] sm:$0xff]
  %v66 = vld [vmem:[%s1 + $0xc0] sm:$0xff]
  %v67 = vld [vmem:[%s1 + $0xc8] sm:$0xff]
  %v68 = vld [vmem:[%s1 + $0xd0] sm:$0xff]
  %v69 = vld [vmem:[%s1 + $0xd8] sm:$0xff]
  %v70 = vld [vmem:[%s1 + $0xe0] sm:$0xff]
  %v71 = vld [vmem:[%s1 + $0xe8] sm:$0xff]
  %v72 = vld [vmem:[%s1 + $0xf0] sm:$0xff]
  %v73 = vld [vmem:[%s1 + $0xf8] sm:$0xff]
  %v74 = vld [vmem:[%s1 + $0x100] sm:$0xff]
  %v75 = vld [vmem:[%s1 + $0x108] sm:$0xff]
  %v76 = vld [vmem:[%s1 + $0x110] sm:$0xff]
  %v77 = vld [vmem:[%s1 + $0x118] sm:$0xff]
  %v78 = vld [vmem:[%s1 + $0x120] sm:$0xff]
  %v79 = vld [vmem:[%s1 + $0x128] sm:$0xff]
  %v80 = vld [vmem:[%s1 + $0x130] sm:$0xff]
  %v81 = vld [vmem:[%s1 + $0x138] sm:$0xff]
  %v82 = vld [vmem:[%s1 + $0x140] sm:$0xff]
  %v83 = vld [vmem:[%s1 + $0x148] sm:$0xff]
  %v84 = vld [vmem:[%s1 + $0x150] sm:$0xff]
  %v85 = vld [vmem:[%s1 + $0x158] sm:$0xff]
  %v86 = vld [vmem:[%s1 + $0x160] sm:$0xff]
  %v87 = vld [vmem:[%s1 + $0x168] sm:$0xff]
  %v88 = vld [vmem:[%s1 + $0x170] sm:$0xff]
  %v89 = vld [vmem:[%s1 + $0x178] sm:$0xff]
  %v90 = vld [vmem:[%s1 + $0x180] sm:$0xff]
  %v91 = vld [vmem:[%s1 + $0x188] sm:$0xff]
  %v92 = vld [vmem:[%s1 + $0x190] sm:$0xff]
  %v93 = vld [vmem:[%s1 + $0x198] sm:$0xff]
  %v94 = vld [vmem:[%s1 + $0x1a0] sm:$0xff]
  %v95 = vld [vmem:[%s1 + $0x1a8] sm:$0xff]
  %v96 = vld [vmem:[%s1 + $0x1b0] sm:$0xff]
  %v97 = vld [vmem:[%s1 + $0x1b8] sm:$0xff]
  %v98 = vld [vmem:[%s1 + $0x1c0] sm:$0xff]
  %v99 = vld [vmem:[%s1 + $0x1c8] sm:$0xff]
  %v100 = vld [vmem:[%s1 + $0x1d0] sm:$0xff]
  %v101 = vld [vmem:[%s1 + $0x1d8] sm:$0xff]
  %v102 = vld [vmem:[%s1 + $0x1e0] sm:$0xff]
  %v103 = vld [vmem:[%s1 + $0x1e8] sm:$0xff]
  %v104 = vld [vmem:[%s1 + $0x1f0] sm:$0xff]
  %v105 = vld [vmem:[%s1 + $0x1f8] sm:$0xff]
  %v106 = vld [vmem:[%s1 + $0x200] sm:$0xff]
  %v107 = vld [vmem:[%s1 + $0x208] sm:$0xff]
  %v108 = vld [vmem:[%s1 + $0x210] sm:$0xff]
  %v109 = vld [vmem:[%s1 + $0x218] sm:$0xff]
  %v110 = vld [vmem:[%s1 + $0x220] sm:$0xff]
  %v111 = vld [vmem:[%s1 + $0x228] sm:$0xff]
  %v112 = vld [vmem:[%s1 + $0x230] sm:$0xff]
  %v113 = vld [vmem:[%s1 + $0x238] sm:$0xff]
  %v114 = vld [vmem:[%s1 + $0x240] sm:$0xff]
  %v115 = vld [vmem:[%s1 + $0x248] sm:$0xff]
  %v116 = vld [vmem:[%s1 + $0x250] sm:$0xff]
  %v117 = vld [vmem:[%s1 + $0x258] sm:$0xff]
  %v118 = vld [vmem:[%s1 + $0x260] sm:$0xff]
  %v119 = vld [vmem:[%s1 + $0x268] sm:$0xff]
  %v120 = vld [vmem:[%s1 + $0x270] sm:$0xff]
  %v121 = vld [vmem:[%s1 + $0x278] sm:$0xff]
  %v122 = vld [vmem:[%s1 + $0x280] sm:$0xff]
  %v123 = vld [vmem:[%s1 + $0x288] sm:$0xff]
  %v124 = vld [vmem:[%s1 + $0x290] sm:$0xff]
  %v125 = vld [vmem:[%s1 + $0x298] sm:$0xff]
  %v126 = vld [vmem:[%s1 + $0x2a0] sm:$0xff]
  %v127 = vld [vmem:[%s1 + $0x2a8] sm:$0xff]
  %v128 = vld [vmem:[%s1 + $0x2b0] sm:$0xff]
  %v129 = vld [vmem:[%s1 + $0x2b8] sm:$0xff]
  %v130 = vld [vmem:[%s1 + $0x2c0] sm:$0xff]
  %v131 = vld [vmem:[%s1 + $0x2c8] sm:$0xff]
  %v132 = vld [vmem:[%s1 + $0x2d0] sm:$0xff]
  %v133 = vld [vmem:[%s1 + $0x2d8] sm:$0xff]
  %v134 = vld [vmem:[%s1 + $0x2e0] sm:$0xff]
  %v135 = vld [vmem:[%s1 + $0x2e8] sm:$0xff]
  %v136 = vld [vmem:[%s1 + $0x2f0] sm:$0xff]
  %v137 = vld [vmem:[%s1 + $0x2f8] sm:$0xff]
  %v138 = vld [vmem:[%s1 + $0x300] sm:$0xff]
  %v139 = vld [vmem:[%s1 + $0x308] sm:$0xff]
  %v140 = vld [vmem:[%s1 + $0x310] sm:$0xff]
  %v141 = vld [vmem:[%s1 + $0x318] sm:$0xff]
  %v142 = vld [vmem:[%s1 + $0x320] sm:$0xff]
  %v143 = vld [vmem:[%s1 + $0x328] sm:$0xff]
  %v144 = vld [vmem:[%s1 + $0x330] sm:$0xff]
  %v145 = vld [vmem:[%s1 + $0x338] sm:$0xff]
  %v146 = vld [vmem:[%s1 + $0x340] sm:$0xff]
  %v147 = vld [vmem:[%s1 + $0x348] sm:$0xff]
  %v148 = vld [vmem:[%s1 + $0x350] sm:$0xff]
  %v149 = vld [vmem:[%s1 + $0x358] sm:$0xff]
  %v150 = vld [vmem:[%s1 + $0x360] sm:$0xff]
  %v151 = vld [vmem:[%s1 + $0x368] sm:$0xff]
  %v152 = vld [vmem:[%s1 + $0x370] sm:$0xff]
  %v153 = vld [vmem:[%s1 + $0x378] sm:$0xff]
  %v154 = vld [vmem:[%s1 + $0x380] sm:$0xff]
  %v155 = vld [vmem:[%s1 + $0x388] sm:$0xff]
  %v156 = vld [vmem:[%s1 + $0x390] sm:$0xff]
  %v157 = vld [vmem:[%s1 + $0x398] sm:$0xff]
  %v158 = vld [vmem:[%s1 + $0x3a0] sm:$0xff]
  %v159 = vld [vmem:[%s1 + $0x3a8] sm:$0xff]
  %v160 = vld [vmem:[%s1 + $0x3b0] sm:$0xff]
  %v161 = vld [vmem:[%s1 + $0x3b8] sm:$0xff]
  %v162 = vld [vmem:[%s1 + $0x3c0] sm:$0xff]
  %v163 = vld [vmem:[%s1 + $0x3c8] sm:$0xff]
  %v164 = vld [vmem:[%s1 + $0x3d0] sm:$0xff]
  %v165 = vld [vmem:[%s1 + $0x3d8] sm:$0xff]
  %v166 = vld [vmem:[%s1 + $0x3e0] sm:$0xff]
  %v167 = vld [vmem:[%s1 + $0x3e8] sm:$0xff]
  %v168 = vld [vmem:[%s1 + $0x3f0] sm:$0xff]
  %v169 = vld [vmem:[%s1 + $0x3f8] sm:$0xff]
  %v170 = vld [vmem:[%s1 + $0x400] sm:$0xff]
  %v171 = vld [vmem:[%s1 + $0x408] sm:$0xff]
  %v172 = vld [vmem:[%s1 + $0x410] sm:$0xff]
  %v173 = vld [vmem:[%s1 + $0x418] sm:$0xff]
  %v174 = vld [vmem:[%s1 + $0x420] sm:$0xff]
  %v175 = vld [vmem:[%s1 + $0x428] sm:$0xff]
  %v176 = vld [vmem:[%s1 + $0x430] sm:$0xff]
  %v177 = vld [vmem:[%s1 + $0x438] sm:$0xff]
  %v178 = vld [vmem:[%s1 + $0x440] sm:$0xff]
  %v179 = vld [vmem:[%s1 + $0x448] sm:$0xff]
  %v180 = vld [vmem:[%s1 + $0x450] sm:$0xff]
  %v181 = vld [vmem:[%s1 + $0x458] sm:$0xff]
  %v182 = vld [vmem:[%s1 + $0x460] sm:$0xff]
  %v183 = vld [vmem:[%s1 + $0x468] sm:$0xff]
  %v184 = vld [vmem:[%s1 + $0x470] sm:$0xff]
  %v185 = vld [vmem:[%s1 + $0x478] sm:$0xff]
  %v186 = vld [vmem:[%s1 + $0x480] sm:$0xff]
  %v187 = vld [vmem:[%s1 + $0x488] sm:$0xff]
  %v188 = vld [vmem:[%s1 + $0x490] sm:$0xff]
  %v189 = vld [vmem:[%s1 + $0x498] sm:$0xff]
  %v190 = vld [vmem:[%s1 + $0x4a0] sm:$0xff]
  %v191 = vld [vmem:[%s1 + $0x4a8] sm:$0xff]
  %v192 = vld [vmem:[%s1 + $0x4b0] sm:$0xff]
  %v193 = vld [vmem:[%s1 + $0x4b8] sm:$0xff]
  %v194 = vld [vmem:[%s1 + $0x4c0] sm:$0xff]
  %v195 = vld [vmem:[%s1 + $0x4c8] sm:$0xff]
  %v196 = vld [vmem:[%s1 + $0x4d0] sm:$0xff]
  %v197 = vld [vmem:[%s1 + $0x4d8] sm:$0xff]
  %v198 = vld [vmem:[%s1 + $0x4e0] sm:$0xff]
  %v199 = vld [vmem:[%s1 + $0x4e8] sm:$0xff]
  %v200 = vld [vmem:[%s1 + $0x4f0] sm:$0xff]
  %v201 = vld [vmem:[%s1 + $0x4f8] sm:$0xff]
  %v202 = vld [vmem:[%s1 + $0x500] sm:$0xff]
  %v203 = vld [vmem:[%s1 + $0x508] sm:$0xff]
  %v204 = vld [vmem:[%s1 + $0x510] sm:$0xff]
  %v205 = vld [vmem:[%s1 + $0x518] sm:$0xff]
  %v206 = vld [vmem:[%s1 + $0x520] sm:$0xff]
  %v207 = vld [vmem:[%s1 + $0x528] sm:$0xff]
  %v208 = vld [vmem:[%s1 + $0x530] sm:$0xff]
  %v209 = vld [vmem:[%s1 + $0x538] sm:$0xff]
  %v210 = vld [vmem:[%s1 + $0x540] sm:$0xff]
  %v211 = vld [vmem:[%s1 + $0x548] sm:$0xff]
  %v212 = vld [vmem:[%s1 + $0x550] sm:$0xff]
  %v213 = vld [vmem:[%s1 + $0x558] sm:$0xff]
  %v214 = vld [vmem:[%s1 + $0x560] sm:$0xff]
  %v215 = vld [vmem:[%s1 + $0x568] sm:$0xff]
  %v216 = vld [vmem:[%s1 + $0x570] sm:$0xff]
  %v217 = vld [vmem:[%s1 + $0x578] sm:$0xff]
  %v218 = vld [vmem:[%s1 + $0x580] sm:$0xff]
  %v219 = vld [vmem:[%s1 + $0x588] sm:$0xff]
  %v220 = vld [vmem:[%s1 + $0x590] sm:$0xff]
  %v221 = vld [vmem:[%s1 + $0x598] sm:$0xff]
  %v222 = vld [vmem:[%s1 + $0x5a0] sm:$0xff]
  %v223 = vld [vmem:[%s1 + $0x5a8] sm:$0xff]
  %v224 = vld [vmem:[%s1 + $0x5b0] sm:$0xff]
  %v225 = vld [vmem:[%s1 + $0x5b8] sm:$0xff]
  %v226 = vld [vmem:[%s1 + $0x5c0] sm:$0xff]
  %v227 = vld [vmem:[%s1 + $0x5c8] sm:$0xff]
  %v228 = vld [vmem:[%s1 + $0x5d0] sm:$0xff]
  %v229 = vld [vmem:[%s1 + $0x5d8] sm:$0xff]
  %v230 = vld [vmem:[%s1 + $0x5e0] sm:$0xff]
  %v231 = vld [vmem:[%s1 + $0x5e8] sm:$0xff]
  %v232 = vld [vmem:[%s1 + $0x5f0] sm:$0xff]
  %v233 = vld [vmem:[%s1 + $0x5f8] sm:$0xff]
  %v234 = vpack.c.bf16 %v48, %v42
  %v235 = vpack.c.bf16 %v49, %v43
  %v236 = vpack.c.bf16 %v50, %v44
  %v237 = vpack.c.bf16 %v51, %v45
  %v238 = vpack.c.bf16 %v52, %v46
  %v239 = vpack.c.bf16 %v53, %v47
  %v240 = vpack.c.bf16 %v60, %v54
  %v241 = vpack.c.bf16 %v61, %v55
  %v242 = vpack.c.bf16 %v62, %v56
  %v243 = vpack.c.bf16 %v63, %v57
  %v244 = vpack.c.bf16 %v64, %v58
  %v245 = vpack.c.bf16 %v65, %v59
  %v246 = vpack.c.bf16 %v72, %v66
  %v247 = vpack.c.bf16 %v73, %v67
  %v248 = vpack.c.bf16 %v74, %v68
  %v249 = vpack.c.bf16 %v75, %v69
  %v250 = vpack.c.bf16 %v76, %v70
  %v251 = vpack.c.bf16 %v77, %v71
  %v252 = vpack.c.bf16 %v84, %v78
  %v253 = vpack.c.bf16 %v85, %v79
  %v254 = vpack.c.bf16 %v86, %v80
  %v255 = vpack.c.bf16 %v87, %v81
  %v256 = vpack.c.bf16 %v88, %v82
  %v257 = vpack.c.bf16 %v89, %v83
  %v258 = vpack.c.bf16 %v96, %v90
  %v259 = vpack.c.bf16 %v97, %v91
  %v260 = vpack.c.bf16 %v98, %v92
  %v261 = vpack.c.bf16 %v99, %v93
  %v262 = vpack.c.bf16 %v100, %v94
  %v263 = vpack.c.bf16 %v101, %v95
  %v264 = vpack.c.bf16 %v108, %v102
  %v265 = vpack.c.bf16 %v109, %v103
  %v266 = vpack.c.bf16 %v110, %v104
  %v267 = vpack.c.bf16 %v111, %v105
  %v268 = vpack.c.bf16 %v112, %v106
  %v269 = vpack.c.bf16 %v113, %v107
  %v270 = vpack.c.bf16 %v120, %v114
  %v271 = vpack.c.bf16 %v121, %v115
  %v272 = vpack.c.bf16 %v122, %v116
  %v273 = vpack.c.bf16 %v123, %v117
  %v274 = vpack.c.bf16 %v124, %v118
  %v275 = vpack.c.bf16 %v125, %v119
  %v276 = vpack.c.bf16 %v132, %v126
  %v277 = vpack.c.bf16 %v133, %v127
  %v278 = vpack.c.bf16 %v134, %v128
  %v279 = vpack.c.bf16 %v135, %v129
  %v280 = vpack.c.bf16 %v136, %v130
  %v281 = vpack.c.bf16 %v137, %v131
  %v282 = vpack.c.bf16 %v144, %v138
  %v283 = vpack.c.bf16 %v145, %v139
  %v284 = vpack.c.bf16 %v146, %v140
  %v285 = vpack.c.bf16 %v147, %v141
  %v286 = vpack.c.bf16 %v148, %v142
  %v287 = vpack.c.bf16 %v149, %v143
  %v288 = vpack.c.bf16 %v156, %v150
  %v289 = vpack.c.bf16 %v157, %v151
  %v290 = vpack.c.bf16 %v158, %v152
  %v291 = vpack.c.bf16 %v159, %v153
  %v292 = vpack.c.bf16 %v160, %v154
  %v293 = vpack.c.bf16 %v161, %v155
  %v294 = vpack.c.bf16 %v168, %v162
  %v295 = vpack.c.bf16 %v169, %v163
  %v296 = vpack.c.bf16 %v170, %v164
  %v297 = vpack.c.bf16 %v171, %v165
  %v298 = vpack.c.bf16 %v172, %v166
  %v299 = vpack.c.bf16 %v173, %v167
  %v300 = vpack.c.bf16 %v180, %v174
  %v301 = vpack.c.bf16 %v181, %v175
  %v302 = vpack.c.bf16 %v182, %v176
  %v303 = vpack.c.bf16 %v183, %v177
  %v304 = vpack.c.bf16 %v184, %v178
  %v305 = vpack.c.bf16 %v185, %v179
  %v306 = vpack.c.bf16 %v192, %v186
  %v307 = vpack.c.bf16 %v193, %v187
  %v308 = vpack.c.bf16 %v194, %v188
  %v309 = vpack.c.bf16 %v195, %v189
  %v310 = vpack.c.bf16 %v196, %v190
  %v311 = vpack.c.bf16 %v197, %v191
  %v312 = vpack.c.bf16 %v204, %v198
  %v313 = vpack.c.bf16 %v205, %v199
  %v314 = vpack.c.bf16 %v206, %v200
  %v315 = vpack.c.bf16 %v207, %v201
  %v316 = vpack.c.bf16 %v208, %v202
  %v317 = vpack.c.bf16 %v209, %v203
  %v318 = vpack.c.bf16 %v216, %v210
  %v319 = vpack.c.bf16 %v217, %v211
  %v320 = vpack.c.bf16 %v218, %v212
  %v321 = vpack.c.bf16 %v219, %v213
  %v322 = vpack.c.bf16 %v220, %v214
  %v323 = vpack.c.bf16 %v221, %v215
  %v324 = vpack.c.bf16 %v228, %v222
  %v325 = vpack.c.bf16 %v229, %v223
  %v326 = vpack.c.bf16 %v230, %v224
  %v327 = vpack.c.bf16 %v231, %v225
  %v328 = vpack.c.bf16 %v232, %v226
  %v329 = vpack.c.bf16 %v233, %v227
  %v330 = vld [vmem:[%s2] sm:$0x3f]
  %v332 = vlaneseq
  %v333 = vshrl.u32 %v332, 7
  %v334 = vsub.s32 0, %v333
  %v335 = vrot.slane %v330, %v334
  %v336 = vlaneseq
  %v337 = vshrl.u32 %v336, 7
  %v338 = vsub.s32 1, %v337
  %v339 = vrot.slane %v330, %v338
  %v340 = vlaneseq
  %v341 = vshrl.u32 %v340, 7
  %v342 = vsub.s32 2, %v341
  %v343 = vrot.slane %v330, %v342
  %v344 = vlaneseq
  %v345 = vshrl.u32 %v344, 7
  %v346 = vsub.s32 3, %v345
  %v347 = vrot.slane %v330, %v346
  %v348 = vlaneseq
  %v349 = vshrl.u32 %v348, 7
  %v350 = vsub.s32 4, %v349
  %v351 = vrot.slane %v330, %v350
  %v352 = vlaneseq
  %v353 = vshrl.u32 %v352, 7
  %v354 = vsub.s32 5, %v353
  %v355 = vrot.slane %v330, %v354
  %362 = vmatprep.subr.bf16.mxu0 %v235
  %363 = vmatpush1.bf16.msra.mxu0 %v234
  %364 = vmatprep.subr.bf16.mxu0 %v241
  %365 = vmatpush1.bf16.msra.mxu0 %v240
  %366 = vmatprep.subr.bf16.mxu0 %v247
  %367 = vmatpush1.bf16.msra.mxu0 %v246
  %368 = vmatprep.subr.bf16.mxu0 %v253
  %369 = vmatpush1.bf16.msra.mxu0 %v252
  %370 = vmatprep.subr.bf16.mxu0 %v259
  %371 = vmatpush1.bf16.msra.mxu0 %v258
  %372 = vmatprep.subr.bf16.mxu0 %v265
  %373 = vmatpush1.bf16.msra.mxu0 %v264
  %374 = vmatprep.subr.bf16.mxu0 %v271
  %375 = vmatpush1.bf16.msra.mxu0 %v270
  %376 = vmatprep.subr.bf16.mxu0 %v277
  %377 = vmatpush1.bf16.msra.mxu0 %v276
  %378 = vmatprep.subr.bf16.mxu0 %v283
  %379 = vmatpush1.bf16.msra.mxu0 %v282
  %380 = vmatprep.subr.bf16.mxu0 %v289
  %381 = vmatpush1.bf16.msra.mxu0 %v288
  %382 = vmatprep.subr.bf16.mxu0 %v295
  %383 = vmatpush1.bf16.msra.mxu0 %v294
  %384 = vmatprep.subr.bf16.mxu0 %v301
  %385 = vmatpush1.bf16.msra.mxu0 %v300
  %386 = vmatprep.subr.bf16.mxu0 %v307
  %387 = vmatpush1.bf16.msra.mxu0 %v306
  %388 = vmatprep.subr.bf16.mxu0 %v313
  %389 = vmatpush1.bf16.msra.mxu0 %v312
  %390 = vmatprep.subr.bf16.mxu0 %v319
  %391 = vmatpush1.bf16.msra.mxu0 %v318
  %392 = vmatprep.subr.bf16.mxu0 %v325
  %393 = vmatpush1.bf16.msra.mxu0 %v324
  %394 = vmatprep.mubr.bf16.mxu0 %v33
  %395 = vmatmul.mubr.bf16.gmra.mrb[0].mxu0 %v32
  %v396 = vpop.f32.mrb[0].mxu0
  %v397 = vadd.f32 %v335, %v396
  %v398 = vpop.f32.mrb[0].mxu0
  %v399 = vadd.f32 %v339, %v398
  %v400 = vpop.f32.mrb[0].mxu0
  %v401 = vadd.f32 %v335, %v400
  %v402 = vpop.f32.mrb[0].mxu0
  %v403 = vadd.f32 %v339, %v402
  %404 = vmatprep.mubr.bf16.mxu0 %v35
  %405 = vmatmul.mubr.bf16.gmra.mrb[0].mxu0 %v34
  %v406 = vpop.f32.mrb[0].mxu0
  %v407 = vadd.f32 %v335, %v406
  %v408 = vpop.f32.mrb[0].mxu0
  %v409 = vadd.f32 %v339, %v408
  %v410 = vpop.f32.mrb[0].mxu0
  %v411 = vadd.f32 %v335, %v410
  %v412 = vpop.f32.mrb[0].mxu0
  %v413 = vadd.f32 %v339, %v412
  %414 = vmatprep.mubr.bf16.mxu0 %v37
  %415 = vmatmul.mubr.bf16.gmra.mrb[0].mxu0 %v36
  %v416 = vpop.f32.mrb[0].mxu0
  %v417 = vadd.f32 %v335, %v416
  %v418 = vpop.f32.mrb[0].mxu0
  %v419 = vadd.f32 %v339, %v418
  %v420 = vpop.f32.mrb[0].mxu0
  %v421 = vadd.f32 %v335, %v420
  %v422 = vpop.f32.mrb[0].mxu0
  %v423 = vadd.f32 %v339, %v422
  %424 = vmatprep.mubr.bf16.mxu0 %v39
  %425 = vmatmul.mubr.bf16.gmra.mrb[0].mxu0 %v38
  %v426 = vpop.f32.mrb[0].mxu0
  %v427 = vadd.f32 %v335, %v426
  %v428 = vpop.f32.mrb[0].mxu0
  %v429 = vadd.f32 %v339, %v428
  %v430 = vpop.f32.mrb[0].mxu0
  %v431 = vadd.f32 %v335, %v430
  %v432 = vpop.f32.mrb[0].mxu0
  %v433 = vadd.f32 %v339, %v432
  %434 = vmatprep.mubr.bf16.mxu0 %v41
  %435 = vmatmul.mubr.bf16.gmra.mrb[0].mxu0 %v40
  %v436 = vpop.f32.mrb[0].mxu0
  %v437 = vadd.f32 %v335, %v436
  %v438 = vpop.f32.mrb[0].mxu0
  %v439 = vadd.f32 %v339, %v438
  %v440 = vpop.f32.mrb[0].mxu0
  %v441 = vpop.f32.mrb[0].mxu0
  %442 = vdwg.mxu0
  %443 = vmatprep.subr.bf16.mxu0 %v237
  %444 = vmatpush1.bf16.msra.mxu0 %v236
  %445 = vmatprep.subr.bf16.mxu0 %v243
  %446 = vmatpush1.bf16.msra.mxu0 %v242
  %447 = vmatprep.subr.bf16.mxu0 %v249
  %448 = vmatpush1.bf16.msra.mxu0 %v248
  %449 = vmatprep.subr.bf16.mxu0 %v255
  %450 = vmatpush1.bf16.msra.mxu0 %v254
  %451 = vmatprep.subr.bf16.mxu0 %v261
  %452 = vmatpush1.bf16.msra.mxu0 %v260
  %453 = vmatprep.subr.bf16.mxu0 %v267
  %454 = vmatpush1.bf16.msra.mxu0 %v266
  %455 = vmatprep.subr.bf16.mxu0 %v273
  %456 = vmatpush1.bf16.msra.mxu0 %v272
  %457 = vmatprep.subr.bf16.mxu0 %v279
  %458 = vmatpush1.bf16.msra.mxu0 %v278
  %459 = vmatprep.subr.bf16.mxu0 %v285
  %460 = vmatpush1.bf16.msra.mxu0 %v284
  %461 = vmatprep.subr.bf16.mxu0 %v291
  %462 = vmatpush1.bf16.msra.mxu0 %v290
  %463 = vmatprep.subr.bf16.mxu0 %v297
  %464 = vmatpush1.bf16.msra.mxu0 %v296
  %465 = vmatprep.subr.bf16.mxu0 %v303
  %466 = vmatpush1.bf16.msra.mxu0 %v302
  %467 = vmatprep.subr.bf16.mxu0 %v309
  %468 = vmatpush1.bf16.msra.mxu0 %v308
  %469 = vmatprep.subr.bf16.mxu0 %v315
  %470 = vmatpush1.bf16.msra.mxu0 %v314
  %471 = vmatprep.subr.bf16.mxu0 %v321
  %472 = vmatpush1.bf16.msra.mxu0 %v320
  %473 = vmatprep.subr.bf16.mxu0 %v327
  %474 = vmatpush1.bf16.msra.mxu0 %v326
  %475 = vmatprep.mubr.bf16.mxu0 %v33
  %476 = vmatmul.mubr.bf16.gmra.mrb[0].mxu0 %v32
  %v477 = vpop.f32.mrb[0].mxu0
  %v478 = vadd.f32 %v343, %v477
  %v479 = vpop.f32.mrb[0].mxu0
  %v480 = vadd.f32 %v347, %v479
  %v481 = vpop.f32.mrb[0].mxu0
  %v482 = vadd.f32 %v343, %v481
  %v483 = vpop.f32.mrb[0].mxu0
  %v484 = vadd.f32 %v347, %v483
  %485 = vmatprep.mubr.bf16.mxu0 %v35
  %486 = vmatmul.mubr.bf16.gmra.mrb[0].mxu0 %v34
  %v487 = vpop.f32.mrb[0].mxu0
  %v488 = vadd.f32 %v343, %v487
  %v489 = vpop.f32.mrb[0].mxu0
  %v490 = vadd.f32 %v347, %v489
  %v491 = vpop.f32.mrb[0].mxu0
  %v492 = vadd.f32 %v343, %v491
  %v493 = vpop.f32.mrb[0].mxu0
  %v494 = vadd.f32 %v347, %v493
  %495 = vmatprep.mubr.bf16.mxu0 %v37
  %496 = vmatmul.mubr.bf16.gmra.mrb[0].mxu0 %v36
  %v497 = vpop.f32.mrb[0].mxu0
  %v498 = vadd.f32 %v343, %v497
  %v499 = vpop.f32.mrb[0].mxu0
  %v500 = vadd.f32 %v347, %v499
  %v501 = vpop.f32.mrb[0].mxu0
  %v502 = vadd.f32 %v343, %v501
  %v503 = vpop.f32.mrb[0].mxu0
  %v504 = vadd.f32 %v347, %v503
  %505 = vmatprep.mubr.bf16.mxu0 %v39
  %506 = vmatmul.mubr.bf16.gmra.mrb[0].mxu0 %v38
  %v507 = vpop.f32.mrb[0].mxu0
  %v508 = vadd.f32 %v343, %v507
  %v509 = vpop.f32.mrb[0].mxu0
  %v510 = vadd.f32 %v347, %v509
  %v511 = vpop.f32.mrb[0].mxu0
  %v512 = vadd.f32 %v343, %v511
  %v513 = vpop.f32.mrb[0].mxu0
  %v514 = vadd.f32 %v347, %v513
  %515 = vmatprep.mubr.bf16.mxu0 %v41
  %516 = vmatmul.mubr.bf16.gmra.mrb[0].mxu0 %v40
  %v517 = vpop.f32.mrb[0].mxu0
  %v518 = vadd.f32 %v343, %v517
  %v519 = vpop.f32.mrb[0].mxu0
  %v520 = vadd.f32 %v347, %v519
  %v521 = vpop.f32.mrb[0].mxu0
  %v522 = vpop.f32.mrb[0].mxu0
  %523 = vdwg.mxu0
  %524 = vmatprep.subr.bf16.mxu0 %v239
  %525 = vmatpush1.bf16.msra.mxu0 %v238
  %526 = vmatprep.subr.bf16.mxu0 %v245
  %527 = vmatpush1.bf16.msra.mxu0 %v244
  %528 = vmatprep.subr.bf16.mxu0 %v251
  %529 = vmatpush1.bf16.msra.mxu0 %v250
  %530 = vmatprep.subr.bf16.mxu0 %v257
  %531 = vmatpush1.bf16.msra.mxu0 %v256
  %532 = vmatprep.subr.bf16.mxu0 %v263
  %533 = vmatpush1.bf16.msra.mxu0 %v262
  %534 = vmatprep.subr.bf16.mxu0 %v269
  %535 = vmatpush1.bf16.msra.mxu0 %v268
  %536 = vmatprep.subr.bf16.mxu0 %v275
  %537 = vmatpush1.bf16.msra.mxu0 %v274
  %538 = vmatprep.subr.bf16.mxu0 %v281
  %539 = vmatpush1.bf16.msra.mxu0 %v280
  %540 = vmatprep.subr.bf16.mxu0 %v287
  %541 = vmatpush1.bf16.msra.mxu0 %v286
  %542 = vmatprep.subr.bf16.mxu0 %v293
  %543 = vmatpush1.bf16.msra.mxu0 %v292
  %544 = vmatprep.subr.bf16.mxu0 %v299
  %545 = vmatpush1.bf16.msra.mxu0 %v298
  %546 = vmatprep.subr.bf16.mxu0 %v305
  %547 = vmatpush1.bf16.msra.mxu0 %v304
  %548 = vmatprep.subr.bf16.mxu0 %v311
  %549 = vmatpush1.bf16.msra.mxu0 %v310
  %550 = vmatprep.subr.bf16.mxu0 %v317
  %551 = vmatpush1.bf16.msra.mxu0 %v316
  %552 = vmatprep.subr.bf16.mxu0 %v323
  %553 = vmatpush1.bf16.msra.mxu0 %v322
  %554 = vmatprep.subr.bf16.mxu0 %v329
  %555 = vmatpush1.bf16.msra.mxu0 %v328
  %556 = vmatprep.mubr.bf16.mxu0 %v33
  %557 = vmatmul.mubr.bf16.gmra.mrb[0].mxu0 %v32
  %v558 = vpop.f32.mrb[0].mxu0
  %v559 = vadd.f32 %v351, %v558
  %v560 = vpop.f32.mrb[0].mxu0
  %v561 = vadd.f32 %v355, %v560
  %v562 = vpop.f32.mrb[0].mxu0
  %v563 = vadd.f32 %v351, %v562
  %v564 = vpop.f32.mrb[0].mxu0
  %v565 = vadd.f32 %v355, %v564
  %566 = vmatprep.mubr.bf16.mxu0 %v35
  %567 = vmatmul.mubr.bf16.gmra.mrb[0].mxu0 %v34
  %v568 = vpop.f32.mrb[0].mxu0
  %v569 = vadd.f32 %v351, %v568
  %v570 = vpop.f32.mrb[0].mxu0
  %v571 = vadd.f32 %v355, %v570
  %v572 = vpop.f32.mrb[0].mxu0
  %v573 = vadd.f32 %v351, %v572
  %v574 = vpop.f32.mrb[0].mxu0
  %v575 = vadd.f32 %v355, %v574
  %576 = vmatprep.mubr.bf16.mxu0 %v37
  %577 = vmatmul.mubr.bf16.gmra.mrb[0].mxu0 %v36
  %v578 = vpop.f32.mrb[0].mxu0
  %v579 = vadd.f32 %v351, %v578
  %v580 = vpop.f32.mrb[0].mxu0
  %v581 = vadd.f32 %v355, %v580
  %v582 = vpop.f32.mrb[0].mxu0
  %v583 = vadd.f32 %v351, %v582
  %v584 = vpop.f32.mrb[0].mxu0
  %v585 = vadd.f32 %v355, %v584
  %586 = vmatprep.mubr.bf16.mxu0 %v39
  %587 = vmatmul.mubr.bf16.gmra.mrb[0].mxu0 %v38
  %v588 = vpop.f32.mrb[0].mxu0
  %v589 = vadd.f32 %v351, %v588
  %v590 = vpop.f32.mrb[0].mxu0
  %v591 = vadd.f32 %v355, %v590
  %v592 = vpop.f32.mrb[0].mxu0
  %v593 = vadd.f32 %v351, %v592
  %v594 = vpop.f32.mrb[0].mxu0
  %v595 = vadd.f32 %v355, %v594
  %596 = vmatprep.mubr.bf16.mxu0 %v41
  %597 = vmatmul.mubr.bf16.gmra.mrb[0].mxu0 %v40
  %v598 = vpop.f32.mrb[0].mxu0
  %v599 = vadd.f32 %v351, %v598
  %v600 = vpop.f32.mrb[0].mxu0
  %v601 = vadd.f32 %v355, %v600
  %v602 = vpop.f32.mrb[0].mxu0
  %v603 = vpop.f32.mrb[0].mxu0
  %604 = vdwg.mxu0
  %605 = vst [vmem:[%s3] sm:$0xff] %v397
  %606 = vst [vmem:[%s3 + $0x8] sm:$0xff] %v399
  %607 = vst [vmem:[%s3 + $0x10] sm:$0xff] %v478
  %608 = vst [vmem:[%s3 + $0x18] sm:$0xff] %v480
  %609 = vst [vmem:[%s3 + $0x20] sm:$0xff] %v559
  %610 = vst [vmem:[%s3 + $0x28] sm:$0xff] %v561
  %611 = vst [vmem:[%s3 + $0x30] sm:$0xff] %v401
  %612 = vst [vmem:[%s3 + $0x38] sm:$0xff] %v403
  %613 = vst [vmem:[%s3 + $0x40] sm:$0xff] %v482
  %614 = vst [vmem:[%s3 + $0x48] sm:$0xff] %v484
  %615 = vst [vmem:[%s3 + $0x50] sm:$0xff] %v563
  %616 = vst [vmem:[%s3 + $0x58] sm:$0xff] %v565
  %617 = vst [vmem:[%s3 + $0x60] sm:$0xff] %v407
  %618 = vst [vmem:[%s3 + $0x68] sm:$0xff] %v409
  %619 = vst [vmem:[%s3 + $0x70] sm:$0xff] %v488
  %620 = vst [vmem:[%s3 + $0x78] sm:$0xff] %v490
  %621 = vst [vmem:[%s3 + $0x80] sm:$0xff] %v569
  %622 = vst [vmem:[%s3 + $0x88] sm:$0xff] %v571
  %623 = vst [vmem:[%s3 + $0x90] sm:$0xff] %v411
  %624 = vst [vmem:[%s3 + $0x98] sm:$0xff] %v413
  %625 = vst [vmem:[%s3 + $0xa0] sm:$0xff] %v492
  %626 = vst [vmem:[%s3 + $0xa8] sm:$0xff] %v494
  %627 = vst [vmem:[%s3 + $0xb0] sm:$0xff] %v573
  %628 = vst [vmem:[%s3 + $0xb8] sm:$0xff] %v575
  %629 = vst [vmem:[%s3 + $0xc0] sm:$0xff] %v417
  %630 = vst [vmem:[%s3 + $0xc8] sm:$0xff] %v419
  %631 = vst [vmem:[%s3 + $0xd0] sm:$0xff] %v498
  %632 = vst [vmem:[%s3 + $0xd8] sm:$0xff] %v500
  %633 = vst [vmem:[%s3 + $0xe0] sm:$0xff] %v579
  %634 = vst [vmem:[%s3 + $0xe8] sm:$0xff] %v581
  %635 = vst [vmem:[%s3 + $0xf0] sm:$0xff] %v421
  %636 = vst [vmem:[%s3 + $0xf8] sm:$0xff] %v423
  %637 = vst [vmem:[%s3 + $0x100] sm:$0xff] %v502
  %638 = vst [vmem:[%s3 + $0x108] sm:$0xff] %v504
  %639 = vst [vmem:[%s3 + $0x110] sm:$0xff] %v583
  %640 = vst [vmem:[%s3 + $0x118] sm:$0xff] %v585
  %641 = vst [vmem:[%s3 + $0x120] sm:$0xff] %v427
  %642 = vst [vmem:[%s3 + $0x128] sm:$0xff] %v429
  %643 = vst [vmem:[%s3 + $0x130] sm:$0xff] %v508
  %644 = vst [vmem:[%s3 + $0x138] sm:$0xff] %v510
  %645 = vst [vmem:[%s3 + $0x140] sm:$0xff] %v589
  %646 = vst [vmem:[%s3 + $0x148] sm:$0xff] %v591
  %647 = vst [vmem:[%s3 + $0x150] sm:$0xff] %v431
  %648 = vst [vmem:[%s3 + $0x158] sm:$0xff] %v433
  %649 = vst [vmem:[%s3 + $0x160] sm:$0xff] %v512
  %650 = vst [vmem:[%s3 + $0x168] sm:$0xff] %v514
  %651 = vst [vmem:[%s3 + $0x170] sm:$0xff] %v593
  %652 = vst [vmem:[%s3 + $0x178] sm:$0xff] %v595
  %653 = vst [vmem:[%s3 + $0x180] sm:$0x3] %v437
  %654 = vst [vmem:[%s3 + $0x188] sm:$0x3] %v439
  %655 = vst [vmem:[%s3 + $0x190] sm:$0x3] %v518
  %656 = vst [vmem:[%s3 + $0x198] sm:$0x3] %v520
  %657 = vst [vmem:[%s3 + $0x1a0] sm:$0x3] %v599
  %658 = vst [vmem:[%s3 + $0x1a8] sm:$0x3] %v601
  // Predicated region
  $region14: #{forward.36} parent=0 // pred_check
    _
  $region15: #{forward.36} parent=0 // pred_check_branch
    %660 = sbr.rel (0) target = $region17
  $region16: #{forward.36} parent=0 // pred_region
    _
  $region17: #{forward.36} parent=0 // pred_fallthru
    _
  // Predicated region
  $region18: #{forward.36} parent=0 // pred_check
    _
  $region19: #{forward.36} parent=0 // pred_check_branch
    %662 = sbr.rel (0) target = $region21
  $region20: #{forward.36} parent=0 // pred_region
    _
  $region21: #{forward.36} parent=0 // pred_fallthru
    _

// kernel: forward.40
$region0: #{forward.40}
  #allocation0 [shape = 'u32[]', space=smem, size = 0x4, offset = 0x4, fixed_abs, tag = 'smem constant byte address 0x4 - core index']
  #allocation1 [shape = 'u32[144,128]{1,0:T(1,128)}', space=vmem, size = 0x12000, scoped, tag = 'internal scratch']
  %s0 = inlined_call_operand.vmem [shape: f32[8,256], index: 0, kind: input, shape index: {}]
  %s1 = inlined_call_operand.vmem [shape: f32[256,768], index: 1, kind: input, shape index: {}]
  %s2 = inlined_call_operand.vmem [shape: f32[1,768], index: 2, kind: input, shape index: {}]
  %s3 = inlined_call_operand.vmem [shape: f32[8,768], index: 3, kind: output, shape index: {}]
  %s4 = sld [smem:[#allocation0]]
  $region22: #{forward.40} parent=0
    _
  %s6 = ssub.s32 1, %s4
  %s7 = scalar_select 0, %s6, %s4
  // Predicated region
  $region2: #{forward.40} parent=0 // pred_check
    _
  $region3: #{forward.40} parent=0 // pred_check_branch
    %9 = sbr.rel (0) target = $region5
  $region4: #{forward.40} parent=0 // pred_region
    _
  $region5: #{forward.40} parent=0 // pred_fallthru
    _
  // Predicated region
  $region6: #{forward.40} parent=0 // pred_check
    _
  $region7: #{forward.40} parent=0 // pred_check_branch
    %11 = sbr.rel (0) target = $region9
  $region8: #{forward.40} parent=0 // pred_region
    _
  $region9: #{forward.40} parent=0 // pred_fallthru
    _
  // Predicated region
  $region10: #{forward.40} parent=0 // pred_check
    _
  $region11: #{forward.40} parent=0 // pred_check_branch
    %13 = sbr.rel (0) target = $region13
  $region12: #{forward.40} parent=0 // pred_region
    _
  $region13: #{forward.40} parent=0 // pred_fallthru
    _
  %v14 = vld [vmem:[%s0] sm:$0xff]
  %v15 = vld [vmem:[%s0 + $0x8] sm:$0xff]
  %v16 = vpack.c.bf16 %v14, %v14
  %v17 = vpack.c.bf16 %v15, %v15
  %v18 = vld [vmem:[%s1] sm:$0xff]
  %v19 = vld [vmem:[%s1 + $0x8] sm:$0xff]
  %v20 = vld [vmem:[%s1 + $0x10] sm:$0xff]
  %v21 = vld [vmem:[%s1 + $0x18] sm:$0xff]
  %v22 = vld [vmem:[%s1 + $0x20] sm:$0xff]
  %v23 = vld [vmem:[%s1 + $0x28] sm:$0xff]
  %v24 = vld [vmem:[%s1 + $0x30] sm:$0xff]
  %v25 = vld [vmem:[%s1 + $0x38] sm:$0xff]
  %v26 = vld [vmem:[%s1 + $0x40] sm:$0xff]
  %v27 = vld [vmem:[%s1 + $0x48] sm:$0xff]
  %v28 = vld [vmem:[%s1 + $0x50] sm:$0xff]
  %v29 = vld [vmem:[%s1 + $0x58] sm:$0xff]
  %v30 = vld [vmem:[%s1 + $0x60] sm:$0xff]
  %v31 = vld [vmem:[%s1 + $0x68] sm:$0xff]
  %v32 = vld [vmem:[%s1 + $0x70] sm:$0xff]
  %v33 = vld [vmem:[%s1 + $0x78] sm:$0xff]
  %v34 = vld [vmem:[%s1 + $0x80] sm:$0xff]
  %v35 = vld [vmem:[%s1 + $0x88] sm:$0xff]
  %v36 = vld [vmem:[%s1 + $0x90] sm:$0xff]
  %v37 = vld [vmem:[%s1 + $0x98] sm:$0xff]
  %v38 = vld [vmem:[%s1 + $0xa0] sm:$0xff]
  %v39 = vld [vmem:[%s1 + $0xa8] sm:$0xff]
  %v40 = vld [vmem:[%s1 + $0xb0] sm:$0xff]
  %v41 = vld [vmem:[%s1 + $0xb8] sm:$0xff]
  %v42 = vld [vmem:[%s1 + $0xc0] sm:$0xff]
  %v43 = vld [vmem:[%s1 + $0xc8] sm:$0xff]
  %v44 = vld [vmem:[%s1 + $0xd0] sm:$0xff]
  %v45 = vld [vmem:[%s1 + $0xd8] sm:$0xff]
  %v46 = vld [vmem:[%s1 + $0xe0] sm:$0xff]
  %v47 = vld [vmem:[%s1 + $0xe8] sm:$0xff]
  %v48 = vld [vmem:[%s1 + $0xf0] sm:$0xff]
  %v49 = vld [vmem:[%s1 + $0xf8] sm:$0xff]
  %v50 = vld [vmem:[%s1 + $0x100] sm:$0xff]
  %v51 = vld [vmem:[%s1 + $0x108] sm:$0xff]
  %v52 = vld [vmem:[%s1 + $0x110] sm:$0xff]
  %v53 = vld [vmem:[%s1 + $0x118] sm:$0xff]
  %v54 = vld [vmem:[%s1 + $0x120] sm:$0xff]
  %v55 = vld [vmem:[%s1 + $0x128] sm:$0xff]
  %v56 = vld [vmem:[%s1 + $0x130] sm:$0xff]
  %v57 = vld [vmem:[%s1 + $0x138] sm:$0xff]
  %v58 = vld [vmem:[%s1 + $0x140] sm:$0xff]
  %v59 = vld [vmem:[%s1 + $0x148] sm:$0xff]
  %v60 = vld [vmem:[%s1 + $0x150] sm:$0xff]
  %v61 = vld [vmem:[%s1 + $0x158] sm:$0xff]
  %v62 = vld [vmem:[%s1 + $0x160] sm:$0xff]
  %v63 = vld [vmem:[%s1 + $0x168] sm:$0xff]
  %v64 = vld [vmem:[%s1 + $0x170] sm:$0xff]
  %v65 = vld [vmem:[%s1 + $0x178] sm:$0xff]
  %v66 = vld [vmem:[%s1 + $0x180] sm:$0xff]
  %v67 = vld [vmem:[%s1 + $0x188] sm:$0xff]
  %v68 = vld [vmem:[%s1 + $0x190] sm:$0xff]
  %v69 = vld [vmem:[%s1 + $0x198] sm:$0xff]
  %v70 = vld [vmem:[%s1 + $0x1a0] sm:$0xff]
  %v71 = vld [vmem:[%s1 + $0x1a8] sm:$0xff]
  %v72 = vld [vmem:[%s1 + $0x1b0] sm:$0xff]
  %v73 = vld [vmem:[%s1 + $0x1b8] sm:$0xff]
  %v74 = vld [vmem:[%s1 + $0x1c0] sm:$0xff]
  %v75 = vld [vmem:[%s1 + $0x1c8] sm:$0xff]
  %v76 = vld [vmem:[%s1 + $0x1d0] sm:$0xff]
  %v77 = vld [vmem:[%s1 + $0x1d8] sm:$0xff]
  %v78 = vld [vmem:[%s1 + $0x1e0] sm:$0xff]
  %v79 = vld [vmem:[%s1 + $0x1e8] sm:$0xff]
  %v80 = vld [vmem:[%s1 + $0x1f0] sm:$0xff]
  %v81 = vld [vmem:[%s1 + $0x1f8] sm:$0xff]
  %v82 = vld [vmem:[%s1 + $0x200] sm:$0xff]
  %v83 = vld [vmem:[%s1 + $0x208] sm:$0xff]
  %v84 = vld [vmem:[%s1 + $0x210] sm:$0xff]
  %v85 = vld [vmem:[%s1 + $0x218] sm:$0xff]
  %v86 = vld [vmem:[%s1 + $0x220] sm:$0xff]
  %v87 = vld [vmem:[%s1 + $0x228] sm:$0xff]
  %v88 = vld [vmem:[%s1 + $0x230] sm:$0xff]
  %v89 = vld [vmem:[%s1 + $0x238] sm:$0xff]
  %v90 = vld [vmem:[%s1 + $0x240] sm:$0xff]
  %v91 = vld [vmem:[%s1 + $0x248] sm:$0xff]
  %v92 = vld [vmem:[%s1 + $0x250] sm:$0xff]
  %v93 = vld [vmem:[%s1 + $0x258] sm:$0xff]
  %v94 = vld [vmem:[%s1 + $0x260] sm:$0xff]
  %v95 = vld [vmem:[%s1 + $0x268] sm:$0xff]
  %v96 = vld [vmem:[%s1 + $0x270] sm:$0xff]
  %v97 = vld [vmem:[%s1 + $0x278] sm:$0xff]
  %v98 = vld [vmem:[%s1 + $0x280] sm:$0xff]
  %v99 = vld [vmem:[%s1 + $0x288] sm:$0xff]
  %v100 = vld [vmem:[%s1 + $0x290] sm:$0xff]
  %v101 = vld [vmem:[%s1 + $0x298] sm:$0xff]
  %v102 = vld [vmem:[%s1 + $0x2a0] sm:$0xff]
  %v103 = vld [vmem:[%s1 + $0x2a8] sm:$0xff]
  %v104 = vld [vmem:[%s1 + $0x2b0] sm:$0xff]
  %v105 = vld [vmem:[%s1 + $0x2b8] sm:$0xff]
  %v106 = vld [vmem:[%s1 + $0x2c0] sm:$0xff]
  %v107 = vld [vmem:[%s1 + $0x2c8] sm:$0xff]
  %v108 = vld [vmem:[%s1 + $0x2d0] sm:$0xff]
  %v109 = vld [vmem:[%s1 + $0x2d8] sm:$0xff]
  %v110 = vld [vmem:[%s1 + $0x2e0] sm:$0xff]
  %v111 = vld [vmem:[%s1 + $0x2e8] sm:$0xff]
  %v112 = vld [vmem:[%s1 + $0x2f0] sm:$0xff]
  %v113 = vld [vmem:[%s1 + $0x2f8] sm:$0xff]
  %v114 = vld [vmem:[%s1 + $0x300] sm:$0xff]
  %v115 = vld [vmem:[%s1 + $0x308] sm:$0xff]
  %v116 = vld [vmem:[%s1 + $0x310] sm:$0xff]
  %v117 = vld [vmem:[%s1 + $0x318] sm:$0xff]
  %v118 = vld [vmem:[%s1 + $0x320] sm:$0xff]
  %v119 = vld [vmem:[%s1 + $0x328] sm:$0xff]
  %v120 = vld [vmem:[%s1 + $0x330] sm:$0xff]
  %v121 = vld [vmem:[%s1 + $0x338] sm:$0xff]
  %v122 = vld [vmem:[%s1 + $0x340] sm:$0xff]
  %v123 = vld [vmem:[%s1 + $0x348] sm:$0xff]
  %v124 = vld [vmem:[%s1 + $0x350] sm:$0xff]
  %v125 = vld [vmem:[%s1 + $0x358] sm:$0xff]
  %v126 = vld [vmem:[%s1 + $0x360] sm:$0xff]
  %v127 = vld [vmem:[%s1 + $0x368] sm:$0xff]
  %v128 = vld [vmem:[%s1 + $0x370] sm:$0xff]
  %v129 = vld [vmem:[%s1 + $0x378] sm:$0xff]
  %v130 = vld [vmem:[%s1 + $0x380] sm:$0xff]
  %v131 = vld [vmem:[%s1 + $0x388] sm:$0xff]
  %v132 = vld [vmem:[%s1 + $0x390] sm:$0xff]
  %v133 = vld [vmem:[%s1 + $0x398] sm:$0xff]
  %v134 = vld [vmem:[%s1 + $0x3a0] sm:$0xff]
  %v135 = vld [vmem:[%s1 + $0x3a8] sm:$0xff]
  %v136 = vld [vmem:[%s1 + $0x3b0] sm:$0xff]
  %v137 = vld [vmem:[%s1 + $0x3b8] sm:$0xff]
  %v138 = vld [vmem:[%s1 + $0x3c0] sm:$0xff]
  %v139 = vld [vmem:[%s1 + $0x3c8] sm:$0xff]
  %v140 = vld [vmem:[%s1 + $0x3d0] sm:$0xff]
  %v141 = vld [vmem:[%s1 + $0x3d8] sm:$0xff]
  %v142 = vld [vmem:[%s1 + $0x3e0] sm:$0xff]
  %v143 = vld [vmem:[%s1 + $0x3e8] sm:$0xff]
  %v144 = vld [vmem:[%s1 + $0x3f0] sm:$0xff]
  %v145 = vld [vmem:[%s1 + $0x3f8] sm:$0xff]
  %v146 = vld [vmem:[%s1 + $0x400] sm:$0xff]
  %v147 = vld [vmem:[%s1 + $0x408] sm:$0xff]
  %v148 = vld [vmem:[%s1 + $0x410] sm:$0xff]
  %v149 = vld [vmem:[%s1 + $0x418] sm:$0xff]
  %v150 = vld [vmem:[%s1 + $0x420] sm:$0xff]
  %v151 = vld [vmem:[%s1 + $0x428] sm:$0xff]
  %v152 = vld [vmem:[%s1 + $0x430] sm:$0xff]
  %v153 = vld [vmem:[%s1 + $0x438] sm:$0xff]
  %v154 = vld [vmem:[%s1 + $0x440] sm:$0xff]
  %v155 = vld [vmem:[%s1 + $0x448] sm:$0xff]
  %v156 = vld [vmem:[%s1 + $0x450] sm:$0xff]
  %v157 = vld [vmem:[%s1 + $0x458] sm:$0xff]
  %v158 = vld [vmem:[%s1 + $0x460] sm:$0xff]
  %v159 = vld [vmem:[%s1 + $0x468] sm:$0xff]
  %v160 = vld [vmem:[%s1 + $0x470] sm:$0xff]
  %v161 = vld [vmem:[%s1 + $0x478] sm:$0xff]
  %v162 = vld [vmem:[%s1 + $0x480] sm:$0xff]
  %v163 = vld [vmem:[%s1 + $0x488] sm:$0xff]
  %v164 = vld [vmem:[%s1 + $0x490] sm:$0xff]
  %v165 = vld [vmem:[%s1 + $0x498] sm:$0xff]
  %v166 = vld [vmem:[%s1 + $0x4a0] sm:$0xff]
  %v167 = vld [vmem:[%s1 + $0x4a8] sm:$0xff]
  %v168 = vld [vmem:[%s1 + $0x4b0] sm:$0xff]
  %v169 = vld [vmem:[%s1 + $0x4b8] sm:$0xff]
  %v170 = vld [vmem:[%s1 + $0x4c0] sm:$0xff]
  %v171 = vld [vmem:[%s1 + $0x4c8] sm:$0xff]
  %v172 = vld [vmem:[%s1 + $0x4d0] sm:$0xff]
  %v173 = vld [vmem:[%s1 + $0x4d8] sm:$0xff]
  %v174 = vld [vmem:[%s1 + $0x4e0] sm:$0xff]
  %v175 = vld [vmem:[%s1 + $0x4e8] sm:$0xff]
  %v176 = vld [vmem:[%s1 + $0x4f0] sm:$0xff]
  %v177 = vld [vmem:[%s1 + $0x4f8] sm:$0xff]
  %v178 = vld [vmem:[%s1 + $0x500] sm:$0xff]
  %v179 = vld [vmem:[%s1 + $0x508] sm:$0xff]
  %v180 = vld [vmem:[%s1 + $0x510] sm:$0xff]
  %v181 = vld [vmem:[%s1 + $0x518] sm:$0xff]
  %v182 = vld [vmem:[%s1 + $0x520] sm:$0xff]
  %v183 = vld [vmem:[%s1 + $0x528] sm:$0xff]
  %v184 = vld [vmem:[%s1 + $0x530] sm:$0xff]
  %v185 = vld [vmem:[%s1 + $0x538] sm:$0xff]
  %v186 = vld [vmem:[%s1 + $0x540] sm:$0xff]
  %v187 = vld [vmem:[%s1 + $0x548] sm:$0xff]
  %v188 = vld [vmem:[%s1 + $0x550] sm:$0xff]
  %v189 = vld [vmem:[%s1 + $0x558] sm:$0xff]
  %v190 = vld [vmem:[%s1 + $0x560] sm:$0xff]
  %v191 = vld [vmem:[%s1 + $0x568] sm:$0xff]
  %v192 = vld [vmem:[%s1 + $0x570] sm:$0xff]
  %v193 = vld [vmem:[%s1 + $0x578] sm:$0xff]
  %v194 = vld [vmem:[%s1 + $0x580] sm:$0xff]
  %v195 = vld [vmem:[%s1 + $0x588] sm:$0xff]
  %v196 = vld [vmem:[%s1 + $0x590] sm:$0xff]
  %v197 = vld [vmem:[%s1 + $0x598] sm:$0xff]
  %v198 = vld [vmem:[%s1 + $0x5a0] sm:$0xff]
  %v199 = vld [vmem:[%s1 + $0x5a8] sm:$0xff]
  %v200 = vld [vmem:[%s1 + $0x5b0] sm:$0xff]
  %v201 = vld [vmem:[%s1 + $0x5b8] sm:$0xff]
  %v202 = vld [vmem:[%s1 + $0x5c0] sm:$0xff]
  %v203 = vld [vmem:[%s1 + $0x5c8] sm:$0xff]
  %v204 = vld [vmem:[%s1 + $0x5d0] sm:$0xff]
  %v205 = vld [vmem:[%s1 + $0x5d8] sm:$0xff]
  %v206 = vld [vmem:[%s1 + $0x5e0] sm:$0xff]
  %v207 = vld [vmem:[%s1 + $0x5e8] sm:$0xff]
  %v208 = vld [vmem:[%s1 + $0x5f0] sm:$0xff]
  %v209 = vld [vmem:[%s1 + $0x5f8] sm:$0xff]
  %v210 = vpack.c.bf16 %v24, %v18
  %v211 = vpack.c.bf16 %v25, %v19
  %v212 = vpack.c.bf16 %v26, %v20
  %v213 = vpack.c.bf16 %v27, %v21
  %v214 = vpack.c.bf16 %v28, %v22
  %v215 = vpack.c.bf16 %v29, %v23
  %v216 = vpack.c.bf16 %v36, %v30
  %v217 = vpack.c.bf16 %v37, %v31
  %v218 = vpack.c.bf16 %v38, %v32
  %v219 = vpack.c.bf16 %v39, %v33
  %v220 = vpack.c.bf16 %v40, %v34
  %v221 = vpack.c.bf16 %v41, %v35
  %v222 = vpack.c.bf16 %v48, %v42
  %v223 = vpack.c.bf16 %v49, %v43
  %v224 = vpack.c.bf16 %v50, %v44
  %v225 = vpack.c.bf16 %v51, %v45
  %v226 = vpack.c.bf16 %v52, %v46
  %v227 = vpack.c.bf16 %v53, %v47
  %v228 = vpack.c.bf16 %v60, %v54
  %v229 = vpack.c.bf16 %v61, %v55
  %v230 = vpack.c.bf16 %v62, %v56
  %v231 = vpack.c.bf16 %v63, %v57
  %v232 = vpack.c.bf16 %v64, %v58
  %v233 = vpack.c.bf16 %v65, %v59
  %v234 = vpack.c.bf16 %v72, %v66
  %v235 = vpack.c.bf16 %v73, %v67
  %v236 = vpack.c.bf16 %v74, %v68
  %v237 = vpack.c.bf16 %v75, %v69
  %v238 = vpack.c.bf16 %v76, %v70
  %v239 = vpack.c.bf16 %v77, %v71
  %v240 = vpack.c.bf16 %v84, %v78
  %v241 = vpack.c.bf16 %v85, %v79
  %v242 = vpack.c.bf16 %v86, %v80
  %v243 = vpack.c.bf16 %v87, %v81
  %v244 = vpack.c.bf16 %v88, %v82
  %v245 = vpack.c.bf16 %v89, %v83
  %v246 = vpack.c.bf16 %v96, %v90
  %v247 = vpack.c.bf16 %v97, %v91
  %v248 = vpack.c.bf16 %v98, %v92
  %v249 = vpack.c.bf16 %v99, %v93
  %v250 = vpack.c.bf16 %v100, %v94
  %v251 = vpack.c.bf16 %v101, %v95
  %v252 = vpack.c.bf16 %v108, %v102
  %v253 = vpack.c.bf16 %v109, %v103
  %v254 = vpack.c.bf16 %v110, %v104
  %v255 = vpack.c.bf16 %v111, %v105
  %v256 = vpack.c.bf16 %v112, %v106
  %v257 = vpack.c.bf16 %v113, %v107
  %v258 = vpack.c.bf16 %v120, %v114
  %v259 = vpack.c.bf16 %v121, %v115
  %v260 = vpack.c.bf16 %v122, %v116
  %v261 = vpack.c.bf16 %v123, %v117
  %v262 = vpack.c.bf16 %v124, %v118
  %v263 = vpack.c.bf16 %v125, %v119
  %v264 = vpack.c.bf16 %v132, %v126
  %v265 = vpack.c.bf16 %v133, %v127
  %v266 = vpack.c.bf16 %v134, %v128
  %v267 = vpack.c.bf16 %v135, %v129
  %v268 = vpack.c.bf16 %v136, %v130
  %v269 = vpack.c.bf16 %v137, %v131
  %v270 = vpack.c.bf16 %v144, %v138
  %v271 = vpack.c.bf16 %v145, %v139
  %v272 = vpack.c.bf16 %v146, %v140
  %v273 = vpack.c.bf16 %v147, %v141
  %v274 = vpack.c.bf16 %v148, %v142
  %v275 = vpack.c.bf16 %v149, %v143
  %v276 = vpack.c.bf16 %v156, %v150
  %v277 = vpack.c.bf16 %v157, %v151
  %v278 = vpack.c.bf16 %v158, %v152
  %v279 = vpack.c.bf16 %v159, %v153
  %v280 = vpack.c.bf16 %v160, %v154
  %v281 = vpack.c.bf16 %v161, %v155
  %v282 = vpack.c.bf16 %v168, %v162
  %v283 = vpack.c.bf16 %v169, %v163
  %v284 = vpack.c.bf16 %v170, %v164
  %v285 = vpack.c.bf16 %v171, %v165
  %v286 = vpack.c.bf16 %v172, %v166
  %v287 = vpack.c.bf16 %v173, %v167
  %v288 = vpack.c.bf16 %v180, %v174
  %v289 = vpack.c.bf16 %v181, %v175
  %v290 = vpack.c.bf16 %v182, %v176
  %v291 = vpack.c.bf16 %v183, %v177
  %v292 = vpack.c.bf16 %v184, %v178
  %v293 = vpack.c.bf16 %v185, %v179
  %v294 = vpack.c.bf16 %v192, %v186
  %v295 = vpack.c.bf16 %v193, %v187
  %v296 = vpack.c.bf16 %v194, %v188
  %v297 = vpack.c.bf16 %v195, %v189
  %v298 = vpack.c.bf16 %v196, %v190
  %v299 = vpack.c.bf16 %v197, %v191
  %v300 = vpack.c.bf16 %v204, %v198
  %v301 = vpack.c.bf16 %v205, %v199
  %v302 = vpack.c.bf16 %v206, %v200
  %v303 = vpack.c.bf16 %v207, %v201
  %v304 = vpack.c.bf16 %v208, %v202
  %v305 = vpack.c.bf16 %v209, %v203
  %v306 = vld [vmem:[%s2] sm:$0x3f]
  %v308 = vlaneseq
  %v309 = vshrl.u32 %v308, 7
  %v310 = vsub.s32 0, %v309
  %v311 = vrot.slane %v306, %v310
  %v312 = vlaneseq
  %v313 = vshrl.u32 %v312, 7
  %v314 = vsub.s32 1, %v313
  %v315 = vrot.slane %v306, %v314
  %v316 = vlaneseq
  %v317 = vshrl.u32 %v316, 7
  %v318 = vsub.s32 2, %v317
  %v319 = vrot.slane %v306, %v318
  %v320 = vlaneseq
  %v321 = vshrl.u32 %v320, 7
  %v322 = vsub.s32 3, %v321
  %v323 = vrot.slane %v306, %v322
  %v324 = vlaneseq
  %v325 = vshrl.u32 %v324, 7
  %v326 = vsub.s32 4, %v325
  %v327 = vrot.slane %v306, %v326
  %v328 = vlaneseq
  %v329 = vshrl.u32 %v328, 7
  %v330 = vsub.s32 5, %v329
  %v331 = vrot.slane %v306, %v330
  %338 = vmatprep.subr.bf16.mxu0 %v211
  %339 = vmatpush1.bf16.msra.mxu0 %v210
  %340 = vmatprep.subr.bf16.mxu0 %v217
  %341 = vmatpush1.bf16.msra.mxu0 %v216
  %342 = vmatprep.subr.bf16.mxu0 %v223
  %343 = vmatpush1.bf16.msra.mxu0 %v222
  %344 = vmatprep.subr.bf16.mxu0 %v229
  %345 = vmatpush1.bf16.msra.mxu0 %v228
  %346 = vmatprep.subr.bf16.mxu0 %v235
  %347 = vmatpush1.bf16.msra.mxu0 %v234
  %348 = vmatprep.subr.bf16.mxu0 %v241
  %349 = vmatpush1.bf16.msra.mxu0 %v240
  %350 = vmatprep.subr.bf16.mxu0 %v247
  %351 = vmatpush1.bf16.msra.mxu0 %v246
  %352 = vmatprep.subr.bf16.mxu0 %v253
  %353 = vmatpush1.bf16.msra.mxu0 %v252
  %354 = vmatprep.subr.bf16.mxu0 %v259
  %355 = vmatpush1.bf16.msra.mxu0 %v258
  %356 = vmatprep.subr.bf16.mxu0 %v265
  %357 = vmatpush1.bf16.msra.mxu0 %v264
  %358 = vmatprep.subr.bf16.mxu0 %v271
  %359 = vmatpush1.bf16.msra.mxu0 %v270
  %360 = vmatprep.subr.bf16.mxu0 %v277
  %361 = vmatpush1.bf16.msra.mxu0 %v276
  %362 = vmatprep.subr.bf16.mxu0 %v283
  %363 = vmatpush1.bf16.msra.mxu0 %v282
  %364 = vmatprep.subr.bf16.mxu0 %v289
  %365 = vmatpush1.bf16.msra.mxu0 %v288
  %366 = vmatprep.subr.bf16.mxu0 %v295
  %367 = vmatpush1.bf16.msra.mxu0 %v294
  %368 = vmatprep.subr.bf16.mxu0 %v301
  %369 = vmatpush1.bf16.msra.mxu0 %v300
  %370 = vmatprep.mubr.bf16.mxu0 %v17
  %371 = vmatmul.mubr.bf16.gmra.mrb[0].mxu0 %v16
  %v372 = vpop.f32.mrb[0].mxu0
  %v373 = vadd.f32 %v311, %v372
  %v374 = vpop.f32.mrb[0].mxu0
  %v375 = vadd.f32 %v315, %v374
  %v376 = vpop.f32.mrb[0].mxu0
  %v377 = vpop.f32.mrb[0].mxu0
  %378 = vdwg.mxu0
  %379 = vmatprep.subr.bf16.mxu0 %v213
  %380 = vmatpush1.bf16.msra.mxu0 %v212
  %381 = vmatprep.subr.bf16.mxu0 %v219
  %382 = vmatpush1.bf16.msra.mxu0 %v218
  %383 = vmatprep.subr.bf16.mxu0 %v225
  %384 = vmatpush1.bf16.msra.mxu0 %v224
  %385 = vmatprep.subr.bf16.mxu0 %v231
  %386 = vmatpush1.bf16.msra.mxu0 %v230
  %387 = vmatprep.subr.bf16.mxu0 %v237
  %388 = vmatpush1.bf16.msra.mxu0 %v236
  %389 = vmatprep.subr.bf16.mxu0 %v243
  %390 = vmatpush1.bf16.msra.mxu0 %v242
  %391 = vmatprep.subr.bf16.mxu0 %v249
  %392 = vmatpush1.bf16.msra.mxu0 %v248
  %393 = vmatprep.subr.bf16.mxu0 %v255
  %394 = vmatpush1.bf16.msra.mxu0 %v254
  %395 = vmatprep.subr.bf16.mxu0 %v261
  %396 = vmatpush1.bf16.msra.mxu0 %v260
  %397 = vmatprep.subr.bf16.mxu0 %v267
  %398 = vmatpush1.bf16.msra.mxu0 %v266
  %399 = vmatprep.subr.bf16.mxu0 %v273
  %400 = vmatpush1.bf16.msra.mxu0 %v272
  %401 = vmatprep.subr.bf16.mxu0 %v279
  %402 = vmatpush1.bf16.msra.mxu0 %v278
  %403 = vmatprep.subr.bf16.mxu0 %v285
  %404 = vmatpush1.bf16.msra.mxu0 %v284
  %405 = vmatprep.subr.bf16.mxu0 %v291
  %406 = vmatpush1.bf16.msra.mxu0 %v290
  %407 = vmatprep.subr.bf16.mxu0 %v297
  %408 = vmatpush1.bf16.msra.mxu0 %v296
  %409 = vmatprep.subr.bf16.mxu0 %v303
  %410 = vmatpush1.bf16.msra.mxu0 %v302
  %411 = vmatprep.mubr.bf16.mxu0 %v17
  %412 = vmatmul.mubr.bf16.gmra.mrb[0].mxu0 %v16
  %v413 = vpop.f32.mrb[0].mxu0
  %v414 = vadd.f32 %v319, %v413
  %v415 = vpop.f32.mrb[0].mxu0
  %v416 = vadd.f32 %v323, %v415
  %v417 = vpop.f32.mrb[0].mxu0
  %v418 = vpop.f32.mrb[0].mxu0
  %419 = vdwg.mxu0
  %420 = vmatprep.subr.bf16.mxu0 %v215
  %421 = vmatpush1.bf16.msra.mxu0 %v214
  %422 = vmatprep.subr.bf16.mxu0 %v221
  %423 = vmatpush1.bf16.msra.mxu0 %v220
  %424 = vmatprep.subr.bf16.mxu0 %v227
  %425 = vmatpush1.bf16.msra.mxu0 %v226
  %426 = vmatprep.subr.bf16.mxu0 %v233
  %427 = vmatpush1.bf16.msra.mxu0 %v232
  %428 = vmatprep.subr.bf16.mxu0 %v239
  %429 = vmatpush1.bf16.msra.mxu0 %v238
  %430 = vmatprep.subr.bf16.mxu0 %v245
  %431 = vmatpush1.bf16.msra.mxu0 %v244
  %432 = vmatprep.subr.bf16.mxu0 %v251
  %433 = vmatpush1.bf16.msra.mxu0 %v250
  %434 = vmatprep.subr.bf16.mxu0 %v257
  %435 = vmatpush1.bf16.msra.mxu0 %v256
  %436 = vmatprep.subr.bf16.mxu0 %v263
  %437 = vmatpush1.bf16.msra.mxu0 %v262
  %438 = vmatprep.subr.bf16.mxu0 %v269
  %439 = vmatpush1.bf16.msra.mxu0 %v268
  %440 = vmatprep.subr.bf16.mxu0 %v275
  %441 = vmatpush1.bf16.msra.mxu0 %v274
  %442 = vmatprep.subr.bf16.mxu0 %v281
  %443 = vmatpush1.bf16.msra.mxu0 %v280
  %444 = vmatprep.subr.bf16.mxu0 %v287
  %445 = vmatpush1.bf16.msra.mxu0 %v286
  %446 = vmatprep.subr.bf16.mxu0 %v293
  %447 = vmatpush1.bf16.msra.mxu0 %v292
  %448 = vmatprep.subr.bf16.mxu0 %v299
  %449 = vmatpush1.bf16.msra.mxu0 %v298
  %450 = vmatprep.subr.bf16.mxu0 %v305
  %451 = vmatpush1.bf16.msra.mxu0 %v304
  %452 = vmatprep.mubr.bf16.mxu0 %v17
  %453 = vmatmul.mubr.bf16.gmra.mrb[0].mxu0 %v16
  %v454 = vpop.f32.mrb[0].mxu0
  %v455 = vadd.f32 %v327, %v454
  %v456 = vpop.f32.mrb[0].mxu0
  %v457 = vadd.f32 %v331, %v456
  %v458 = vpop.f32.mrb[0].mxu0
  %v459 = vpop.f32.mrb[0].mxu0
  %460 = vdwg.mxu0
  %461 = vst [vmem:[%s3] sm:$0xff] %v373
  %462 = vst [vmem:[%s3 + $0x8] sm:$0xff] %v375
  %463 = vst [vmem:[%s3 + $0x10] sm:$0xff] %v414
  %464 = vst [vmem:[%s3 + $0x18] sm:$0xff] %v416
  %465 = vst [vmem:[%s3 + $0x20] sm:$0xff] %v455
  %466 = vst [vmem:[%s3 + $0x28] sm:$0xff] %v457
  // Predicated region
  $region14: #{forward.40} parent=0 // pred_check
    _
  $region15: #{forward.40} parent=0 // pred_check_branch
    %468 = sbr.rel (0) target = $region17
  $region16: #{forward.40} parent=0 // pred_region
    _
  $region17: #{forward.40} parent=0 // pred_fallthru
    _
  // Predicated region
  $region18: #{forward.40} parent=0 // pred_check
    _
  $region19: #{forward.40} parent=0 // pred_check_branch
    %470 = sbr.rel (0) target = $region21
  $region20: #{forward.40} parent=0 // pred_region
    _
  $region21: #{forward.40} parent=0 // pred_fallthru
    _

// kernel: forward.41
$region0: #{forward.41}
  #allocation0 [shape = 'u32[]', space=smem, size = 0x4, offset = 0x4, fixed_abs, tag = 'smem constant byte address 0x4 - core index']
  #allocation1 [shape = 'u32[144,128]{1,0:T(1,128)}', space=vmem, size = 0x12000, scoped, tag = 'internal scratch']
  #allocation2 [shape = 'f32[4,2]{1,0:T(4,128)}', space=vmem, size = 0x800, scoped, tag = 'scratch operand']
  #allocation3 [shape = 'f32[4,2]{1,0:T(4,128)}', space=vmem, size = 0x800, scoped, tag = 'scratch operand']
  #allocation4 [shape = 'f32[4,256]{1,0:T(4,128)}', space=vmem, size = 0x1000, scoped, tag = 'scratch operand']
  %s0 = inlined_call_operand.vmem [shape: f32[2,4,256], index: 0, kind: input, shape index: {}]
  %s1 = inlined_call_operand.vmem [shape: f32[2,4,256], index: 1, kind: input, shape index: {}]
  %s2 = inlined_call_operand.vmem [shape: f32[2,4,256], index: 2, kind: input, shape index: {}]
  %s3 = inlined_call_operand.vmem [shape: f32[2,4,256], index: 3, kind: output, shape index: {}]
  %s4 = sld [smem:[#allocation0]]
  $region53: #{forward.41} parent=0
    _
  %s6 = ssub.s32 1, %s4
  %s7 = scalar_select 0, %s6, %s4
  loop: start=0, step=1, limit=4
  $region2: #{forward.41} parent=0 // loop_pre_header
    _
  $region3: #{forward.41} parent=0 // loop_header
    %s9 = sphi 0, %s13
    %p10 = scmp.ge.s32.totalorder %s9, 4
    %s16 = sphi 0, %s35
    %s17 = sphi 0, %s31
    %s18 = sphi 0, %s27
    %s19 = sphi 0, %s16
    %s20 = sphi 0, %s17
    %s21 = sphi 0, %s18
    %s22 = sphi 0, %s19
    %s23 = sphi 0, %s20
    %s24 = sphi 0, %s21
    %s40 = sphi 0, %s42
    %s43 = sphi 0, %s40
    %s44 = sphi 0, %s43
    %s60 = sphi 0, %s44
    %s68 = sphi 0, %s70
    %s71 = sphi 0, %s68
    %s72 = sphi 0, %s71
    %s88 = sphi 0, %s72
    %s96 = sphi 0, %s98
    %s99 = sphi 0, %s96
    %s100 = sphi 0, %s99
    %s116 = sphi 0, %s100
    %s124 = sphi 0, %s126
    %s127 = sphi 0, %s124
    %s128 = sphi 0, %s127
    %s144 = sphi 0, %s128
  $region4: #{forward.41} parent=0 // loop_header_branch
    %12 = sbr.rel (%p10) target = $region8
  $region5: #{forward.41} parent=0 // loop_body
    %s14 = ssub.s32 %s9, 1
    %s15 = ssub.s32 %s9, 2
    %s25 = sadd.s32 1, %s18
    %p26 = scmp.ge.s32.totalorder %s25, 1
    %s27 = scalar_select %p26, 0, %s25
    %s28 = sadd.s32 1, %s17
    %s29 = scalar_select %p26, %s28, %s17
    %p30 = scmp.ge.s32.totalorder %s29, 1
    %s31 = scalar_select %p30, 0, %s29
    %s32 = sadd.s32 1, %s16
    %s33 = scalar_select %p30, %s32, %s16
    %p34 = scmp.ge.s32.totalorder %s33, 2
    %s35 = scalar_select %p34, 0, %s33
    %s36 = ssub.s32 %s16, %s35
    %s37 = ssub.s32 %s17, %s31
    %s38 = sor.u32 %s36, %s37
    %p39 = scmp.eq.s32.totalorder %s38, 0
    %s41 = sadd.s32 %s40, 1
    %s42 = scalar_select %p39, %s40, %s41
    %p45 = pneg %p39
    %p46 = scmp.eq.s32.totalorder %s9, 1
    %p47 = por %p45, %p46
    %p48 = scmp.ne.s32.totalorder %s40, %s43
    %p49 = scmp.eq.s32.totalorder %s9, 0
    %p50 = por %p48, %p49
    %p51 = scmp.ne.s32.totalorder %s40, %s43
    %p52 = scmp.eq.s32.totalorder %s14, 1
    %p53 = por %p51, %p52
    %p54 = scmp.ne.s32.totalorder %s43, %s44
    %p55 = scmp.eq.s32.totalorder %s14, 0
    %p56 = por %p54, %p55
    %p57 = scmp.ne.s32.totalorder %s43, %s44
    %p58 = scmp.eq.s32.totalorder %s15, 1
    %p59 = por %p57, %p58
    %p61 = scmp.ne.s32.totalorder %s44, %s60
    %p62 = scmp.eq.s32.totalorder %s15, 0
    %p63 = por %p61, %p62
    %s64 = ssub.s32 %s16, %s35
    %s65 = ssub.s32 %s18, %s27
    %s66 = sor.u32 %s64, %s65
    %p67 = scmp.eq.s32.totalorder %s66, 0
    %s69 = sadd.s32 %s68, 1
    %s70 = scalar_select %p67, %s68, %s69
    %p73 = pneg %p67
    %p74 = scmp.eq.s32.totalorder %s9, 1
    %p75 = por %p73, %p74
    %p76 = scmp.ne.s32.totalorder %s68, %s71
    %p77 = scmp.eq.s32.totalorder %s9, 0
    %p78 = por %p76, %p77
    %p79 = scmp.ne.s32.totalorder %s68, %s71
    %p80 = scmp.eq.s32.totalorder %s14, 1
    %p81 = por %p79, %p80
    %p82 = scmp.ne.s32.totalorder %s71, %s72
    %p83 = scmp.eq.s32.totalorder %s14, 0
    %p84 = por %p82, %p83
    %p85 = scmp.ne.s32.totalorder %s71, %s72
    %p86 = scmp.eq.s32.totalorder %s15, 1
    %p87 = por %p85, %p86
    %p89 = scmp.ne.s32.totalorder %s72, %s88
    %p90 = scmp.eq.s32.totalorder %s15, 0
    %p91 = por %p89, %p90
    %s92 = ssub.s32 %s16, %s35
    %s93 = ssub.s32 %s18, %s27
    %s94 = sor.u32 %s92, %s93
    %p95 = scmp.eq.s32.totalorder %s94, 0
    %s97 = sadd.s32 %s96, 1
    %s98 = scalar_select %p95, %s96, %s97
    %p101 = pneg %p95
    %p102 = scmp.eq.s32.totalorder %s9, 1
    %p103 = por %p101, %p102
    %p104 = scmp.ne.s32.totalorder %s96, %s99
    %p105 = scmp.eq.s32.totalorder %s9, 0
    %p106 = por %p104, %p105
    %p107 = scmp.ne.s32.totalorder %s96, %s99
    %p108 = scmp.eq.s32.totalorder %s14, 1
    %p109 = por %p107, %p108
    %p110 = scmp.ne.s32.totalorder %s99, %s100
    %p111 = scmp.eq.s32.totalorder %s14, 0
    %p112 = por %p110, %p111
    %p113 = scmp.ne.s32.totalorder %s99, %s100
    %p114 = scmp.eq.s32.totalorder %s15, 1
    %p115 = por %p113, %p114
    %p117 = scmp.ne.s32.totalorder %s100, %s116
    %p118 = scmp.eq.s32.totalorder %s15, 0
    %p119 = por %p117, %p118
    %s120 = ssub.s32 %s16, %s35
    %s121 = ssub.s32 %s17, %s31
    %s122 = sor.u32 %s120, %s121
    %p123 = scmp.eq.s32.totalorder %s122, 0
    %s125 = sadd.s32 %s124, 1
    %s126 = scalar_select %p123, %s124, %s125
    %p129 = pneg %p123
    %p130 = scmp.eq.s32.totalorder %s9, 1
    %p131 = por %p129, %p130
    %p132 = scmp.ne.s32.totalorder %s124, %s127
    %p133 = scmp.eq.s32.totalorder %s9, 0
    %p134 = por %p132, %p133
    %p135 = scmp.ne.s32.totalorder %s124, %s127
    %p136 = scmp.eq.s32.totalorder %s14, 1
    %p137 = por %p135, %p136
    %p138 = scmp.ne.s32.totalorder %s127, %s128
    %p139 = scmp.eq.s32.totalorder %s14, 0
    %p140 = por %p138, %p139
    %p141 = scmp.ne.s32.totalorder %s127, %s128
    %p142 = scmp.eq.s32.totalorder %s15, 1
    %p143 = por %p141, %p142
    %p145 = scmp.ne.s32.totalorder %s128, %s144
    %p146 = scmp.eq.s32.totalorder %s15, 0
    %p147 = por %p145, %p146
    %p148 = scmp.le.s32.totalorder 1, %s9
    %p149 = scmp.lt.s32.totalorder %s9, 3
    %p150 = pnand %p148, %p149
    %p151 = pneg %p150
    // Predicated region
    $region9: #{forward.41} parent=5 // pred_check
      _
    $region10: #{forward.41} parent=5 // pred_check_branch
      %153 = sbr.rel (%p150) target = $region12
    $region11: #{forward.41} parent=5 // pred_region
      %s154 = ssub.s32 %s9, 1
    $region12: #{forward.41} parent=5 // pred_fallthru
      _
    %p155 = scmp.lt.s32.totalorder %s9, 2
    // Predicated region
    $region13: #{forward.41} parent=5 // pred_check
      %p156 = pneg %p155
    $region14: #{forward.41} parent=5 // pred_check_branch
      %158 = sbr.rel (%p156) target = $region16
    $region15: #{forward.41} parent=5 // pred_region
      // Predicated region
      $region17: #{forward.41} parent=15 // pred_check
        %p159 = pneg %p50
      $region18: #{forward.41} parent=15 // pred_check_branch
        %161 = sbr.rel (%p159) target = $region20
      $region19: #{forward.41} parent=15 // pred_region
        %p162 = scmp.lt.s32.totalorder %s16, 1
        %s163 = scalar_select %p162, %s16, 1
        %p164 = scmp.lt.s32.totalorder %s17, 0
        %s165 = scalar_select %p164, %s17, 0
        %s166 = smul.addr %s165, 2
        %s167 = smul.addr %s163, 2
        %s168 = sadd.s32 %s166, %s167
        %s169 = smul.addr %s168, 4
        %s170 = scalar_lea.vmem %s0, %s169
      $region20: #{forward.41} parent=15 // pred_fallthru
        _
      // Predicated region
      $region21: #{forward.41} parent=15 // pred_check
        %p171 = pneg %p78
      $region22: #{forward.41} parent=15 // pred_check_branch
        %173 = sbr.rel (%p171) target = $region24
      $region23: #{forward.41} parent=15 // pred_region
        %p174 = scmp.lt.s32.totalorder %s16, 1
        %s175 = scalar_select %p174, %s16, 1
        %p176 = scmp.lt.s32.totalorder %s18, 0
        %s177 = scalar_select %p176, %s18, 0
        %s178 = smul.addr %s177, 2
        %s179 = smul.addr %s175, 2
        %s180 = sadd.s32 %s178, %s179
        %s181 = smul.addr %s180, 4
        %s182 = scalar_lea.vmem %s1, %s181
      $region24: #{forward.41} parent=15 // pred_fallthru
        _
      // Predicated region
      $region25: #{forward.41} parent=15 // pred_check
        %p183 = pneg %p106
      $region26: #{forward.41} parent=15 // pred_check_branch
        %185 = sbr.rel (%p183) target = $region28
      $region27: #{forward.41} parent=15 // pred_region
        %p186 = scmp.lt.s32.totalorder %s16, 1
        %s187 = scalar_select %p186, %s16, 1
        %p188 = scmp.lt.s32.totalorder %s18, 0
        %s189 = scalar_select %p188, %s18, 0
        %s190 = smul.addr %s189, 2
        %s191 = smul.addr %s187, 2
        %s192 = sadd.s32 %s190, %s191
        %s193 = smul.addr %s192, 4
        %s194 = scalar_lea.vmem %s2, %s193
      $region28: #{forward.41} parent=15 // pred_fallthru
        _
    $region16: #{forward.41} parent=5 // pred_fallthru
      _
    %p195 = scmp.le.s32.totalorder 1, %s9
    %p196 = scmp.lt.s32.totalorder %s9, 3
    %p197 = pnand %p195, %p196
    %p198 = pneg %p197
    // Predicated region
    $region29: #{forward.41} parent=5 // pred_check
      _
    $region30: #{forward.41} parent=5 // pred_check_branch
      %200 = sbr.rel (%p197) target = $region32
    $region31: #{forward.41} parent=5 // pred_region
      %s201 = ssub.s32 %s9, 1
      %p202 = scmp.lt.s32.totalorder %s19, 1
      %s203 = scalar_select %p202, %s19, 1
      %p204 = scmp.lt.s32.totalorder %s20, 0
      %s205 = scalar_select %p204, %s20, 0
      %s206 = smul.addr %s205, 2
      %s207 = smul.addr %s203, 2
      %s208 = sadd.s32 %s206, %s207
      %s209 = smul.addr %s208, 4
      %s210 = scalar_lea.vmem %s0, %s209
      %p211 = pneg %p56
      %p212 = pneg %p53
      %p213 = scmp.lt.s32.totalorder %s19, 1
      %s214 = scalar_select %p213, %s19, 1
      %p215 = scmp.lt.s32.totalorder %s21, 0
      %s216 = scalar_select %p215, %s21, 0
      %s217 = smul.addr %s216, 2
      %s218 = smul.addr %s214, 2
      %s219 = sadd.s32 %s217, %s218
      %s220 = smul.addr %s219, 4
      %s221 = scalar_lea.vmem %s1, %s220
      %p222 = pneg %p84
      %p223 = pneg %p81
      %p224 = scmp.lt.s32.totalorder %s19, 1
      %s225 = scalar_select %p224, %s19, 1
      %p226 = scmp.lt.s32.totalorder %s21, 0
      %s227 = scalar_select %p226, %s21, 0
      %s228 = smul.addr %s227, 2
      %s229 = smul.addr %s225, 2
      %s230 = sadd.s32 %s228, %s229
      %s231 = smul.addr %s230, 4
      %s232 = scalar_lea.vmem %s2, %s231
      %p233 = pneg %p112
      %p234 = pneg %p109
      %p235 = pneg %p140
      %p236 = pneg %p137
      %p237 = scmp.lt.s32.totalorder %s19, 1
      %s238 = scalar_select %p237, %s19, 1
      %p239 = scmp.lt.s32.totalorder %s20, 0
      %s240 = scalar_select %p239, %s20, 0
      %s241 = smul.addr %s240, 2
      %s242 = smul.addr %s238, 2
      %s243 = sadd.s32 %s241, %s242
      %s244 = smul.addr %s243, 4
      %s245 = scalar_lea.vmem %s3, %s244
      %p246 = scmp.lt.s32.totalorder %s19, 1
      %s247 = scalar_select %p246, %s19, 1
      %p248 = scmp.lt.s32.totalorder %s20, 0
      %s249 = scalar_select %p248, %s20, 0
      %s250 = smul.addr %s249, 2
      %s251 = smul.addr %s247, 2
      %s252 = sadd.s32 %s250, %s251
      %s253 = smul.addr %s252, 4
      %s254 = scalar_lea.vmem %s0, %s253
      %p255 = scmp.lt.s32.totalorder %s19, 1
      %s256 = scalar_select %p255, %s19, 1
      %p257 = scmp.lt.s32.totalorder %s21, 0
      %s258 = scalar_select %p257, %s21, 0
      %s259 = smul.addr %s258, 2
      %s260 = smul.addr %s256, 2
      %s261 = sadd.s32 %s259, %s260
      %s262 = smul.addr %s261, 4
      %s263 = scalar_lea.vmem %s1, %s262
      %p264 = scmp.lt.s32.totalorder %s19, 1
      %s265 = scalar_select %p264, %s19, 1
      %p266 = scmp.lt.s32.totalorder %s21, 0
      %s267 = scalar_select %p266, %s21, 0
      %s268 = smul.addr %s267, 2
      %s269 = smul.addr %s265, 2
      %s270 = sadd.s32 %s268, %s269
      %s271 = smul.addr %s270, 4
      %s272 = scalar_lea.vmem %s2, %s271
      %p273 = scmp.lt.s32.totalorder %s19, 1
      %s274 = scalar_select %p273, %s19, 1
      %p275 = scmp.lt.s32.totalorder %s20, 0
      %s276 = scalar_select %p275, %s20, 0
      %s277 = smul.addr %s276, 2
      %s278 = smul.addr %s274, 2
      %s279 = sadd.s32 %s277, %s278
      %s280 = smul.addr %s279, 4
      %s281 = scalar_lea.vmem %s3, %s280
      %p283 = scmp.eq.s32.totalorder %s21, 0
      // Predicated region
      $region33: #{forward.41} parent=31 // pred_check
        %p284 = pneg %p283
      $region34: #{forward.41} parent=31 // pred_check_branch
        %286 = sbr.rel (%p284) target = $region36
      $region35: #{forward.41} parent=31 // pred_region
        %vm287 = vcmask 11264
        %288 = vst.msk [vmem:[#allocation2] sm:$0xf] %vm287, -1e+30
        %289 = vst.msk [vmem:[#allocation3] sm:$0xf] %vm287, 0.0
        %290 = vst [vmem:[#allocation4] sm:$0xff] 0.0
      $region36: #{forward.41} parent=31 // pred_fallthru
        _
      %v291 = vld [vmem:[%s254] sm:$0xff]
      %v292 = vld [vmem:[%s263] sm:$0xff]
      %v293 = vld [vmem:[%s272] sm:$0xff]
      %v294 = vmul.f32 %v291, 0.088388346
      %v295 = vpack.c.bf16 %v294, %v294
      %v296 = vpack.c.bf16 %v292, %v292
      %v297 = vpack.c.bf16 %v293, %v293
      %298 = vmatprep.subr.bf16.mxu0 0
      %299 = vmatpush1.bf16.xpose.msra.mxu0 %v296
      %300 = vmatprep.subr.bf16.mxu0 0
      %301 = vmatpush1.bf16.xpose.msra.mxu0 0
      %302 = vmatprep.subr.bf16.mxu0 0
      %303 = vmatpush1.bf16.xpose.msra.mxu0 0
      %304 = vmatprep.subr.bf16.mxu0 0
      %305 = vmatpush1.bf16.xpose.msra.mxu0 0
      %306 = vmatprep.subr.bf16.mxu0 0
      %307 = vmatpush1.bf16.xpose.msra.mxu0 0
      %308 = vmatprep.subr.bf16.mxu0 0
      %309 = vmatpush1.bf16.xpose.msra.mxu0 0
      %310 = vmatprep.subr.bf16.mxu0 0
      %311 = vmatpush1.bf16.xpose.msra.mxu0 0
      %312 = vmatprep.subr.bf16.mxu0 0
      %313 = vmatpush1.bf16.xpose.msra.mxu0 0
      %314 = vmatprep.subr.bf16.mxu0 0
      %315 = vmatpush1.bf16.xpose.msra.mxu0 0
      %316 = vmatprep.subr.bf16.mxu0 0
      %317 = vmatpush1.bf16.xpose.msra.mxu0 0
      %318 = vmatprep.subr.bf16.mxu0 0
      %319 = vmatpush1.bf16.xpose.msra.mxu0 0
      %320 = vmatprep.subr.bf16.mxu0 0
      %321 = vmatpush1.bf16.xpose.msra.mxu0 0
      %322 = vmatprep.subr.bf16.mxu0 0
      %323 = vmatpush1.bf16.xpose.msra.mxu0 0
      %324 = vmatprep.subr.bf16.mxu0 0
      %325 = vmatpush1.bf16.xpose.msra.mxu0 0
      %326 = vmatprep.subr.bf16.mxu0 0
      %327 = vmatpush1.bf16.xpose.msra.mxu0 0
      %328 = vmatprep.subr.bf16.mxu0 0
      %329 = vmatpush1.bf16.xpose.msra.mxu0 0
      %330 = vmatprep.mubr.bf16.mxu0 0
      %331 = vmatmul.mubr.bf16.gmra.mrb[0].mxu0 %v295
      %v332 = vpop.f32.mrb[0].mxu0
      %v333 = vadd.f32 0.0, %v332
      %v334 = vpop.f32.mrb[0].mxu0
      %v335 = vpop.f32.mrb[0].mxu0
      %v336 = vpop.f32.mrb[0].mxu0
      %337 = vdwg.mxu0
      %v338 = vld [vmem:[#allocation2] sm:$0xf]
      %vm339 = vcmask 27648
      %v340 = vsel %vm339, %v333, -inf
      %341 = vmax.xlane.f32.xlu0 %v340
      %v342 = vpop.xlane.xlu0 %341
      %v343 = vmax.f32 %v338, %v342
      %v344 = vsub.f32 %v338, %v343
      %v345 = vmul.f32 %v344, 1.442695
      %v346 = vpow.pop %v345
      %348 = vset.pattern.permute.xlu0 0
      %349 = vperm.xlu0 %348, %v343
      %v350 = vpop.permute.xlu0 %349
      %v352 = vsub.f32 %v333, %v350
      %v353 = vmul.f32 %v352, 1.442695
      %v354 = vpow.pop %v353
      %v355 = vld [vmem:[#allocation3] sm:$0xf]
      %v356 = vmul.f32 %v346, %v355
      %v357 = vsel %vm339, %v354, 0.0
      %358 = vadd.xlane.f32.xlu0 %v357
      %v359 = vpop.xlane.xlu0 %358
      %v360 = vadd.f32 %v356, %v359
      %vm361 = vcmask 3072
      %362 = vst.msk [vmem:[#allocation3] sm:$0xf] %vm361, %v360
      %v363 = vld [vmem:[#allocation4] sm:$0xf]
      %365 = vset.pattern.permute.xlu0 0
      %366 = vperm.xlu0 %365, %v346
      %v367 = vpop.permute.xlu0 %366
      %v369 = vmul.f32 %v367, %v363
      %v370 = vpack.c.bf16 %v354, %v354
      %vm371 = vcmask 31744
      %v373 = vsel %vm371, %v370, 0
      %vm375 = vcmask 1041408
      %v377 = vsel %vm375, %v297, 0
      %379 = vmatprep.subr.bf16.mxu0 0
      %380 = vmatpush1.bf16.msra.mxu0 %v377
      %381 = vmatprep.subr.bf16.mxu0 0
      %382 = vmatpush1.bf16.msra.mxu0 0
      %383 = vmatprep.subr.bf16.mxu0 0
      %384 = vmatpush1.bf16.msra.mxu0 0
      %385 = vmatprep.subr.bf16.mxu0 0
      %386 = vmatpush1.bf16.msra.mxu0 0
      %387 = vmatprep.subr.bf16.mxu0 0
      %388 = vmatpush1.bf16.msra.mxu0 0
      %389 = vmatprep.subr.bf16.mxu0 0
      %390 = vmatpush1.bf16.msra.mxu0 0
      %391 = vmatprep.subr.bf16.mxu0 0
      %392 = vmatpush1.bf16.msra.mxu0 0
      %393 = vmatprep.subr.bf16.mxu0 0
      %394 = vmatpush1.bf16.msra.mxu0 0
      %395 = vmatprep.subr.bf16.mxu0 0
      %396 = vmatpush1.bf16.msra.mxu0 0
      %397 = vmatprep.subr.bf16.mxu0 0
      %398 = vmatpush1.bf16.msra.mxu0 0
      %399 = vmatprep.subr.bf16.mxu0 0
      %400 = vmatpush1.bf16.msra.mxu0 0
      %401 = vmatprep.subr.bf16.mxu0 0
      %402 = vmatpush1.bf16.msra.mxu0 0
      %403 = vmatprep.subr.bf16.mxu0 0
      %404 = vmatpush1.bf16.msra.mxu0 0
      %405 = vmatprep.subr.bf16.mxu0 0
      %406 = vmatpush1.bf16.msra.mxu0 0
      %407 = vmatprep.subr.bf16.mxu0 0
      %408 = vmatpush1.bf16.msra.mxu0 0
      %409 = vmatprep.subr.bf16.mxu0 0
      %410 = vmatpush1.bf16.msra.mxu0 0
      %411 = vmatprep.mubr.bf16.mxu0 0
      %412 = vmatmul.mubr.bf16.gmra.mrb[0].mxu0 %v373
      %v413 = vpop.f32.mrb[0].mxu0
      %v414 = vadd.f32 0.0, %v413
      %v415 = vpop.f32.mrb[0].mxu0
      %v416 = vpop.f32.mrb[0].mxu0
      %v417 = vpop.f32.mrb[0].mxu0
      %418 = vdwg.mxu0
      %v419 = vadd.f32 %v369, %v414
      %420 = vst [vmem:[#allocation4] sm:$0xf] %v419
      %421 = vst.msk [vmem:[#allocation2] sm:$0xf] %vm361, %v343
      %v423 = vrot.slane %v291, 4
      %v425 = vmul.f32 %v423, 0.088388346
      %v426 = vpack.c.bf16 %v425, %v425
      %v428 = vcombine.high %v292, %v292
      %v430 = vpack.c.bf16 %v428, %v428
      %v432 = vcombine.high %v293, %v293
      %v434 = vpack.c.bf16 %v432, %v432
      %435 = vmatprep.subr.bf16.mxu0 0
      %436 = vmatpush1.bf16.xpose.msra.mxu0 %v430
      %437 = vmatprep.subr.bf16.mxu0 0
      %438 = vmatpush1.bf16.xpose.msra.mxu0 0
      %439 = vmatprep.subr.bf16.mxu0 0
      %440 = vmatpush1.bf16.xpose.msra.mxu0 0
      %441 = vmatprep.subr.bf16.mxu0 0
      %442 = vmatpush1.bf16.xpose.msra.mxu0 0
      %443 = vmatprep.subr.bf16.mxu0 0
      %444 = vmatpush1.bf16.xpose.msra.mxu0 0
      %445 = vmatprep.subr.bf16.mxu0 0
      %446 = vmatpush1.bf16.xpose.msra.mxu0 0
      %447 = vmatprep.subr.bf16.mxu0 0
      %448 = vmatpush1.bf16.xpose.msra.mxu0 0
      %449 = vmatprep.subr.bf16.mxu0 0
      %450 = vmatpush1.bf16.xpose.msra.mxu0 0
      %451 = vmatprep.subr.bf16.mxu0 0
      %452 = vmatpush1.bf16.xpose.msra.mxu0 0
      %453 = vmatprep.subr.bf16.mxu0 0
      %454 = vmatpush1.bf16.xpose.msra.mxu0 0
      %455 = vmatprep.subr.bf16.mxu0 0
      %456 = vmatpush1.bf16.xpose.msra.mxu0 0
      %457 = vmatprep.subr.bf16.mxu0 0
      %458 = vmatpush1.bf16.xpose.msra.mxu0 0
      %459 = vmatprep.subr.bf16.mxu0 0
      %460 = vmatpush1.bf16.xpose.msra.mxu0 0
      %461 = vmatprep.subr.bf16.mxu0 0
      %462 = vmatpush1.bf16.xpose.msra.mxu0 0
      %463 = vmatprep.subr.bf16.mxu0 0
      %464 = vmatpush1.bf16.xpose.msra.mxu0 0
      %465 = vmatprep.subr.bf16.mxu0 0
      %466 = vmatpush1.bf16.xpose.msra.mxu0 0
      %467 = vmatprep.mubr.bf16.mxu0 0
      %468 = vmatmul.mubr.bf16.gmra.mrb[0].mxu0 %v426
      %v469 = vpop.f32.mrb[0].mxu0
      %v470 = vadd.f32 0.0, %v469
      %v471 = vpop.f32.mrb[0].mxu0
      %v472 = vpop.f32.mrb[0].mxu0
      %v473 = vpop.f32.mrb[0].mxu0
      %474 = vdwg.mxu0
      %v475 = vld [vmem:[#allocation2] sm:$0xf]
      %v476 = vsel %vm339, %v470, -inf
      %477 = vmax.xlane.f32.xlu0 %v476
      %v478 = vpop.xlane.xlu0 %477
      %v479 = vmax.f32 %v475, %v478
      %v480 = vsub.f32 %v475, %v479
      %v481 = vmul.f32 %v480, 1.442695
      %v482 = vpow.pop %v481
      %484 = vset.pattern.permute.xlu0 1
      %485 = vperm.xlu0 %484, %v479
      %v486 = vpop.permute.xlu0 %485
      %v488 = vsub.f32 %v470, %v486
      %v489 = vmul.f32 %v488, 1.442695
      %v490 = vpow.pop %v489
      %v491 = vld [vmem:[#allocation3] sm:$0xf]
      %v492 = vmul.f32 %v482, %v491
      %v493 = vsel %vm339, %v490, 0.0
      %494 = vadd.xlane.f32.xlu0 %v493
      %v495 = vpop.xlane.xlu0 %494
      %v496 = vadd.f32 %v492, %v495
      %vm497 = vcmask 11272
      %498 = vst.msk [vmem:[#allocation3] sm:$0xf] %vm497, %v496
      %v499 = vld [vmem:[#allocation4 + $0x4] sm:$0xf]
      %501 = vset.pattern.permute.xlu0 1
      %502 = vperm.xlu0 %501, %v482
      %v503 = vpop.permute.xlu0 %502
      %v505 = vmul.f32 %v503, %v499
      %v506 = vpack.c.bf16 %v490, %v490
      %v508 = vsel %vm371, %v506, 0
      %v511 = vsel %vm375, %v434, 0
      %513 = vmatprep.subr.bf16.mxu0 0
      %514 = vmatpush1.bf16.msra.mxu0 %v511
      %515 = vmatprep.subr.bf16.mxu0 0
      %516 = vmatpush1.bf16.msra.mxu0 0
      %517 = vmatprep.subr.bf16.mxu0 0
      %518 = vmatpush1.bf16.msra.mxu0 0
      %519 = vmatprep.subr.bf16.mxu0 0
      %520 = vmatpush1.bf16.msra.mxu0 0
      %521 = vmatprep.subr.bf16.mxu0 0
      %522 = vmatpush1.bf16.msra.mxu0 0
      %523 = vmatprep.subr.bf16.mxu0 0
      %524 = vmatpush1.bf16.msra.mxu0 0
      %525 = vmatprep.subr.bf16.mxu0 0
      %526 = vmatpush1.bf16.msra.mxu0 0
      %527 = vmatprep.subr.bf16.mxu0 0
      %528 = vmatpush1.bf16.msra.mxu0 0
      %529 = vmatprep.subr.bf16.mxu0 0
      %530 = vmatpush1.bf16.msra.mxu0 0
      %531 = vmatprep.subr.bf16.mxu0 0
      %532 = vmatpush1.bf16.msra.mxu0 0
      %533 = vmatprep.subr.bf16.mxu0 0
      %534 = vmatpush1.bf16.msra.mxu0 0
      %535 = vmatprep.subr.bf16.mxu0 0
      %536 = vmatpush1.bf16.msra.mxu0 0
      %537 = vmatprep.subr.bf16.mxu0 0
      %538 = vmatpush1.bf16.msra.mxu0 0
      %539 = vmatprep.subr.bf16.mxu0 0
      %540 = vmatpush1.bf16.msra.mxu0 0
      %541 = vmatprep.subr.bf16.mxu0 0
      %542 = vmatpush1.bf16.msra.mxu0 0
      %543 = vmatprep.subr.bf16.mxu0 0
      %544 = vmatpush1.bf16.msra.mxu0 0
      %545 = vmatprep.mubr.bf16.mxu0 0
      %546 = vmatmul.mubr.bf16.gmra.mrb[0].mxu0 %v508
      %v547 = vpop.f32.mrb[0].mxu0
      %v548 = vadd.f32 0.0, %v547
      %v549 = vpop.f32.mrb[0].mxu0
      %v550 = vpop.f32.mrb[0].mxu0
      %v551 = vpop.f32.mrb[0].mxu0
      %552 = vdwg.mxu0
      %v553 = vadd.f32 %v505, %v548
      %554 = vst [vmem:[#allocation4 + $0x4] sm:$0xf] %v553
      %555 = vst.msk [vmem:[#allocation2] sm:$0xf] %vm497, %v479
      // Predicated region
      $region37: #{forward.41} parent=31 // pred_check
        %p556 = pneg %p283
      $region38: #{forward.41} parent=31 // pred_check_branch
        %558 = sbr.rel (%p556) target = $region40
      $region39: #{forward.41} parent=31 // pred_region
        %v559 = vld [vmem:[#allocation3] sm:$0xf]
        %v560 = vrcp.pop %v559
        %v561 = vld [vmem:[#allocation4] sm:$0xf]
        %563 = vset.pattern.permute.xlu0 0
        %564 = vperm.xlu0 %563, %v560
        %v565 = vpop.permute.xlu0 %564
        %v567 = vmul.f32 %v561, %v565
        %v568 = vld [vmem:[#allocation4 + $0x4] sm:$0xf]
        %569 = vset.pattern.permute.xlu0 1
        %570 = vperm.xlu0 %569, %v560
        %v571 = vpop.permute.xlu0 %570
        %v573 = vmul.f32 %v568, %v571
        %v576 = vcombine.low %v567, %v573
        %578 = vst [vmem:[%s281] sm:$0xff] %v576
      $region40: #{forward.41} parent=31 // pred_fallthru
        _
      %p579 = scmp.lt.s32.totalorder %s19, 1
      %s580 = scalar_select %p579, %s19, 1
      %p581 = scmp.lt.s32.totalorder %s20, 0
      %s582 = scalar_select %p581, %s20, 0
      %s583 = smul.addr %s582, 2
      %s584 = smul.addr %s580, 2
      %s585 = sadd.s32 %s583, %s584
      %s586 = smul.addr %s585, 4
      %s587 = scalar_lea.vmem %s3, %s586
      // Predicated region
      $region41: #{forward.41} parent=31 // pred_check
        %p588 = pneg %p137
      $region42: #{forward.41} parent=31 // pred_check_branch
        %590 = sbr.rel (%p588) target = $region44
      $region43: #{forward.41} parent=31 // pred_region
        _
      $region44: #{forward.41} parent=31 // pred_fallthru
        _
    $region32: #{forward.41} parent=5 // pred_fallthru
      _
    %p591 = scmp.le.s32.totalorder 2, %s9
    // Predicated region
    $region45: #{forward.41} parent=5 // pred_check
      %p592 = pneg %p591
    $region46: #{forward.41} parent=5 // pred_check_branch
      %594 = sbr.rel (%p592) target = $region48
    $region47: #{forward.41} parent=5 // pred_region
      %s595 = ssub.s32 %s9, 2
      // Predicated region
      $region49: #{forward.41} parent=47 // pred_check
        %p596 = pneg %p143
      $region50: #{forward.41} parent=47 // pred_check_branch
        %598 = sbr.rel (%p596) target = $region52
      $region51: #{forward.41} parent=47 // pred_region
        %p599 = scmp.lt.s32.totalorder %s22, 1
        %s600 = scalar_select %p599, %s22, 1
        %p601 = scmp.lt.s32.totalorder %s23, 0
        %s602 = scalar_select %p601, %s23, 0
        %s603 = smul.addr %s602, 2
        %s604 = smul.addr %s600, 2
        %s605 = sadd.s32 %s603, %s604
        %s606 = smul.addr %s605, 4
        %s607 = scalar_lea.vmem %s3, %s606
      $region52: #{forward.41} parent=47 // pred_fallthru
        _
    $region48: #{forward.41} parent=5 // pred_fallthru
      _
  $region6: #{forward.41} parent=0 // loop_footer
    %s13 = sadd.s32 1, %s9
  $region7: #{forward.41} parent=0 // loop_footer_branch
    %8 = sbr.rel target = $region3
  $region8: #{forward.41} parent=0 // loop_exit
    _

// kernel: forward.42
$region0: #{forward.42}
  #allocation0 [shape = 'u32[]', space=smem, size = 0x4, offset = 0x4, fixed_abs, tag = 'smem constant byte address 0x4 - core index']
  #allocation1 [shape = 'u32[144,128]{1,0:T(1,128)}', space=vmem, size = 0x12000, scoped, tag = 'internal scratch']
  %s0 = inlined_call_operand.vmem [shape: f32[8,256], index: 0, kind: input, shape index: {}]
  %s1 = inlined_call_operand.vmem [shape: f32[8,256], index: 1, kind: input, shape index: {}]
  %s2 = inlined_call_operand.vmem [shape: f32[256,256], index: 2, kind: input, shape index: {}]
  %s3 = inlined_call_operand.vmem [shape: f32[1,256], index: 3, kind: input, shape index: {}]
  %s4 = inlined_call_operand.vmem [shape: f32[1,256], index: 4, kind: input, shape index: {}]
  %s5 = inlined_call_operand.vmem [shape: f32[1,256], index: 5, kind: input, shape index: {}]
  %s6 = inlined_call_operand.vmem [shape: f32[8,256], index: 6, kind: output, shape index: {}]
  %s7 = sld [smem:[#allocation0]]
  $region34: #{forward.42} parent=0
    _
  %s9 = ssub.s32 1, %s7
  %s10 = scalar_select 0, %s9, %s7
  // Predicated region
  $region2: #{forward.42} parent=0 // pred_check
    _
  $region3: #{forward.42} parent=0 // pred_check_branch
    %12 = sbr.rel (0) target = $region5
  $region4: #{forward.42} parent=0 // pred_region
    _
  $region5: #{forward.42} parent=0 // pred_fallthru
    _
  // Predicated region
  $region6: #{forward.42} parent=0 // pred_check
    _
  $region7: #{forward.42} parent=0 // pred_check_branch
    %14 = sbr.rel (0) target = $region9
  $region8: #{forward.42} parent=0 // pred_region
    _
  $region9: #{forward.42} parent=0 // pred_fallthru
    _
  // Predicated region
  $region10: #{forward.42} parent=0 // pred_check
    _
  $region11: #{forward.42} parent=0 // pred_check_branch
    %16 = sbr.rel (0) target = $region13
  $region12: #{forward.42} parent=0 // pred_region
    _
  $region13: #{forward.42} parent=0 // pred_fallthru
    _
  // Predicated region
  $region14: #{forward.42} parent=0 // pred_check
    _
  $region15: #{forward.42} parent=0 // pred_check_branch
    %18 = sbr.rel (0) target = $region17
  $region16: #{forward.42} parent=0 // pred_region
    _
  $region17: #{forward.42} parent=0 // pred_fallthru
    _
  // Predicated region
  $region18: #{forward.42} parent=0 // pred_check
    _
  $region19: #{forward.42} parent=0 // pred_check_branch
    %20 = sbr.rel (0) target = $region21
  $region20: #{forward.42} parent=0 // pred_region
    _
  $region21: #{forward.42} parent=0 // pred_fallthru
    _
  // Predicated region
  $region22: #{forward.42} parent=0 // pred_check
    _
  $region23: #{forward.42} parent=0 // pred_check_branch
    %22 = sbr.rel (0) target = $region25
  $region24: #{forward.42} parent=0 // pred_region
    _
  $region25: #{forward.42} parent=0 // pred_fallthru
    _
  %v23 = vld [vmem:[%s0] sm:$0xff]
  %v24 = vld [vmem:[%s0 + $0x8] sm:$0xff]
  %v25 = vpack.c.bf16 %v23, %v23
  %v26 = vpack.c.bf16 %v24, %v24
  %v27 = vld [vmem:[%s2] sm:$0xff]
  %v28 = vld [vmem:[%s2 + $0x8] sm:$0xff]
  %v29 = vld [vmem:[%s2 + $0x10] sm:$0xff]
  %v30 = vld [vmem:[%s2 + $0x18] sm:$0xff]
  %v31 = vld [vmem:[%s2 + $0x20] sm:$0xff]
  %v32 = vld [vmem:[%s2 + $0x28] sm:$0xff]
  %v33 = vld [vmem:[%s2 + $0x30] sm:$0xff]
  %v34 = vld [vmem:[%s2 + $0x38] sm:$0xff]
  %v35 = vld [vmem:[%s2 + $0x40] sm:$0xff]
  %v36 = vld [vmem:[%s2 + $0x48] sm:$0xff]
  %v37 = vld [vmem:[%s2 + $0x50] sm:$0xff]
  %v38 = vld [vmem:[%s2 + $0x58] sm:$0xff]
  %v39 = vld [vmem:[%s2 + $0x60] sm:$0xff]
  %v40 = vld [vmem:[%s2 + $0x68] sm:$0xff]
  %v41 = vld [vmem:[%s2 + $0x70] sm:$0xff]
  %v42 = vld [vmem:[%s2 + $0x78] sm:$0xff]
  %v43 = vld [vmem:[%s2 + $0x80] sm:$0xff]
  %v44 = vld [vmem:[%s2 + $0x88] sm:$0xff]
  %v45 = vld [vmem:[%s2 + $0x90] sm:$0xff]
  %v46 = vld [vmem:[%s2 + $0x98] sm:$0xff]
  %v47 = vld [vmem:[%s2 + $0xa0] sm:$0xff]
  %v48 = vld [vmem:[%s2 + $0xa8] sm:$0xff]
  %v49 = vld [vmem:[%s2 + $0xb0] sm:$0xff]
  %v50 = vld [vmem:[%s2 + $0xb8] sm:$0xff]
  %v51 = vld [vmem:[%s2 + $0xc0] sm:$0xff]
  %v52 = vld [vmem:[%s2 + $0xc8] sm:$0xff]
  %v53 = vld [vmem:[%s2 + $0xd0] sm:$0xff]
  %v54 = vld [vmem:[%s2 + $0xd8] sm:$0xff]
  %v55 = vld [vmem:[%s2 + $0xe0] sm:$0xff]
  %v56 = vld [vmem:[%s2 + $0xe8] sm:$0xff]
  %v57 = vld [vmem:[%s2 + $0xf0] sm:$0xff]
  %v58 = vld [vmem:[%s2 + $0xf8] sm:$0xff]
  %v59 = vld [vmem:[%s2 + $0x100] sm:$0xff]
  %v60 = vld [vmem:[%s2 + $0x108] sm:$0xff]
  %v61 = vld [vmem:[%s2 + $0x110] sm:$0xff]
  %v62 = vld [vmem:[%s2 + $0x118] sm:$0xff]
  %v63 = vld [vmem:[%s2 + $0x120] sm:$0xff]
  %v64 = vld [vmem:[%s2 + $0x128] sm:$0xff]
  %v65 = vld [vmem:[%s2 + $0x130] sm:$0xff]
  %v66 = vld [vmem:[%s2 + $0x138] sm:$0xff]
  %v67 = vld [vmem:[%s2 + $0x140] sm:$0xff]
  %v68 = vld [vmem:[%s2 + $0x148] sm:$0xff]
  %v69 = vld [vmem:[%s2 + $0x150] sm:$0xff]
  %v70 = vld [vmem:[%s2 + $0x158] sm:$0xff]
  %v71 = vld [vmem:[%s2 + $0x160] sm:$0xff]
  %v72 = vld [vmem:[%s2 + $0x168] sm:$0xff]
  %v73 = vld [vmem:[%s2 + $0x170] sm:$0xff]
  %v74 = vld [vmem:[%s2 + $0x178] sm:$0xff]
  %v75 = vld [vmem:[%s2 + $0x180] sm:$0xff]
  %v76 = vld [vmem:[%s2 + $0x188] sm:$0xff]
  %v77 = vld [vmem:[%s2 + $0x190] sm:$0xff]
  %v78 = vld [vmem:[%s2 + $0x198] sm:$0xff]
  %v79 = vld [vmem:[%s2 + $0x1a0] sm:$0xff]
  %v80 = vld [vmem:[%s2 + $0x1a8] sm:$0xff]
  %v81 = vld [vmem:[%s2 + $0x1b0] sm:$0xff]
  %v82 = vld [vmem:[%s2 + $0x1b8] sm:$0xff]
  %v83 = vld [vmem:[%s2 + $0x1c0] sm:$0xff]
  %v84 = vld [vmem:[%s2 + $0x1c8] sm:$0xff]
  %v85 = vld [vmem:[%s2 + $0x1d0] sm:$0xff]
  %v86 = vld [vmem:[%s2 + $0x1d8] sm:$0xff]
  %v87 = vld [vmem:[%s2 + $0x1e0] sm:$0xff]
  %v88 = vld [vmem:[%s2 + $0x1e8] sm:$0xff]
  %v89 = vld [vmem:[%s2 + $0x1f0] sm:$0xff]
  %v90 = vld [vmem:[%s2 + $0x1f8] sm:$0xff]
  %v91 = vpack.c.bf16 %v29, %v27
  %v92 = vpack.c.bf16 %v30, %v28
  %v93 = vpack.c.bf16 %v33, %v31
  %v94 = vpack.c.bf16 %v34, %v32
  %v95 = vpack.c.bf16 %v37, %v35
  %v96 = vpack.c.bf16 %v38, %v36
  %v97 = vpack.c.bf16 %v41, %v39
  %v98 = vpack.c.bf16 %v42, %v40
  %v99 = vpack.c.bf16 %v45, %v43
  %v100 = vpack.c.bf16 %v46, %v44
  %v101 = vpack.c.bf16 %v49, %v47
  %v102 = vpack.c.bf16 %v50, %v48
  %v103 = vpack.c.bf16 %v53, %v51
  %v104 = vpack.c.bf16 %v54, %v52
  %v105 = vpack.c.bf16 %v57, %v55
  %v106 = vpack.c.bf16 %v58, %v56
  %v107 = vpack.c.bf16 %v61, %v59
  %v108 = vpack.c.bf16 %v62, %v60
  %v109 = vpack.c.bf16 %v65, %v63
  %v110 = vpack.c.bf16 %v66, %v64
  %v111 = vpack.c.bf16 %v69, %v67
  %v112 = vpack.c.bf16 %v70, %v68
  %v113 = vpack.c.bf16 %v73, %v71
  %v114 = vpack.c.bf16 %v74, %v72
  %v115 = vpack.c.bf16 %v77, %v75
  %v116 = vpack.c.bf16 %v78, %v76
  %v117 = vpack.c.bf16 %v81, %v79
  %v118 = vpack.c.bf16 %v82, %v80
  %v119 = vpack.c.bf16 %v85, %v83
  %v120 = vpack.c.bf16 %v86, %v84
  %v121 = vpack.c.bf16 %v89, %v87
  %v122 = vpack.c.bf16 %v90, %v88
  %v123 = vld [vmem:[%s3] sm:$0x3]
  %v125 = vlaneseq
  %v126 = vshrl.u32 %v125, 7
  %v127 = vsub.s32 0, %v126
  %v128 = vrot.slane %v123, %v127
  %v129 = vlaneseq
  %v130 = vshrl.u32 %v129, 7
  %v131 = vsub.s32 1, %v130
  %v132 = vrot.slane %v123, %v131
  %135 = vmatprep.subr.bf16.mxu0 %v92
  %136 = vmatpush1.bf16.msra.mxu0 %v91
  %137 = vmatprep.subr.bf16.mxu0 %v94
  %138 = vmatpush1.bf16.msra.mxu0 %v93
  %139 = vmatprep.subr.bf16.mxu0 %v96
  %140 = vmatpush1.bf16.msra.mxu0 %v95
  %141 = vmatprep.subr.bf16.mxu0 %v98
  %142 = vmatpush1.bf16.msra.mxu0 %v97
  %143 = vmatprep.subr.bf16.mxu0 %v100
  %144 = vmatpush1.bf16.msra.mxu0 %v99
  %145 = vmatprep.subr.bf16.mxu0 %v102
  %146 = vmatpush1.bf16.msra.mxu0 %v101
  %147 = vmatprep.subr.bf16.mxu0 %v104
  %148 = vmatpush1.bf16.msra.mxu0 %v103
  %149 = vmatprep.subr.bf16.mxu0 %v106
  %150 = vmatpush1.bf16.msra.mxu0 %v105
  %151 = vmatprep.subr.bf16.mxu0 %v108
  %152 = vmatpush1.bf16.msra.mxu0 %v107
  %153 = vmatprep.subr.bf16.mxu0 %v110
  %154 = vmatpush1.bf16.msra.mxu0 %v109
  %155 = vmatprep.subr.bf16.mxu0 %v112
  %156 = vmatpush1.bf16.msra.mxu0 %v111
  %157 = vmatprep.subr.bf16.mxu0 %v114
  %158 = vmatpush1.bf16.msra.mxu0 %v113
  %159 = vmatprep.subr.bf16.mxu0 %v116
  %160 = vmatpush1.bf16.msra.mxu0 %v115
  %161 = vmatprep.subr.bf16.mxu0 %v118
  %162 = vmatpush1.bf16.msra.mxu0 %v117
  %163 = vmatprep.subr.bf16.mxu0 %v120
  %164 = vmatpush1.bf16.msra.mxu0 %v119
  %165 = vmatprep.subr.bf16.mxu0 %v122
  %166 = vmatpush1.bf16.msra.mxu0 %v121
  %167 = vmatprep.mubr.bf16.mxu0 %v26
  %168 = vmatmul.mubr.bf16.gmra.mrb[0].mxu0 %v25
  %v169 = vpop.f32.mrb[0].mxu0
  %v170 = vadd.f32 %v128, %v169
  %v171 = vpop.f32.mrb[0].mxu0
  %v172 = vadd.f32 %v132, %v171
  %v173 = vpop.f32.mrb[0].mxu0
  %v174 = vpop.f32.mrb[0].mxu0
  %175 = vdwg.mxu0
  %v176 = vld [vmem:[%s1] sm:$0xff]
  %v177 = vld [vmem:[%s1 + $0x8] sm:$0xff]
  %v178 = vadd.f32 %v170, %v176
  %v179 = vadd.f32 %v172, %v177
  %v180 = vld [vmem:[%s4] sm:$0x3]
  %v181 = vld [vmem:[%s5] sm:$0x3]
  %v182 = vadd.f32 %v178, %v179
  %183 = vadd.xlane.f32.xlu0 %v182
  %v184 = vpop.xlane.xlu0 %183
  %v185 = vrcp.pop 256.0
  %v186 = vmul.f32 %v184, %v185
  %v187 = vsub.f32 %v178, %v186
  %v188 = vsub.f32 %v179, %v186
  %v189 = vmul.f32 %v187, %v187
  %v190 = vmul.f32 %v188, %v188
  %v191 = vadd.f32 %v189, %v190
  %192 = vadd.xlane.f32.xlu0 %v191
  %v193 = vpop.xlane.xlu0 %192
  %v194 = vmul.f32 %v193, %v185
  %v195 = vadd.f32 %v194, 1e-05
  %v196 = vrsqrt.pop %v195
  %v197 = vmul.f32 %v187, %v196
  %v198 = vmul.f32 %v188, %v196
  %v200 = vlaneseq
  %v201 = vshrl.u32 %v200, 7
  %v202 = vsub.s32 0, %v201
  %v203 = vrot.slane %v180, %v202
  %v204 = vlaneseq
  %v205 = vshrl.u32 %v204, 7
  %v206 = vsub.s32 1, %v205
  %v207 = vrot.slane %v180, %v206
  %v210 = vmul.f32 %v197, %v203
  %v211 = vmul.f32 %v198, %v207
  %v213 = vlaneseq
  %v214 = vshrl.u32 %v213, 7
  %v215 = vsub.s32 0, %v214
  %v216 = vrot.slane %v181, %v215
  %v217 = vlaneseq
  %v218 = vshrl.u32 %v217, 7
  %v219 = vsub.s32 1, %v218
  %v220 = vrot.slane %v181, %v219
  %v223 = vadd.f32 %v210, %v216
  %v224 = vadd.f32 %v211, %v220
  %225 = vst [vmem:[%s6] sm:$0xff] %v223
  %226 = vst [vmem:[%s6 + $0x8] sm:$0xff] %v224
  // Predicated region
  $region26: #{forward.42} parent=0 // pred_check
    _
  $region27: #{forward.42} parent=0 // pred_check_branch
    %228 = sbr.rel (0) target = $region29
  $region28: #{forward.42} parent=0 // pred_region
    _
  $region29: #{forward.42} parent=0 // pred_fallthru
    _
  // Predicated region
  $region30: #{forward.42} parent=0 // pred_check
    _
  $region31: #{forward.42} parent=0 // pred_check_branch
    %230 = sbr.rel (0) target = $region33
  $region32: #{forward.42} parent=0 // pred_region
    _
  $region33: #{forward.42} parent=0 // pred_fallthru
    _

// kernel: forward.47
$region0: #{forward.47}
  #allocation0 [shape = 'u32[]', space=smem, size = 0x4, offset = 0x4, fixed_abs, tag = 'smem constant byte address 0x4 - core index']
  #allocation1 [shape = 'u32[144,128]{1,0:T(1,128)}', space=vmem, size = 0x12000, scoped, tag = 'internal scratch']
  %s0 = inlined_call_operand.vmem [shape: f32[8,256], index: 0, kind: input, shape index: {}]
  %s1 = inlined_call_operand.vmem [shape: f32[256,256], index: 1, kind: input, shape index: {}]
  %s2 = inlined_call_operand.vmem [shape: f32[1,256], index: 2, kind: input, shape index: {}]
  %s3 = inlined_call_operand.vmem [shape: f32[256,256], index: 3, kind: input, shape index: {}]
  %s4 = inlined_call_operand.hbm [shape: f32[1,256], index: 4, kind: input, shape index: {}]
  %s5 = inlined_call_operand.hbm [shape: f32[1,256], index: 5, kind: input, shape index: {}]
  %s6 = inlined_call_operand.hbm [shape: f32[1,256], index: 6, kind: input, shape index: {}]
  %s7 = inlined_call_operand.vmem [shape: f32[8,256], index: 7, kind: output, shape index: {}]
  %s8 = sld [smem:[#allocation0]]
  $region50: #{forward.47} parent=0
    _
  %s10 = ssub.s32 1, %s8
  %s11 = scalar_select 0, %s10, %s8
  $region1: #{forward.47} parent=0
    #allocation2 [shape = 'u8[1024]{0}', space=vmem, size = 0x400, scoped, tag = 'input window, operand 4, single buffered']
    #allocation3 [shape = 's32[1]{0}', space=sflag, size = 0x4, scoped, tag = 'scoped memory for forward.47']
    #allocation4 [shape = 'u8[1024]{0}', space=vmem, size = 0x400, scoped, tag = 'input window, operand 5, single buffered']
    #allocation5 [shape = 's32[1]{0}', space=sflag, size = 0x4, scoped, tag = 'scoped memory for forward.47']
    #allocation6 [shape = 'u8[1024]{0}', space=vmem, size = 0x400, scoped, tag = 'input window, operand 6, single buffered']
    %12 = vsyncpa [#allocation3], 0
    %13 = vsyncpa [#allocation5], 0
    // Predicated region
    $region2: #{forward.47} parent=1 // pred_check
      _
    $region3: #{forward.47} parent=1 // pred_check_branch
      %15 = sbr.rel (0) target = $region5
    $region4: #{forward.47} parent=1 // pred_region
      _
    $region5: #{forward.47} parent=1 // pred_fallthru
      _
    // Predicated region
    $region6: #{forward.47} parent=1 // pred_check
      _
    $region7: #{forward.47} parent=1 // pred_check_branch
      %17 = sbr.rel (0) target = $region9
    $region8: #{forward.47} parent=1 // pred_region
      _
    $region9: #{forward.47} parent=1 // pred_fallthru
      _
    // Predicated region
    $region10: #{forward.47} parent=1 // pred_check
      _
    $region11: #{forward.47} parent=1 // pred_check_branch
      %19 = sbr.rel (0) target = $region13
    $region12: #{forward.47} parent=1 // pred_region
      _
    $region13: #{forward.47} parent=1 // pred_fallthru
      _
    // Predicated region
    $region14: #{forward.47} parent=1 // pred_check
      _
    $region15: #{forward.47} parent=1 // pred_check_branch
      %21 = sbr.rel (0) target = $region17
    $region16: #{forward.47} parent=1 // pred_region
      _
    $region17: #{forward.47} parent=1 // pred_fallthru
      _
    // Predicated region
    $region18: #{forward.47} parent=1 // pred_check
      _
    $region19: #{forward.47} parent=1 // pred_check_branch
      %23 = sbr.rel (0) target = $region21
    $region20: #{forward.47} parent=1 // pred_region
      %s25 = ssub.s32 32, 32
      %26 = vsyncadd [#allocation3], %s25
      %s28 = sshll.u32 [#allocation2], 4
      %s29 = int_to_ptr.vmem [resolvable:$true] %s28
      %31 = dma.hbm_to_vmem [thread:$0]  %s4, 32, %s29, [#allocation3]
    $region21: #{forward.47} parent=1 // pred_fallthru
      _
    // Predicated region
    $region22: #{forward.47} parent=1 // pred_check
      _
    $region23: #{forward.47} parent=1 // pred_check_branch
      %33 = sbr.rel (0) target = $region25
    $region24: #{forward.47} parent=1 // pred_region
      %s35 = ssub.s32 32, 32
      %36 = vsyncadd [#allocation5], %s35
      %s38 = sshll.u32 [#allocation4], 4
      %s39 = int_to_ptr.vmem [resolvable:$true] %s38
      %41 = dma.hbm_to_vmem [thread:$0]  %s5, 32, %s39, [#allocation5]
    $region25: #{forward.47} parent=1 // pred_fallthru
      _
    // Predicated region
    $region26: #{forward.47} parent=1 // pred_check
      _
    $region27: #{forward.47} parent=1 // pred_check_branch
      %43 = sbr.rel (0) target = $region29
    $region28: #{forward.47} parent=1 // pred_region
      %s45 = ssub.s32 32, 32
      %46 = vsyncadd [#allocation5], %s45
      %s48 = sshll.u32 [#allocation6], 4
      %s49 = int_to_ptr.vmem [resolvable:$true] %s48
      %51 = dma.hbm_to_vmem [thread:$0]  %s6, 32, %s49, [#allocation5]
    $region29: #{forward.47} parent=1 // pred_fallthru
      _
    // Predicated region
    $region30: #{forward.47} parent=1 // pred_check
      _
    $region31: #{forward.47} parent=1 // pred_check_branch
      %53 = sbr.rel (0) target = $region33
    $region32: #{forward.47} parent=1 // pred_region
      %54 = dma.done [#allocation3], 32
    $region33: #{forward.47} parent=1 // pred_fallthru
      _
    // Predicated region
    $region34: #{forward.47} parent=1 // pred_check
      _
    $region35: #{forward.47} parent=1 // pred_check_branch
      %56 = sbr.rel (0) target = $region37
    $region36: #{forward.47} parent=1 // pred_region
      %57 = dma.done [#allocation5], 32
    $region37: #{forward.47} parent=1 // pred_fallthru
      _
    // Predicated region
    $region38: #{forward.47} parent=1 // pred_check
      _
    $region39: #{forward.47} parent=1 // pred_check_branch
      %59 = sbr.rel (0) target = $region41
    $region40: #{forward.47} parent=1 // pred_region
      %60 = dma.done [#allocation5], 32
    $region41: #{forward.47} parent=1 // pred_fallthru
      _
    %v61 = vld [vmem:[%s0] sm:$0xff]
    %v62 = vld [vmem:[%s0 + $0x8] sm:$0xff]
    %v63 = vpack.c.bf16 %v61, %v61
    %v64 = vpack.c.bf16 %v62, %v62
    %v65 = vld [vmem:[%s1] sm:$0xff]
    %v66 = vld [vmem:[%s1 + $0x8] sm:$0xff]
    %v67 = vld [vmem:[%s1 + $0x10] sm:$0xff]
    %v68 = vld [vmem:[%s1 + $0x18] sm:$0xff]
    %v69 = vld [vmem:[%s1 + $0x20] sm:$0xff]
    %v70 = vld [vmem:[%s1 + $0x28] sm:$0xff]
    %v71 = vld [vmem:[%s1 + $0x30] sm:$0xff]
    %v72 = vld [vmem:[%s1 + $0x38] sm:$0xff]
    %v73 = vld [vmem:[%s1 + $0x40] sm:$0xff]
    %v74 = vld [vmem:[%s1 + $0x48] sm:$0xff]
    %v75 = vld [vmem:[%s1 + $0x50] sm:$0xff]
    %v76 = vld [vmem:[%s1 + $0x58] sm:$0xff]
    %v77 = vld [vmem:[%s1 + $0x60] sm:$0xff]
    %v78 = vld [vmem:[%s1 + $0x68] sm:$0xff]
    %v79 = vld [vmem:[%s1 + $0x70] sm:$0xff]
    %v80 = vld [vmem:[%s1 + $0x78] sm:$0xff]
    %v81 = vld [vmem:[%s1 + $0x80] sm:$0xff]
    %v82 = vld [vmem:[%s1 + $0x88] sm:$0xff]
    %v83 = vld [vmem:[%s1 + $0x90] sm:$0xff]
    %v84 = vld [vmem:[%s1 + $0x98] sm:$0xff]
    %v85 = vld [vmem:[%s1 + $0xa0] sm:$0xff]
    %v86 = vld [vmem:[%s1 + $0xa8] sm:$0xff]
    %v87 = vld [vmem:[%s1 + $0xb0] sm:$0xff]
    %v88 = vld [vmem:[%s1 + $0xb8] sm:$0xff]
    %v89 = vld [vmem:[%s1 + $0xc0] sm:$0xff]
    %v90 = vld [vmem:[%s1 + $0xc8] sm:$0xff]
    %v91 = vld [vmem:[%s1 + $0xd0] sm:$0xff]
    %v92 = vld [vmem:[%s1 + $0xd8] sm:$0xff]
    %v93 = vld [vmem:[%s1 + $0xe0] sm:$0xff]
    %v94 = vld [vmem:[%s1 + $0xe8] sm:$0xff]
    %v95 = vld [vmem:[%s1 + $0xf0] sm:$0xff]
    %v96 = vld [vmem:[%s1 + $0xf8] sm:$0xff]
    %v97 = vld [vmem:[%s1 + $0x100] sm:$0xff]
    %v98 = vld [vmem:[%s1 + $0x108] sm:$0xff]
    %v99 = vld [vmem:[%s1 + $0x110] sm:$0xff]
    %v100 = vld [vmem:[%s1 + $0x118] sm:$0xff]
    %v101 = vld [vmem:[%s1 + $0x120] sm:$0xff]
    %v102 = vld [vmem:[%s1 + $0x128] sm:$0xff]
    %v103 = vld [vmem:[%s1 + $0x130] sm:$0xff]
    %v104 = vld [vmem:[%s1 + $0x138] sm:$0xff]
    %v105 = vld [vmem:[%s1 + $0x140] sm:$0xff]
    %v106 = vld [vmem:[%s1 + $0x148] sm:$0xff]
    %v107 = vld [vmem:[%s1 + $0x150] sm:$0xff]
    %v108 = vld [vmem:[%s1 + $0x158] sm:$0xff]
    %v109 = vld [vmem:[%s1 + $0x160] sm:$0xff]
    %v110 = vld [vmem:[%s1 + $0x168] sm:$0xff]
    %v111 = vld [vmem:[%s1 + $0x170] sm:$0xff]
    %v112 = vld [vmem:[%s1 + $0x178] sm:$0xff]
    %v113 = vld [vmem:[%s1 + $0x180] sm:$0xff]
    %v114 = vld [vmem:[%s1 + $0x188] sm:$0xff]
    %v115 = vld [vmem:[%s1 + $0x190] sm:$0xff]
    %v116 = vld [vmem:[%s1 + $0x198] sm:$0xff]
    %v117 = vld [vmem:[%s1 + $0x1a0] sm:$0xff]
    %v118 = vld [vmem:[%s1 + $0x1a8] sm:$0xff]
    %v119 = vld [vmem:[%s1 + $0x1b0] sm:$0xff]
    %v120 = vld [vmem:[%s1 + $0x1b8] sm:$0xff]
    %v121 = vld [vmem:[%s1 + $0x1c0] sm:$0xff]
    %v122 = vld [vmem:[%s1 + $0x1c8] sm:$0xff]
    %v123 = vld [vmem:[%s1 + $0x1d0] sm:$0xff]
    %v124 = vld [vmem:[%s1 + $0x1d8] sm:$0xff]
    %v125 = vld [vmem:[%s1 + $0x1e0] sm:$0xff]
    %v126 = vld [vmem:[%s1 + $0x1e8] sm:$0xff]
    %v127 = vld [vmem:[%s1 + $0x1f0] sm:$0xff]
    %v128 = vld [vmem:[%s1 + $0x1f8] sm:$0xff]
    %v129 = vpack.c.bf16 %v67, %v65
    %v130 = vpack.c.bf16 %v68, %v66
    %v131 = vpack.c.bf16 %v71, %v69
    %v132 = vpack.c.bf16 %v72, %v70
    %v133 = vpack.c.bf16 %v75, %v73
    %v134 = vpack.c.bf16 %v76, %v74
    %v135 = vpack.c.bf16 %v79, %v77
    %v136 = vpack.c.bf16 %v80, %v78
    %v137 = vpack.c.bf16 %v83, %v81
    %v138 = vpack.c.bf16 %v84, %v82
    %v139 = vpack.c.bf16 %v87, %v85
    %v140 = vpack.c.bf16 %v88, %v86
    %v141 = vpack.c.bf16 %v91, %v89
    %v142 = vpack.c.bf16 %v92, %v90
    %v143 = vpack.c.bf16 %v95, %v93
    %v144 = vpack.c.bf16 %v96, %v94
    %v145 = vpack.c.bf16 %v99, %v97
    %v146 = vpack.c.bf16 %v100, %v98
    %v147 = vpack.c.bf16 %v103, %v101
    %v148 = vpack.c.bf16 %v104, %v102
    %v149 = vpack.c.bf16 %v107, %v105
    %v150 = vpack.c.bf16 %v108, %v106
    %v151 = vpack.c.bf16 %v111, %v109
    %v152 = vpack.c.bf16 %v112, %v110
    %v153 = vpack.c.bf16 %v115, %v113
    %v154 = vpack.c.bf16 %v116, %v114
    %v155 = vpack.c.bf16 %v119, %v117
    %v156 = vpack.c.bf16 %v120, %v118
    %v157 = vpack.c.bf16 %v123, %v121
    %v158 = vpack.c.bf16 %v124, %v122
    %v159 = vpack.c.bf16 %v127, %v125
    %v160 = vpack.c.bf16 %v128, %v126
    %v161 = vld [vmem:[%s2] sm:$0x3]
    %v163 = vlaneseq
    %v164 = vshrl.u32 %v163, 7
    %v165 = vsub.s32 0, %v164
    %v166 = vrot.slane %v161, %v165
    %v167 = vlaneseq
    %v168 = vshrl.u32 %v167, 7
    %v169 = vsub.s32 1, %v168
    %v170 = vrot.slane %v161, %v169
    %173 = vmatprep.subr.bf16.mxu0 %v130
    %174 = vmatpush1.bf16.msra.mxu0 %v129
    %175 = vmatprep.subr.bf16.mxu0 %v132
    %176 = vmatpush1.bf16.msra.mxu0 %v131
    %177 = vmatprep.subr.bf16.mxu0 %v134
    %178 = vmatpush1.bf16.msra.mxu0 %v133
    %179 = vmatprep.subr.bf16.mxu0 %v136
    %180 = vmatpush1.bf16.msra.mxu0 %v135
    %181 = vmatprep.subr.bf16.mxu0 %v138
    %182 = vmatpush1.bf16.msra.mxu0 %v137
    %183 = vmatprep.subr.bf16.mxu0 %v140
    %184 = vmatpush1.bf16.msra.mxu0 %v139
    %185 = vmatprep.subr.bf16.mxu0 %v142
    %186 = vmatpush1.bf16.msra.mxu0 %v141
    %187 = vmatprep.subr.bf16.mxu0 %v144
    %188 = vmatpush1.bf16.msra.mxu0 %v143
    %189 = vmatprep.subr.bf16.mxu0 %v146
    %190 = vmatpush1.bf16.msra.mxu0 %v145
    %191 = vmatprep.subr.bf16.mxu0 %v148
    %192 = vmatpush1.bf16.msra.mxu0 %v147
    %193 = vmatprep.subr.bf16.mxu0 %v150
    %194 = vmatpush1.bf16.msra.mxu0 %v149
    %195 = vmatprep.subr.bf16.mxu0 %v152
    %196 = vmatpush1.bf16.msra.mxu0 %v151
    %197 = vmatprep.subr.bf16.mxu0 %v154
    %198 = vmatpush1.bf16.msra.mxu0 %v153
    %199 = vmatprep.subr.bf16.mxu0 %v156
    %200 = vmatpush1.bf16.msra.mxu0 %v155
    %201 = vmatprep.subr.bf16.mxu0 %v158
    %202 = vmatpush1.bf16.msra.mxu0 %v157
    %203 = vmatprep.subr.bf16.mxu0 %v160
    %204 = vmatpush1.bf16.msra.mxu0 %v159
    %205 = vmatprep.mubr.bf16.mxu0 %v64
    %206 = vmatmul.mubr.bf16.gmra.mrb[0].mxu0 %v63
    %v207 = vpop.f32.mrb[0].mxu0
    %v208 = vadd.f32 %v166, %v207
    %v209 = vpop.f32.mrb[0].mxu0
    %v210 = vadd.f32 %v170, %v209
    %v211 = vpop.f32.mrb[0].mxu0
    %v212 = vpop.f32.mrb[0].mxu0
    %213 = vdwg.mxu0
    %v214 = vmax.f32 %v208, 0.0
    %v215 = vmax.f32 %v210, 0.0
    %v216 = vpack.c.bf16 %v214, %v214
    %v217 = vpack.c.bf16 %v215, %v215
    %v218 = vld [vmem:[%s3] sm:$0xff]
    %v219 = vld [vmem:[%s3 + $0x8] sm:$0xff]
    %v220 = vld [vmem:[%s3 + $0x10] sm:$0xff]
    %v221 = vld [vmem:[%s3 + $0x18] sm:$0xff]
    %v222 = vld [vmem:[%s3 + $0x20] sm:$0xff]
    %v223 = vld [vmem:[%s3 + $0x28] sm:$0xff]
    %v224 = vld [vmem:[%s3 + $0x30] sm:$0xff]
    %v225 = vld [vmem:[%s3 + $0x38] sm:$0xff]
    %v226 = vld [vmem:[%s3 + $0x40] sm:$0xff]
    %v227 = vld [vmem:[%s3 + $0x48] sm:$0xff]
    %v228 = vld [vmem:[%s3 + $0x50] sm:$0xff]
    %v229 = vld [vmem:[%s3 + $0x58] sm:$0xff]
    %v230 = vld [vmem:[%s3 + $0x60] sm:$0xff]
    %v231 = vld [vmem:[%s3 + $0x68] sm:$0xff]
    %v232 = vld [vmem:[%s3 + $0x70] sm:$0xff]
    %v233 = vld [vmem:[%s3 + $0x78] sm:$0xff]
    %v234 = vld [vmem:[%s3 + $0x80] sm:$0xff]
    %v235 = vld [vmem:[%s3 + $0x88] sm:$0xff]
    %v236 = vld [vmem:[%s3 + $0x90] sm:$0xff]
    %v237 = vld [vmem:[%s3 + $0x98] sm:$0xff]
    %v238 = vld [vmem:[%s3 + $0xa0] sm:$0xff]
    %v239 = vld [vmem:[%s3 + $0xa8] sm:$0xff]
    %v240 = vld [vmem:[%s3 + $0xb0] sm:$0xff]
    %v241 = vld [vmem:[%s3 + $0xb8] sm:$0xff]
    %v242 = vld [vmem:[%s3 + $0xc0] sm:$0xff]
    %v243 = vld [vmem:[%s3 + $0xc8] sm:$0xff]
    %v244 = vld [vmem:[%s3 + $0xd0] sm:$0xff]
    %v245 = vld [vmem:[%s3 + $0xd8] sm:$0xff]
    %v246 = vld [vmem:[%s3 + $0xe0] sm:$0xff]
    %v247 = vld [vmem:[%s3 + $0xe8] sm:$0xff]
    %v248 = vld [vmem:[%s3 + $0xf0] sm:$0xff]
    %v249 = vld [vmem:[%s3 + $0xf8] sm:$0xff]
    %v250 = vld [vmem:[%s3 + $0x100] sm:$0xff]
    %v251 = vld [vmem:[%s3 + $0x108] sm:$0xff]
    %v252 = vld [vmem:[%s3 + $0x110] sm:$0xff]
    %v253 = vld [vmem:[%s3 + $0x118] sm:$0xff]
    %v254 = vld [vmem:[%s3 + $0x120] sm:$0xff]
    %v255 = vld [vmem:[%s3 + $0x128] sm:$0xff]
    %v256 = vld [vmem:[%s3 + $0x130] sm:$0xff]
    %v257 = vld [vmem:[%s3 + $0x138] sm:$0xff]
    %v258 = vld [vmem:[%s3 + $0x140] sm:$0xff]
    %v259 = vld [vmem:[%s3 + $0x148] sm:$0xff]
    %v260 = vld [vmem:[%s3 + $0x150] sm:$0xff]
    %v261 = vld [vmem:[%s3 + $0x158] sm:$0xff]
    %v262 = vld [vmem:[%s3 + $0x160] sm:$0xff]
    %v263 = vld [vmem:[%s3 + $0x168] sm:$0xff]
    %v264 = vld [vmem:[%s3 + $0x170] sm:$0xff]
    %v265 = vld [vmem:[%s3 + $0x178] sm:$0xff]
    %v266 = vld [vmem:[%s3 + $0x180] sm:$0xff]
    %v267 = vld [vmem:[%s3 + $0x188] sm:$0xff]
    %v268 = vld [vmem:[%s3 + $0x190] sm:$0xff]
    %v269 = vld [vmem:[%s3 + $0x198] sm:$0xff]
    %v270 = vld [vmem:[%s3 + $0x1a0] sm:$0xff]
    %v271 = vld [vmem:[%s3 + $0x1a8] sm:$0xff]
    %v272 = vld [vmem:[%s3 + $0x1b0] sm:$0xff]
    %v273 = vld [vmem:[%s3 + $0x1b8] sm:$0xff]
    %v274 = vld [vmem:[%s3 + $0x1c0] sm:$0xff]
    %v275 = vld [vmem:[%s3 + $0x1c8] sm:$0xff]
    %v276 = vld [vmem:[%s3 + $0x1d0] sm:$0xff]
    %v277 = vld [vmem:[%s3 + $0x1d8] sm:$0xff]
    %v278 = vld [vmem:[%s3 + $0x1e0] sm:$0xff]
    %v279 = vld [vmem:[%s3 + $0x1e8] sm:$0xff]
    %v280 = vld [vmem:[%s3 + $0x1f0] sm:$0xff]
    %v281 = vld [vmem:[%s3 + $0x1f8] sm:$0xff]
    %v282 = vpack.c.bf16 %v220, %v218
    %v283 = vpack.c.bf16 %v221, %v219
    %v284 = vpack.c.bf16 %v224, %v222
    %v285 = vpack.c.bf16 %v225, %v223
    %v286 = vpack.c.bf16 %v228, %v226
    %v287 = vpack.c.bf16 %v229, %v227
    %v288 = vpack.c.bf16 %v232, %v230
    %v289 = vpack.c.bf16 %v233, %v231
    %v290 = vpack.c.bf16 %v236, %v234
    %v291 = vpack.c.bf16 %v237, %v235
    %v292 = vpack.c.bf16 %v240, %v238
    %v293 = vpack.c.bf16 %v241, %v239
    %v294 = vpack.c.bf16 %v244, %v242
    %v295 = vpack.c.bf16 %v245, %v243
    %v296 = vpack.c.bf16 %v248, %v246
    %v297 = vpack.c.bf16 %v249, %v247
    %v298 = vpack.c.bf16 %v252, %v250
    %v299 = vpack.c.bf16 %v253, %v251
    %v300 = vpack.c.bf16 %v256, %v254
    %v301 = vpack.c.bf16 %v257, %v255
    %v302 = vpack.c.bf16 %v260, %v258
    %v303 = vpack.c.bf16 %v261, %v259
    %v304 = vpack.c.bf16 %v264, %v262
    %v305 = vpack.c.bf16 %v265, %v263
    %v306 = vpack.c.bf16 %v268, %v266
    %v307 = vpack.c.bf16 %v269, %v267
    %v308 = vpack.c.bf16 %v272, %v270
    %v309 = vpack.c.bf16 %v273, %v271
    %v310 = vpack.c.bf16 %v276, %v274
    %v311 = vpack.c.bf16 %v277, %v275
    %v312 = vpack.c.bf16 %v280, %v278
    %v313 = vpack.c.bf16 %v281, %v279
    %v314 = vld [vmem:[#allocation2] sm:$0x3]
    %v316 = vlaneseq
    %v317 = vshrl.u32 %v316, 7
    %v318 = vsub.s32 0, %v317
    %v319 = vrot.slane %v314, %v318
    %v320 = vlaneseq
    %v321 = vshrl.u32 %v320, 7
    %v322 = vsub.s32 1, %v321
    %v323 = vrot.slane %v314, %v322
    %326 = vmatprep.subr.bf16.mxu0 %v283
    %327 = vmatpush1.bf16.msra.mxu0 %v282
    %328 = vmatprep.subr.bf16.mxu0 %v285
    %329 = vmatpush1.bf16.msra.mxu0 %v284
    %330 = vmatprep.subr.bf16.mxu0 %v287
    %331 = vmatpush1.bf16.msra.mxu0 %v286
    %332 = vmatprep.subr.bf16.mxu0 %v289
    %333 = vmatpush1.bf16.msra.mxu0 %v288
    %334 = vmatprep.subr.bf16.mxu0 %v291
    %335 = vmatpush1.bf16.msra.mxu0 %v290
    %336 = vmatprep.subr.bf16.mxu0 %v293
    %337 = vmatpush1.bf16.msra.mxu0 %v292
    %338 = vmatprep.subr.bf16.mxu0 %v295
    %339 = vmatpush1.bf16.msra.mxu0 %v294
    %340 = vmatprep.subr.bf16.mxu0 %v297
    %341 = vmatpush1.bf16.msra.mxu0 %v296
    %342 = vmatprep.subr.bf16.mxu0 %v299
    %343 = vmatpush1.bf16.msra.mxu0 %v298
    %344 = vmatprep.subr.bf16.mxu0 %v301
    %345 = vmatpush1.bf16.msra.mxu0 %v300
    %346 = vmatprep.subr.bf16.mxu0 %v303
    %347 = vmatpush1.bf16.msra.mxu0 %v302
    %348 = vmatprep.subr.bf16.mxu0 %v305
    %349 = vmatpush1.bf16.msra.mxu0 %v304
    %350 = vmatprep.subr.bf16.mxu0 %v307
    %351 = vmatpush1.bf16.msra.mxu0 %v306
    %352 = vmatprep.subr.bf16.mxu0 %v309
    %353 = vmatpush1.bf16.msra.mxu0 %v308
    %354 = vmatprep.subr.bf16.mxu0 %v311
    %355 = vmatpush1.bf16.msra.mxu0 %v310
    %356 = vmatprep.subr.bf16.mxu0 %v313
    %357 = vmatpush1.bf16.msra.mxu0 %v312
    %358 = vmatprep.mubr.bf16.mxu0 %v217
    %359 = vmatmul.mubr.bf16.gmra.mrb[0].mxu0 %v216
    %v360 = vpop.f32.mrb[0].mxu0
    %v361 = vadd.f32 %v319, %v360
    %v362 = vpop.f32.mrb[0].mxu0
    %v363 = vadd.f32 %v323, %v362
    %v364 = vpop.f32.mrb[0].mxu0
    %v365 = vpop.f32.mrb[0].mxu0
    %366 = vdwg.mxu0
    %v367 = vadd.f32 %v361, %v61
    %v368 = vadd.f32 %v363, %v62
    %v369 = vld [vmem:[#allocation4] sm:$0x3]
    %v370 = vld [vmem:[#allocation6] sm:$0x3]
    %v371 = vadd.f32 %v367, %v368
    %372 = vadd.xlane.f32.xlu0 %v371
    %v373 = vpop.xlane.xlu0 %372
    %v374 = vrcp.pop 256.0
    %v375 = vmul.f32 %v373, %v374
    %v376 = vsub.f32 %v367, %v375
    %v377 = vsub.f32 %v368, %v375
    %v378 = vmul.f32 %v376, %v376
    %v379 = vmul.f32 %v377, %v377
    %v380 = vadd.f32 %v378, %v379
    %381 = vadd.xlane.f32.xlu0 %v380
    %v382 = vpop.xlane.xlu0 %381
    %v383 = vmul.f32 %v382, %v374
    %v384 = vadd.f32 %v383, 1e-05
    %v385 = vrsqrt.pop %v384
    %v386 = vmul.f32 %v376, %v385
    %v387 = vmul.f32 %v377, %v385
    %v389 = vlaneseq
    %v390 = vshrl.u32 %v389, 7
    %v391 = vsub.s32 0, %v390
    %v392 = vrot.slane %v369, %v391
    %v393 = vlaneseq
    %v394 = vshrl.u32 %v393, 7
    %v395 = vsub.s32 1, %v394
    %v396 = vrot.slane %v369, %v395
    %v399 = vmul.f32 %v386, %v392
    %v400 = vmul.f32 %v387, %v396
    %v402 = vlaneseq
    %v403 = vshrl.u32 %v402, 7
    %v404 = vsub.s32 0, %v403
    %v405 = vrot.slane %v370, %v404
    %v406 = vlaneseq
    %v407 = vshrl.u32 %v406, 7
    %v408 = vsub.s32 1, %v407
    %v409 = vrot.slane %v370, %v408
    %v412 = vadd.f32 %v399, %v405
    %v413 = vadd.f32 %v400, %v409
    %414 = vst [vmem:[%s7] sm:$0xff] %v412
    %415 = vst [vmem:[%s7 + $0x8] sm:$0xff] %v413
    // Predicated region
    $region42: #{forward.47} parent=1 // pred_check
      _
    $region43: #{forward.47} parent=1 // pred_check_branch
      %417 = sbr.rel (0) target = $region45
    $region44: #{forward.47} parent=1 // pred_region
      _
    $region45: #{forward.47} parent=1 // pred_fallthru
      _
    // Predicated region
    $region46: #{forward.47} parent=1 // pred_check
      _
    $region47: #{forward.47} parent=1 // pred_check_branch
      %419 = sbr.rel (0) target = $region49
    $region48: #{forward.47} parent=1 // pred_region
      _
    $region49: #{forward.47} parent=1 // pred_fallthru
      _
    %420 = vsyncpa [#allocation3], 1
    %421 = vsyncpa [#allocation5], 1

// kernel: forward.43
$region0: #{forward.43}
  #allocation0 [shape = 'u32[]', space=smem, size = 0x4, offset = 0x4, fixed_abs, tag = 'smem constant byte address 0x4 - core index']
  #allocation1 [shape = 'u32[144,128]{1,0:T(1,128)}', space=vmem, size = 0x12000, scoped, tag = 'internal scratch']
  %s0 = inlined_call_operand.vmem [shape: f32[8,256], index: 0, kind: input, shape index: {}]
  %s1 = inlined_call_operand.vmem [shape: f32[256,256], index: 1, kind: input, shape index: {}]
  %s2 = inlined_call_operand.vmem [shape: f32[1,256], index: 2, kind: input, shape index: {}]
  %s3 = inlined_call_operand.vmem [shape: f32[256,256], index: 3, kind: input, shape index: {}]
  %s4 = inlined_call_operand.vmem [shape: f32[1,256], index: 4, kind: input, shape index: {}]
  %s5 = inlined_call_operand.vmem [shape: f32[1,256], index: 5, kind: input, shape index: {}]
  %s6 = inlined_call_operand.vmem [shape: f32[1,256], index: 6, kind: input, shape index: {}]
  %s7 = inlined_call_operand.vmem [shape: f32[8,256], index: 7, kind: output, shape index: {}]
  %s8 = sld [smem:[#allocation0]]
  $region38: #{forward.43} parent=0
    _
  %s10 = ssub.s32 1, %s8
  %s11 = scalar_select 0, %s10, %s8
  // Predicated region
  $region2: #{forward.43} parent=0 // pred_check
    _
  $region3: #{forward.43} parent=0 // pred_check_branch
    %13 = sbr.rel (0) target = $region5
  $region4: #{forward.43} parent=0 // pred_region
    _
  $region5: #{forward.43} parent=0 // pred_fallthru
    _
  // Predicated region
  $region6: #{forward.43} parent=0 // pred_check
    _
  $region7: #{forward.43} parent=0 // pred_check_branch
    %15 = sbr.rel (0) target = $region9
  $region8: #{forward.43} parent=0 // pred_region
    _
  $region9: #{forward.43} parent=0 // pred_fallthru
    _
  // Predicated region
  $region10: #{forward.43} parent=0 // pred_check
    _
  $region11: #{forward.43} parent=0 // pred_check_branch
    %17 = sbr.rel (0) target = $region13
  $region12: #{forward.43} parent=0 // pred_region
    _
  $region13: #{forward.43} parent=0 // pred_fallthru
    _
  // Predicated region
  $region14: #{forward.43} parent=0 // pred_check
    _
  $region15: #{forward.43} parent=0 // pred_check_branch
    %19 = sbr.rel (0) target = $region17
  $region16: #{forward.43} parent=0 // pred_region
    _
  $region17: #{forward.43} parent=0 // pred_fallthru
    _
  // Predicated region
  $region18: #{forward.43} parent=0 // pred_check
    _
  $region19: #{forward.43} parent=0 // pred_check_branch
    %21 = sbr.rel (0) target = $region21
  $region20: #{forward.43} parent=0 // pred_region
    _
  $region21: #{forward.43} parent=0 // pred_fallthru
    _
  // Predicated region
  $region22: #{forward.43} parent=0 // pred_check
    _
  $region23: #{forward.43} parent=0 // pred_check_branch
    %23 = sbr.rel (0) target = $region25
  $region24: #{forward.43} parent=0 // pred_region
    _
  $region25: #{forward.43} parent=0 // pred_fallthru
    _
  // Predicated region
  $region26: #{forward.43} parent=0 // pred_check
    _
  $region27: #{forward.43} parent=0 // pred_check_branch
    %25 = sbr.rel (0) target = $region29
  $region28: #{forward.43} parent=0 // pred_region
    _
  $region29: #{forward.43} parent=0 // pred_fallthru
    _
  %v26 = vld [vmem:[%s0] sm:$0xff]
  %v27 = vld [vmem:[%s0 + $0x8] sm:$0xff]
  %v28 = vpack.c.bf16 %v26, %v26
  %v29 = vpack.c.bf16 %v27, %v27
  %v30 = vld [vmem:[%s1] sm:$0xff]
  %v31 = vld [vmem:[%s1 + $0x8] sm:$0xff]
  %v32 = vld [vmem:[%s1 + $0x10] sm:$0xff]
  %v33 = vld [vmem:[%s1 + $0x18] sm:$0xff]
  %v34 = vld [vmem:[%s1 + $0x20] sm:$0xff]
  %v35 = vld [vmem:[%s1 + $0x28] sm:$0xff]
  %v36 = vld [vmem:[%s1 + $0x30] sm:$0xff]
  %v37 = vld [vmem:[%s1 + $0x38] sm:$0xff]
  %v38 = vld [vmem:[%s1 + $0x40] sm:$0xff]
  %v39 = vld [vmem:[%s1 + $0x48] sm:$0xff]
  %v40 = vld [vmem:[%s1 + $0x50] sm:$0xff]
  %v41 = vld [vmem:[%s1 + $0x58] sm:$0xff]
  %v42 = vld [vmem:[%s1 + $0x60] sm:$0xff]
  %v43 = vld [vmem:[%s1 + $0x68] sm:$0xff]
  %v44 = vld [vmem:[%s1 + $0x70] sm:$0xff]
  %v45 = vld [vmem:[%s1 + $0x78] sm:$0xff]
  %v46 = vld [vmem:[%s1 + $0x80] sm:$0xff]
  %v47 = vld [vmem:[%s1 + $0x88] sm:$0xff]
  %v48 = vld [vmem:[%s1 + $0x90] sm:$0xff]
  %v49 = vld [vmem:[%s1 + $0x98] sm:$0xff]
  %v50 = vld [vmem:[%s1 + $0xa0] sm:$0xff]
  %v51 = vld [vmem:[%s1 + $0xa8] sm:$0xff]
  %v52 = vld [vmem:[%s1 + $0xb0] sm:$0xff]
  %v53 = vld [vmem:[%s1 + $0xb8] sm:$0xff]
  %v54 = vld [vmem:[%s1 + $0xc0] sm:$0xff]
  %v55 = vld [vmem:[%s1 + $0xc8] sm:$0xff]
  %v56 = vld [vmem:[%s1 + $0xd0] sm:$0xff]
  %v57 = vld [vmem:[%s1 + $0xd8] sm:$0xff]
  %v58 = vld [vmem:[%s1 + $0xe0] sm:$0xff]
  %v59 = vld [vmem:[%s1 + $0xe8] sm:$0xff]
  %v60 = vld [vmem:[%s1 + $0xf0] sm:$0xff]
  %v61 = vld [vmem:[%s1 + $0xf8] sm:$0xff]
  %v62 = vld [vmem:[%s1 + $0x100] sm:$0xff]
  %v63 = vld [vmem:[%s1 + $0x108] sm:$0xff]
  %v64 = vld [vmem:[%s1 + $0x110] sm:$0xff]
  %v65 = vld [vmem:[%s1 + $0x118] sm:$0xff]
  %v66 = vld [vmem:[%s1 + $0x120] sm:$0xff]
  %v67 = vld [vmem:[%s1 + $0x128] sm:$0xff]
  %v68 = vld [vmem:[%s1 + $0x130] sm:$0xff]
  %v69 = vld [vmem:[%s1 + $0x138] sm:$0xff]
  %v70 = vld [vmem:[%s1 + $0x140] sm:$0xff]
  %v71 = vld [vmem:[%s1 + $0x148] sm:$0xff]
  %v72 = vld [vmem:[%s1 + $0x150] sm:$0xff]
  %v73 = vld [vmem:[%s1 + $0x158] sm:$0xff]
  %v74 = vld [vmem:[%s1 + $0x160] sm:$0xff]
  %v75 = vld [vmem:[%s1 + $0x168] sm:$0xff]
  %v76 = vld [vmem:[%s1 + $0x170] sm:$0xff]
  %v77 = vld [vmem:[%s1 + $0x178] sm:$0xff]
  %v78 = vld [vmem:[%s1 + $0x180] sm:$0xff]
  %v79 = vld [vmem:[%s1 + $0x188] sm:$0xff]
  %v80 = vld [vmem:[%s1 + $0x190] sm:$0xff]
  %v81 = vld [vmem:[%s1 + $0x198] sm:$0xff]
  %v82 = vld [vmem:[%s1 + $0x1a0] sm:$0xff]
  %v83 = vld [vmem:[%s1 + $0x1a8] sm:$0xff]
  %v84 = vld [vmem:[%s1 + $0x1b0] sm:$0xff]
  %v85 = vld [vmem:[%s1 + $0x1b8] sm:$0xff]
  %v86 = vld [vmem:[%s1 + $0x1c0] sm:$0xff]
  %v87 = vld [vmem:[%s1 + $0x1c8] sm:$0xff]
  %v88 = vld [vmem:[%s1 + $0x1d0] sm:$0xff]
  %v89 = vld [vmem:[%s1 + $0x1d8] sm:$0xff]
  %v90 = vld [vmem:[%s1 + $0x1e0] sm:$0xff]
  %v91 = vld [vmem:[%s1 + $0x1e8] sm:$0xff]
  %v92 = vld [vmem:[%s1 + $0x1f0] sm:$0xff]
  %v93 = vld [vmem:[%s1 + $0x1f8] sm:$0xff]
  %v94 = vpack.c.bf16 %v32, %v30
  %v95 = vpack.c.bf16 %v33, %v31
  %v96 = vpack.c.bf16 %v36, %v34
  %v97 = vpack.c.bf16 %v37, %v35
  %v98 = vpack.c.bf16 %v40, %v38
  %v99 = vpack.c.bf16 %v41, %v39
  %v100 = vpack.c.bf16 %v44, %v42
  %v101 = vpack.c.bf16 %v45, %v43
  %v102 = vpack.c.bf16 %v48, %v46
  %v103 = vpack.c.bf16 %v49, %v47
  %v104 = vpack.c.bf16 %v52, %v50
  %v105 = vpack.c.bf16 %v53, %v51
  %v106 = vpack.c.bf16 %v56, %v54
  %v107 = vpack.c.bf16 %v57, %v55
  %v108 = vpack.c.bf16 %v60, %v58
  %v109 = vpack.c.bf16 %v61, %v59
  %v110 = vpack.c.bf16 %v64, %v62
  %v111 = vpack.c.bf16 %v65, %v63
  %v112 = vpack.c.bf16 %v68, %v66
  %v113 = vpack.c.bf16 %v69, %v67
  %v114 = vpack.c.bf16 %v72, %v70
  %v115 = vpack.c.bf16 %v73, %v71
  %v116 = vpack.c.bf16 %v76, %v74
  %v117 = vpack.c.bf16 %v77, %v75
  %v118 = vpack.c.bf16 %v80, %v78
  %v119 = vpack.c.bf16 %v81, %v79
  %v120 = vpack.c.bf16 %v84, %v82
  %v121 = vpack.c.bf16 %v85, %v83
  %v122 = vpack.c.bf16 %v88, %v86
  %v123 = vpack.c.bf16 %v89, %v87
  %v124 = vpack.c.bf16 %v92, %v90
  %v125 = vpack.c.bf16 %v93, %v91
  %v126 = vld [vmem:[%s2] sm:$0x3]
  %v128 = vlaneseq
  %v129 = vshrl.u32 %v128, 7
  %v130 = vsub.s32 0, %v129
  %v131 = vrot.slane %v126, %v130
  %v132 = vlaneseq
  %v133 = vshrl.u32 %v132, 7
  %v134 = vsub.s32 1, %v133
  %v135 = vrot.slane %v126, %v134
  %138 = vmatprep.subr.bf16.mxu0 %v95
  %139 = vmatpush1.bf16.msra.mxu0 %v94
  %140 = vmatprep.subr.bf16.mxu0 %v97
  %141 = vmatpush1.bf16.msra.mxu0 %v96
  %142 = vmatprep.subr.bf16.mxu0 %v99
  %143 = vmatpush1.bf16.msra.mxu0 %v98
  %144 = vmatprep.subr.bf16.mxu0 %v101
  %145 = vmatpush1.bf16.msra.mxu0 %v100
  %146 = vmatprep.subr.bf16.mxu0 %v103
  %147 = vmatpush1.bf16.msra.mxu0 %v102
  %148 = vmatprep.subr.bf16.mxu0 %v105
  %149 = vmatpush1.bf16.msra.mxu0 %v104
  %150 = vmatprep.subr.bf16.mxu0 %v107
  %151 = vmatpush1.bf16.msra.mxu0 %v106
  %152 = vmatprep.subr.bf16.mxu0 %v109
  %153 = vmatpush1.bf16.msra.mxu0 %v108
  %154 = vmatprep.subr.bf16.mxu0 %v111
  %155 = vmatpush1.bf16.msra.mxu0 %v110
  %156 = vmatprep.subr.bf16.mxu0 %v113
  %157 = vmatpush1.bf16.msra.mxu0 %v112
  %158 = vmatprep.subr.bf16.mxu0 %v115
  %159 = vmatpush1.bf16.msra.mxu0 %v114
  %160 = vmatprep.subr.bf16.mxu0 %v117
  %161 = vmatpush1.bf16.msra.mxu0 %v116
  %162 = vmatprep.subr.bf16.mxu0 %v119
  %163 = vmatpush1.bf16.msra.mxu0 %v118
  %164 = vmatprep.subr.bf16.mxu0 %v121
  %165 = vmatpush1.bf16.msra.mxu0 %v120
  %166 = vmatprep.subr.bf16.mxu0 %v123
  %167 = vmatpush1.bf16.msra.mxu0 %v122
  %168 = vmatprep.subr.bf16.mxu0 %v125
  %169 = vmatpush1.bf16.msra.mxu0 %v124
  %170 = vmatprep.mubr.bf16.mxu0 %v29
  %171 = vmatmul.mubr.bf16.gmra.mrb[0].mxu0 %v28
  %v172 = vpop.f32.mrb[0].mxu0
  %v173 = vadd.f32 %v131, %v172
  %v174 = vpop.f32.mrb[0].mxu0
  %v175 = vadd.f32 %v135, %v174
  %v176 = vpop.f32.mrb[0].mxu0
  %v177 = vpop.f32.mrb[0].mxu0
  %178 = vdwg.mxu0
  %v179 = vmax.f32 %v173, 0.0
  %v180 = vmax.f32 %v175, 0.0
  %v181 = vpack.c.bf16 %v179, %v179
  %v182 = vpack.c.bf16 %v180, %v180
  %v183 = vld [vmem:[%s3] sm:$0xff]
  %v184 = vld [vmem:[%s3 + $0x8] sm:$0xff]
  %v185 = vld [vmem:[%s3 + $0x10] sm:$0xff]
  %v186 = vld [vmem:[%s3 + $0x18] sm:$0xff]
  %v187 = vld [vmem:[%s3 + $0x20] sm:$0xff]
  %v188 = vld [vmem:[%s3 + $0x28] sm:$0xff]
  %v189 = vld [vmem:[%s3 + $0x30] sm:$0xff]
  %v190 = vld [vmem:[%s3 + $0x38] sm:$0xff]
  %v191 = vld [vmem:[%s3 + $0x40] sm:$0xff]
  %v192 = vld [vmem:[%s3 + $0x48] sm:$0xff]
  %v193 = vld [vmem:[%s3 + $0x50] sm:$0xff]
  %v194 = vld [vmem:[%s3 + $0x58] sm:$0xff]
  %v195 = vld [vmem:[%s3 + $0x60] sm:$0xff]
  %v196 = vld [vmem:[%s3 + $0x68] sm:$0xff]
  %v197 = vld [vmem:[%s3 + $0x70] sm:$0xff]
  %v198 = vld [vmem:[%s3 + $0x78] sm:$0xff]
  %v199 = vld [vmem:[%s3 + $0x80] sm:$0xff]
  %v200 = vld [vmem:[%s3 + $0x88] sm:$0xff]
  %v201 = vld [vmem:[%s3 + $0x90] sm:$0xff]
  %v202 = vld [vmem:[%s3 + $0x98] sm:$0xff]
  %v203 = vld [vmem:[%s3 + $0xa0] sm:$0xff]
  %v204 = vld [vmem:[%s3 + $0xa8] sm:$0xff]
  %v205 = vld [vmem:[%s3 + $0xb0] sm:$0xff]
  %v206 = vld [vmem:[%s3 + $0xb8] sm:$0xff]
  %v207 = vld [vmem:[%s3 + $0xc0] sm:$0xff]
  %v208 = vld [vmem:[%s3 + $0xc8] sm:$0xff]
  %v209 = vld [vmem:[%s3 + $0xd0] sm:$0xff]
  %v210 = vld [vmem:[%s3 + $0xd8] sm:$0xff]
  %v211 = vld [vmem:[%s3 + $0xe0] sm:$0xff]
  %v212 = vld [vmem:[%s3 + $0xe8] sm:$0xff]
  %v213 = vld [vmem:[%s3 + $0xf0] sm:$0xff]
  %v214 = vld [vmem:[%s3 + $0xf8] sm:$0xff]
  %v215 = vld [vmem:[%s3 + $0x100] sm:$0xff]
  %v216 = vld [vmem:[%s3 + $0x108] sm:$0xff]
  %v217 = vld [vmem:[%s3 + $0x110] sm:$0xff]
  %v218 = vld [vmem:[%s3 + $0x118] sm:$0xff]
  %v219 = vld [vmem:[%s3 + $0x120] sm:$0xff]
  %v220 = vld [vmem:[%s3 + $0x128] sm:$0xff]
  %v221 = vld [vmem:[%s3 + $0x130] sm:$0xff]
  %v222 = vld [vmem:[%s3 + $0x138] sm:$0xff]
  %v223 = vld [vmem:[%s3 + $0x140] sm:$0xff]
  %v224 = vld [vmem:[%s3 + $0x148] sm:$0xff]
  %v225 = vld [vmem:[%s3 + $0x150] sm:$0xff]
  %v226 = vld [vmem:[%s3 + $0x158] sm:$0xff]
  %v227 = vld [vmem:[%s3 + $0x160] sm:$0xff]
  %v228 = vld [vmem:[%s3 + $0x168] sm:$0xff]
  %v229 = vld [vmem:[%s3 + $0x170] sm:$0xff]
  %v230 = vld [vmem:[%s3 + $0x178] sm:$0xff]
  %v231 = vld [vmem:[%s3 + $0x180] sm:$0xff]
  %v232 = vld [vmem:[%s3 + $0x188] sm:$0xff]
  %v233 = vld [vmem:[%s3 + $0x190] sm:$0xff]
  %v234 = vld [vmem:[%s3 + $0x198] sm:$0xff]
  %v235 = vld [vmem:[%s3 + $0x1a0] sm:$0xff]
  %v236 = vld [vmem:[%s3 + $0x1a8] sm:$0xff]
  %v237 = vld [vmem:[%s3 + $0x1b0] sm:$0xff]
  %v238 = vld [vmem:[%s3 + $0x1b8] sm:$0xff]
  %v239 = vld [vmem:[%s3 + $0x1c0] sm:$0xff]
  %v240 = vld [vmem:[%s3 + $0x1c8] sm:$0xff]
  %v241 = vld [vmem:[%s3 + $0x1d0] sm:$0xff]
  %v242 = vld [vmem:[%s3 + $0x1d8] sm:$0xff]
  %v243 = vld [vmem:[%s3 + $0x1e0] sm:$0xff]
  %v244 = vld [vmem:[%s3 + $0x1e8] sm:$0xff]
  %v245 = vld [vmem:[%s3 + $0x1f0] sm:$0xff]
  %v246 = vld [vmem:[%s3 + $0x1f8] sm:$0xff]
  %v247 = vpack.c.bf16 %v185, %v183
  %v248 = vpack.c.bf16 %v186, %v184
  %v249 = vpack.c.bf16 %v189, %v187
  %v250 = vpack.c.bf16 %v190, %v188
  %v251 = vpack.c.bf16 %v193, %v191
  %v252 = vpack.c.bf16 %v194, %v192
  %v253 = vpack.c.bf16 %v197, %v195
  %v254 = vpack.c.bf16 %v198, %v196
  %v255 = vpack.c.bf16 %v201, %v199
  %v256 = vpack.c.bf16 %v202, %v200
  %v257 = vpack.c.bf16 %v205, %v203
  %v258 = vpack.c.bf16 %v206, %v204
  %v259 = vpack.c.bf16 %v209, %v207
  %v260 = vpack.c.bf16 %v210, %v208
  %v261 = vpack.c.bf16 %v213, %v211
  %v262 = vpack.c.bf16 %v214, %v212
  %v263 = vpack.c.bf16 %v217, %v215
  %v264 = vpack.c.bf16 %v218, %v216
  %v265 = vpack.c.bf16 %v221, %v219
  %v266 = vpack.c.bf16 %v222, %v220
  %v267 = vpack.c.bf16 %v225, %v223
  %v268 = vpack.c.bf16 %v226, %v224
  %v269 = vpack.c.bf16 %v229, %v227
  %v270 = vpack.c.bf16 %v230, %v228
  %v271 = vpack.c.bf16 %v233, %v231
  %v272 = vpack.c.bf16 %v234, %v232
  %v273 = vpack.c.bf16 %v237, %v235
  %v274 = vpack.c.bf16 %v238, %v236
  %v275 = vpack.c.bf16 %v241, %v239
  %v276 = vpack.c.bf16 %v242, %v240
  %v277 = vpack.c.bf16 %v245, %v243
  %v278 = vpack.c.bf16 %v246, %v244
  %v279 = vld [vmem:[%s4] sm:$0x3]
  %v281 = vlaneseq
  %v282 = vshrl.u32 %v281, 7
  %v283 = vsub.s32 0, %v282
  %v284 = vrot.slane %v279, %v283
  %v285 = vlaneseq
  %v286 = vshrl.u32 %v285, 7
  %v287 = vsub.s32 1, %v286
  %v288 = vrot.slane %v279, %v287
  %291 = vmatprep.subr.bf16.mxu0 %v248
  %292 = vmatpush1.bf16.msra.mxu0 %v247
  %293 = vmatprep.subr.bf16.mxu0 %v250
  %294 = vmatpush1.bf16.msra.mxu0 %v249
  %295 = vmatprep.subr.bf16.mxu0 %v252
  %296 = vmatpush1.bf16.msra.mxu0 %v251
  %297 = vmatprep.subr.bf16.mxu0 %v254
  %298 = vmatpush1.bf16.msra.mxu0 %v253
  %299 = vmatprep.subr.bf16.mxu0 %v256
  %300 = vmatpush1.bf16.msra.mxu0 %v255
  %301 = vmatprep.subr.bf16.mxu0 %v258
  %302 = vmatpush1.bf16.msra.mxu0 %v257
  %303 = vmatprep.subr.bf16.mxu0 %v260
  %304 = vmatpush1.bf16.msra.mxu0 %v259
  %305 = vmatprep.subr.bf16.mxu0 %v262
  %306 = vmatpush1.bf16.msra.mxu0 %v261
  %307 = vmatprep.subr.bf16.mxu0 %v264
  %308 = vmatpush1.bf16.msra.mxu0 %v263
  %309 = vmatprep.subr.bf16.mxu0 %v266
  %310 = vmatpush1.bf16.msra.mxu0 %v265
  %311 = vmatprep.subr.bf16.mxu0 %v268
  %312 = vmatpush1.bf16.msra.mxu0 %v267
  %313 = vmatprep.subr.bf16.mxu0 %v270
  %314 = vmatpush1.bf16.msra.mxu0 %v269
  %315 = vmatprep.subr.bf16.mxu0 %v272
  %316 = vmatpush1.bf16.msra.mxu0 %v271
  %317 = vmatprep.subr.bf16.mxu0 %v274
  %318 = vmatpush1.bf16.msra.mxu0 %v273
  %319 = vmatprep.subr.bf16.mxu0 %v276
  %320 = vmatpush1.bf16.msra.mxu0 %v275
  %321 = vmatprep.subr.bf16.mxu0 %v278
  %322 = vmatpush1.bf16.msra.mxu0 %v277
  %323 = vmatprep.mubr.bf16.mxu0 %v182
  %324 = vmatmul.mubr.bf16.gmra.mrb[0].mxu0 %v181
  %v325 = vpop.f32.mrb[0].mxu0
  %v326 = vadd.f32 %v284, %v325
  %v327 = vpop.f32.mrb[0].mxu0
  %v328 = vadd.f32 %v288, %v327
  %v329 = vpop.f32.mrb[0].mxu0
  %v330 = vpop.f32.mrb[0].mxu0
  %331 = vdwg.mxu0
  %v332 = vadd.f32 %v326, %v26
  %v333 = vadd.f32 %v328, %v27
  %v334 = vld [vmem:[%s5] sm:$0x3]
  %v335 = vld [vmem:[%s6] sm:$0x3]
  %v336 = vadd.f32 %v332, %v333
  %337 = vadd.xlane.f32.xlu0 %v336
  %v338 = vpop.xlane.xlu0 %337
  %v339 = vrcp.pop 256.0
  %v340 = vmul.f32 %v338, %v339
  %v341 = vsub.f32 %v332, %v340
  %v342 = vsub.f32 %v333, %v340
  %v343 = vmul.f32 %v341, %v341
  %v344 = vmul.f32 %v342, %v342
  %v345 = vadd.f32 %v343, %v344
  %346 = vadd.xlane.f32.xlu0 %v345
  %v347 = vpop.xlane.xlu0 %346
  %v348 = vmul.f32 %v347, %v339
  %v349 = vadd.f32 %v348, 1e-05
  %v350 = vrsqrt.pop %v349
  %v351 = vmul.f32 %v341, %v350
  %v352 = vmul.f32 %v342, %v350
  %v354 = vlaneseq
  %v355 = vshrl.u32 %v354, 7
  %v356 = vsub.s32 0, %v355
  %v357 = vrot.slane %v334, %v356
  %v358 = vlaneseq
  %v359 = vshrl.u32 %v358, 7
  %v360 = vsub.s32 1, %v359
  %v361 = vrot.slane %v334, %v360
  %v364 = vmul.f32 %v351, %v357
  %v365 = vmul.f32 %v352, %v361
  %v367 = vlaneseq
  %v368 = vshrl.u32 %v367, 7
  %v369 = vsub.s32 0, %v368
  %v370 = vrot.slane %v335, %v369
  %v371 = vlaneseq
  %v372 = vshrl.u32 %v371, 7
  %v373 = vsub.s32 1, %v372
  %v374 = vrot.slane %v335, %v373
  %v377 = vadd.f32 %v364, %v370
  %v378 = vadd.f32 %v365, %v374
  %379 = vst [vmem:[%s7] sm:$0xff] %v377
  %380 = vst [vmem:[%s7 + $0x8] sm:$0xff] %v378
  // Predicated region
  $region30: #{forward.43} parent=0 // pred_check
    _
  $region31: #{forward.43} parent=0 // pred_check_branch
    %382 = sbr.rel (0) target = $region33
  $region32: #{forward.43} parent=0 // pred_region
    _
  $region33: #{forward.43} parent=0 // pred_fallthru
    _
  // Predicated region
  $region34: #{forward.43} parent=0 // pred_check
    _
  $region35: #{forward.43} parent=0 // pred_check_branch
    %384 = sbr.rel (0) target = $region37
  $region36: #{forward.43} parent=0 // pred_region
    _
  $region37: #{forward.43} parent=0 // pred_fallthru
    _

</llo_original>
